<compile_context>
chip_gen: v6e
topology: v6e:2x2x1
jax: 0.10.0
libtpu: 0.0.40
codegen_flags: <defaults>
</compile_context>

<pallas_src>
import functools

import numpy as np
import jax
import jax.numpy as jnp
from jax.experimental import pallas as pl
from jax.experimental.pallas import tpu as pltpu

EPS = 1e-5

# Geometry implied by the module (conv input 10x13x18, conv1 5x5, conv2 3x3).
C_IN, H_IN, W_IN = 10, 13, 18
C1, KH1, KW1 = 16, 5, 5
H1, W1 = H_IN - KH1 + 1, W_IN - KW1 + 1          # 9, 14
C2, KH2, KW2 = 32, 3, 3
H2, W2 = H1 - KH2 + 1, W1 - KW2 + 1              # 7, 12
K1 = C_IN * KH1 * KW1                            # 250
K1P = 256                                        # lane-padded contraction
K2 = C1 * KH2 * KW2                              # 144
P1 = H1 * W1                                     # 126 conv1 grid positions
P2 = H2 * W2                                     # 84  conv2 grid positions
F_FLAT = C2 * P2                                 # 2688


def _round_up(x, m):
    return ((x + m - 1) // m) * m


def _full_spec(shape):
    nd = len(shape)
    return pl.BlockSpec(shape, lambda *_: (0,) * nd)


# --------------------------- fused Pallas kernel -----------------------------

def _make_fused_forward(batch_size, hidden_size, action_size):
    B, H, A = batch_size, hidden_size, action_size
    R1 = B * P1                       # conv1 output rows, row = pos*B + b
    R1P = _round_up(R1, 8)
    R2 = B * P2                       # number of valid conv2 outputs
    MAX_SHIFT = ((KH2 - 1) * W1 + (KW2 - 1)) * B
    Y1ROWS = _round_up(R1P + MAX_SHIFT, 8)

    # Row-validity masks (built once on the host): col0 -> real conv1 row,
    # col1 -> row is a valid conv2 output position (h<7, w<12).
    r = np.arange(R1P)
    posg = r // B
    m1 = (r < R1).astype(np.float32)
    m2 = ((r < R1) & ((posg // W1) < H2) & ((posg % W1) < W2)).astype(np.float32)
    masks_const = jnp.asarray(np.stack([m1, m2], axis=1))          # (R1P, 2)

    def kernel(masks_ref, p1_ref, w1_ref, cp1_ref, w2_ref, cp2_ref,
               wf1_hbm, bf12_ref, wf2_hbm, wf3_ref, bf3_ref,
               out_ref, y1_s, z2_s, wf1_v, wf2_v, sem):
        # Kick off MLP weight streaming first so it overlaps the conv work.
        wf1_cp = pltpu.make_async_copy(wf1_hbm, wf1_v, sem.at[0])
        wf2_cp = pltpu.make_async_copy(wf2_hbm, wf2_v, sem.at[1])
        wf1_cp.start()
        wf2_cp.start()

        vm1 = masks_ref[:, 0:1]
        vm2 = masks_ref[:, 1:2]

        # ---- conv1 (im2col matmul) + ReLU + BN1 (training-mode batch stats) --
        y = jnp.dot(p1_ref[...], w1_ref[...], preferred_element_type=jnp.float32)
        y = jnp.maximum(y + cp1_ref[0:1, :], 0.0)
        mean1 = jnp.sum(y * vm1, axis=0, keepdims=True) * (1.0 / R1)
        d1 = (y - mean1) * vm1
        var1 = jnp.sum(d1 * d1, axis=0, keepdims=True) * (1.0 / R1)
        y1 = (cp1_ref[1:2, :] * (y - mean1) * jax.lax.rsqrt(var1 + EPS)
              + cp1_ref[2:3, :])
        y1_s[0:R1P, :] = y1
        y1_s[R1P:Y1ROWS, :] = jnp.zeros((Y1ROWS - R1P, C1), jnp.float32)

        # ---- conv2 as 9 shifted-slice matmuls (no im2col scatter loop) ------
        z = jnp.zeros((R1P, C2), jnp.float32)
        for dh in range(KH2):
            for dw in range(KW2):
                s = dh * KW2 + dw
                shift = (dh * W1 + dw) * B
                z = z + jnp.dot(y1_s[shift:shift + R1P, :],
                                w2_ref[s * C1:(s + 1) * C1, :],
                                preferred_element_type=jnp.float32)
        z = jnp.maximum(z + cp2_ref[0:1, :], 0.0)
        mean2 = jnp.sum(z * vm2, axis=0, keepdims=True) * (1.0 / R2)
        d2 = (z - mean2) * vm2
        var2 = jnp.sum(d2 * d2, axis=0, keepdims=True) * (1.0 / R2)
        z2_s[...] = (cp2_ref[1:2, :] * (z - mean2) * jax.lax.rsqrt(var2 + EPS)
                     + cp2_ref[2:3, :])

        # ---- fc1: 84 position-wise (B,32)@(32,H) accumulations --------------
        # (absorbs PyTorch's NCHW flatten via the pre-permuted weight layout;
        #  invalid grid rows are never touched)
        wf1_cp.wait()
        acc = jnp.zeros((B, H), jnp.float32)
        for hh in range(H2):
            for ww in range(W2):
                q = hh * W2 + ww
                pos = hh * W1 + ww
                xq = z2_s[pos * B:(pos + 1) * B, :].astype(jnp.bfloat16)
                acc = acc + jnp.dot(xq, wf1_v[q * C2:(q + 1) * C2, :],
                                    preferred_element_type=jnp.float32)
        h1a = jnp.maximum(acc + bf12_ref[0:1, :], 0.0)

        # ---- fc2 -> ReLU -> fc3 ---------------------------------------------
        wf2_cp.wait()
        h2a = jnp.dot(h1a.astype(jnp.bfloat16), wf2_v[...],
                      preferred_element_type=jnp.float32) + bf12_ref[1:2, :]
        h2a = jnp.maximum(h2a, 0.0)
        out_ref[...] = (jnp.dot(h2a.astype(jnp.bfloat16), wf3_ref[...],
                                preferred_element_type=jnp.float32)
                        + bf3_ref[...])

    flops = int(2 * (R1P * K1P * C1 + 9 * R1P * C1 * C2
                     + R2 * C2 * H + B * H * H + B * H * A))
    bytes_accessed = int(4 * R1P * K1P + 4 * (K1P * C1 + K2 * C2 + 2 * R1P)
                         + 2 * (F_FLAT * H + H * H + H * A)
                         + 4 * (2 * H + A) + 4 * B * A)
    cost = pl.CostEstimate(flops=flops, transcendentals=2 * (C1 + C2),
                           bytes_accessed=bytes_accessed)

    def call(p1, w1col, cp1, w2stack, cp2, wf1, bf12, wf2, wf3, bf3):
        in_specs = [
            _full_spec(masks_const.shape),
            _full_spec(p1.shape),
            _full_spec(w1col.shape),
            _full_spec(cp1.shape),
            _full_spec(w2stack.shape),
            _full_spec(cp2.shape),
            pl.BlockSpec(memory_space=pl.ANY),    # wf1 stays in HBM, DMA'd in
            _full_spec(bf12.shape),
            pl.BlockSpec(memory_space=pl.ANY),    # wf2 stays in HBM, DMA'd in
            _full_spec(wf3.shape),
            _full_spec(bf3.shape),
        ]
        return pl.pallas_call(
            kernel,
            out_shape=jax.ShapeDtypeStruct((B, A), jnp.float32),
            in_specs=in_specs,
            out_specs=_full_spec((B, A)),
            scratch_shapes=[
                pltpu.VMEM((Y1ROWS, C1), jnp.float32),   # normalized conv1 out
                pltpu.VMEM((R1P, C2), jnp.float32),      # normalized conv2 out
                pltpu.VMEM((F_FLAT, H), jnp.bfloat16),   # streamed fc1 weight
                pltpu.VMEM((H, H), jnp.bfloat16),        # streamed fc2 weight
                pltpu.SemaphoreType.DMA((2,)),
            ],
            compiler_params=pltpu.CompilerParams(
                vmem_limit_bytes=32 * 1024 * 1024),
            cost_estimate=cost,
        )(masks_const, p1, w1col, cp1, w2stack, cp2, wf1, bf12, wf2, wf3, bf3)

    return call


# ------------------------------ JAX glue -------------------------------------

def im2col_conv1(x):
    """x: (B,10,13,18) NCHW -> (R1P, 256); row = (h1*14+w1)*B + b,
    column = c_in*25 + kh*5 + kw (lane-padded 250 -> 256)."""
    Bsz = x.shape[0]
    r1 = Bsz * H1 * W1
    r1p = _round_up(r1, 8)
    cols = []
    for di in range(KH1):
        for dj in range(KW1):
            cols.append(x[:, :, di:di + H1, dj:dj + W1])   # (B, C, H1, W1)
    p = jnp.stack(cols, axis=2)                            # (B, C, 25, H1, W1)
    p = p.transpose(3, 4, 0, 1, 2)                         # (H1, W1, B, C, 25)
    p = p.reshape(r1, K1)
    return jnp.pad(p, ((0, r1p - r1), (0, K1P - K1)))


def actor_forward(params, bol, rat, rat2, num, num2, ids, dis1, dis2, dis3, bun,
                  *, fused_fn, batch_size):
    B = batch_size
    p = params

    # ---- embeddings / small linears (XLA gathers + elementwise glue) ----
    x_bol = p["E_bool"][bol]                                       # (B, 7, 2)
    x_rat = rat @ p["W_r1_t"] + p["b_r1"] + p["E_r2"][rat2]        # (B, 20, 8)
    x_num = jax.nn.leaky_relu(num @ p["W_n_t"] + p["b_n"], negative_slope=0.01)
    x_num = jnp.clip(x_num, -1.0, 1.0) + p["E_n2"][num2]           # (B, 17, 18)
    x_dis1 = p["E_dis"][dis1]                                      # (B, 19, 8)
    x_dis2 = p["E_dis2"][dis2]                                     # (B, 20, 18)
    x_id = p["E_id"][ids]                                          # (B, 20, 18)
    x_bun = p["E_bun"][bun]                                        # (B, 20, 18)
    x_dis3 = p["E_dis3"][dis3]                                     # (B, 6, 2)

    # ---- pad / reshape assembly to NCHW (B, 10, 13, 18) ----
    x2 = jnp.concatenate([x_bol, x_dis3], axis=1)                  # (B, 13, 2)
    x2 = jnp.pad(x2, ((0, 0), (0, 0), (0, 16)))[:, None]           # (B,1,13,18)
    x8 = jnp.concatenate([x_rat, x_dis1], axis=1)                  # (B, 39, 8)
    x8 = jnp.pad(x8, ((0, 0), (0, 0), (0, 10))).reshape(B, 3, 13, 18)
    x18 = jnp.concatenate([x_dis2, x_id, x_bun, x_num], axis=1)    # (B, 77, 18)
    x18 = jnp.pad(x18, ((0, 0), (0, 1), (0, 0))).reshape(B, 6, 13, 18)
    x = jnp.concatenate([x2, x8, x18], axis=1)                     # (B,10,13,18)

    # ---- conv1 im2col (tiny, XLA); everything downstream in one fused kernel
    p1 = im2col_conv1(x)
    return fused_fn(p1,
                    p["w1col"], p["cp1"], p["w2stack"], p["cp2"],
                    p["wf1"], p["bf12"], p["wf2"], p["wf3"], p["bf3"])


# --------------------------- deterministic init -------------------------------

def init_raw_params(key, hidden_size, action_size):
    ks = jax.random.split(key, 22)

    def n(k, shape, scale):
        return (jax.random.normal(k, shape) * scale).astype(jnp.float32)

    return dict(
        E_bool=n(ks[0], (2, 2), 1.0),
        W_r1=n(ks[1], (8, 1), 0.1), b_r1=n(ks[2], (8,), 0.1),
        E_dis=n(ks[3], (10, 8), 1.0),
        E_dis2=n(ks[4], (45, 18), 1.0),
        E_dis3=n(ks[5], (3, 2), 1.0),
        E_r2=n(ks[6], (20, 8), 1.0),
        W_n=n(ks[7], (18, 1), 0.1), b_n=n(ks[8], (18,), 0.1),
        E_id=n(ks[9], (10000, 18), 1.0),
        E_bun=n(ks[10], (100000, 18), 1.0),
        E_n2=n(ks[11], (40, 18), 1.0),
        conv1_w=n(ks[12], (C1, C_IN, KH1, KW1), 0.05),
        conv1_b=n(ks[13], (C1,), 0.05),
        conv2_w=n(ks[14], (C2, C1, KH2, KW2), 0.05),
        conv2_b=n(ks[15], (C2,), 0.05),
        bn1_g=jnp.ones((C1,), jnp.float32), bn1_b=jnp.zeros((C1,), jnp.float32),
        bn2_g=jnp.ones((C2,), jnp.float32), bn2_b=jnp.zeros((C2,), jnp.float32),
        fc1_w=n(ks[16], (hidden_size, F_FLAT), 0.02),
        fc1_b=n(ks[17], (hidden_size,), 0.02),
        fc2_w=n(ks[18], (hidden_size, hidden_size), 0.02),
        fc2_b=n(ks[19], (hidden_size,), 0.02),
        fc3_w=n(ks[20], (action_size, hidden_size), 0.02),
        fc3_b=n(ks[21], (action_size,), 0.02),
    )


def prepare_params(raw):
    """One-time (outside jit) re-layout of the weights for the fused kernel."""
    H = raw["fc1_w"].shape[0]
    A = raw["fc3_w"].shape[0]
    # conv1 weight in im2col layout, contraction padded 250 -> 256
    w1col = jnp.pad(raw["conv1_w"].reshape(C1, K1).T, ((0, K1P - K1), (0, 0)))
    # conv2 weight split per (dh,dw) tap: row = (dh*3+dw)*16 + c_in
    w2stack = raw["conv2_w"].transpose(2, 3, 1, 0).reshape(K2, C2)
    # packed per-channel params: rows = [conv bias, bn gamma, bn beta]
    cp1 = jnp.stack([raw["conv1_b"], raw["bn1_g"], raw["bn1_b"]], axis=0)
    cp2 = jnp.stack([raw["conv2_b"], raw["bn2_g"], raw["bn2_b"]], axis=0)
    # fc1 weight permuted so kernel row = (h2*12+w2)*32 + c matches the
    # position-wise accumulation (absorbs PyTorch's NCHW flatten exactly)
    wf1 = (raw["fc1_w"].reshape(H, C2, H2, W2)
           .transpose(2, 3, 1, 0).reshape(F_FLAT, H).astype(jnp.bfloat16))
    # TODO(synk): int8 (v5e/v6e) / fp8 (v7x) weight-only quant of wf1/wf2 would
    # halve the weight-streaming bytes that bound this kernel at hidden=1024.
    return dict(
        E_bool=raw["E_bool"], E_dis=raw["E_dis"], E_dis2=raw["E_dis2"],
        E_dis3=raw["E_dis3"], E_r2=raw["E_r2"], E_id=raw["E_id"],
        E_bun=raw["E_bun"], E_n2=raw["E_n2"],
        W_r1_t=raw["W_r1"].T, b_r1=raw["b_r1"],
        W_n_t=raw["W_n"].T, b_n=raw["b_n"],
        w1col=w1col, cp1=cp1, w2stack=w2stack, cp2=cp2,
        wf1=wf1, bf12=jnp.stack([raw["fc1_b"], raw["fc2_b"]], axis=0),
        wf2=raw["fc2_w"].T.astype(jnp.bfloat16),
        wf3=raw["fc3_w"].T.astype(jnp.bfloat16),
        bf3=raw["fc3_b"].reshape(1, A),
    )


if __name__ == "__main__":
    B = 2
    hidden_size = 128      # module default is 1024; small for the smoke test
    action_size = 8

    key = jax.random.PRNGKey(0)
    pkey, *ikeys = jax.random.split(key, 12)
    params = prepare_params(init_raw_params(pkey, hidden_size, action_size))

    # Sequence counts chosen so the PyTorch reshapes are valid:
    #   n_bol + n_dis3 = 13 ; n_rat + n_dis1 = 39 ; n_dis2+n_id+n_bun+n_num = 77
    bol = jax.random.randint(ikeys[0], (B, 7), 0, 2)
    rat = jax.random.uniform(ikeys[1], (B, 20, 1), jnp.float32)
    rat2 = jax.random.randint(ikeys[2], (B, 20), 0, 20)
    num = jax.random.normal(ikeys[3], (B, 17, 1), jnp.float32)
    num2 = jax.random.randint(ikeys[4], (B, 17), 0, 40)
    ids = jax.random.randint(ikeys[5], (B, 20), 0, 10000)
    dis1 = jax.random.randint(ikeys[6], (B, 19), 0, 10)
    dis2 = jax.random.randint(ikeys[7], (B, 20), 0, 45)
    dis3 = jax.random.randint(ikeys[8], (B, 6), 0, 3)
    bun = jax.random.randint(ikeys[9], (B, 20), 0, 100000)

    fused_fn = _make_fused_forward(B, hidden_size, action_size)
    fwd = jax.jit(functools.partial(actor_forward,
                                    fused_fn=fused_fn, batch_size=B))
    logits = fwd(params, bol, rat, rat2, num, num2, ids, dis1, dis2, dis3, bun)
    jax.block_until_ready(logits)
    assert logits.shape == (B, action_size)
    assert bool(jnp.all(jnp.isfinite(logits)))
    print("KERNEL_OK")
</pallas_src>

<mosaic_0001>
module attributes {stable_mosaic.version = 11 : i64} {
  func.func @kernel(%arg0: memref<256x2xf32, #tpu.memory_space<vmem>>, %arg1: memref<256x256xf32, #tpu.memory_space<vmem>>, %arg2: memref<256x16xf32, #tpu.memory_space<vmem>>, %arg3: memref<3x16xf32, #tpu.memory_space<vmem>>, %arg4: memref<144x32xf32, #tpu.memory_space<vmem>>, %arg5: memref<3x32xf32, #tpu.memory_space<vmem>>, %arg6: memref<2688x128xbf16, #tpu.memory_space<any>>, %arg7: memref<2x128xf32, #tpu.memory_space<vmem>>, %arg8: memref<128x128xbf16, #tpu.memory_space<any>>, %arg9: memref<128x8xbf16, #tpu.memory_space<vmem>>, %arg10: memref<1x8xf32, #tpu.memory_space<vmem>>, %arg11: memref<2x8xf32, #tpu.memory_space<vmem>>, %arg12: memref<320x16xf32, #tpu.memory_space<vmem>>, %arg13: memref<256x32xf32, #tpu.memory_space<vmem>>, %arg14: memref<2688x128xbf16, #tpu.memory_space<vmem>>, %arg15: memref<128x128xbf16, #tpu.memory_space<vmem>>, %arg16: memref<2x!tpu.dma_semaphore, #tpu.memory_space<semaphore_mem>>) attributes {dimension_semantics = [], scalar_prefetch = 0 : i64, scratch_operands = 5 : i64, tpu.core_type = #tpu.core_type<tc>} {
    %c0_i32 = arith.constant 0 : i32
    %0 = tpu.memref_slice %arg16[%c0_i32] : memref<2x!tpu.dma_semaphore, #tpu.memory_space<semaphore_mem>> -> memref<1x!tpu.dma_semaphore, #tpu.memory_space<semaphore_mem>>
    %1 = tpu.memref_squeeze %0 : memref<1x!tpu.dma_semaphore, #tpu.memory_space<semaphore_mem>> -> memref<!tpu.dma_semaphore, #tpu.memory_space<semaphore_mem>>
    tpu.enqueue_dma source(%arg6 : memref<2688x128xbf16, #tpu.memory_space<any>>) target(%arg14 : memref<2688x128xbf16, #tpu.memory_space<vmem>>) target_semaphore(%1 : memref<!tpu.dma_semaphore, #tpu.memory_space<semaphore_mem>>)
    %c1_i32 = arith.constant 1 : i32
    %2 = tpu.memref_slice %arg16[%c1_i32] : memref<2x!tpu.dma_semaphore, #tpu.memory_space<semaphore_mem>> -> memref<1x!tpu.dma_semaphore, #tpu.memory_space<semaphore_mem>>
    %3 = tpu.memref_squeeze %2 : memref<1x!tpu.dma_semaphore, #tpu.memory_space<semaphore_mem>> -> memref<!tpu.dma_semaphore, #tpu.memory_space<semaphore_mem>>
    tpu.enqueue_dma source(%arg8 : memref<128x128xbf16, #tpu.memory_space<any>>) target(%arg15 : memref<128x128xbf16, #tpu.memory_space<vmem>>) target_semaphore(%3 : memref<!tpu.dma_semaphore, #tpu.memory_space<semaphore_mem>>)
    %c0 = arith.constant 0 : index
    %c0_0 = arith.constant 0 : index
    %4 = vector.load %arg0[%c0, %c0_0] : memref<256x2xf32, #tpu.memory_space<vmem>>, vector<256x1xf32>
    %c0_1 = arith.constant 0 : index
    %c1 = arith.constant 1 : index
    %5 = vector.load %arg0[%c0_1, %c1] : memref<256x2xf32, #tpu.memory_space<vmem>>, vector<256x1xf32>
    %c0_2 = arith.constant 0 : index
    %c0_3 = arith.constant 0 : index
    %6 = vector.load %arg1[%c0_2, %c0_3] : memref<256x256xf32, #tpu.memory_space<vmem>>, vector<256x256xf32>
    %c0_4 = arith.constant 0 : index
    %c0_5 = arith.constant 0 : index
    %7 = vector.load %arg2[%c0_4, %c0_5] : memref<256x16xf32, #tpu.memory_space<vmem>>, vector<256x16xf32>
    %cst = arith.constant dense<0.000000e+00> : vector<256x16xf32>
    %8 = tpu.matmul %6, %7, %cst {dimension_numbers = #tpu.dot_dimension_numbers<[1], [0], [0], [1], [0, 0, 1, 1], [], []>} : vector<256x256xf32>, vector<256x16xf32>, vector<256x16xf32> -> vector<256x16xf32>
    %c0_6 = arith.constant 0 : index
    %c0_7 = arith.constant 0 : index
    %9 = vector.load %arg3[%c0_6, %c0_7] : memref<3x16xf32, #tpu.memory_space<vmem>>, vector<1x16xf32>
    %10 = vector.broadcast %9 : vector<1x16xf32> to vector<256x16xf32>
    %11 = arith.addf %8, %10 : vector<256x16xf32>
    %cst_8 = arith.constant 0.000000e+00 : f32
    %12 = vector.broadcast %cst_8 : f32 to vector<256x16xf32>
    %13 = arith.maximumf %11, %12 : vector<256x16xf32>
    %14 = vector.broadcast %4 : vector<256x1xf32> to vector<256x16xf32>
    %15 = arith.mulf %13, %14 : vector<256x16xf32>
    %cst_9 = arith.constant dense<0.000000e+00> : vector<16xf32>
    %16 = vector.multi_reduction <add>, %15, %cst_9 [0] : vector<256x16xf32> to vector<16xf32>
    %17 = vector.shape_cast %16 : vector<16xf32> to vector<1x16xf32>
    %cst_10 = arith.constant 0.0039682542 : f32
    %18 = vector.broadcast %cst_10 : f32 to vector<1x16xf32>
    %19 = arith.mulf %17, %18 : vector<1x16xf32>
    %20 = vector.broadcast %19 : vector<1x16xf32> to vector<256x16xf32>
    %21 = arith.subf %13, %20 : vector<256x16xf32>
    %22 = vector.broadcast %4 : vector<256x1xf32> to vector<256x16xf32>
    %23 = arith.mulf %21, %22 : vector<256x16xf32>
    %24 = arith.mulf %23, %23 : vector<256x16xf32>
    %cst_11 = arith.constant dense<0.000000e+00> : vector<16xf32>
    %25 = vector.multi_reduction <add>, %24, %cst_11 [0] : vector<256x16xf32> to vector<16xf32>
    %26 = vector.shape_cast %25 : vector<16xf32> to vector<1x16xf32>
    %cst_12 = arith.constant 0.0039682542 : f32
    %27 = vector.broadcast %cst_12 : f32 to vector<1x16xf32>
    %28 = arith.mulf %26, %27 : vector<1x16xf32>
    %c1_13 = arith.constant 1 : index
    %c0_14 = arith.constant 0 : index
    %29 = vector.load %arg3[%c1_13, %c0_14] : memref<3x16xf32, #tpu.memory_space<vmem>>, vector<1x16xf32>
    %30 = vector.broadcast %19 : vector<1x16xf32> to vector<256x16xf32>
    %31 = arith.subf %13, %30 : vector<256x16xf32>
    %32 = vector.broadcast %29 : vector<1x16xf32> to vector<256x16xf32>
    %33 = arith.mulf %32, %31 : vector<256x16xf32>
    %cst_15 = arith.constant 9.99999974E-6 : f32
    %34 = vector.broadcast %cst_15 : f32 to vector<1x16xf32>
    %35 = arith.addf %28, %34 : vector<1x16xf32>
    %36 = math.rsqrt %35 : vector<1x16xf32>
    %37 = vector.broadcast %36 : vector<1x16xf32> to vector<256x16xf32>
    %38 = arith.mulf %33, %37 : vector<256x16xf32>
    %c2 = arith.constant 2 : index
    %c0_16 = arith.constant 0 : index
    %39 = vector.load %arg3[%c2, %c0_16] : memref<3x16xf32, #tpu.memory_space<vmem>>, vector<1x16xf32>
    %40 = vector.broadcast %39 : vector<1x16xf32> to vector<256x16xf32>
    %41 = arith.addf %38, %40 : vector<256x16xf32>
    %c0_17 = arith.constant 0 : index
    %c0_18 = arith.constant 0 : index
    %42 = vector.load %arg12[%c0_17, %c0_18] : memref<320x16xf32, #tpu.memory_space<vmem>>, vector<256x16xf32>
    tpu.vector_store %arg12[%c0_17, %c0_18], %41 {strides = array<i32>} : memref<320x16xf32, #tpu.memory_space<vmem>>, vector<256x16xf32>,
    %cst_19 = arith.constant 0.000000e+00 : f32
    %43 = vector.broadcast %cst_19 : f32 to vector<64x16xf32>
    %c256 = arith.constant 256 : index
    %c0_20 = arith.constant 0 : index
    %44 = vector.load %arg12[%c256, %c0_20] : memref<320x16xf32, #tpu.memory_space<vmem>>, vector<64x16xf32>
    tpu.vector_store %arg12[%c256, %c0_20], %43 {strides = array<i32>} : memref<320x16xf32, #tpu.memory_space<vmem>>, vector<64x16xf32>,
    %cst_21 = arith.constant 0.000000e+00 : f32
    %45 = vector.broadcast %cst_21 : f32 to vector<256x32xf32>
    %c0_22 = arith.constant 0 : index
    %c0_23 = arith.constant 0 : index
    %46 = vector.load %arg12[%c0_22, %c0_23] : memref<320x16xf32, #tpu.memory_space<vmem>>, vector<256x16xf32>
    %c0_24 = arith.constant 0 : index
    %c0_25 = arith.constant 0 : index
    %47 = vector.load %arg4[%c0_24, %c0_25] : memref<144x32xf32, #tpu.memory_space<vmem>>, vector<16x32xf32>
    %cst_26 = arith.constant dense<0.000000e+00> : vector<256x32xf32>
    %48 = tpu.matmul %46, %47, %cst_26 {dimension_numbers = #tpu.dot_dimension_numbers<[1], [0], [0], [1], [0, 0, 1, 1], [], []>} : vector<256x16xf32>, vector<16x32xf32>, vector<256x32xf32> -> vector<256x32xf32>
    %49 = arith.addf %45, %48 : vector<256x32xf32>
    %c2_27 = arith.constant 2 : index
    %c0_28 = arith.constant 0 : index
    %50 = vector.load %arg12[%c2_27, %c0_28] : memref<320x16xf32, #tpu.memory_space<vmem>>, vector<256x16xf32>
    %c16 = arith.constant 16 : index
    %c0_29 = arith.constant 0 : index
    %51 = vector.load %arg4[%c16, %c0_29] : memref<144x32xf32, #tpu.memory_space<vmem>>, vector<16x32xf32>
    %cst_30 = arith.constant dense<0.000000e+00> : vector<256x32xf32>
    %52 = tpu.matmul %50, %51, %cst_30 {dimension_numbers = #tpu.dot_dimension_numbers<[1], [0], [0], [1], [0, 0, 1, 1], [], []>} : vector<256x16xf32>, vector<16x32xf32>, vector<256x32xf32> -> vector<256x32xf32>
    %53 = arith.addf %49, %52 : vector<256x32xf32>
    %c4 = arith.constant 4 : index
    %c0_31 = arith.constant 0 : index
    %54 = vector.load %arg12[%c4, %c0_31] : memref<320x16xf32, #tpu.memory_space<vmem>>, vector<256x16xf32>
    %c32 = arith.constant 32 : index
    %c0_32 = arith.constant 0 : index
    %55 = vector.load %arg4[%c32, %c0_32] : memref<144x32xf32, #tpu.memory_space<vmem>>, vector<16x32xf32>
    %cst_33 = arith.constant dense<0.000000e+00> : vector<256x32xf32>
    %56 = tpu.matmul %54, %55, %cst_33 {dimension_numbers = #tpu.dot_dimension_numbers<[1], [0], [0], [1], [0, 0, 1, 1], [], []>} : vector<256x16xf32>, vector<16x32xf32>, vector<256x32xf32> -> vector<256x32xf32>
    %57 = arith.addf %53, %56 : vector<256x32xf32>
    %c28 = arith.constant 28 : index
    %c0_34 = arith.constant 0 : index
    %58 = vector.load %arg12[%c28, %c0_34] : memref<320x16xf32, #tpu.memory_space<vmem>>, vector<256x16xf32>
    %c48 = arith.constant 48 : index
    %c0_35 = arith.constant 0 : index
    %59 = vector.load %arg4[%c48, %c0_35] : memref<144x32xf32, #tpu.memory_space<vmem>>, vector<16x32xf32>
    %cst_36 = arith.constant dense<0.000000e+00> : vector<256x32xf32>
    %60 = tpu.matmul %58, %59, %cst_36 {dimension_numbers = #tpu.dot_dimension_numbers<[1], [0], [0], [1], [0, 0, 1, 1], [], []>} : vector<256x16xf32>, vector<16x32xf32>, vector<256x32xf32> -> vector<256x32xf32>
    %61 = arith.addf %57, %60 : vector<256x32xf32>
    %c30 = arith.constant 30 : index
    %c0_37 = arith.constant 0 : index
    %62 = vector.load %arg12[%c30, %c0_37] : memref<320x16xf32, #tpu.memory_space<vmem>>, vector<256x16xf32>
    %c64 = arith.constant 64 : index
    %c0_38 = arith.constant 0 : index
    %63 = vector.load %arg4[%c64, %c0_38] : memref<144x32xf32, #tpu.memory_space<vmem>>, vector<16x32xf32>
    %cst_39 = arith.constant dense<0.000000e+00> : vector<256x32xf32>
    %64 = tpu.matmul %62, %63, %cst_39 {dimension_numbers = #tpu.dot_dimension_numbers<[1], [0], [0], [1], [0, 0, 1, 1], [], []>} : vector<256x16xf32>, vector<16x32xf32>, vector<256x32xf32> -> vector<256x32xf32>
    %65 = arith.addf %61, %64 : vector<256x32xf32>
    %c32_40 = arith.constant 32 : index
    %c0_41 = arith.constant 0 : index
    %66 = vector.load %arg12[%c32_40, %c0_41] : memref<320x16xf32, #tpu.memory_space<vmem>>, vector<256x16xf32>
    %c80 = arith.constant 80 : index
    %c0_42 = arith.constant 0 : index
    %67 = vector.load %arg4[%c80, %c0_42] : memref<144x32xf32, #tpu.memory_space<vmem>>, vector<16x32xf32>
    %cst_43 = arith.constant dense<0.000000e+00> : vector<256x32xf32>
    %68 = tpu.matmul %66, %67, %cst_43 {dimension_numbers = #tpu.dot_dimension_numbers<[1], [0], [0], [1], [0, 0, 1, 1], [], []>} : vector<256x16xf32>, vector<16x32xf32>, vector<256x32xf32> -> vector<256x32xf32>
    %69 = arith.addf %65, %68 : vector<256x32xf32>
    %c56 = arith.constant 56 : index
    %c0_44 = arith.constant 0 : index
    %70 = vector.load %arg12[%c56, %c0_44] : memref<320x16xf32, #tpu.memory_space<vmem>>, vector<256x16xf32>
    %c96 = arith.constant 96 : index
    %c0_45 = arith.constant 0 : index
    %71 = vector.load %arg4[%c96, %c0_45] : memref<144x32xf32, #tpu.memory_space<vmem>>, vector<16x32xf32>
    %cst_46 = arith.constant dense<0.000000e+00> : vector<256x32xf32>
    %72 = tpu.matmul %70, %71, %cst_46 {dimension_numbers = #tpu.dot_dimension_numbers<[1], [0], [0], [1], [0, 0, 1, 1], [], []>} : vector<256x16xf32>, vector<16x32xf32>, vector<256x32xf32> -> vector<256x32xf32>
    %73 = arith.addf %69, %72 : vector<256x32xf32>
    %c58 = arith.constant 58 : index
    %c0_47 = arith.constant 0 : index
    %74 = vector.load %arg12[%c58, %c0_47] : memref<320x16xf32, #tpu.memory_space<vmem>>, vector<256x16xf32>
    %c112 = arith.constant 112 : index
    %c0_48 = arith.constant 0 : index
    %75 = vector.load %arg4[%c112, %c0_48] : memref<144x32xf32, #tpu.memory_space<vmem>>, vector<16x32xf32>
    %cst_49 = arith.constant dense<0.000000e+00> : vector<256x32xf32>
    %76 = tpu.matmul %74, %75, %cst_49 {dimension_numbers = #tpu.dot_dimension_numbers<[1], [0], [0], [1], [0, 0, 1, 1], [], []>} : vector<256x16xf32>, vector<16x32xf32>, vector<256x32xf32> -> vector<256x32xf32>
    %77 = arith.addf %73, %76 : vector<256x32xf32>
    %c60 = arith.constant 60 : index
    %c0_50 = arith.constant 0 : index
    %78 = vector.load %arg12[%c60, %c0_50] : memref<320x16xf32, #tpu.memory_space<vmem>>, vector<256x16xf32>
    %c128 = arith.constant 128 : index
    %c0_51 = arith.constant 0 : index
    %79 = vector.load %arg4[%c128, %c0_51] : memref<144x32xf32, #tpu.memory_space<vmem>>, vector<16x32xf32>
    %cst_52 = arith.constant dense<0.000000e+00> : vector<256x32xf32>
    %80 = tpu.matmul %78, %79, %cst_52 {dimension_numbers = #tpu.dot_dimension_numbers<[1], [0], [0], [1], [0, 0, 1, 1], [], []>} : vector<256x16xf32>, vector<16x32xf32>, vector<256x32xf32> -> vector<256x32xf32>
    %81 = arith.addf %77, %80 : vector<256x32xf32>
    %c0_53 = arith.constant 0 : index
    %c0_54 = arith.constant 0 : index
    %82 = vector.load %arg5[%c0_53, %c0_54] : memref<3x32xf32, #tpu.memory_space<vmem>>, vector<1x32xf32>
    %83 = vector.broadcast %82 : vector<1x32xf32> to vector<256x32xf32>
    %84 = arith.addf %81, %83 : vector<256x32xf32>
    %cst_55 = arith.constant 0.000000e+00 : f32
    %85 = vector.broadcast %cst_55 : f32 to vector<256x32xf32>
    %86 = arith.maximumf %84, %85 : vector<256x32xf32>
    %87 = vector.broadcast %5 : vector<256x1xf32> to vector<256x32xf32>
    %88 = arith.mulf %86, %87 : vector<256x32xf32>
    %cst_56 = arith.constant dense<0.000000e+00> : vector<32xf32>
    %89 = vector.multi_reduction <add>, %88, %cst_56 [0] : vector<256x32xf32> to vector<32xf32>
    %90 = vector.shape_cast %89 : vector<32xf32> to vector<1x32xf32>
    %cst_57 = arith.constant 0.00595238106 : f32
    %91 = vector.broadcast %cst_57 : f32 to vector<1x32xf32>
    %92 = arith.mulf %90, %91 : vector<1x32xf32>
    %93 = vector.broadcast %92 : vector<1x32xf32> to vector<256x32xf32>
    %94 = arith.subf %86, %93 : vector<256x32xf32>
    %95 = vector.broadcast %5 : vector<256x1xf32> to vector<256x32xf32>
    %96 = arith.mulf %94, %95 : vector<256x32xf32>
    %97 = arith.mulf %96, %96 : vector<256x32xf32>
    %cst_58 = arith.constant dense<0.000000e+00> : vector<32xf32>
    %98 = vector.multi_reduction <add>, %97, %cst_58 [0] : vector<256x32xf32> to vector<32xf32>
    %99 = vector.shape_cast %98 : vector<32xf32> to vector<1x32xf32>
    %cst_59 = arith.constant 0.00595238106 : f32
    %100 = vector.broadcast %cst_59 : f32 to vector<1x32xf32>
    %101 = arith.mulf %99, %100 : vector<1x32xf32>
    %c1_60 = arith.constant 1 : index
    %c0_61 = arith.constant 0 : index
    %102 = vector.load %arg5[%c1_60, %c0_61] : memref<3x32xf32, #tpu.memory_space<vmem>>, vector<1x32xf32>
    %103 = vector.broadcast %92 : vector<1x32xf32> to vector<256x32xf32>
    %104 = arith.subf %86, %103 : vector<256x32xf32>
    %105 = vector.broadcast %102 : vector<1x32xf32> to vector<256x32xf32>
    %106 = arith.mulf %105, %104 : vector<256x32xf32>
    %cst_62 = arith.constant 9.99999974E-6 : f32
    %107 = vector.broadcast %cst_62 : f32 to vector<1x32xf32>
    %108 = arith.addf %101, %107 : vector<1x32xf32>
    %109 = math.rsqrt %108 : vector<1x32xf32>
    %110 = vector.broadcast %109 : vector<1x32xf32> to vector<256x32xf32>
    %111 = arith.mulf %106, %110 : vector<256x32xf32>
    %c2_63 = arith.constant 2 : index
    %c0_64 = arith.constant 0 : index
    %112 = vector.load %arg5[%c2_63, %c0_64] : memref<3x32xf32, #tpu.memory_space<vmem>>, vector<1x32xf32>
    %113 = vector.broadcast %112 : vector<1x32xf32> to vector<256x32xf32>
    %114 = arith.addf %111, %113 : vector<256x32xf32>
    %c0_65 = arith.constant 0 : index
    %c0_66 = arith.constant 0 : index
    %115 = vector.load %arg13[%c0_65, %c0_66] : memref<256x32xf32, #tpu.memory_space<vmem>>, vector<256x32xf32>
    tpu.vector_store %arg13[%c0_65, %c0_66], %114 {strides = array<i32>} : memref<256x32xf32, #tpu.memory_space<vmem>>, vector<256x32xf32>,
    %c0_i32_67 = arith.constant 0 : i32
    %116 = tpu.memref_slice %arg16[%c0_i32_67] : memref<2x!tpu.dma_semaphore, #tpu.memory_space<semaphore_mem>> -> memref<1x!tpu.dma_semaphore, #tpu.memory_space<semaphore_mem>>
    %117 = tpu.memref_squeeze %116 : memref<1x!tpu.dma_semaphore, #tpu.memory_space<semaphore_mem>> -> memref<!tpu.dma_semaphore, #tpu.memory_space<semaphore_mem>>
    tpu.wait_dma2 semaphore(%117 : memref<!tpu.dma_semaphore, #tpu.memory_space<semaphore_mem>>) src(%arg6 : memref<2688x128xbf16, #tpu.memory_space<any>>) dst(%arg14 : memref<2688x128xbf16, #tpu.memory_space<vmem>>)
    %cst_68 = arith.constant 0.000000e+00 : f32
    %118 = vector.broadcast %cst_68 : f32 to vector<2x128xf32>
    %c0_69 = arith.constant 0 : index
    %c0_70 = arith.constant 0 : index
    %119 = vector.load %arg13[%c0_69, %c0_70] : memref<256x32xf32, #tpu.memory_space<vmem>>, vector<2x32xf32>
    %120 = arith.truncf %119 : vector<2x32xf32> to vector<2x32xbf16>
    %c0_71 = arith.constant 0 : index
    %c0_72 = arith.constant 0 : index
    %121 = vector.load %arg14[%c0_71, %c0_72] : memref<2688x128xbf16, #tpu.memory_space<vmem>>, vector<32x128xbf16>
    %cst_73 = arith.constant dense<0.000000e+00> : vector<2x128xf32>
    %122 = tpu.matmul %120, %121, %cst_73 {dimension_numbers = #tpu.dot_dimension_numbers<[1], [0], [0], [1], [0, 0, 1, 1], [], []>} : vector<2x32xbf16>, vector<32x128xbf16>, vector<2x128xf32> -> vector<2x128xf32>
    %123 = arith.addf %118, %122 : vector<2x128xf32>
    %c2_74 = arith.constant 2 : index
    %c0_75 = arith.constant 0 : index
    %124 = vector.load %arg13[%c2_74, %c0_75] : memref<256x32xf32, #tpu.memory_space<vmem>>, vector<2x32xf32>
    %125 = arith.truncf %124 : vector<2x32xf32> to vector<2x32xbf16>
    %c32_76 = arith.constant 32 : index
    %c0_77 = arith.constant 0 : index
    %126 = vector.load %arg14[%c32_76, %c0_77] : memref<2688x128xbf16, #tpu.memory_space<vmem>>, vector<32x128xbf16>
    %cst_78 = arith.constant dense<0.000000e+00> : vector<2x128xf32>
    %127 = tpu.matmul %125, %126, %cst_78 {dimension_numbers = #tpu.dot_dimension_numbers<[1], [0], [0], [1], [0, 0, 1, 1], [], []>} : vector<2x32xbf16>, vector<32x128xbf16>, vector<2x128xf32> -> vector<2x128xf32>
    %128 = arith.addf %123, %127 : vector<2x128xf32>
    %c4_79 = arith.constant 4 : index
    %c0_80 = arith.constant 0 : index
    %129 = vector.load %arg13[%c4_79, %c0_80] : memref<256x32xf32, #tpu.memory_space<vmem>>, vector<2x32xf32>
    %130 = arith.truncf %129 : vector<2x32xf32> to vector<2x32xbf16>
    %c64_81 = arith.constant 64 : index
    %c0_82 = arith.constant 0 : index
    %131 = vector.load %arg14[%c64_81, %c0_82] : memref<2688x128xbf16, #tpu.memory_space<vmem>>, vector<32x128xbf16>
    %cst_83 = arith.constant dense<0.000000e+00> : vector<2x128xf32>
    %132 = tpu.matmul %130, %131, %cst_83 {dimension_numbers = #tpu.dot_dimension_numbers<[1], [0], [0], [1], [0, 0, 1, 1], [], []>} : vector<2x32xbf16>, vector<32x128xbf16>, vector<2x128xf32> -> vector<2x128xf32>
    %133 = arith.addf %128, %132 : vector<2x128xf32>
    %c6 = arith.constant 6 : index
    %c0_84 = arith.constant 0 : index
    %134 = vector.load %arg13[%c6, %c0_84] : memref<256x32xf32, #tpu.memory_space<vmem>>, vector<2x32xf32>
    %135 = arith.truncf %134 : vector<2x32xf32> to vector<2x32xbf16>
    %c96_85 = arith.constant 96 : index
    %c0_86 = arith.constant 0 : index
    %136 = vector.load %arg14[%c96_85, %c0_86] : memref<2688x128xbf16, #tpu.memory_space<vmem>>, vector<32x128xbf16>
    %cst_87 = arith.constant dense<0.000000e+00> : vector<2x128xf32>
    %137 = tpu.matmul %135, %136, %cst_87 {dimension_numbers = #tpu.dot_dimension_numbers<[1], [0], [0], [1], [0, 0, 1, 1], [], []>} : vector<2x32xbf16>, vector<32x128xbf16>, vector<2x128xf32> -> vector<2x128xf32>
    %138 = arith.addf %133, %137 : vector<2x128xf32>
    %c8 = arith.constant 8 : index
    %c0_88 = arith.constant 0 : index
    %139 = vector.load %arg13[%c8, %c0_88] : memref<256x32xf32, #tpu.memory_space<vmem>>, vector<2x32xf32>
    %140 = arith.truncf %139 : vector<2x32xf32> to vector<2x32xbf16>
    %c128_89 = arith.constant 128 : index
    %c0_90 = arith.constant 0 : index
    %141 = vector.load %arg14[%c128_89, %c0_90] : memref<2688x128xbf16, #tpu.memory_space<vmem>>, vector<32x128xbf16>
    %cst_91 = arith.constant dense<0.000000e+00> : vector<2x128xf32>
    %142 = tpu.matmul %140, %141, %cst_91 {dimension_numbers = #tpu.dot_dimension_numbers<[1], [0], [0], [1], [0, 0, 1, 1], [], []>} : vector<2x32xbf16>, vector<32x128xbf16>, vector<2x128xf32> -> vector<2x128xf32>
    %143 = arith.addf %138, %142 : vector<2x128xf32>
    %c10 = arith.constant 10 : index
    %c0_92 = arith.constant 0 : index
    %144 = vector.load %arg13[%c10, %c0_92] : memref<256x32xf32, #tpu.memory_space<vmem>>, vector<2x32xf32>
    %145 = arith.truncf %144 : vector<2x32xf32> to vector<2x32xbf16>
    %c160 = arith.constant 160 : index
    %c0_93 = arith.constant 0 : index
    %146 = vector.load %arg14[%c160, %c0_93] : memref<2688x128xbf16, #tpu.memory_space<vmem>>, vector<32x128xbf16>
    %cst_94 = arith.constant dense<0.000000e+00> : vector<2x128xf32>
    %147 = tpu.matmul %145, %146, %cst_94 {dimension_numbers = #tpu.dot_dimension_numbers<[1], [0], [0], [1], [0, 0, 1, 1], [], []>} : vector<2x32xbf16>, vector<32x128xbf16>, vector<2x128xf32> -> vector<2x128xf32>
    %148 = arith.addf %143, %147 : vector<2x128xf32>
    %c12 = arith.constant 12 : index
    %c0_95 = arith.constant 0 : index
    %149 = vector.load %arg13[%c12, %c0_95] : memref<256x32xf32, #tpu.memory_space<vmem>>, vector<2x32xf32>
    %150 = arith.truncf %149 : vector<2x32xf32> to vector<2x32xbf16>
    %c192 = arith.constant 192 : index
    %c0_96 = arith.constant 0 : index
    %151 = vector.load %arg14[%c192, %c0_96] : memref<2688x128xbf16, #tpu.memory_space<vmem>>, vector<32x128xbf16>
    %cst_97 = arith.constant dense<0.000000e+00> : vector<2x128xf32>
    %152 = tpu.matmul %150, %151, %cst_97 {dimension_numbers = #tpu.dot_dimension_numbers<[1], [0], [0], [1], [0, 0, 1, 1], [], []>} : vector<2x32xbf16>, vector<32x128xbf16>, vector<2x128xf32> -> vector<2x128xf32>
    %153 = arith.addf %148, %152 : vector<2x128xf32>
    %c14 = arith.constant 14 : index
    %c0_98 = arith.constant 0 : index
    %154 = vector.load %arg13[%c14, %c0_98] : memref<256x32xf32, #tpu.memory_space<vmem>>, vector<2x32xf32>
    %155 = arith.truncf %154 : vector<2x32xf32> to vector<2x32xbf16>
    %c224 = arith.constant 224 : index
    %c0_99 = arith.constant 0 : index
    %156 = vector.load %arg14[%c224, %c0_99] : memref<2688x128xbf16, #tpu.memory_space<vmem>>, vector<32x128xbf16>
    %cst_100 = arith.constant dense<0.000000e+00> : vector<2x128xf32>
    %157 = tpu.matmul %155, %156, %cst_100 {dimension_numbers = #tpu.dot_dimension_numbers<[1], [0], [0], [1], [0, 0, 1, 1], [], []>} : vector<2x32xbf16>, vector<32x128xbf16>, vector<2x128xf32> -> vector<2x128xf32>
    %158 = arith.addf %153, %157 : vector<2x128xf32>
    %c16_101 = arith.constant 16 : index
    %c0_102 = arith.constant 0 : index
    %159 = vector.load %arg13[%c16_101, %c0_102] : memref<256x32xf32, #tpu.memory_space<vmem>>, vector<2x32xf32>
    %160 = arith.truncf %159 : vector<2x32xf32> to vector<2x32xbf16>
    %c256_103 = arith.constant 256 : index
    %c0_104 = arith.constant 0 : index
    %161 = vector.load %arg14[%c256_103, %c0_104] : memref<2688x128xbf16, #tpu.memory_space<vmem>>, vector<32x128xbf16>
    %cst_105 = arith.constant dense<0.000000e+00> : vector<2x128xf32>
    %162 = tpu.matmul %160, %161, %cst_105 {dimension_numbers = #tpu.dot_dimension_numbers<[1], [0], [0], [1], [0, 0, 1, 1], [], []>} : vector<2x32xbf16>, vector<32x128xbf16>, vector<2x128xf32> -> vector<2x128xf32>
    %163 = arith.addf %158, %162 : vector<2x128xf32>
    %c18 = arith.constant 18 : index
    %c0_106 = arith.constant 0 : index
    %164 = vector.load %arg13[%c18, %c0_106] : memref<256x32xf32, #tpu.memory_space<vmem>>, vector<2x32xf32>
    %165 = arith.truncf %164 : vector<2x32xf32> to vector<2x32xbf16>
    %c288 = arith.constant 288 : index
    %c0_107 = arith.constant 0 : index
    %166 = vector.load %arg14[%c288, %c0_107] : memref<2688x128xbf16, #tpu.memory_space<vmem>>, vector<32x128xbf16>
    %cst_108 = arith.constant dense<0.000000e+00> : vector<2x128xf32>
    %167 = tpu.matmul %165, %166, %cst_108 {dimension_numbers = #tpu.dot_dimension_numbers<[1], [0], [0], [1], [0, 0, 1, 1], [], []>} : vector<2x32xbf16>, vector<32x128xbf16>, vector<2x128xf32> -> vector<2x128xf32>
    %168 = arith.addf %163, %167 : vector<2x128xf32>
    %c20 = arith.constant 20 : index
    %c0_109 = arith.constant 0 : index
    %169 = vector.load %arg13[%c20, %c0_109] : memref<256x32xf32, #tpu.memory_space<vmem>>, vector<2x32xf32>
    %170 = arith.truncf %169 : vector<2x32xf32> to vector<2x32xbf16>
    %c320 = arith.constant 320 : index
    %c0_110 = arith.constant 0 : index
    %171 = vector.load %arg14[%c320, %c0_110] : memref<2688x128xbf16, #tpu.memory_space<vmem>>, vector<32x128xbf16>
    %cst_111 = arith.constant dense<0.000000e+00> : vector<2x128xf32>
    %172 = tpu.matmul %170, %171, %cst_111 {dimension_numbers = #tpu.dot_dimension_numbers<[1], [0], [0], [1], [0, 0, 1, 1], [], []>} : vector<2x32xbf16>, vector<32x128xbf16>, vector<2x128xf32> -> vector<2x128xf32>
    %173 = arith.addf %168, %172 : vector<2x128xf32>
    %c22 = arith.constant 22 : index
    %c0_112 = arith.constant 0 : index
    %174 = vector.load %arg13[%c22, %c0_112] : memref<256x32xf32, #tpu.memory_space<vmem>>, vector<2x32xf32>
    %175 = arith.truncf %174 : vector<2x32xf32> to vector<2x32xbf16>
    %c352 = arith.constant 352 : index
    %c0_113 = arith.constant 0 : index
    %176 = vector.load %arg14[%c352, %c0_113] : memref<2688x128xbf16, #tpu.memory_space<vmem>>, vector<32x128xbf16>
    %cst_114 = arith.constant dense<0.000000e+00> : vector<2x128xf32>
    %177 = tpu.matmul %175, %176, %cst_114 {dimension_numbers = #tpu.dot_dimension_numbers<[1], [0], [0], [1], [0, 0, 1, 1], [], []>} : vector<2x32xbf16>, vector<32x128xbf16>, vector<2x128xf32> -> vector<2x128xf32>
    %178 = arith.addf %173, %177 : vector<2x128xf32>
    %c28_115 = arith.constant 28 : index
    %c0_116 = arith.constant 0 : index
    %179 = vector.load %arg13[%c28_115, %c0_116] : memref<256x32xf32, #tpu.memory_space<vmem>>, vector<2x32xf32>
    %180 = arith.truncf %179 : vector<2x32xf32> to vector<2x32xbf16>
    %c384 = arith.constant 384 : index
    %c0_117 = arith.constant 0 : index
    %181 = vector.load %arg14[%c384, %c0_117] : memref<2688x128xbf16, #tpu.memory_space<vmem>>, vector<32x128xbf16>
    %cst_118 = arith.constant dense<0.000000e+00> : vector<2x128xf32>
    %182 = tpu.matmul %180, %181, %cst_118 {dimension_numbers = #tpu.dot_dimension_numbers<[1], [0], [0], [1], [0, 0, 1, 1], [], []>} : vector<2x32xbf16>, vector<32x128xbf16>, vector<2x128xf32> -> vector<2x128xf32>
    %183 = arith.addf %178, %182 : vector<2x128xf32>
    %c30_119 = arith.constant 30 : index
    %c0_120 = arith.constant 0 : index
    %184 = vector.load %arg13[%c30_119, %c0_120] : memref<256x32xf32, #tpu.memory_space<vmem>>, vector<2x32xf32>
    %185 = arith.truncf %184 : vector<2x32xf32> to vector<2x32xbf16>
    %c416 = arith.constant 416 : index
    %c0_121 = arith.constant 0 : index
    %186 = vector.load %arg14[%c416, %c0_121] : memref<2688x128xbf16, #tpu.memory_space<vmem>>, vector<32x128xbf16>
    %cst_122 = arith.constant dense<0.000000e+00> : vector<2x128xf32>
    %187 = tpu.matmul %185, %186, %cst_122 {dimension_numbers = #tpu.dot_dimension_numbers<[1], [0], [0], [1], [0, 0, 1, 1], [], []>} : vector<2x32xbf16>, vector<32x128xbf16>, vector<2x128xf32> -> vector<2x128xf32>
    %188 = arith.addf %183, %187 : vector<2x128xf32>
    %c32_123 = arith.constant 32 : index
    %c0_124 = arith.constant 0 : index
    %189 = vector.load %arg13[%c32_123, %c0_124] : memref<256x32xf32, #tpu.memory_space<vmem>>, vector<2x32xf32>
    %190 = arith.truncf %189 : vector<2x32xf32> to vector<2x32xbf16>
    %c448 = arith.constant 448 : index
    %c0_125 = arith.constant 0 : index
    %191 = vector.load %arg14[%c448, %c0_125] : memref<2688x128xbf16, #tpu.memory_space<vmem>>, vector<32x128xbf16>
    %cst_126 = arith.constant dense<0.000000e+00> : vector<2x128xf32>
    %192 = tpu.matmul %190, %191, %cst_126 {dimension_numbers = #tpu.dot_dimension_numbers<[1], [0], [0], [1], [0, 0, 1, 1], [], []>} : vector<2x32xbf16>, vector<32x128xbf16>, vector<2x128xf32> -> vector<2x128xf32>
    %193 = arith.addf %188, %192 : vector<2x128xf32>
    %c34 = arith.constant 34 : index
    %c0_127 = arith.constant 0 : index
    %194 = vector.load %arg13[%c34, %c0_127] : memref<256x32xf32, #tpu.memory_space<vmem>>, vector<2x32xf32>
    %195 = arith.truncf %194 : vector<2x32xf32> to vector<2x32xbf16>
    %c480 = arith.constant 480 : index
    %c0_128 = arith.constant 0 : index
    %196 = vector.load %arg14[%c480, %c0_128] : memref<2688x128xbf16, #tpu.memory_space<vmem>>, vector<32x128xbf16>
    %cst_129 = arith.constant dense<0.000000e+00> : vector<2x128xf32>
    %197 = tpu.matmul %195, %196, %cst_129 {dimension_numbers = #tpu.dot_dimension_numbers<[1], [0], [0], [1], [0, 0, 1, 1], [], []>} : vector<2x32xbf16>, vector<32x128xbf16>, vector<2x128xf32> -> vector<2x128xf32>
    %198 = arith.addf %193, %197 : vector<2x128xf32>
    %c36 = arith.constant 36 : index
    %c0_130 = arith.constant 0 : index
    %199 = vector.load %arg13[%c36, %c0_130] : memref<256x32xf32, #tpu.memory_space<vmem>>, vector<2x32xf32>
    %200 = arith.truncf %199 : vector<2x32xf32> to vector<2x32xbf16>
    %c512 = arith.constant 512 : index
    %c0_131 = arith.constant 0 : index
    %201 = vector.load %arg14[%c512, %c0_131] : memref<2688x128xbf16, #tpu.memory_space<vmem>>, vector<32x128xbf16>
    %cst_132 = arith.constant dense<0.000000e+00> : vector<2x128xf32>
    %202 = tpu.matmul %200, %201, %cst_132 {dimension_numbers = #tpu.dot_dimension_numbers<[1], [0], [0], [1], [0, 0, 1, 1], [], []>} : vector<2x32xbf16>, vector<32x128xbf16>, vector<2x128xf32> -> vector<2x128xf32>
    %203 = arith.addf %198, %202 : vector<2x128xf32>
    %c38 = arith.constant 38 : index
    %c0_133 = arith.constant 0 : index
    %204 = vector.load %arg13[%c38, %c0_133] : memref<256x32xf32, #tpu.memory_space<vmem>>, vector<2x32xf32>
    %205 = arith.truncf %204 : vector<2x32xf32> to vector<2x32xbf16>
    %c544 = arith.constant 544 : index
    %c0_134 = arith.constant 0 : index
    %206 = vector.load %arg14[%c544, %c0_134] : memref<2688x128xbf16, #tpu.memory_space<vmem>>, vector<32x128xbf16>
    %cst_135 = arith.constant dense<0.000000e+00> : vector<2x128xf32>
    %207 = tpu.matmul %205, %206, %cst_135 {dimension_numbers = #tpu.dot_dimension_numbers<[1], [0], [0], [1], [0, 0, 1, 1], [], []>} : vector<2x32xbf16>, vector<32x128xbf16>, vector<2x128xf32> -> vector<2x128xf32>
    %208 = arith.addf %203, %207 : vector<2x128xf32>
    %c40 = arith.constant 40 : index
    %c0_136 = arith.constant 0 : index
    %209 = vector.load %arg13[%c40, %c0_136] : memref<256x32xf32, #tpu.memory_space<vmem>>, vector<2x32xf32>
    %210 = arith.truncf %209 : vector<2x32xf32> to vector<2x32xbf16>
    %c576 = arith.constant 576 : index
    %c0_137 = arith.constant 0 : index
    %211 = vector.load %arg14[%c576, %c0_137] : memref<2688x128xbf16, #tpu.memory_space<vmem>>, vector<32x128xbf16>
    %cst_138 = arith.constant dense<0.000000e+00> : vector<2x128xf32>
    %212 = tpu.matmul %210, %211, %cst_138 {dimension_numbers = #tpu.dot_dimension_numbers<[1], [0], [0], [1], [0, 0, 1, 1], [], []>} : vector<2x32xbf16>, vector<32x128xbf16>, vector<2x128xf32> -> vector<2x128xf32>
    %213 = arith.addf %208, %212 : vector<2x128xf32>
    %c42 = arith.constant 42 : index
    %c0_139 = arith.constant 0 : index
    %214 = vector.load %arg13[%c42, %c0_139] : memref<256x32xf32, #tpu.memory_space<vmem>>, vector<2x32xf32>
    %215 = arith.truncf %214 : vector<2x32xf32> to vector<2x32xbf16>
    %c608 = arith.constant 608 : index
    %c0_140 = arith.constant 0 : index
    %216 = vector.load %arg14[%c608, %c0_140] : memref<2688x128xbf16, #tpu.memory_space<vmem>>, vector<32x128xbf16>
    %cst_141 = arith.constant dense<0.000000e+00> : vector<2x128xf32>
    %217 = tpu.matmul %215, %216, %cst_141 {dimension_numbers = #tpu.dot_dimension_numbers<[1], [0], [0], [1], [0, 0, 1, 1], [], []>} : vector<2x32xbf16>, vector<32x128xbf16>, vector<2x128xf32> -> vector<2x128xf32>
    %218 = arith.addf %213, %217 : vector<2x128xf32>
    %c44 = arith.constant 44 : index
    %c0_142 = arith.constant 0 : index
    %219 = vector.load %arg13[%c44, %c0_142] : memref<256x32xf32, #tpu.memory_space<vmem>>, vector<2x32xf32>
    %220 = arith.truncf %219 : vector<2x32xf32> to vector<2x32xbf16>
    %c640 = arith.constant 640 : index
    %c0_143 = arith.constant 0 : index
    %221 = vector.load %arg14[%c640, %c0_143] : memref<2688x128xbf16, #tpu.memory_space<vmem>>, vector<32x128xbf16>
    %cst_144 = arith.constant dense<0.000000e+00> : vector<2x128xf32>
    %222 = tpu.matmul %220, %221, %cst_144 {dimension_numbers = #tpu.dot_dimension_numbers<[1], [0], [0], [1], [0, 0, 1, 1], [], []>} : vector<2x32xbf16>, vector<32x128xbf16>, vector<2x128xf32> -> vector<2x128xf32>
    %223 = arith.addf %218, %222 : vector<2x128xf32>
    %c46 = arith.constant 46 : index
    %c0_145 = arith.constant 0 : index
    %224 = vector.load %arg13[%c46, %c0_145] : memref<256x32xf32, #tpu.memory_space<vmem>>, vector<2x32xf32>
    %225 = arith.truncf %224 : vector<2x32xf32> to vector<2x32xbf16>
    %c672 = arith.constant 672 : index
    %c0_146 = arith.constant 0 : index
    %226 = vector.load %arg14[%c672, %c0_146] : memref<2688x128xbf16, #tpu.memory_space<vmem>>, vector<32x128xbf16>
    %cst_147 = arith.constant dense<0.000000e+00> : vector<2x128xf32>
    %227 = tpu.matmul %225, %226, %cst_147 {dimension_numbers = #tpu.dot_dimension_numbers<[1], [0], [0], [1], [0, 0, 1, 1], [], []>} : vector<2x32xbf16>, vector<32x128xbf16>, vector<2x128xf32> -> vector<2x128xf32>
    %228 = arith.addf %223, %227 : vector<2x128xf32>
    %c48_148 = arith.constant 48 : index
    %c0_149 = arith.constant 0 : index
    %229 = vector.load %arg13[%c48_148, %c0_149] : memref<256x32xf32, #tpu.memory_space<vmem>>, vector<2x32xf32>
    %230 = arith.truncf %229 : vector<2x32xf32> to vector<2x32xbf16>
    %c704 = arith.constant 704 : index
    %c0_150 = arith.constant 0 : index
    %231 = vector.load %arg14[%c704, %c0_150] : memref<2688x128xbf16, #tpu.memory_space<vmem>>, vector<32x128xbf16>
    %cst_151 = arith.constant dense<0.000000e+00> : vector<2x128xf32>
    %232 = tpu.matmul %230, %231, %cst_151 {dimension_numbers = #tpu.dot_dimension_numbers<[1], [0], [0], [1], [0, 0, 1, 1], [], []>} : vector<2x32xbf16>, vector<32x128xbf16>, vector<2x128xf32> -> vector<2x128xf32>
    %233 = arith.addf %228, %232 : vector<2x128xf32>
    %c50 = arith.constant 50 : index
    %c0_152 = arith.constant 0 : index
    %234 = vector.load %arg13[%c50, %c0_152] : memref<256x32xf32, #tpu.memory_space<vmem>>, vector<2x32xf32>
    %235 = arith.truncf %234 : vector<2x32xf32> to vector<2x32xbf16>
    %c736 = arith.constant 736 : index
    %c0_153 = arith.constant 0 : index
    %236 = vector.load %arg14[%c736, %c0_153] : memref<2688x128xbf16, #tpu.memory_space<vmem>>, vector<32x128xbf16>
    %cst_154 = arith.constant dense<0.000000e+00> : vector<2x128xf32>
    %237 = tpu.matmul %235, %236, %cst_154 {dimension_numbers = #tpu.dot_dimension_numbers<[1], [0], [0], [1], [0, 0, 1, 1], [], []>} : vector<2x32xbf16>, vector<32x128xbf16>, vector<2x128xf32> -> vector<2x128xf32>
    %238 = arith.addf %233, %237 : vector<2x128xf32>
    %c56_155 = arith.constant 56 : index
    %c0_156 = arith.constant 0 : index
    %239 = vector.load %arg13[%c56_155, %c0_156] : memref<256x32xf32, #tpu.memory_space<vmem>>, vector<2x32xf32>
    %240 = arith.truncf %239 : vector<2x32xf32> to vector<2x32xbf16>
    %c768 = arith.constant 768 : index
    %c0_157 = arith.constant 0 : index
    %241 = vector.load %arg14[%c768, %c0_157] : memref<2688x128xbf16, #tpu.memory_space<vmem>>, vector<32x128xbf16>
    %cst_158 = arith.constant dense<0.000000e+00> : vector<2x128xf32>
    %242 = tpu.matmul %240, %241, %cst_158 {dimension_numbers = #tpu.dot_dimension_numbers<[1], [0], [0], [1], [0, 0, 1, 1], [], []>} : vector<2x32xbf16>, vector<32x128xbf16>, vector<2x128xf32> -> vector<2x128xf32>
    %243 = arith.addf %238, %242 : vector<2x128xf32>
    %c58_159 = arith.constant 58 : index
    %c0_160 = arith.constant 0 : index
    %244 = vector.load %arg13[%c58_159, %c0_160] : memref<256x32xf32, #tpu.memory_space<vmem>>, vector<2x32xf32>
    %245 = arith.truncf %244 : vector<2x32xf32> to vector<2x32xbf16>
    %c800 = arith.constant 800 : index
    %c0_161 = arith.constant 0 : index
    %246 = vector.load %arg14[%c800, %c0_161] : memref<2688x128xbf16, #tpu.memory_space<vmem>>, vector<32x128xbf16>
    %cst_162 = arith.constant dense<0.000000e+00> : vector<2x128xf32>
    %247 = tpu.matmul %245, %246, %cst_162 {dimension_numbers = #tpu.dot_dimension_numbers<[1], [0], [0], [1], [0, 0, 1, 1], [], []>} : vector<2x32xbf16>, vector<32x128xbf16>, vector<2x128xf32> -> vector<2x128xf32>
    %248 = arith.addf %243, %247 : vector<2x128xf32>
    %c60_163 = arith.constant 60 : index
    %c0_164 = arith.constant 0 : index
    %249 = vector.load %arg13[%c60_163, %c0_164] : memref<256x32xf32, #tpu.memory_space<vmem>>, vector<2x32xf32>
    %250 = arith.truncf %249 : vector<2x32xf32> to vector<2x32xbf16>
    %c832 = arith.constant 832 : index
    %c0_165 = arith.constant 0 : index
    %251 = vector.load %arg14[%c832, %c0_165] : memref<2688x128xbf16, #tpu.memory_space<vmem>>, vector<32x128xbf16>
    %cst_166 = arith.constant dense<0.000000e+00> : vector<2x128xf32>
    %252 = tpu.matmul %250, %251, %cst_166 {dimension_numbers = #tpu.dot_dimension_numbers<[1], [0], [0], [1], [0, 0, 1, 1], [], []>} : vector<2x32xbf16>, vector<32x128xbf16>, vector<2x128xf32> -> vector<2x128xf32>
    %253 = arith.addf %248, %252 : vector<2x128xf32>
    %c62 = arith.constant 62 : index
    %c0_167 = arith.constant 0 : index
    %254 = vector.load %arg13[%c62, %c0_167] : memref<256x32xf32, #tpu.memory_space<vmem>>, vector<2x32xf32>
    %255 = arith.truncf %254 : vector<2x32xf32> to vector<2x32xbf16>
    %c864 = arith.constant 864 : index
    %c0_168 = arith.constant 0 : index
    %256 = vector.load %arg14[%c864, %c0_168] : memref<2688x128xbf16, #tpu.memory_space<vmem>>, vector<32x128xbf16>
    %cst_169 = arith.constant dense<0.000000e+00> : vector<2x128xf32>
    %257 = tpu.matmul %255, %256, %cst_169 {dimension_numbers = #tpu.dot_dimension_numbers<[1], [0], [0], [1], [0, 0, 1, 1], [], []>} : vector<2x32xbf16>, vector<32x128xbf16>, vector<2x128xf32> -> vector<2x128xf32>
    %258 = arith.addf %253, %257 : vector<2x128xf32>
    %c64_170 = arith.constant 64 : index
    %c0_171 = arith.constant 0 : index
    %259 = vector.load %arg13[%c64_170, %c0_171] : memref<256x32xf32, #tpu.memory_space<vmem>>, vector<2x32xf32>
    %260 = arith.truncf %259 : vector<2x32xf32> to vector<2x32xbf16>
    %c896 = arith.constant 896 : index
    %c0_172 = arith.constant 0 : index
    %261 = vector.load %arg14[%c896, %c0_172] : memref<2688x128xbf16, #tpu.memory_space<vmem>>, vector<32x128xbf16>
    %cst_173 = arith.constant dense<0.000000e+00> : vector<2x128xf32>
    %262 = tpu.matmul %260, %261, %cst_173 {dimension_numbers = #tpu.dot_dimension_numbers<[1], [0], [0], [1], [0, 0, 1, 1], [], []>} : vector<2x32xbf16>, vector<32x128xbf16>, vector<2x128xf32> -> vector<2x128xf32>
    %263 = arith.addf %258, %262 : vector<2x128xf32>
    %c66 = arith.constant 66 : index
    %c0_174 = arith.constant 0 : index
    %264 = vector.load %arg13[%c66, %c0_174] : memref<256x32xf32, #tpu.memory_space<vmem>>, vector<2x32xf32>
    %265 = arith.truncf %264 : vector<2x32xf32> to vector<2x32xbf16>
    %c928 = arith.constant 928 : index
    %c0_175 = arith.constant 0 : index
    %266 = vector.load %arg14[%c928, %c0_175] : memref<2688x128xbf16, #tpu.memory_space<vmem>>, vector<32x128xbf16>
    %cst_176 = arith.constant dense<0.000000e+00> : vector<2x128xf32>
    %267 = tpu.matmul %265, %266, %cst_176 {dimension_numbers = #tpu.dot_dimension_numbers<[1], [0], [0], [1], [0, 0, 1, 1], [], []>} : vector<2x32xbf16>, vector<32x128xbf16>, vector<2x128xf32> -> vector<2x128xf32>
    %268 = arith.addf %263, %267 : vector<2x128xf32>
    %c68 = arith.constant 68 : index
    %c0_177 = arith.constant 0 : index
    %269 = vector.load %arg13[%c68, %c0_177] : memref<256x32xf32, #tpu.memory_space<vmem>>, vector<2x32xf32>
    %270 = arith.truncf %269 : vector<2x32xf32> to vector<2x32xbf16>
    %c960 = arith.constant 960 : index
    %c0_178 = arith.constant 0 : index
    %271 = vector.load %arg14[%c960, %c0_178] : memref<2688x128xbf16, #tpu.memory_space<vmem>>, vector<32x128xbf16>
    %cst_179 = arith.constant dense<0.000000e+00> : vector<2x128xf32>
    %272 = tpu.matmul %270, %271, %cst_179 {dimension_numbers = #tpu.dot_dimension_numbers<[1], [0], [0], [1], [0, 0, 1, 1], [], []>} : vector<2x32xbf16>, vector<32x128xbf16>, vector<2x128xf32> -> vector<2x128xf32>
    %273 = arith.addf %268, %272 : vector<2x128xf32>
    %c70 = arith.constant 70 : index
    %c0_180 = arith.constant 0 : index
    %274 = vector.load %arg13[%c70, %c0_180] : memref<256x32xf32, #tpu.memory_space<vmem>>, vector<2x32xf32>
    %275 = arith.truncf %274 : vector<2x32xf32> to vector<2x32xbf16>
    %c992 = arith.constant 992 : index
    %c0_181 = arith.constant 0 : index
    %276 = vector.load %arg14[%c992, %c0_181] : memref<2688x128xbf16, #tpu.memory_space<vmem>>, vector<32x128xbf16>
    %cst_182 = arith.constant dense<0.000000e+00> : vector<2x128xf32>
    %277 = tpu.matmul %275, %276, %cst_182 {dimension_numbers = #tpu.dot_dimension_numbers<[1], [0], [0], [1], [0, 0, 1, 1], [], []>} : vector<2x32xbf16>, vector<32x128xbf16>, vector<2x128xf32> -> vector<2x128xf32>
    %278 = arith.addf %273, %277 : vector<2x128xf32>
    %c72 = arith.constant 72 : index
    %c0_183 = arith.constant 0 : index
    %279 = vector.load %arg13[%c72, %c0_183] : memref<256x32xf32, #tpu.memory_space<vmem>>, vector<2x32xf32>
    %280 = arith.truncf %279 : vector<2x32xf32> to vector<2x32xbf16>
    %c1024 = arith.constant 1024 : index
    %c0_184 = arith.constant 0 : index
    %281 = vector.load %arg14[%c1024, %c0_184] : memref<2688x128xbf16, #tpu.memory_space<vmem>>, vector<32x128xbf16>
    %cst_185 = arith.constant dense<0.000000e+00> : vector<2x128xf32>
    %282 = tpu.matmul %280, %281, %cst_185 {dimension_numbers = #tpu.dot_dimension_numbers<[1], [0], [0], [1], [0, 0, 1, 1], [], []>} : vector<2x32xbf16>, vector<32x128xbf16>, vector<2x128xf32> -> vector<2x128xf32>
    %283 = arith.addf %278, %282 : vector<2x128xf32>
    %c74 = arith.constant 74 : index
    %c0_186 = arith.constant 0 : index
    %284 = vector.load %arg13[%c74, %c0_186] : memref<256x32xf32, #tpu.memory_space<vmem>>, vector<2x32xf32>
    %285 = arith.truncf %284 : vector<2x32xf32> to vector<2x32xbf16>
    %c1056 = arith.constant 1056 : index
    %c0_187 = arith.constant 0 : index
    %286 = vector.load %arg14[%c1056, %c0_187] : memref<2688x128xbf16, #tpu.memory_space<vmem>>, vector<32x128xbf16>
    %cst_188 = arith.constant dense<0.000000e+00> : vector<2x128xf32>
    %287 = tpu.matmul %285, %286, %cst_188 {dimension_numbers = #tpu.dot_dimension_numbers<[1], [0], [0], [1], [0, 0, 1, 1], [], []>} : vector<2x32xbf16>, vector<32x128xbf16>, vector<2x128xf32> -> vector<2x128xf32>
    %288 = arith.addf %283, %287 : vector<2x128xf32>
    %c76 = arith.constant 76 : index
    %c0_189 = arith.constant 0 : index
    %289 = vector.load %arg13[%c76, %c0_189] : memref<256x32xf32, #tpu.memory_space<vmem>>, vector<2x32xf32>
    %290 = arith.truncf %289 : vector<2x32xf32> to vector<2x32xbf16>
    %c1088 = arith.constant 1088 : index
    %c0_190 = arith.constant 0 : index
    %291 = vector.load %arg14[%c1088, %c0_190] : memref<2688x128xbf16, #tpu.memory_space<vmem>>, vector<32x128xbf16>
    %cst_191 = arith.constant dense<0.000000e+00> : vector<2x128xf32>
    %292 = tpu.matmul %290, %291, %cst_191 {dimension_numbers = #tpu.dot_dimension_numbers<[1], [0], [0], [1], [0, 0, 1, 1], [], []>} : vector<2x32xbf16>, vector<32x128xbf16>, vector<2x128xf32> -> vector<2x128xf32>
    %293 = arith.addf %288, %292 : vector<2x128xf32>
    %c78 = arith.constant 78 : index
    %c0_192 = arith.constant 0 : index
    %294 = vector.load %arg13[%c78, %c0_192] : memref<256x32xf32, #tpu.memory_space<vmem>>, vector<2x32xf32>
    %295 = arith.truncf %294 : vector<2x32xf32> to vector<2x32xbf16>
    %c1120 = arith.constant 1120 : index
    %c0_193 = arith.constant 0 : index
    %296 = vector.load %arg14[%c1120, %c0_193] : memref<2688x128xbf16, #tpu.memory_space<vmem>>, vector<32x128xbf16>
    %cst_194 = arith.constant dense<0.000000e+00> : vector<2x128xf32>
    %297 = tpu.matmul %295, %296, %cst_194 {dimension_numbers = #tpu.dot_dimension_numbers<[1], [0], [0], [1], [0, 0, 1, 1], [], []>} : vector<2x32xbf16>, vector<32x128xbf16>, vector<2x128xf32> -> vector<2x128xf32>
    %298 = arith.addf %293, %297 : vector<2x128xf32>
    %c84 = arith.constant 84 : index
    %c0_195 = arith.constant 0 : index
    %299 = vector.load %arg13[%c84, %c0_195] : memref<256x32xf32, #tpu.memory_space<vmem>>, vector<2x32xf32>
    %300 = arith.truncf %299 : vector<2x32xf32> to vector<2x32xbf16>
    %c1152 = arith.constant 1152 : index
    %c0_196 = arith.constant 0 : index
    %301 = vector.load %arg14[%c1152, %c0_196] : memref<2688x128xbf16, #tpu.memory_space<vmem>>, vector<32x128xbf16>
    %cst_197 = arith.constant dense<0.000000e+00> : vector<2x128xf32>
    %302 = tpu.matmul %300, %301, %cst_197 {dimension_numbers = #tpu.dot_dimension_numbers<[1], [0], [0], [1], [0, 0, 1, 1], [], []>} : vector<2x32xbf16>, vector<32x128xbf16>, vector<2x128xf32> -> vector<2x128xf32>
    %303 = arith.addf %298, %302 : vector<2x128xf32>
    %c86 = arith.constant 86 : index
    %c0_198 = arith.constant 0 : index
    %304 = vector.load %arg13[%c86, %c0_198] : memref<256x32xf32, #tpu.memory_space<vmem>>, vector<2x32xf32>
    %305 = arith.truncf %304 : vector<2x32xf32> to vector<2x32xbf16>
    %c1184 = arith.constant 1184 : index
    %c0_199 = arith.constant 0 : index
    %306 = vector.load %arg14[%c1184, %c0_199] : memref<2688x128xbf16, #tpu.memory_space<vmem>>, vector<32x128xbf16>
    %cst_200 = arith.constant dense<0.000000e+00> : vector<2x128xf32>
    %307 = tpu.matmul %305, %306, %cst_200 {dimension_numbers = #tpu.dot_dimension_numbers<[1], [0], [0], [1], [0, 0, 1, 1], [], []>} : vector<2x32xbf16>, vector<32x128xbf16>, vector<2x128xf32> -> vector<2x128xf32>
    %308 = arith.addf %303, %307 : vector<2x128xf32>
    %c88 = arith.constant 88 : index
    %c0_201 = arith.constant 0 : index
    %309 = vector.load %arg13[%c88, %c0_201] : memref<256x32xf32, #tpu.memory_space<vmem>>, vector<2x32xf32>
    %310 = arith.truncf %309 : vector<2x32xf32> to vector<2x32xbf16>
    %c1216 = arith.constant 1216 : index
    %c0_202 = arith.constant 0 : index
    %311 = vector.load %arg14[%c1216, %c0_202] : memref<2688x128xbf16, #tpu.memory_space<vmem>>, vector<32x128xbf16>
    %cst_203 = arith.constant dense<0.000000e+00> : vector<2x128xf32>
    %312 = tpu.matmul %310, %311, %cst_203 {dimension_numbers = #tpu.dot_dimension_numbers<[1], [0], [0], [1], [0, 0, 1, 1], [], []>} : vector<2x32xbf16>, vector<32x128xbf16>, vector<2x128xf32> -> vector<2x128xf32>
    %313 = arith.addf %308, %312 : vector<2x128xf32>
    %c90 = arith.constant 90 : index
    %c0_204 = arith.constant 0 : index
    %314 = vector.load %arg13[%c90, %c0_204] : memref<256x32xf32, #tpu.memory_space<vmem>>, vector<2x32xf32>
    %315 = arith.truncf %314 : vector<2x32xf32> to vector<2x32xbf16>
    %c1248 = arith.constant 1248 : index
    %c0_205 = arith.constant 0 : index
    %316 = vector.load %arg14[%c1248, %c0_205] : memref<2688x128xbf16, #tpu.memory_space<vmem>>, vector<32x128xbf16>
    %cst_206 = arith.constant dense<0.000000e+00> : vector<2x128xf32>
    %317 = tpu.matmul %315, %316, %cst_206 {dimension_numbers = #tpu.dot_dimension_numbers<[1], [0], [0], [1], [0, 0, 1, 1], [], []>} : vector<2x32xbf16>, vector<32x128xbf16>, vector<2x128xf32> -> vector<2x128xf32>
    %318 = arith.addf %313, %317 : vector<2x128xf32>
    %c92 = arith.constant 92 : index
    %c0_207 = arith.constant 0 : index
    %319 = vector.load %arg13[%c92, %c0_207] : memref<256x32xf32, #tpu.memory_space<vmem>>, vector<2x32xf32>
    %320 = arith.truncf %319 : vector<2x32xf32> to vector<2x32xbf16>
    %c1280 = arith.constant 1280 : index
    %c0_208 = arith.constant 0 : index
    %321 = vector.load %arg14[%c1280, %c0_208] : memref<2688x128xbf16, #tpu.memory_space<vmem>>, vector<32x128xbf16>
    %cst_209 = arith.constant dense<0.000000e+00> : vector<2x128xf32>
    %322 = tpu.matmul %320, %321, %cst_209 {dimension_numbers = #tpu.dot_dimension_numbers<[1], [0], [0], [1], [0, 0, 1, 1], [], []>} : vector<2x32xbf16>, vector<32x128xbf16>, vector<2x128xf32> -> vector<2x128xf32>
    %323 = arith.addf %318, %322 : vector<2x128xf32>
    %c94 = arith.constant 94 : index
    %c0_210 = arith.constant 0 : index
    %324 = vector.load %arg13[%c94, %c0_210] : memref<256x32xf32, #tpu.memory_space<vmem>>, vector<2x32xf32>
    %325 = arith.truncf %324 : vector<2x32xf32> to vector<2x32xbf16>
    %c1312 = arith.constant 1312 : index
    %c0_211 = arith.constant 0 : index
    %326 = vector.load %arg14[%c1312, %c0_211] : memref<2688x128xbf16, #tpu.memory_space<vmem>>, vector<32x128xbf16>
    %cst_212 = arith.constant dense<0.000000e+00> : vector<2x128xf32>
    %327 = tpu.matmul %325, %326, %cst_212 {dimension_numbers = #tpu.dot_dimension_numbers<[1], [0], [0], [1], [0, 0, 1, 1], [], []>} : vector<2x32xbf16>, vector<32x128xbf16>, vector<2x128xf32> -> vector<2x128xf32>
    %328 = arith.addf %323, %327 : vector<2x128xf32>
    %c96_213 = arith.constant 96 : index
    %c0_214 = arith.constant 0 : index
    %329 = vector.load %arg13[%c96_213, %c0_214] : memref<256x32xf32, #tpu.memory_space<vmem>>, vector<2x32xf32>
    %330 = arith.truncf %329 : vector<2x32xf32> to vector<2x32xbf16>
    %c1344 = arith.constant 1344 : index
    %c0_215 = arith.constant 0 : index
    %331 = vector.load %arg14[%c1344, %c0_215] : memref<2688x128xbf16, #tpu.memory_space<vmem>>, vector<32x128xbf16>
    %cst_216 = arith.constant dense<0.000000e+00> : vector<2x128xf32>
    %332 = tpu.matmul %330, %331, %cst_216 {dimension_numbers = #tpu.dot_dimension_numbers<[1], [0], [0], [1], [0, 0, 1, 1], [], []>} : vector<2x32xbf16>, vector<32x128xbf16>, vector<2x128xf32> -> vector<2x128xf32>
    %333 = arith.addf %328, %332 : vector<2x128xf32>
    %c98 = arith.constant 98 : index
    %c0_217 = arith.constant 0 : index
    %334 = vector.load %arg13[%c98, %c0_217] : memref<256x32xf32, #tpu.memory_space<vmem>>, vector<2x32xf32>
    %335 = arith.truncf %334 : vector<2x32xf32> to vector<2x32xbf16>
    %c1376 = arith.constant 1376 : index
    %c0_218 = arith.constant 0 : index
    %336 = vector.load %arg14[%c1376, %c0_218] : memref<2688x128xbf16, #tpu.memory_space<vmem>>, vector<32x128xbf16>
    %cst_219 = arith.constant dense<0.000000e+00> : vector<2x128xf32>
    %337 = tpu.matmul %335, %336, %cst_219 {dimension_numbers = #tpu.dot_dimension_numbers<[1], [0], [0], [1], [0, 0, 1, 1], [], []>} : vector<2x32xbf16>, vector<32x128xbf16>, vector<2x128xf32> -> vector<2x128xf32>
    %338 = arith.addf %333, %337 : vector<2x128xf32>
    %c100 = arith.constant 100 : index
    %c0_220 = arith.constant 0 : index
    %339 = vector.load %arg13[%c100, %c0_220] : memref<256x32xf32, #tpu.memory_space<vmem>>, vector<2x32xf32>
    %340 = arith.truncf %339 : vector<2x32xf32> to vector<2x32xbf16>
    %c1408 = arith.constant 1408 : index
    %c0_221 = arith.constant 0 : index
    %341 = vector.load %arg14[%c1408, %c0_221] : memref<2688x128xbf16, #tpu.memory_space<vmem>>, vector<32x128xbf16>
    %cst_222 = arith.constant dense<0.000000e+00> : vector<2x128xf32>
    %342 = tpu.matmul %340, %341, %cst_222 {dimension_numbers = #tpu.dot_dimension_numbers<[1], [0], [0], [1], [0, 0, 1, 1], [], []>} : vector<2x32xbf16>, vector<32x128xbf16>, vector<2x128xf32> -> vector<2x128xf32>
    %343 = arith.addf %338, %342 : vector<2x128xf32>
    %c102 = arith.constant 102 : index
    %c0_223 = arith.constant 0 : index
    %344 = vector.load %arg13[%c102, %c0_223] : memref<256x32xf32, #tpu.memory_space<vmem>>, vector<2x32xf32>
    %345 = arith.truncf %344 : vector<2x32xf32> to vector<2x32xbf16>
    %c1440 = arith.constant 1440 : index
    %c0_224 = arith.constant 0 : index
    %346 = vector.load %arg14[%c1440, %c0_224] : memref<2688x128xbf16, #tpu.memory_space<vmem>>, vector<32x128xbf16>
    %cst_225 = arith.constant dense<0.000000e+00> : vector<2x128xf32>
    %347 = tpu.matmul %345, %346, %cst_225 {dimension_numbers = #tpu.dot_dimension_numbers<[1], [0], [0], [1], [0, 0, 1, 1], [], []>} : vector<2x32xbf16>, vector<32x128xbf16>, vector<2x128xf32> -> vector<2x128xf32>
    %348 = arith.addf %343, %347 : vector<2x128xf32>
    %c104 = arith.constant 104 : index
    %c0_226 = arith.constant 0 : index
    %349 = vector.load %arg13[%c104, %c0_226] : memref<256x32xf32, #tpu.memory_space<vmem>>, vector<2x32xf32>
    %350 = arith.truncf %349 : vector<2x32xf32> to vector<2x32xbf16>
    %c1472 = arith.constant 1472 : index
    %c0_227 = arith.constant 0 : index
    %351 = vector.load %arg14[%c1472, %c0_227] : memref<2688x128xbf16, #tpu.memory_space<vmem>>, vector<32x128xbf16>
    %cst_228 = arith.constant dense<0.000000e+00> : vector<2x128xf32>
    %352 = tpu.matmul %350, %351, %cst_228 {dimension_numbers = #tpu.dot_dimension_numbers<[1], [0], [0], [1], [0, 0, 1, 1], [], []>} : vector<2x32xbf16>, vector<32x128xbf16>, vector<2x128xf32> -> vector<2x128xf32>
    %353 = arith.addf %348, %352 : vector<2x128xf32>
    %c106 = arith.constant 106 : index
    %c0_229 = arith.constant 0 : index
    %354 = vector.load %arg13[%c106, %c0_229] : memref<256x32xf32, #tpu.memory_space<vmem>>, vector<2x32xf32>
    %355 = arith.truncf %354 : vector<2x32xf32> to vector<2x32xbf16>
    %c1504 = arith.constant 1504 : index
    %c0_230 = arith.constant 0 : index
    %356 = vector.load %arg14[%c1504, %c0_230] : memref<2688x128xbf16, #tpu.memory_space<vmem>>, vector<32x128xbf16>
    %cst_231 = arith.constant dense<0.000000e+00> : vector<2x128xf32>
    %357 = tpu.matmul %355, %356, %cst_231 {dimension_numbers = #tpu.dot_dimension_numbers<[1], [0], [0], [1], [0, 0, 1, 1], [], []>} : vector<2x32xbf16>, vector<32x128xbf16>, vector<2x128xf32> -> vector<2x128xf32>
    %358 = arith.addf %353, %357 : vector<2x128xf32>
    %c112_232 = arith.constant 112 : index
    %c0_233 = arith.constant 0 : index
    %359 = vector.load %arg13[%c112_232, %c0_233] : memref<256x32xf32, #tpu.memory_space<vmem>>, vector<2x32xf32>
    %360 = arith.truncf %359 : vector<2x32xf32> to vector<2x32xbf16>
    %c1536 = arith.constant 1536 : index
    %c0_234 = arith.constant 0 : index
    %361 = vector.load %arg14[%c1536, %c0_234] : memref<2688x128xbf16, #tpu.memory_space<vmem>>, vector<32x128xbf16>
    %cst_235 = arith.constant dense<0.000000e+00> : vector<2x128xf32>
    %362 = tpu.matmul %360, %361, %cst_235 {dimension_numbers = #tpu.dot_dimension_numbers<[1], [0], [0], [1], [0, 0, 1, 1], [], []>} : vector<2x32xbf16>, vector<32x128xbf16>, vector<2x128xf32> -> vector<2x128xf32>
    %363 = arith.addf %358, %362 : vector<2x128xf32>
    %c114 = arith.constant 114 : index
    %c0_236 = arith.constant 0 : index
    %364 = vector.load %arg13[%c114, %c0_236] : memref<256x32xf32, #tpu.memory_space<vmem>>, vector<2x32xf32>
    %365 = arith.truncf %364 : vector<2x32xf32> to vector<2x32xbf16>
    %c1568 = arith.constant 1568 : index
    %c0_237 = arith.constant 0 : index
    %366 = vector.load %arg14[%c1568, %c0_237] : memref<2688x128xbf16, #tpu.memory_space<vmem>>, vector<32x128xbf16>
    %cst_238 = arith.constant dense<0.000000e+00> : vector<2x128xf32>
    %367 = tpu.matmul %365, %366, %cst_238 {dimension_numbers = #tpu.dot_dimension_numbers<[1], [0], [0], [1], [0, 0, 1, 1], [], []>} : vector<2x32xbf16>, vector<32x128xbf16>, vector<2x128xf32> -> vector<2x128xf32>
    %368 = arith.addf %363, %367 : vector<2x128xf32>
    %c116 = arith.constant 116 : index
    %c0_239 = arith.constant 0 : index
    %369 = vector.load %arg13[%c116, %c0_239] : memref<256x32xf32, #tpu.memory_space<vmem>>, vector<2x32xf32>
    %370 = arith.truncf %369 : vector<2x32xf32> to vector<2x32xbf16>
    %c1600 = arith.constant 1600 : index
    %c0_240 = arith.constant 0 : index
    %371 = vector.load %arg14[%c1600, %c0_240] : memref<2688x128xbf16, #tpu.memory_space<vmem>>, vector<32x128xbf16>
    %cst_241 = arith.constant dense<0.000000e+00> : vector<2x128xf32>
    %372 = tpu.matmul %370, %371, %cst_241 {dimension_numbers = #tpu.dot_dimension_numbers<[1], [0], [0], [1], [0, 0, 1, 1], [], []>} : vector<2x32xbf16>, vector<32x128xbf16>, vector<2x128xf32> -> vector<2x128xf32>
    %373 = arith.addf %368, %372 : vector<2x128xf32>
    %c118 = arith.constant 118 : index
    %c0_242 = arith.constant 0 : index
    %374 = vector.load %arg13[%c118, %c0_242] : memref<256x32xf32, #tpu.memory_space<vmem>>, vector<2x32xf32>
    %375 = arith.truncf %374 : vector<2x32xf32> to vector<2x32xbf16>
    %c1632 = arith.constant 1632 : index
    %c0_243 = arith.constant 0 : index
    %376 = vector.load %arg14[%c1632, %c0_243] : memref<2688x128xbf16, #tpu.memory_space<vmem>>, vector<32x128xbf16>
    %cst_244 = arith.constant dense<0.000000e+00> : vector<2x128xf32>
    %377 = tpu.matmul %375, %376, %cst_244 {dimension_numbers = #tpu.dot_dimension_numbers<[1], [0], [0], [1], [0, 0, 1, 1], [], []>} : vector<2x32xbf16>, vector<32x128xbf16>, vector<2x128xf32> -> vector<2x128xf32>
    %378 = arith.addf %373, %377 : vector<2x128xf32>
    %c120 = arith.constant 120 : index
    %c0_245 = arith.constant 0 : index
    %379 = vector.load %arg13[%c120, %c0_245] : memref<256x32xf32, #tpu.memory_space<vmem>>, vector<2x32xf32>
    %380 = arith.truncf %379 : vector<2x32xf32> to vector<2x32xbf16>
    %c1664 = arith.constant 1664 : index
    %c0_246 = arith.constant 0 : index
    %381 = vector.load %arg14[%c1664, %c0_246] : memref<2688x128xbf16, #tpu.memory_space<vmem>>, vector<32x128xbf16>
    %cst_247 = arith.constant dense<0.000000e+00> : vector<2x128xf32>
    %382 = tpu.matmul %380, %381, %cst_247 {dimension_numbers = #tpu.dot_dimension_numbers<[1], [0], [0], [1], [0, 0, 1, 1], [], []>} : vector<2x32xbf16>, vector<32x128xbf16>, vector<2x128xf32> -> vector<2x128xf32>
    %383 = arith.addf %378, %382 : vector<2x128xf32>
    %c122 = arith.constant 122 : index
    %c0_248 = arith.constant 0 : index
    %384 = vector.load %arg13[%c122, %c0_248] : memref<256x32xf32, #tpu.memory_space<vmem>>, vector<2x32xf32>
    %385 = arith.truncf %384 : vector<2x32xf32> to vector<2x32xbf16>
    %c1696 = arith.constant 1696 : index
    %c0_249 = arith.constant 0 : index
    %386 = vector.load %arg14[%c1696, %c0_249] : memref<2688x128xbf16, #tpu.memory_space<vmem>>, vector<32x128xbf16>
    %cst_250 = arith.constant dense<0.000000e+00> : vector<2x128xf32>
    %387 = tpu.matmul %385, %386, %cst_250 {dimension_numbers = #tpu.dot_dimension_numbers<[1], [0], [0], [1], [0, 0, 1, 1], [], []>} : vector<2x32xbf16>, vector<32x128xbf16>, vector<2x128xf32> -> vector<2x128xf32>
    %388 = arith.addf %383, %387 : vector<2x128xf32>
    %c124 = arith.constant 124 : index
    %c0_251 = arith.constant 0 : index
    %389 = vector.load %arg13[%c124, %c0_251] : memref<256x32xf32, #tpu.memory_space<vmem>>, vector<2x32xf32>
    %390 = arith.truncf %389 : vector<2x32xf32> to vector<2x32xbf16>
    %c1728 = arith.constant 1728 : index
    %c0_252 = arith.constant 0 : index
    %391 = vector.load %arg14[%c1728, %c0_252] : memref<2688x128xbf16, #tpu.memory_space<vmem>>, vector<32x128xbf16>
    %cst_253 = arith.constant dense<0.000000e+00> : vector<2x128xf32>
    %392 = tpu.matmul %390, %391, %cst_253 {dimension_numbers = #tpu.dot_dimension_numbers<[1], [0], [0], [1], [0, 0, 1, 1], [], []>} : vector<2x32xbf16>, vector<32x128xbf16>, vector<2x128xf32> -> vector<2x128xf32>
    %393 = arith.addf %388, %392 : vector<2x128xf32>
    %c126 = arith.constant 126 : index
    %c0_254 = arith.constant 0 : index
    %394 = vector.load %arg13[%c126, %c0_254] : memref<256x32xf32, #tpu.memory_space<vmem>>, vector<2x32xf32>
    %395 = arith.truncf %394 : vector<2x32xf32> to vector<2x32xbf16>
    %c1760 = arith.constant 1760 : index
    %c0_255 = arith.constant 0 : index
    %396 = vector.load %arg14[%c1760, %c0_255] : memref<2688x128xbf16, #tpu.memory_space<vmem>>, vector<32x128xbf16>
    %cst_256 = arith.constant dense<0.000000e+00> : vector<2x128xf32>
    %397 = tpu.matmul %395, %396, %cst_256 {dimension_numbers = #tpu.dot_dimension_numbers<[1], [0], [0], [1], [0, 0, 1, 1], [], []>} : vector<2x32xbf16>, vector<32x128xbf16>, vector<2x128xf32> -> vector<2x128xf32>
    %398 = arith.addf %393, %397 : vector<2x128xf32>
    %c128_257 = arith.constant 128 : index
    %c0_258 = arith.constant 0 : index
    %399 = vector.load %arg13[%c128_257, %c0_258] : memref<256x32xf32, #tpu.memory_space<vmem>>, vector<2x32xf32>
    %400 = arith.truncf %399 : vector<2x32xf32> to vector<2x32xbf16>
    %c1792 = arith.constant 1792 : index
    %c0_259 = arith.constant 0 : index
    %401 = vector.load %arg14[%c1792, %c0_259] : memref<2688x128xbf16, #tpu.memory_space<vmem>>, vector<32x128xbf16>
    %cst_260 = arith.constant dense<0.000000e+00> : vector<2x128xf32>
    %402 = tpu.matmul %400, %401, %cst_260 {dimension_numbers = #tpu.dot_dimension_numbers<[1], [0], [0], [1], [0, 0, 1, 1], [], []>} : vector<2x32xbf16>, vector<32x128xbf16>, vector<2x128xf32> -> vector<2x128xf32>
    %403 = arith.addf %398, %402 : vector<2x128xf32>
    %c130 = arith.constant 130 : index
    %c0_261 = arith.constant 0 : index
    %404 = vector.load %arg13[%c130, %c0_261] : memref<256x32xf32, #tpu.memory_space<vmem>>, vector<2x32xf32>
    %405 = arith.truncf %404 : vector<2x32xf32> to vector<2x32xbf16>
    %c1824 = arith.constant 1824 : index
    %c0_262 = arith.constant 0 : index
    %406 = vector.load %arg14[%c1824, %c0_262] : memref<2688x128xbf16, #tpu.memory_space<vmem>>, vector<32x128xbf16>
    %cst_263 = arith.constant dense<0.000000e+00> : vector<2x128xf32>
    %407 = tpu.matmul %405, %406, %cst_263 {dimension_numbers = #tpu.dot_dimension_numbers<[1], [0], [0], [1], [0, 0, 1, 1], [], []>} : vector<2x32xbf16>, vector<32x128xbf16>, vector<2x128xf32> -> vector<2x128xf32>
    %408 = arith.addf %403, %407 : vector<2x128xf32>
    %c132 = arith.constant 132 : index
    %c0_264 = arith.constant 0 : index
    %409 = vector.load %arg13[%c132, %c0_264] : memref<256x32xf32, #tpu.memory_space<vmem>>, vector<2x32xf32>
    %410 = arith.truncf %409 : vector<2x32xf32> to vector<2x32xbf16>
    %c1856 = arith.constant 1856 : index
    %c0_265 = arith.constant 0 : index
    %411 = vector.load %arg14[%c1856, %c0_265] : memref<2688x128xbf16, #tpu.memory_space<vmem>>, vector<32x128xbf16>
    %cst_266 = arith.constant dense<0.000000e+00> : vector<2x128xf32>
    %412 = tpu.matmul %410, %411, %cst_266 {dimension_numbers = #tpu.dot_dimension_numbers<[1], [0], [0], [1], [0, 0, 1, 1], [], []>} : vector<2x32xbf16>, vector<32x128xbf16>, vector<2x128xf32> -> vector<2x128xf32>
    %413 = arith.addf %408, %412 : vector<2x128xf32>
    %c134 = arith.constant 134 : index
    %c0_267 = arith.constant 0 : index
    %414 = vector.load %arg13[%c134, %c0_267] : memref<256x32xf32, #tpu.memory_space<vmem>>, vector<2x32xf32>
    %415 = arith.truncf %414 : vector<2x32xf32> to vector<2x32xbf16>
    %c1888 = arith.constant 1888 : index
    %c0_268 = arith.constant 0 : index
    %416 = vector.load %arg14[%c1888, %c0_268] : memref<2688x128xbf16, #tpu.memory_space<vmem>>, vector<32x128xbf16>
    %cst_269 = arith.constant dense<0.000000e+00> : vector<2x128xf32>
    %417 = tpu.matmul %415, %416, %cst_269 {dimension_numbers = #tpu.dot_dimension_numbers<[1], [0], [0], [1], [0, 0, 1, 1], [], []>} : vector<2x32xbf16>, vector<32x128xbf16>, vector<2x128xf32> -> vector<2x128xf32>
    %418 = arith.addf %413, %417 : vector<2x128xf32>
    %c140 = arith.constant 140 : index
    %c0_270 = arith.constant 0 : index
    %419 = vector.load %arg13[%c140, %c0_270] : memref<256x32xf32, #tpu.memory_space<vmem>>, vector<2x32xf32>
    %420 = arith.truncf %419 : vector<2x32xf32> to vector<2x32xbf16>
    %c1920 = arith.constant 1920 : index
    %c0_271 = arith.constant 0 : index
    %421 = vector.load %arg14[%c1920, %c0_271] : memref<2688x128xbf16, #tpu.memory_space<vmem>>, vector<32x128xbf16>
    %cst_272 = arith.constant dense<0.000000e+00> : vector<2x128xf32>
    %422 = tpu.matmul %420, %421, %cst_272 {dimension_numbers = #tpu.dot_dimension_numbers<[1], [0], [0], [1], [0, 0, 1, 1], [], []>} : vector<2x32xbf16>, vector<32x128xbf16>, vector<2x128xf32> -> vector<2x128xf32>
    %423 = arith.addf %418, %422 : vector<2x128xf32>
    %c142 = arith.constant 142 : index
    %c0_273 = arith.constant 0 : index
    %424 = vector.load %arg13[%c142, %c0_273] : memref<256x32xf32, #tpu.memory_space<vmem>>, vector<2x32xf32>
    %425 = arith.truncf %424 : vector<2x32xf32> to vector<2x32xbf16>
    %c1952 = arith.constant 1952 : index
    %c0_274 = arith.constant 0 : index
    %426 = vector.load %arg14[%c1952, %c0_274] : memref<2688x128xbf16, #tpu.memory_space<vmem>>, vector<32x128xbf16>
    %cst_275 = arith.constant dense<0.000000e+00> : vector<2x128xf32>
    %427 = tpu.matmul %425, %426, %cst_275 {dimension_numbers = #tpu.dot_dimension_numbers<[1], [0], [0], [1], [0, 0, 1, 1], [], []>} : vector<2x32xbf16>, vector<32x128xbf16>, vector<2x128xf32> -> vector<2x128xf32>
    %428 = arith.addf %423, %427 : vector<2x128xf32>
    %c144 = arith.constant 144 : index
    %c0_276 = arith.constant 0 : index
    %429 = vector.load %arg13[%c144, %c0_276] : memref<256x32xf32, #tpu.memory_space<vmem>>, vector<2x32xf32>
    %430 = arith.truncf %429 : vector<2x32xf32> to vector<2x32xbf16>
    %c1984 = arith.constant 1984 : index
    %c0_277 = arith.constant 0 : index
    %431 = vector.load %arg14[%c1984, %c0_277] : memref<2688x128xbf16, #tpu.memory_space<vmem>>, vector<32x128xbf16>
    %cst_278 = arith.constant dense<0.000000e+00> : vector<2x128xf32>
    %432 = tpu.matmul %430, %431, %cst_278 {dimension_numbers = #tpu.dot_dimension_numbers<[1], [0], [0], [1], [0, 0, 1, 1], [], []>} : vector<2x32xbf16>, vector<32x128xbf16>, vector<2x128xf32> -> vector<2x128xf32>
    %433 = arith.addf %428, %432 : vector<2x128xf32>
    %c146 = arith.constant 146 : index
    %c0_279 = arith.constant 0 : index
    %434 = vector.load %arg13[%c146, %c0_279] : memref<256x32xf32, #tpu.memory_space<vmem>>, vector<2x32xf32>
    %435 = arith.truncf %434 : vector<2x32xf32> to vector<2x32xbf16>
    %c2016 = arith.constant 2016 : index
    %c0_280 = arith.constant 0 : index
    %436 = vector.load %arg14[%c2016, %c0_280] : memref<2688x128xbf16, #tpu.memory_space<vmem>>, vector<32x128xbf16>
    %cst_281 = arith.constant dense<0.000000e+00> : vector<2x128xf32>
    %437 = tpu.matmul %435, %436, %cst_281 {dimension_numbers = #tpu.dot_dimension_numbers<[1], [0], [0], [1], [0, 0, 1, 1], [], []>} : vector<2x32xbf16>, vector<32x128xbf16>, vector<2x128xf32> -> vector<2x128xf32>
    %438 = arith.addf %433, %437 : vector<2x128xf32>
    %c148 = arith.constant 148 : index
    %c0_282 = arith.constant 0 : index
    %439 = vector.load %arg13[%c148, %c0_282] : memref<256x32xf32, #tpu.memory_space<vmem>>, vector<2x32xf32>
    %440 = arith.truncf %439 : vector<2x32xf32> to vector<2x32xbf16>
    %c2048 = arith.constant 2048 : index
    %c0_283 = arith.constant 0 : index
    %441 = vector.load %arg14[%c2048, %c0_283] : memref<2688x128xbf16, #tpu.memory_space<vmem>>, vector<32x128xbf16>
    %cst_284 = arith.constant dense<0.000000e+00> : vector<2x128xf32>
    %442 = tpu.matmul %440, %441, %cst_284 {dimension_numbers = #tpu.dot_dimension_numbers<[1], [0], [0], [1], [0, 0, 1, 1], [], []>} : vector<2x32xbf16>, vector<32x128xbf16>, vector<2x128xf32> -> vector<2x128xf32>
    %443 = arith.addf %438, %442 : vector<2x128xf32>
    %c150 = arith.constant 150 : index
    %c0_285 = arith.constant 0 : index
    %444 = vector.load %arg13[%c150, %c0_285] : memref<256x32xf32, #tpu.memory_space<vmem>>, vector<2x32xf32>
    %445 = arith.truncf %444 : vector<2x32xf32> to vector<2x32xbf16>
    %c2080 = arith.constant 2080 : index
    %c0_286 = arith.constant 0 : index
    %446 = vector.load %arg14[%c2080, %c0_286] : memref<2688x128xbf16, #tpu.memory_space<vmem>>, vector<32x128xbf16>
    %cst_287 = arith.constant dense<0.000000e+00> : vector<2x128xf32>
    %447 = tpu.matmul %445, %446, %cst_287 {dimension_numbers = #tpu.dot_dimension_numbers<[1], [0], [0], [1], [0, 0, 1, 1], [], []>} : vector<2x32xbf16>, vector<32x128xbf16>, vector<2x128xf32> -> vector<2x128xf32>
    %448 = arith.addf %443, %447 : vector<2x128xf32>
    %c152 = arith.constant 152 : index
    %c0_288 = arith.constant 0 : index
    %449 = vector.load %arg13[%c152, %c0_288] : memref<256x32xf32, #tpu.memory_space<vmem>>, vector<2x32xf32>
    %450 = arith.truncf %449 : vector<2x32xf32> to vector<2x32xbf16>
    %c2112 = arith.constant 2112 : index
    %c0_289 = arith.constant 0 : index
    %451 = vector.load %arg14[%c2112, %c0_289] : memref<2688x128xbf16, #tpu.memory_space<vmem>>, vector<32x128xbf16>
    %cst_290 = arith.constant dense<0.000000e+00> : vector<2x128xf32>
    %452 = tpu.matmul %450, %451, %cst_290 {dimension_numbers = #tpu.dot_dimension_numbers<[1], [0], [0], [1], [0, 0, 1, 1], [], []>} : vector<2x32xbf16>, vector<32x128xbf16>, vector<2x128xf32> -> vector<2x128xf32>
    %453 = arith.addf %448, %452 : vector<2x128xf32>
    %c154 = arith.constant 154 : index
    %c0_291 = arith.constant 0 : index
    %454 = vector.load %arg13[%c154, %c0_291] : memref<256x32xf32, #tpu.memory_space<vmem>>, vector<2x32xf32>
    %455 = arith.truncf %454 : vector<2x32xf32> to vector<2x32xbf16>
    %c2144 = arith.constant 2144 : index
    %c0_292 = arith.constant 0 : index
    %456 = vector.load %arg14[%c2144, %c0_292] : memref<2688x128xbf16, #tpu.memory_space<vmem>>, vector<32x128xbf16>
    %cst_293 = arith.constant dense<0.000000e+00> : vector<2x128xf32>
    %457 = tpu.matmul %455, %456, %cst_293 {dimension_numbers = #tpu.dot_dimension_numbers<[1], [0], [0], [1], [0, 0, 1, 1], [], []>} : vector<2x32xbf16>, vector<32x128xbf16>, vector<2x128xf32> -> vector<2x128xf32>
    %458 = arith.addf %453, %457 : vector<2x128xf32>
    %c156 = arith.constant 156 : index
    %c0_294 = arith.constant 0 : index
    %459 = vector.load %arg13[%c156, %c0_294] : memref<256x32xf32, #tpu.memory_space<vmem>>, vector<2x32xf32>
    %460 = arith.truncf %459 : vector<2x32xf32> to vector<2x32xbf16>
    %c2176 = arith.constant 2176 : index
    %c0_295 = arith.constant 0 : index
    %461 = vector.load %arg14[%c2176, %c0_295] : memref<2688x128xbf16, #tpu.memory_space<vmem>>, vector<32x128xbf16>
    %cst_296 = arith.constant dense<0.000000e+00> : vector<2x128xf32>
    %462 = tpu.matmul %460, %461, %cst_296 {dimension_numbers = #tpu.dot_dimension_numbers<[1], [0], [0], [1], [0, 0, 1, 1], [], []>} : vector<2x32xbf16>, vector<32x128xbf16>, vector<2x128xf32> -> vector<2x128xf32>
    %463 = arith.addf %458, %462 : vector<2x128xf32>
    %c158 = arith.constant 158 : index
    %c0_297 = arith.constant 0 : index
    %464 = vector.load %arg13[%c158, %c0_297] : memref<256x32xf32, #tpu.memory_space<vmem>>, vector<2x32xf32>
    %465 = arith.truncf %464 : vector<2x32xf32> to vector<2x32xbf16>
    %c2208 = arith.constant 2208 : index
    %c0_298 = arith.constant 0 : index
    %466 = vector.load %arg14[%c2208, %c0_298] : memref<2688x128xbf16, #tpu.memory_space<vmem>>, vector<32x128xbf16>
    %cst_299 = arith.constant dense<0.000000e+00> : vector<2x128xf32>
    %467 = tpu.matmul %465, %466, %cst_299 {dimension_numbers = #tpu.dot_dimension_numbers<[1], [0], [0], [1], [0, 0, 1, 1], [], []>} : vector<2x32xbf16>, vector<32x128xbf16>, vector<2x128xf32> -> vector<2x128xf32>
    %468 = arith.addf %463, %467 : vector<2x128xf32>
    %c160_300 = arith.constant 160 : index
    %c0_301 = arith.constant 0 : index
    %469 = vector.load %arg13[%c160_300, %c0_301] : memref<256x32xf32, #tpu.memory_space<vmem>>, vector<2x32xf32>
    %470 = arith.truncf %469 : vector<2x32xf32> to vector<2x32xbf16>
    %c2240 = arith.constant 2240 : index
    %c0_302 = arith.constant 0 : index
    %471 = vector.load %arg14[%c2240, %c0_302] : memref<2688x128xbf16, #tpu.memory_space<vmem>>, vector<32x128xbf16>
    %cst_303 = arith.constant dense<0.000000e+00> : vector<2x128xf32>
    %472 = tpu.matmul %470, %471, %cst_303 {dimension_numbers = #tpu.dot_dimension_numbers<[1], [0], [0], [1], [0, 0, 1, 1], [], []>} : vector<2x32xbf16>, vector<32x128xbf16>, vector<2x128xf32> -> vector<2x128xf32>
    %473 = arith.addf %468, %472 : vector<2x128xf32>
    %c162 = arith.constant 162 : index
    %c0_304 = arith.constant 0 : index
    %474 = vector.load %arg13[%c162, %c0_304] : memref<256x32xf32, #tpu.memory_space<vmem>>, vector<2x32xf32>
    %475 = arith.truncf %474 : vector<2x32xf32> to vector<2x32xbf16>
    %c2272 = arith.constant 2272 : index
    %c0_305 = arith.constant 0 : index
    %476 = vector.load %arg14[%c2272, %c0_305] : memref<2688x128xbf16, #tpu.memory_space<vmem>>, vector<32x128xbf16>
    %cst_306 = arith.constant dense<0.000000e+00> : vector<2x128xf32>
    %477 = tpu.matmul %475, %476, %cst_306 {dimension_numbers = #tpu.dot_dimension_numbers<[1], [0], [0], [1], [0, 0, 1, 1], [], []>} : vector<2x32xbf16>, vector<32x128xbf16>, vector<2x128xf32> -> vector<2x128xf32>
    %478 = arith.addf %473, %477 : vector<2x128xf32>
    %c168 = arith.constant 168 : index
    %c0_307 = arith.constant 0 : index
    %479 = vector.load %arg13[%c168, %c0_307] : memref<256x32xf32, #tpu.memory_space<vmem>>, vector<2x32xf32>
    %480 = arith.truncf %479 : vector<2x32xf32> to vector<2x32xbf16>
    %c2304 = arith.constant 2304 : index
    %c0_308 = arith.constant 0 : index
    %481 = vector.load %arg14[%c2304, %c0_308] : memref<2688x128xbf16, #tpu.memory_space<vmem>>, vector<32x128xbf16>
    %cst_309 = arith.constant dense<0.000000e+00> : vector<2x128xf32>
    %482 = tpu.matmul %480, %481, %cst_309 {dimension_numbers = #tpu.dot_dimension_numbers<[1], [0], [0], [1], [0, 0, 1, 1], [], []>} : vector<2x32xbf16>, vector<32x128xbf16>, vector<2x128xf32> -> vector<2x128xf32>
    %483 = arith.addf %478, %482 : vector<2x128xf32>
    %c170 = arith.constant 170 : index
    %c0_310 = arith.constant 0 : index
    %484 = vector.load %arg13[%c170, %c0_310] : memref<256x32xf32, #tpu.memory_space<vmem>>, vector<2x32xf32>
    %485 = arith.truncf %484 : vector<2x32xf32> to vector<2x32xbf16>
    %c2336 = arith.constant 2336 : index
    %c0_311 = arith.constant 0 : index
    %486 = vector.load %arg14[%c2336, %c0_311] : memref<2688x128xbf16, #tpu.memory_space<vmem>>, vector<32x128xbf16>
    %cst_312 = arith.constant dense<0.000000e+00> : vector<2x128xf32>
    %487 = tpu.matmul %485, %486, %cst_312 {dimension_numbers = #tpu.dot_dimension_numbers<[1], [0], [0], [1], [0, 0, 1, 1], [], []>} : vector<2x32xbf16>, vector<32x128xbf16>, vector<2x128xf32> -> vector<2x128xf32>
    %488 = arith.addf %483, %487 : vector<2x128xf32>
    %c172 = arith.constant 172 : index
    %c0_313 = arith.constant 0 : index
    %489 = vector.load %arg13[%c172, %c0_313] : memref<256x32xf32, #tpu.memory_space<vmem>>, vector<2x32xf32>
    %490 = arith.truncf %489 : vector<2x32xf32> to vector<2x32xbf16>
    %c2368 = arith.constant 2368 : index
    %c0_314 = arith.constant 0 : index
    %491 = vector.load %arg14[%c2368, %c0_314] : memref<2688x128xbf16, #tpu.memory_space<vmem>>, vector<32x128xbf16>
    %cst_315 = arith.constant dense<0.000000e+00> : vector<2x128xf32>
    %492 = tpu.matmul %490, %491, %cst_315 {dimension_numbers = #tpu.dot_dimension_numbers<[1], [0], [0], [1], [0, 0, 1, 1], [], []>} : vector<2x32xbf16>, vector<32x128xbf16>, vector<2x128xf32> -> vector<2x128xf32>
    %493 = arith.addf %488, %492 : vector<2x128xf32>
    %c174 = arith.constant 174 : index
    %c0_316 = arith.constant 0 : index
    %494 = vector.load %arg13[%c174, %c0_316] : memref<256x32xf32, #tpu.memory_space<vmem>>, vector<2x32xf32>
    %495 = arith.truncf %494 : vector<2x32xf32> to vector<2x32xbf16>
    %c2400 = arith.constant 2400 : index
    %c0_317 = arith.constant 0 : index
    %496 = vector.load %arg14[%c2400, %c0_317] : memref<2688x128xbf16, #tpu.memory_space<vmem>>, vector<32x128xbf16>
    %cst_318 = arith.constant dense<0.000000e+00> : vector<2x128xf32>
    %497 = tpu.matmul %495, %496, %cst_318 {dimension_numbers = #tpu.dot_dimension_numbers<[1], [0], [0], [1], [0, 0, 1, 1], [], []>} : vector<2x32xbf16>, vector<32x128xbf16>, vector<2x128xf32> -> vector<2x128xf32>
    %498 = arith.addf %493, %497 : vector<2x128xf32>
    %c176 = arith.constant 176 : index
    %c0_319 = arith.constant 0 : index
    %499 = vector.load %arg13[%c176, %c0_319] : memref<256x32xf32, #tpu.memory_space<vmem>>, vector<2x32xf32>
    %500 = arith.truncf %499 : vector<2x32xf32> to vector<2x32xbf16>
    %c2432 = arith.constant 2432 : index
    %c0_320 = arith.constant 0 : index
    %501 = vector.load %arg14[%c2432, %c0_320] : memref<2688x128xbf16, #tpu.memory_space<vmem>>, vector<32x128xbf16>
    %cst_321 = arith.constant dense<0.000000e+00> : vector<2x128xf32>
    %502 = tpu.matmul %500, %501, %cst_321 {dimension_numbers = #tpu.dot_dimension_numbers<[1], [0], [0], [1], [0, 0, 1, 1], [], []>} : vector<2x32xbf16>, vector<32x128xbf16>, vector<2x128xf32> -> vector<2x128xf32>
    %503 = arith.addf %498, %502 : vector<2x128xf32>
    %c178 = arith.constant 178 : index
    %c0_322 = arith.constant 0 : index
    %504 = vector.load %arg13[%c178, %c0_322] : memref<256x32xf32, #tpu.memory_space<vmem>>, vector<2x32xf32>
    %505 = arith.truncf %504 : vector<2x32xf32> to vector<2x32xbf16>
    %c2464 = arith.constant 2464 : index
    %c0_323 = arith.constant 0 : index
    %506 = vector.load %arg14[%c2464, %c0_323] : memref<2688x128xbf16, #tpu.memory_space<vmem>>, vector<32x128xbf16>
    %cst_324 = arith.constant dense<0.000000e+00> : vector<2x128xf32>
    %507 = tpu.matmul %505, %506, %cst_324 {dimension_numbers = #tpu.dot_dimension_numbers<[1], [0], [0], [1], [0, 0, 1, 1], [], []>} : vector<2x32xbf16>, vector<32x128xbf16>, vector<2x128xf32> -> vector<2x128xf32>
    %508 = arith.addf %503, %507 : vector<2x128xf32>
    %c180 = arith.constant 180 : index
    %c0_325 = arith.constant 0 : index
    %509 = vector.load %arg13[%c180, %c0_325] : memref<256x32xf32, #tpu.memory_space<vmem>>, vector<2x32xf32>
    %510 = arith.truncf %509 : vector<2x32xf32> to vector<2x32xbf16>
    %c2496 = arith.constant 2496 : index
    %c0_326 = arith.constant 0 : index
    %511 = vector.load %arg14[%c2496, %c0_326] : memref<2688x128xbf16, #tpu.memory_space<vmem>>, vector<32x128xbf16>
    %cst_327 = arith.constant dense<0.000000e+00> : vector<2x128xf32>
    %512 = tpu.matmul %510, %511, %cst_327 {dimension_numbers = #tpu.dot_dimension_numbers<[1], [0], [0], [1], [0, 0, 1, 1], [], []>} : vector<2x32xbf16>, vector<32x128xbf16>, vector<2x128xf32> -> vector<2x128xf32>
    %513 = arith.addf %508, %512 : vector<2x128xf32>
    %c182 = arith.constant 182 : index
    %c0_328 = arith.constant 0 : index
    %514 = vector.load %arg13[%c182, %c0_328] : memref<256x32xf32, #tpu.memory_space<vmem>>, vector<2x32xf32>
    %515 = arith.truncf %514 : vector<2x32xf32> to vector<2x32xbf16>
    %c2528 = arith.constant 2528 : index
    %c0_329 = arith.constant 0 : index
    %516 = vector.load %arg14[%c2528, %c0_329] : memref<2688x128xbf16, #tpu.memory_space<vmem>>, vector<32x128xbf16>
    %cst_330 = arith.constant dense<0.000000e+00> : vector<2x128xf32>
    %517 = tpu.matmul %515, %516, %cst_330 {dimension_numbers = #tpu.dot_dimension_numbers<[1], [0], [0], [1], [0, 0, 1, 1], [], []>} : vector<2x32xbf16>, vector<32x128xbf16>, vector<2x128xf32> -> vector<2x128xf32>
    %518 = arith.addf %513, %517 : vector<2x128xf32>
    %c184 = arith.constant 184 : index
    %c0_331 = arith.constant 0 : index
    %519 = vector.load %arg13[%c184, %c0_331] : memref<256x32xf32, #tpu.memory_space<vmem>>, vector<2x32xf32>
    %520 = arith.truncf %519 : vector<2x32xf32> to vector<2x32xbf16>
    %c2560 = arith.constant 2560 : index
    %c0_332 = arith.constant 0 : index
    %521 = vector.load %arg14[%c2560, %c0_332] : memref<2688x128xbf16, #tpu.memory_space<vmem>>, vector<32x128xbf16>
    %cst_333 = arith.constant dense<0.000000e+00> : vector<2x128xf32>
    %522 = tpu.matmul %520, %521, %cst_333 {dimension_numbers = #tpu.dot_dimension_numbers<[1], [0], [0], [1], [0, 0, 1, 1], [], []>} : vector<2x32xbf16>, vector<32x128xbf16>, vector<2x128xf32> -> vector<2x128xf32>
    %523 = arith.addf %518, %522 : vector<2x128xf32>
    %c186 = arith.constant 186 : index
    %c0_334 = arith.constant 0 : index
    %524 = vector.load %arg13[%c186, %c0_334] : memref<256x32xf32, #tpu.memory_space<vmem>>, vector<2x32xf32>
    %525 = arith.truncf %524 : vector<2x32xf32> to vector<2x32xbf16>
    %c2592 = arith.constant 2592 : index
    %c0_335 = arith.constant 0 : index
    %526 = vector.load %arg14[%c2592, %c0_335] : memref<2688x128xbf16, #tpu.memory_space<vmem>>, vector<32x128xbf16>
    %cst_336 = arith.constant dense<0.000000e+00> : vector<2x128xf32>
    %527 = tpu.matmul %525, %526, %cst_336 {dimension_numbers = #tpu.dot_dimension_numbers<[1], [0], [0], [1], [0, 0, 1, 1], [], []>} : vector<2x32xbf16>, vector<32x128xbf16>, vector<2x128xf32> -> vector<2x128xf32>
    %528 = arith.addf %523, %527 : vector<2x128xf32>
    %c188 = arith.constant 188 : index
    %c0_337 = arith.constant 0 : index
    %529 = vector.load %arg13[%c188, %c0_337] : memref<256x32xf32, #tpu.memory_space<vmem>>, vector<2x32xf32>
    %530 = arith.truncf %529 : vector<2x32xf32> to vector<2x32xbf16>
    %c2624 = arith.constant 2624 : index
    %c0_338 = arith.constant 0 : index
    %531 = vector.load %arg14[%c2624, %c0_338] : memref<2688x128xbf16, #tpu.memory_space<vmem>>, vector<32x128xbf16>
    %cst_339 = arith.constant dense<0.000000e+00> : vector<2x128xf32>
    %532 = tpu.matmul %530, %531, %cst_339 {dimension_numbers = #tpu.dot_dimension_numbers<[1], [0], [0], [1], [0, 0, 1, 1], [], []>} : vector<2x32xbf16>, vector<32x128xbf16>, vector<2x128xf32> -> vector<2x128xf32>
    %533 = arith.addf %528, %532 : vector<2x128xf32>
    %c190 = arith.constant 190 : index
    %c0_340 = arith.constant 0 : index
    %534 = vector.load %arg13[%c190, %c0_340] : memref<256x32xf32, #tpu.memory_space<vmem>>, vector<2x32xf32>
    %535 = arith.truncf %534 : vector<2x32xf32> to vector<2x32xbf16>
    %c2656 = arith.constant 2656 : index
    %c0_341 = arith.constant 0 : index
    %536 = vector.load %arg14[%c2656, %c0_341] : memref<2688x128xbf16, #tpu.memory_space<vmem>>, vector<32x128xbf16>
    %cst_342 = arith.constant dense<0.000000e+00> : vector<2x128xf32>
    %537 = tpu.matmul %535, %536, %cst_342 {dimension_numbers = #tpu.dot_dimension_numbers<[1], [0], [0], [1], [0, 0, 1, 1], [], []>} : vector<2x32xbf16>, vector<32x128xbf16>, vector<2x128xf32> -> vector<2x128xf32>
    %538 = arith.addf %533, %537 : vector<2x128xf32>
    %c0_343 = arith.constant 0 : index
    %c0_344 = arith.constant 0 : index
    %539 = vector.load %arg7[%c0_343, %c0_344] : memref<2x128xf32, #tpu.memory_space<vmem>>, vector<1x128xf32>
    %540 = vector.broadcast %539 : vector<1x128xf32> to vector<2x128xf32>
    %541 = arith.addf %538, %540 : vector<2x128xf32>
    %cst_345 = arith.constant 0.000000e+00 : f32
    %542 = vector.broadcast %cst_345 : f32 to vector<2x128xf32>
    %543 = arith.maximumf %541, %542 : vector<2x128xf32>
    %c1_i32_346 = arith.constant 1 : i32
    %544 = tpu.memref_slice %arg16[%c1_i32_346] : memref<2x!tpu.dma_semaphore, #tpu.memory_space<semaphore_mem>> -> memref<1x!tpu.dma_semaphore, #tpu.memory_space<semaphore_mem>>
    %545 = tpu.memref_squeeze %544 : memref<1x!tpu.dma_semaphore, #tpu.memory_space<semaphore_mem>> -> memref<!tpu.dma_semaphore, #tpu.memory_space<semaphore_mem>>
    tpu.wait_dma2 semaphore(%545 : memref<!tpu.dma_semaphore, #tpu.memory_space<semaphore_mem>>) src(%arg8 : memref<128x128xbf16, #tpu.memory_space<any>>) dst(%arg15 : memref<128x128xbf16, #tpu.memory_space<vmem>>)
    %546 = arith.truncf %543 : vector<2x128xf32> to vector<2x128xbf16>
    %c0_347 = arith.constant 0 : index
    %c0_348 = arith.constant 0 : index
    %547 = vector.load %arg15[%c0_347, %c0_348] : memref<128x128xbf16, #tpu.memory_space<vmem>>, vector<128x128xbf16>
    %cst_349 = arith.constant dense<0.000000e+00> : vector<2x128xf32>
    %548 = tpu.matmul %546, %547, %cst_349 {dimension_numbers = #tpu.dot_dimension_numbers<[1], [0], [0], [1], [0, 0, 1, 1], [], []>} : vector<2x128xbf16>, vector<128x128xbf16>, vector<2x128xf32> -> vector<2x128xf32>
    %c1_350 = arith.constant 1 : index
    %c0_351 = arith.constant 0 : index
    %549 = vector.load %arg7[%c1_350, %c0_351] : memref<2x128xf32, #tpu.memory_space<vmem>>, vector<1x128xf32>
    %550 = vector.broadcast %549 : vector<1x128xf32> to vector<2x128xf32>
    %551 = arith.addf %548, %550 : vector<2x128xf32>
    %cst_352 = arith.constant 0.000000e+00 : f32
    %552 = vector.broadcast %cst_352 : f32 to vector<2x128xf32>
    %553 = arith.maximumf %551, %552 : vector<2x128xf32>
    %554 = arith.truncf %553 : vector<2x128xf32> to vector<2x128xbf16>
    %c0_353 = arith.constant 0 : index
    %c0_354 = arith.constant 0 : index
    %555 = vector.load %arg9[%c0_353, %c0_354] : memref<128x8xbf16, #tpu.memory_space<vmem>>, vector<128x8xbf16>
    %cst_355 = arith.constant dense<0.000000e+00> : vector<2x8xf32>
    %556 = tpu.matmul %554, %555, %cst_355 {dimension_numbers = #tpu.dot_dimension_numbers<[1], [0], [0], [1], [0, 0, 1, 1], [], []>} : vector<2x128xbf16>, vector<128x8xbf16>, vector<2x8xf32> -> vector<2x8xf32>
    %c0_356 = arith.constant 0 : index
    %c0_357 = arith.constant 0 : index
    %557 = vector.load %arg10[%c0_356, %c0_357] : memref<1x8xf32, #tpu.memory_space<vmem>>, vector<1x8xf32>
    %558 = vector.broadcast %557 : vector<1x8xf32> to vector<2x8xf32>
    %559 = arith.addf %556, %558 : vector<2x8xf32>
    %c0_358 = arith.constant 0 : index
    %c0_359 = arith.constant 0 : index
    %560 = vector.load %arg11[%c0_358, %c0_359] : memref<2x8xf32, #tpu.memory_space<vmem>>, vector<2x8xf32>
    tpu.vector_store %arg11[%c0_358, %c0_359], %559 {strides = array<i32>} : memref<2x8xf32, #tpu.memory_space<vmem>>, vector<2x8xf32>,
    return
  }
}

</mosaic_0001>

<llo_original>
// kernel: actor_forward.1
$region0: #{actor_forward.1}
  #allocation0 [shape = 'u32[]', space=smem, size = 0x4, offset = 0x4, fixed_abs, tag = 'smem constant byte address 0x4 - core index']
  #allocation1 [shape = 'u32[144,128]{1,0:T(1,128)}', space=vmem, size = 0x12000, scoped, tag = 'internal scratch']
  #allocation2 [shape = 'f32[320,16]{1,0:T(8,128)}', space=vmem, size = 0x28000, scoped, tag = 'scratch operand']
  #allocation3 [shape = 'f32[256,32]{1,0:T(8,128)}', space=vmem, size = 0x20000, scoped, tag = 'scratch operand']
  #allocation4 [shape = 'bf16[2688,128]{1,0:T(8,128)(2,1)}', space=vmem, size = 0xa8000, scoped, tag = 'scratch operand']
  #allocation5 [shape = 'bf16[128,128]{1,0:T(8,128)(2,1)}', space=vmem, size = 0x8000, scoped, tag = 'scratch operand']
  #allocation6 [shape = 's32[2]{0}', space=sflag, size = 0x8, scoped, tag = 'scratch operand']
  #allocation9 [shape = 's32[]', space=sflag, size = 0x4, offset = 0, fixed_abs, tag = 'sflag constant byte address 0x0 - dummy sync flag']
  #allocation10 [shape = 's32[]', space=sflag, size = 0x4, offset = 0, fixed_abs, tag = 'sflag constant byte address 0x0 - dummy sync flag']
  %s0 = inlined_call_operand.vmem [shape: f32[256,2], index: 0, kind: input, shape index: {}]
  %s1 = inlined_call_operand.vmem [shape: f32[256,256], index: 1, kind: input, shape index: {}]
  %s2 = inlined_call_operand.vmem [shape: f32[256,16], index: 2, kind: input, shape index: {}]
  %s3 = inlined_call_operand.vmem [shape: f32[3,16], index: 3, kind: input, shape index: {}]
  %s4 = inlined_call_operand.vmem [shape: f32[144,32], index: 4, kind: input, shape index: {}]
  %s5 = inlined_call_operand.vmem [shape: f32[3,32], index: 5, kind: input, shape index: {}]
  %s6 = inlined_call_operand.vmem [shape: bf16[2688,128], index: 6, kind: input, shape index: {}]
  %s7 = inlined_call_operand.vmem [shape: f32[2,128], index: 7, kind: input, shape index: {}]
  %s8 = inlined_call_operand.vmem [shape: bf16[128,128], index: 8, kind: input, shape index: {}]
  %s9 = inlined_call_operand.vmem [shape: bf16[128,8], index: 9, kind: input, shape index: {}]
  %s10 = inlined_call_operand.vmem [shape: f32[1,8], index: 10, kind: input, shape index: {}]
  %s11 = inlined_call_operand.hbm [shape: f32[2,8], index: 11, kind: output, shape index: {}]
  %s12 = sld [smem:[#allocation0]]
  $region114: #{actor_forward.1} parent=0
    _
  %s14 = ssub.s32 1, %s12
  %s15 = scalar_select 0, %s14, %s12
  $region1: #{actor_forward.1} parent=0
    #allocation7 [shape = 'u8[1024]{0}', space=vmem, size = 0x400, scoped, tag = 'output window, operand 0, single buffered']
    #allocation8 [shape = 's32[1]{0}', space=sflag, size = 0x4, scoped, tag = 'scoped memory for actor_forward.1']
    %16 = vsyncpa [#allocation8], 0
    // Predicated region
    $region2: #{actor_forward.1} parent=1 // pred_check
      _
    $region3: #{actor_forward.1} parent=1 // pred_check_branch
      %18 = sbr.rel (0) target = $region5
    $region4: #{actor_forward.1} parent=1 // pred_region
      _
    $region5: #{actor_forward.1} parent=1 // pred_fallthru
      _
    // Predicated region
    $region6: #{actor_forward.1} parent=1 // pred_check
      _
    $region7: #{actor_forward.1} parent=1 // pred_check_branch
      %20 = sbr.rel (0) target = $region9
    $region8: #{actor_forward.1} parent=1 // pred_region
      _
    $region9: #{actor_forward.1} parent=1 // pred_fallthru
      _
    // Predicated region
    $region10: #{actor_forward.1} parent=1 // pred_check
      _
    $region11: #{actor_forward.1} parent=1 // pred_check_branch
      %22 = sbr.rel (0) target = $region13
    $region12: #{actor_forward.1} parent=1 // pred_region
      _
    $region13: #{actor_forward.1} parent=1 // pred_fallthru
      _
    // Predicated region
    $region14: #{actor_forward.1} parent=1 // pred_check
      _
    $region15: #{actor_forward.1} parent=1 // pred_check_branch
      %24 = sbr.rel (0) target = $region17
    $region16: #{actor_forward.1} parent=1 // pred_region
      _
    $region17: #{actor_forward.1} parent=1 // pred_fallthru
      _
    // Predicated region
    $region18: #{actor_forward.1} parent=1 // pred_check
      _
    $region19: #{actor_forward.1} parent=1 // pred_check_branch
      %26 = sbr.rel (0) target = $region21
    $region20: #{actor_forward.1} parent=1 // pred_region
      _
    $region21: #{actor_forward.1} parent=1 // pred_fallthru
      _
    // Predicated region
    $region22: #{actor_forward.1} parent=1 // pred_check
      _
    $region23: #{actor_forward.1} parent=1 // pred_check_branch
      %28 = sbr.rel (0) target = $region25
    $region24: #{actor_forward.1} parent=1 // pred_region
      _
    $region25: #{actor_forward.1} parent=1 // pred_fallthru
      _
    // Predicated region
    $region26: #{actor_forward.1} parent=1 // pred_check
      _
    $region27: #{actor_forward.1} parent=1 // pred_check_branch
      %30 = sbr.rel (0) target = $region29
    $region28: #{actor_forward.1} parent=1 // pred_region
      _
    $region29: #{actor_forward.1} parent=1 // pred_fallthru
      _
    // Predicated region
    $region30: #{actor_forward.1} parent=1 // pred_check
      _
    $region31: #{actor_forward.1} parent=1 // pred_check_branch
      %32 = sbr.rel (0) target = $region33
    $region32: #{actor_forward.1} parent=1 // pred_region
      _
    $region33: #{actor_forward.1} parent=1 // pred_fallthru
      _
    // Predicated region
    $region34: #{actor_forward.1} parent=1 // pred_check
      _
    $region35: #{actor_forward.1} parent=1 // pred_check_branch
      %34 = sbr.rel (0) target = $region37
    $region36: #{actor_forward.1} parent=1 // pred_region
      _
    $region37: #{actor_forward.1} parent=1 // pred_fallthru
      _
    %p37 = scmp.lt.u32.totalorder 1344, 8
    %p38 = pneg %p37
    // Predicated region
    $region38: #{actor_forward.1} parent=1 // pred_check
      _
    $region39: #{actor_forward.1} parent=1 // pred_check_branch
      %40 = sbr.rel (%p37) target = $region41
    $region40: #{actor_forward.1} parent=1 // pred_region
      %s56 = sand.u32 1344, 7
      %p57 = scmp.eq.s32.totalorder %s56, 0
      // Predicated region
      $region53: #{actor_forward.1} parent=40 // pred_check
        %p58 = pneg %p57
      $region54: #{actor_forward.1} parent=40 // pred_check_branch
        %60 = sbr.rel (%p58) target = $region56
      $region55: #{actor_forward.1} parent=40 // pred_region
        loop: start=0, step=1, limit=1
        $region57: #{actor_forward.1} parent=55 // loop_pre_header
          _
        $region58: #{actor_forward.1} parent=55 // loop_header
          %s62 = sphi 0, %s66
          %p63 = scmp.ge.s32.totalorder %s62, 1
          %s67 = sphi %s6, %s6
          %s68 = sphi [#allocation4], [#allocation4]
        $region59: #{actor_forward.1} parent=55 // loop_header_branch
          %65 = sbr.rel (%p63) target = $region63
        $region60: #{actor_forward.1} parent=55 // loop_body
          %v69 = vld [vmem:[%s67] sm:$0xff]
          %70 = vst [vmem:[%s68] sm:$0xff] %v69
          %v71 = vld [vmem:[%s67 + $0x8] sm:$0xff]
          %72 = vst [vmem:[%s68 + $0x8] sm:$0xff] %v71
          %v73 = vld [vmem:[%s67 + $0x10] sm:$0xff]
          %74 = vst [vmem:[%s68 + $0x10] sm:$0xff] %v73
          %v75 = vld [vmem:[%s67 + $0x18] sm:$0xff]
          %76 = vst [vmem:[%s68 + $0x18] sm:$0xff] %v75
          %v77 = vld [vmem:[%s67 + $0x20] sm:$0xff]
          %78 = vst [vmem:[%s68 + $0x20] sm:$0xff] %v77
          %v79 = vld [vmem:[%s67 + $0x28] sm:$0xff]
          %80 = vst [vmem:[%s68 + $0x28] sm:$0xff] %v79
          %v81 = vld [vmem:[%s67 + $0x30] sm:$0xff]
          %82 = vst [vmem:[%s68 + $0x30] sm:$0xff] %v81
          %v83 = vld [vmem:[%s67 + $0x38] sm:$0xff]
          %84 = vst [vmem:[%s68 + $0x38] sm:$0xff] %v83
          %v85 = vld [vmem:[%s67 + $0x40] sm:$0xff]
          %86 = vst [vmem:[%s68 + $0x40] sm:$0xff] %v85
          %v87 = vld [vmem:[%s67 + $0x48] sm:$0xff]
          %88 = vst [vmem:[%s68 + $0x48] sm:$0xff] %v87
          %v89 = vld [vmem:[%s67 + $0x50] sm:$0xff]
          %90 = vst [vmem:[%s68 + $0x50] sm:$0xff] %v89
          %v91 = vld [vmem:[%s67 + $0x58] sm:$0xff]
          %92 = vst [vmem:[%s68 + $0x58] sm:$0xff] %v91
          %v93 = vld [vmem:[%s67 + $0x60] sm:$0xff]
          %94 = vst [vmem:[%s68 + $0x60] sm:$0xff] %v93
          %v95 = vld [vmem:[%s67 + $0x68] sm:$0xff]
          %96 = vst [vmem:[%s68 + $0x68] sm:$0xff] %v95
          %v97 = vld [vmem:[%s67 + $0x70] sm:$0xff]
          %98 = vst [vmem:[%s68 + $0x70] sm:$0xff] %v97
          %v99 = vld [vmem:[%s67 + $0x78] sm:$0xff]
          %100 = vst [vmem:[%s68 + $0x78] sm:$0xff] %v99
          %v101 = vld [vmem:[%s67 + $0x80] sm:$0xff]
          %102 = vst [vmem:[%s68 + $0x80] sm:$0xff] %v101
          %v103 = vld [vmem:[%s67 + $0x88] sm:$0xff]
          %104 = vst [vmem:[%s68 + $0x88] sm:$0xff] %v103
          %v105 = vld [vmem:[%s67 + $0x90] sm:$0xff]
          %106 = vst [vmem:[%s68 + $0x90] sm:$0xff] %v105
          %v107 = vld [vmem:[%s67 + $0x98] sm:$0xff]
          %108 = vst [vmem:[%s68 + $0x98] sm:$0xff] %v107
          %v109 = vld [vmem:[%s67 + $0xa0] sm:$0xff]
          %110 = vst [vmem:[%s68 + $0xa0] sm:$0xff] %v109
          %v111 = vld [vmem:[%s67 + $0xa8] sm:$0xff]
          %112 = vst [vmem:[%s68 + $0xa8] sm:$0xff] %v111
          %v113 = vld [vmem:[%s67 + $0xb0] sm:$0xff]
          %114 = vst [vmem:[%s68 + $0xb0] sm:$0xff] %v113
          %v115 = vld [vmem:[%s67 + $0xb8] sm:$0xff]
          %116 = vst [vmem:[%s68 + $0xb8] sm:$0xff] %v115
          %v117 = vld [vmem:[%s67 + $0xc0] sm:$0xff]
          %118 = vst [vmem:[%s68 + $0xc0] sm:$0xff] %v117
          %v119 = vld [vmem:[%s67 + $0xc8] sm:$0xff]
          %120 = vst [vmem:[%s68 + $0xc8] sm:$0xff] %v119
          %v121 = vld [vmem:[%s67 + $0xd0] sm:$0xff]
          %122 = vst [vmem:[%s68 + $0xd0] sm:$0xff] %v121
          %v123 = vld [vmem:[%s67 + $0xd8] sm:$0xff]
          %124 = vst [vmem:[%s68 + $0xd8] sm:$0xff] %v123
          %v125 = vld [vmem:[%s67 + $0xe0] sm:$0xff]
          %126 = vst [vmem:[%s68 + $0xe0] sm:$0xff] %v125
          %v127 = vld [vmem:[%s67 + $0xe8] sm:$0xff]
          %128 = vst [vmem:[%s68 + $0xe8] sm:$0xff] %v127
          %v129 = vld [vmem:[%s67 + $0xf0] sm:$0xff]
          %130 = vst [vmem:[%s68 + $0xf0] sm:$0xff] %v129
          %v131 = vld [vmem:[%s67 + $0xf8] sm:$0xff]
          %132 = vst [vmem:[%s68 + $0xf8] sm:$0xff] %v131
          %v133 = vld [vmem:[%s67 + $0x100] sm:$0xff]
          %134 = vst [vmem:[%s68 + $0x100] sm:$0xff] %v133
          %v135 = vld [vmem:[%s67 + $0x108] sm:$0xff]
          %136 = vst [vmem:[%s68 + $0x108] sm:$0xff] %v135
          %v137 = vld [vmem:[%s67 + $0x110] sm:$0xff]
          %138 = vst [vmem:[%s68 + $0x110] sm:$0xff] %v137
          %v139 = vld [vmem:[%s67 + $0x118] sm:$0xff]
          %140 = vst [vmem:[%s68 + $0x118] sm:$0xff] %v139
          %v141 = vld [vmem:[%s67 + $0x120] sm:$0xff]
          %142 = vst [vmem:[%s68 + $0x120] sm:$0xff] %v141
          %v143 = vld [vmem:[%s67 + $0x128] sm:$0xff]
          %144 = vst [vmem:[%s68 + $0x128] sm:$0xff] %v143
          %v145 = vld [vmem:[%s67 + $0x130] sm:$0xff]
          %146 = vst [vmem:[%s68 + $0x130] sm:$0xff] %v145
          %v147 = vld [vmem:[%s67 + $0x138] sm:$0xff]
          %148 = vst [vmem:[%s68 + $0x138] sm:$0xff] %v147
          %v149 = vld [vmem:[%s67 + $0x140] sm:$0xff]
          %150 = vst [vmem:[%s68 + $0x140] sm:$0xff] %v149
          %v151 = vld [vmem:[%s67 + $0x148] sm:$0xff]
          %152 = vst [vmem:[%s68 + $0x148] sm:$0xff] %v151
          %v153 = vld [vmem:[%s67 + $0x150] sm:$0xff]
          %154 = vst [vmem:[%s68 + $0x150] sm:$0xff] %v153
          %v155 = vld [vmem:[%s67 + $0x158] sm:$0xff]
          %156 = vst [vmem:[%s68 + $0x158] sm:$0xff] %v155
          %v157 = vld [vmem:[%s67 + $0x160] sm:$0xff]
          %158 = vst [vmem:[%s68 + $0x160] sm:$0xff] %v157
          %v159 = vld [vmem:[%s67 + $0x168] sm:$0xff]
          %160 = vst [vmem:[%s68 + $0x168] sm:$0xff] %v159
          %v161 = vld [vmem:[%s67 + $0x170] sm:$0xff]
          %162 = vst [vmem:[%s68 + $0x170] sm:$0xff] %v161
          %v163 = vld [vmem:[%s67 + $0x178] sm:$0xff]
          %164 = vst [vmem:[%s68 + $0x178] sm:$0xff] %v163
          %v165 = vld [vmem:[%s67 + $0x180] sm:$0xff]
          %166 = vst [vmem:[%s68 + $0x180] sm:$0xff] %v165
          %v167 = vld [vmem:[%s67 + $0x188] sm:$0xff]
          %168 = vst [vmem:[%s68 + $0x188] sm:$0xff] %v167
          %v169 = vld [vmem:[%s67 + $0x190] sm:$0xff]
          %170 = vst [vmem:[%s68 + $0x190] sm:$0xff] %v169
          %v171 = vld [vmem:[%s67 + $0x198] sm:$0xff]
          %172 = vst [vmem:[%s68 + $0x198] sm:$0xff] %v171
          %v173 = vld [vmem:[%s67 + $0x1a0] sm:$0xff]
          %174 = vst [vmem:[%s68 + $0x1a0] sm:$0xff] %v173
          %v175 = vld [vmem:[%s67 + $0x1a8] sm:$0xff]
          %176 = vst [vmem:[%s68 + $0x1a8] sm:$0xff] %v175
          %v177 = vld [vmem:[%s67 + $0x1b0] sm:$0xff]
          %178 = vst [vmem:[%s68 + $0x1b0] sm:$0xff] %v177
          %v179 = vld [vmem:[%s67 + $0x1b8] sm:$0xff]
          %180 = vst [vmem:[%s68 + $0x1b8] sm:$0xff] %v179
          %v181 = vld [vmem:[%s67 + $0x1c0] sm:$0xff]
          %182 = vst [vmem:[%s68 + $0x1c0] sm:$0xff] %v181
          %v183 = vld [vmem:[%s67 + $0x1c8] sm:$0xff]
          %184 = vst [vmem:[%s68 + $0x1c8] sm:$0xff] %v183
          %v185 = vld [vmem:[%s67 + $0x1d0] sm:$0xff]
          %186 = vst [vmem:[%s68 + $0x1d0] sm:$0xff] %v185
          %v187 = vld [vmem:[%s67 + $0x1d8] sm:$0xff]
          %188 = vst [vmem:[%s68 + $0x1d8] sm:$0xff] %v187
          %v189 = vld [vmem:[%s67 + $0x1e0] sm:$0xff]
          %190 = vst [vmem:[%s68 + $0x1e0] sm:$0xff] %v189
          %v191 = vld [vmem:[%s67 + $0x1e8] sm:$0xff]
          %192 = vst [vmem:[%s68 + $0x1e8] sm:$0xff] %v191
          %v193 = vld [vmem:[%s67 + $0x1f0] sm:$0xff]
          %194 = vst [vmem:[%s68 + $0x1f0] sm:$0xff] %v193
          %v195 = vld [vmem:[%s67 + $0x1f8] sm:$0xff]
          %196 = vst [vmem:[%s68 + $0x1f8] sm:$0xff] %v195
          %v197 = vld [vmem:[%s67 + $0x200] sm:$0xff]
          %198 = vst [vmem:[%s68 + $0x200] sm:$0xff] %v197
          %v199 = vld [vmem:[%s67 + $0x208] sm:$0xff]
          %200 = vst [vmem:[%s68 + $0x208] sm:$0xff] %v199
          %v201 = vld [vmem:[%s67 + $0x210] sm:$0xff]
          %202 = vst [vmem:[%s68 + $0x210] sm:$0xff] %v201
          %v203 = vld [vmem:[%s67 + $0x218] sm:$0xff]
          %204 = vst [vmem:[%s68 + $0x218] sm:$0xff] %v203
          %v205 = vld [vmem:[%s67 + $0x220] sm:$0xff]
          %206 = vst [vmem:[%s68 + $0x220] sm:$0xff] %v205
          %v207 = vld [vmem:[%s67 + $0x228] sm:$0xff]
          %208 = vst [vmem:[%s68 + $0x228] sm:$0xff] %v207
          %v209 = vld [vmem:[%s67 + $0x230] sm:$0xff]
          %210 = vst [vmem:[%s68 + $0x230] sm:$0xff] %v209
          %v211 = vld [vmem:[%s67 + $0x238] sm:$0xff]
          %212 = vst [vmem:[%s68 + $0x238] sm:$0xff] %v211
          %v213 = vld [vmem:[%s67 + $0x240] sm:$0xff]
          %214 = vst [vmem:[%s68 + $0x240] sm:$0xff] %v213
          %v215 = vld [vmem:[%s67 + $0x248] sm:$0xff]
          %216 = vst [vmem:[%s68 + $0x248] sm:$0xff] %v215
          %v217 = vld [vmem:[%s67 + $0x250] sm:$0xff]
          %218 = vst [vmem:[%s68 + $0x250] sm:$0xff] %v217
          %v219 = vld [vmem:[%s67 + $0x258] sm:$0xff]
          %220 = vst [vmem:[%s68 + $0x258] sm:$0xff] %v219
          %v221 = vld [vmem:[%s67 + $0x260] sm:$0xff]
          %222 = vst [vmem:[%s68 + $0x260] sm:$0xff] %v221
          %v223 = vld [vmem:[%s67 + $0x268] sm:$0xff]
          %224 = vst [vmem:[%s68 + $0x268] sm:$0xff] %v223
          %v225 = vld [vmem:[%s67 + $0x270] sm:$0xff]
          %226 = vst [vmem:[%s68 + $0x270] sm:$0xff] %v225
          %v227 = vld [vmem:[%s67 + $0x278] sm:$0xff]
          %228 = vst [vmem:[%s68 + $0x278] sm:$0xff] %v227
          %v229 = vld [vmem:[%s67 + $0x280] sm:$0xff]
          %230 = vst [vmem:[%s68 + $0x280] sm:$0xff] %v229
          %v231 = vld [vmem:[%s67 + $0x288] sm:$0xff]
          %232 = vst [vmem:[%s68 + $0x288] sm:$0xff] %v231
          %v233 = vld [vmem:[%s67 + $0x290] sm:$0xff]
          %234 = vst [vmem:[%s68 + $0x290] sm:$0xff] %v233
          %v235 = vld [vmem:[%s67 + $0x298] sm:$0xff]
          %236 = vst [vmem:[%s68 + $0x298] sm:$0xff] %v235
          %v237 = vld [vmem:[%s67 + $0x2a0] sm:$0xff]
          %238 = vst [vmem:[%s68 + $0x2a0] sm:$0xff] %v237
          %v239 = vld [vmem:[%s67 + $0x2a8] sm:$0xff]
          %240 = vst [vmem:[%s68 + $0x2a8] sm:$0xff] %v239
          %v241 = vld [vmem:[%s67 + $0x2b0] sm:$0xff]
          %242 = vst [vmem:[%s68 + $0x2b0] sm:$0xff] %v241
          %v243 = vld [vmem:[%s67 + $0x2b8] sm:$0xff]
          %244 = vst [vmem:[%s68 + $0x2b8] sm:$0xff] %v243
          %v245 = vld [vmem:[%s67 + $0x2c0] sm:$0xff]
          %246 = vst [vmem:[%s68 + $0x2c0] sm:$0xff] %v245
          %v247 = vld [vmem:[%s67 + $0x2c8] sm:$0xff]
          %248 = vst [vmem:[%s68 + $0x2c8] sm:$0xff] %v247
          %v249 = vld [vmem:[%s67 + $0x2d0] sm:$0xff]
          %250 = vst [vmem:[%s68 + $0x2d0] sm:$0xff] %v249
          %v251 = vld [vmem:[%s67 + $0x2d8] sm:$0xff]
          %252 = vst [vmem:[%s68 + $0x2d8] sm:$0xff] %v251
          %v253 = vld [vmem:[%s67 + $0x2e0] sm:$0xff]
          %254 = vst [vmem:[%s68 + $0x2e0] sm:$0xff] %v253
          %v255 = vld [vmem:[%s67 + $0x2e8] sm:$0xff]
          %256 = vst [vmem:[%s68 + $0x2e8] sm:$0xff] %v255
          %v257 = vld [vmem:[%s67 + $0x2f0] sm:$0xff]
          %258 = vst [vmem:[%s68 + $0x2f0] sm:$0xff] %v257
          %v259 = vld [vmem:[%s67 + $0x2f8] sm:$0xff]
          %260 = vst [vmem:[%s68 + $0x2f8] sm:$0xff] %v259
          %v261 = vld [vmem:[%s67 + $0x300] sm:$0xff]
          %262 = vst [vmem:[%s68 + $0x300] sm:$0xff] %v261
          %v263 = vld [vmem:[%s67 + $0x308] sm:$0xff]
          %264 = vst [vmem:[%s68 + $0x308] sm:$0xff] %v263
          %v265 = vld [vmem:[%s67 + $0x310] sm:$0xff]
          %266 = vst [vmem:[%s68 + $0x310] sm:$0xff] %v265
          %v267 = vld [vmem:[%s67 + $0x318] sm:$0xff]
          %268 = vst [vmem:[%s68 + $0x318] sm:$0xff] %v267
          %v269 = vld [vmem:[%s67 + $0x320] sm:$0xff]
          %270 = vst [vmem:[%s68 + $0x320] sm:$0xff] %v269
          %v271 = vld [vmem:[%s67 + $0x328] sm:$0xff]
          %272 = vst [vmem:[%s68 + $0x328] sm:$0xff] %v271
          %v273 = vld [vmem:[%s67 + $0x330] sm:$0xff]
          %274 = vst [vmem:[%s68 + $0x330] sm:$0xff] %v273
          %v275 = vld [vmem:[%s67 + $0x338] sm:$0xff]
          %276 = vst [vmem:[%s68 + $0x338] sm:$0xff] %v275
          %v277 = vld [vmem:[%s67 + $0x340] sm:$0xff]
          %278 = vst [vmem:[%s68 + $0x340] sm:$0xff] %v277
          %v279 = vld [vmem:[%s67 + $0x348] sm:$0xff]
          %280 = vst [vmem:[%s68 + $0x348] sm:$0xff] %v279
          %v281 = vld [vmem:[%s67 + $0x350] sm:$0xff]
          %282 = vst [vmem:[%s68 + $0x350] sm:$0xff] %v281
          %v283 = vld [vmem:[%s67 + $0x358] sm:$0xff]
          %284 = vst [vmem:[%s68 + $0x358] sm:$0xff] %v283
          %v285 = vld [vmem:[%s67 + $0x360] sm:$0xff]
          %286 = vst [vmem:[%s68 + $0x360] sm:$0xff] %v285
          %v287 = vld [vmem:[%s67 + $0x368] sm:$0xff]
          %288 = vst [vmem:[%s68 + $0x368] sm:$0xff] %v287
          %v289 = vld [vmem:[%s67 + $0x370] sm:$0xff]
          %290 = vst [vmem:[%s68 + $0x370] sm:$0xff] %v289
          %v291 = vld [vmem:[%s67 + $0x378] sm:$0xff]
          %292 = vst [vmem:[%s68 + $0x378] sm:$0xff] %v291
          %v293 = vld [vmem:[%s67 + $0x380] sm:$0xff]
          %294 = vst [vmem:[%s68 + $0x380] sm:$0xff] %v293
          %v295 = vld [vmem:[%s67 + $0x388] sm:$0xff]
          %296 = vst [vmem:[%s68 + $0x388] sm:$0xff] %v295
          %v297 = vld [vmem:[%s67 + $0x390] sm:$0xff]
          %298 = vst [vmem:[%s68 + $0x390] sm:$0xff] %v297
          %v299 = vld [vmem:[%s67 + $0x398] sm:$0xff]
          %300 = vst [vmem:[%s68 + $0x398] sm:$0xff] %v299
          %v301 = vld [vmem:[%s67 + $0x3a0] sm:$0xff]
          %302 = vst [vmem:[%s68 + $0x3a0] sm:$0xff] %v301
          %v303 = vld [vmem:[%s67 + $0x3a8] sm:$0xff]
          %304 = vst [vmem:[%s68 + $0x3a8] sm:$0xff] %v303
          %v305 = vld [vmem:[%s67 + $0x3b0] sm:$0xff]
          %306 = vst [vmem:[%s68 + $0x3b0] sm:$0xff] %v305
          %v307 = vld [vmem:[%s67 + $0x3b8] sm:$0xff]
          %308 = vst [vmem:[%s68 + $0x3b8] sm:$0xff] %v307
          %v309 = vld [vmem:[%s67 + $0x3c0] sm:$0xff]
          %310 = vst [vmem:[%s68 + $0x3c0] sm:$0xff] %v309
          %v311 = vld [vmem:[%s67 + $0x3c8] sm:$0xff]
          %312 = vst [vmem:[%s68 + $0x3c8] sm:$0xff] %v311
          %v313 = vld [vmem:[%s67 + $0x3d0] sm:$0xff]
          %314 = vst [vmem:[%s68 + $0x3d0] sm:$0xff] %v313
          %v315 = vld [vmem:[%s67 + $0x3d8] sm:$0xff]
          %316 = vst [vmem:[%s68 + $0x3d8] sm:$0xff] %v315
          %v317 = vld [vmem:[%s67 + $0x3e0] sm:$0xff]
          %318 = vst [vmem:[%s68 + $0x3e0] sm:$0xff] %v317
          %v319 = vld [vmem:[%s67 + $0x3e8] sm:$0xff]
          %320 = vst [vmem:[%s68 + $0x3e8] sm:$0xff] %v319
          %v321 = vld [vmem:[%s67 + $0x3f0] sm:$0xff]
          %322 = vst [vmem:[%s68 + $0x3f0] sm:$0xff] %v321
          %v323 = vld [vmem:[%s67 + $0x3f8] sm:$0xff]
          %324 = vst [vmem:[%s68 + $0x3f8] sm:$0xff] %v323
          %v325 = vld [vmem:[%s67 + $0x400] sm:$0xff]
          %326 = vst [vmem:[%s68 + $0x400] sm:$0xff] %v325
          %v327 = vld [vmem:[%s67 + $0x408] sm:$0xff]
          %328 = vst [vmem:[%s68 + $0x408] sm:$0xff] %v327
          %v329 = vld [vmem:[%s67 + $0x410] sm:$0xff]
          %330 = vst [vmem:[%s68 + $0x410] sm:$0xff] %v329
          %v331 = vld [vmem:[%s67 + $0x418] sm:$0xff]
          %332 = vst [vmem:[%s68 + $0x418] sm:$0xff] %v331
          %v333 = vld [vmem:[%s67 + $0x420] sm:$0xff]
          %334 = vst [vmem:[%s68 + $0x420] sm:$0xff] %v333
          %v335 = vld [vmem:[%s67 + $0x428] sm:$0xff]
          %336 = vst [vmem:[%s68 + $0x428] sm:$0xff] %v335
          %v337 = vld [vmem:[%s67 + $0x430] sm:$0xff]
          %338 = vst [vmem:[%s68 + $0x430] sm:$0xff] %v337
          %v339 = vld [vmem:[%s67 + $0x438] sm:$0xff]
          %340 = vst [vmem:[%s68 + $0x438] sm:$0xff] %v339
          %v341 = vld [vmem:[%s67 + $0x440] sm:$0xff]
          %342 = vst [vmem:[%s68 + $0x440] sm:$0xff] %v341
          %v343 = vld [vmem:[%s67 + $0x448] sm:$0xff]
          %344 = vst [vmem:[%s68 + $0x448] sm:$0xff] %v343
          %v345 = vld [vmem:[%s67 + $0x450] sm:$0xff]
          %346 = vst [vmem:[%s68 + $0x450] sm:$0xff] %v345
          %v347 = vld [vmem:[%s67 + $0x458] sm:$0xff]
          %348 = vst [vmem:[%s68 + $0x458] sm:$0xff] %v347
          %v349 = vld [vmem:[%s67 + $0x460] sm:$0xff]
          %350 = vst [vmem:[%s68 + $0x460] sm:$0xff] %v349
          %v351 = vld [vmem:[%s67 + $0x468] sm:$0xff]
          %352 = vst [vmem:[%s68 + $0x468] sm:$0xff] %v351
          %v353 = vld [vmem:[%s67 + $0x470] sm:$0xff]
          %354 = vst [vmem:[%s68 + $0x470] sm:$0xff] %v353
          %v355 = vld [vmem:[%s67 + $0x478] sm:$0xff]
          %356 = vst [vmem:[%s68 + $0x478] sm:$0xff] %v355
          %v357 = vld [vmem:[%s67 + $0x480] sm:$0xff]
          %358 = vst [vmem:[%s68 + $0x480] sm:$0xff] %v357
          %v359 = vld [vmem:[%s67 + $0x488] sm:$0xff]
          %360 = vst [vmem:[%s68 + $0x488] sm:$0xff] %v359
          %v361 = vld [vmem:[%s67 + $0x490] sm:$0xff]
          %362 = vst [vmem:[%s68 + $0x490] sm:$0xff] %v361
          %v363 = vld [vmem:[%s67 + $0x498] sm:$0xff]
          %364 = vst [vmem:[%s68 + $0x498] sm:$0xff] %v363
          %v365 = vld [vmem:[%s67 + $0x4a0] sm:$0xff]
          %366 = vst [vmem:[%s68 + $0x4a0] sm:$0xff] %v365
          %v367 = vld [vmem:[%s67 + $0x4a8] sm:$0xff]
          %368 = vst [vmem:[%s68 + $0x4a8] sm:$0xff] %v367
          %v369 = vld [vmem:[%s67 + $0x4b0] sm:$0xff]
          %370 = vst [vmem:[%s68 + $0x4b0] sm:$0xff] %v369
          %v371 = vld [vmem:[%s67 + $0x4b8] sm:$0xff]
          %372 = vst [vmem:[%s68 + $0x4b8] sm:$0xff] %v371
          %v373 = vld [vmem:[%s67 + $0x4c0] sm:$0xff]
          %374 = vst [vmem:[%s68 + $0x4c0] sm:$0xff] %v373
          %v375 = vld [vmem:[%s67 + $0x4c8] sm:$0xff]
          %376 = vst [vmem:[%s68 + $0x4c8] sm:$0xff] %v375
          %v377 = vld [vmem:[%s67 + $0x4d0] sm:$0xff]
          %378 = vst [vmem:[%s68 + $0x4d0] sm:$0xff] %v377
          %v379 = vld [vmem:[%s67 + $0x4d8] sm:$0xff]
          %380 = vst [vmem:[%s68 + $0x4d8] sm:$0xff] %v379
          %v381 = vld [vmem:[%s67 + $0x4e0] sm:$0xff]
          %382 = vst [vmem:[%s68 + $0x4e0] sm:$0xff] %v381
          %v383 = vld [vmem:[%s67 + $0x4e8] sm:$0xff]
          %384 = vst [vmem:[%s68 + $0x4e8] sm:$0xff] %v383
          %v385 = vld [vmem:[%s67 + $0x4f0] sm:$0xff]
          %386 = vst [vmem:[%s68 + $0x4f0] sm:$0xff] %v385
          %v387 = vld [vmem:[%s67 + $0x4f8] sm:$0xff]
          %388 = vst [vmem:[%s68 + $0x4f8] sm:$0xff] %v387
          %v389 = vld [vmem:[%s67 + $0x500] sm:$0xff]
          %390 = vst [vmem:[%s68 + $0x500] sm:$0xff] %v389
          %v391 = vld [vmem:[%s67 + $0x508] sm:$0xff]
          %392 = vst [vmem:[%s68 + $0x508] sm:$0xff] %v391
          %v393 = vld [vmem:[%s67 + $0x510] sm:$0xff]
          %394 = vst [vmem:[%s68 + $0x510] sm:$0xff] %v393
          %v395 = vld [vmem:[%s67 + $0x518] sm:$0xff]
          %396 = vst [vmem:[%s68 + $0x518] sm:$0xff] %v395
          %v397 = vld [vmem:[%s67 + $0x520] sm:$0xff]
          %398 = vst [vmem:[%s68 + $0x520] sm:$0xff] %v397
          %v399 = vld [vmem:[%s67 + $0x528] sm:$0xff]
          %400 = vst [vmem:[%s68 + $0x528] sm:$0xff] %v399
          %v401 = vld [vmem:[%s67 + $0x530] sm:$0xff]
          %402 = vst [vmem:[%s68 + $0x530] sm:$0xff] %v401
          %v403 = vld [vmem:[%s67 + $0x538] sm:$0xff]
          %404 = vst [vmem:[%s68 + $0x538] sm:$0xff] %v403
        $region61: #{actor_forward.1} parent=55 // loop_footer
          %s66 = sadd.s32 1, %s62
        $region62: #{actor_forward.1} parent=55 // loop_footer_branch
          %61 = sbr.rel target = $region58
        $region63: #{actor_forward.1} parent=55 // loop_exit
          _
      $region56: #{actor_forward.1} parent=40 // pred_fallthru
        _
      %p405 = pneg %p57
      // Predicated region
      $region64: #{actor_forward.1} parent=40 // pred_check
        _
      $region65: #{actor_forward.1} parent=40 // pred_check_branch
        %407 = sbr.rel (%p57) target = $region67
      $region66: #{actor_forward.1} parent=40 // pred_region
        %s408 = sand.u32 1344, 7
      $region67: #{actor_forward.1} parent=40 // pred_fallthru
        _
    $region41: #{actor_forward.1} parent=1 // pred_fallthru
      _
    // Predicated region
    $region42: #{actor_forward.1} parent=1 // pred_check
      %p41 = pneg %p37
    $region43: #{actor_forward.1} parent=1 // pred_check_branch
      %43 = sbr.rel (%p41) target = $region45
    $region44: #{actor_forward.1} parent=1 // pred_region
      %s44 = sshll.u32 1, 1344
      %s45 = ssub.s32 %s44, 1
      loop: start=0, step=1, limit=1
      $region46: #{actor_forward.1} parent=44 // loop_pre_header
        _
      $region47: #{actor_forward.1} parent=44 // loop_header
        %s47 = sphi 0, %s51
        %p48 = scmp.ge.s32.totalorder %s47, 1
        %s52 = sphi %s6, %s6
        %s53 = sphi [#allocation4], [#allocation4]
      $region48: #{actor_forward.1} parent=44 // loop_header_branch
        %50 = sbr.rel (%p48) target = $region52
      $region49: #{actor_forward.1} parent=44 // loop_body
        %v54 = vld [vmem:[%s52] sm:%s45]
        %55 = vst [vmem:[%s53] sm:%s45] %v54
      $region50: #{actor_forward.1} parent=44 // loop_footer
        %s51 = sadd.s32 1, %s47
      $region51: #{actor_forward.1} parent=44 // loop_footer_branch
        %46 = sbr.rel target = $region47
      $region52: #{actor_forward.1} parent=44 // loop_exit
        _
    $region45: #{actor_forward.1} parent=1 // pred_fallthru
      _
    // Predicated region
    $region68: #{actor_forward.1} parent=1 // pred_check
      _
    $region69: #{actor_forward.1} parent=1 // pred_check_branch
      %411 = sbr.rel (0) target = $region71
    $region70: #{actor_forward.1} parent=1 // pred_region
      %412 = vsyncadd [#allocation6], 21504
    $region71: #{actor_forward.1} parent=1 // pred_fallthru
      _
    %s413 = scalar_lea.sflag [#allocation6], 1
    %p415 = scmp.lt.u32.totalorder 64, 8
    %p416 = pneg %p415
    // Predicated region
    $region72: #{actor_forward.1} parent=1 // pred_check
      _
    $region73: #{actor_forward.1} parent=1 // pred_check_branch
      %418 = sbr.rel (%p415) target = $region75
    $region74: #{actor_forward.1} parent=1 // pred_region
      %s434 = sand.u32 64, 7
      %p435 = scmp.eq.s32.totalorder %s434, 0
      // Predicated region
      $region87: #{actor_forward.1} parent=74 // pred_check
        %p436 = pneg %p435
      $region88: #{actor_forward.1} parent=74 // pred_check_branch
        %438 = sbr.rel (%p436) target = $region90
      $region89: #{actor_forward.1} parent=74 // pred_region
        loop: start=0, step=1, limit=1
        $region91: #{actor_forward.1} parent=89 // loop_pre_header
          _
        $region92: #{actor_forward.1} parent=89 // loop_header
          %s440 = sphi 0, %s444
          %p441 = scmp.ge.s32.totalorder %s440, 1
          %s445 = sphi %s8, %s8
          %s446 = sphi [#allocation5], [#allocation5]
        $region93: #{actor_forward.1} parent=89 // loop_header_branch
          %443 = sbr.rel (%p441) target = $region97
        $region94: #{actor_forward.1} parent=89 // loop_body
          %v447 = vld [vmem:[%s445] sm:$0xff]
          %448 = vst [vmem:[%s446] sm:$0xff] %v447
          %v449 = vld [vmem:[%s445 + $0x8] sm:$0xff]
          %450 = vst [vmem:[%s446 + $0x8] sm:$0xff] %v449
          %v451 = vld [vmem:[%s445 + $0x10] sm:$0xff]
          %452 = vst [vmem:[%s446 + $0x10] sm:$0xff] %v451
          %v453 = vld [vmem:[%s445 + $0x18] sm:$0xff]
          %454 = vst [vmem:[%s446 + $0x18] sm:$0xff] %v453
          %v455 = vld [vmem:[%s445 + $0x20] sm:$0xff]
          %456 = vst [vmem:[%s446 + $0x20] sm:$0xff] %v455
          %v457 = vld [vmem:[%s445 + $0x28] sm:$0xff]
          %458 = vst [vmem:[%s446 + $0x28] sm:$0xff] %v457
          %v459 = vld [vmem:[%s445 + $0x30] sm:$0xff]
          %460 = vst [vmem:[%s446 + $0x30] sm:$0xff] %v459
          %v461 = vld [vmem:[%s445 + $0x38] sm:$0xff]
          %462 = vst [vmem:[%s446 + $0x38] sm:$0xff] %v461
        $region95: #{actor_forward.1} parent=89 // loop_footer
          %s444 = sadd.s32 1, %s440
        $region96: #{actor_forward.1} parent=89 // loop_footer_branch
          %439 = sbr.rel target = $region92
        $region97: #{actor_forward.1} parent=89 // loop_exit
          _
      $region90: #{actor_forward.1} parent=74 // pred_fallthru
        _
      %p463 = pneg %p435
      // Predicated region
      $region98: #{actor_forward.1} parent=74 // pred_check
        _
      $region99: #{actor_forward.1} parent=74 // pred_check_branch
        %465 = sbr.rel (%p435) target = $region101
      $region100: #{actor_forward.1} parent=74 // pred_region
        %s466 = sand.u32 64, 7
      $region101: #{actor_forward.1} parent=74 // pred_fallthru
        _
    $region75: #{actor_forward.1} parent=1 // pred_fallthru
      _
    // Predicated region
    $region76: #{actor_forward.1} parent=1 // pred_check
      %p419 = pneg %p415
    $region77: #{actor_forward.1} parent=1 // pred_check_branch
      %421 = sbr.rel (%p419) target = $region79
    $region78: #{actor_forward.1} parent=1 // pred_region
      %s422 = sshll.u32 1, 64
      %s423 = ssub.s32 %s422, 1
      loop: start=0, step=1, limit=1
      $region80: #{actor_forward.1} parent=78 // loop_pre_header
        _
      $region81: #{actor_forward.1} parent=78 // loop_header
        %s425 = sphi 0, %s429
        %p426 = scmp.ge.s32.totalorder %s425, 1
        %s430 = sphi %s8, %s8
        %s431 = sphi [#allocation5], [#allocation5]
      $region82: #{actor_forward.1} parent=78 // loop_header_branch
        %428 = sbr.rel (%p426) target = $region86
      $region83: #{actor_forward.1} parent=78 // loop_body
        %v432 = vld [vmem:[%s430] sm:%s423]
        %433 = vst [vmem:[%s431] sm:%s423] %v432
      $region84: #{actor_forward.1} parent=78 // loop_footer
        %s429 = sadd.s32 1, %s425
      $region85: #{actor_forward.1} parent=78 // loop_footer_branch
        %424 = sbr.rel target = $region81
      $region86: #{actor_forward.1} parent=78 // loop_exit
        _
    $region79: #{actor_forward.1} parent=1 // pred_fallthru
      _
    // Predicated region
    $region102: #{actor_forward.1} parent=1 // pred_check
      _
    $region103: #{actor_forward.1} parent=1 // pred_check_branch
      %469 = sbr.rel (0) target = $region105
    $region104: #{actor_forward.1} parent=1 // pred_region
      %470 = vsyncadd %s413, 1024
    $region105: #{actor_forward.1} parent=1 // pred_fallthru
      _
    %v471 = vld [vmem:[%s0] sm:$0xff]
    %v472 = vld [vmem:[%s0 + $0x8] sm:$0xff]
    %v473 = vld [vmem:[%s0 + $0x10] sm:$0xff]
    %v474 = vld [vmem:[%s0 + $0x18] sm:$0xff]
    %v475 = vld [vmem:[%s0 + $0x20] sm:$0xff]
    %v476 = vld [vmem:[%s0 + $0x28] sm:$0xff]
    %v477 = vld [vmem:[%s0 + $0x30] sm:$0xff]
    %v478 = vld [vmem:[%s0 + $0x38] sm:$0xff]
    %v479 = vld [vmem:[%s0 + $0x40] sm:$0xff]
    %v480 = vld [vmem:[%s0 + $0x48] sm:$0xff]
    %v481 = vld [vmem:[%s0 + $0x50] sm:$0xff]
    %v482 = vld [vmem:[%s0 + $0x58] sm:$0xff]
    %v483 = vld [vmem:[%s0 + $0x60] sm:$0xff]
    %v484 = vld [vmem:[%s0 + $0x68] sm:$0xff]
    %v485 = vld [vmem:[%s0 + $0x70] sm:$0xff]
    %v486 = vld [vmem:[%s0 + $0x78] sm:$0xff]
    %v487 = vld [vmem:[%s0 + $0x80] sm:$0xff]
    %v488 = vld [vmem:[%s0 + $0x88] sm:$0xff]
    %v489 = vld [vmem:[%s0 + $0x90] sm:$0xff]
    %v490 = vld [vmem:[%s0 + $0x98] sm:$0xff]
    %v491 = vld [vmem:[%s0 + $0xa0] sm:$0xff]
    %v492 = vld [vmem:[%s0 + $0xa8] sm:$0xff]
    %v493 = vld [vmem:[%s0 + $0xb0] sm:$0xff]
    %v494 = vld [vmem:[%s0 + $0xb8] sm:$0xff]
    %v495 = vld [vmem:[%s0 + $0xc0] sm:$0xff]
    %v496 = vld [vmem:[%s0 + $0xc8] sm:$0xff]
    %v497 = vld [vmem:[%s0 + $0xd0] sm:$0xff]
    %v498 = vld [vmem:[%s0 + $0xd8] sm:$0xff]
    %v499 = vld [vmem:[%s0 + $0xe0] sm:$0xff]
    %v500 = vld [vmem:[%s0 + $0xe8] sm:$0xff]
    %v501 = vld [vmem:[%s0 + $0xf0] sm:$0xff]
    %v502 = vld [vmem:[%s0 + $0xf8] sm:$0xff]
    %v503 = vld [vmem:[%s1] sm:$0xff]
    %v504 = vld [vmem:[%s1 + $0x8] sm:$0xff]
    %v505 = vld [vmem:[%s1 + $0x10] sm:$0xff]
    %v506 = vld [vmem:[%s1 + $0x18] sm:$0xff]
    %v507 = vld [vmem:[%s1 + $0x20] sm:$0xff]
    %v508 = vld [vmem:[%s1 + $0x28] sm:$0xff]
    %v509 = vld [vmem:[%s1 + $0x30] sm:$0xff]
    %v510 = vld [vmem:[%s1 + $0x38] sm:$0xff]
    %v511 = vld [vmem:[%s1 + $0x40] sm:$0xff]
    %v512 = vld [vmem:[%s1 + $0x48] sm:$0xff]
    %v513 = vld [vmem:[%s1 + $0x50] sm:$0xff]
    %v514 = vld [vmem:[%s1 + $0x58] sm:$0xff]
    %v515 = vld [vmem:[%s1 + $0x60] sm:$0xff]
    %v516 = vld [vmem:[%s1 + $0x68] sm:$0xff]
    %v517 = vld [vmem:[%s1 + $0x70] sm:$0xff]
    %v518 = vld [vmem:[%s1 + $0x78] sm:$0xff]
    %v519 = vld [vmem:[%s1 + $0x80] sm:$0xff]
    %v520 = vld [vmem:[%s1 + $0x88] sm:$0xff]
    %v521 = vld [vmem:[%s1 + $0x90] sm:$0xff]
    %v522 = vld [vmem:[%s1 + $0x98] sm:$0xff]
    %v523 = vld [vmem:[%s1 + $0xa0] sm:$0xff]
    %v524 = vld [vmem:[%s1 + $0xa8] sm:$0xff]
    %v525 = vld [vmem:[%s1 + $0xb0] sm:$0xff]
    %v526 = vld [vmem:[%s1 + $0xb8] sm:$0xff]
    %v527 = vld [vmem:[%s1 + $0xc0] sm:$0xff]
    %v528 = vld [vmem:[%s1 + $0xc8] sm:$0xff]
    %v529 = vld [vmem:[%s1 + $0xd0] sm:$0xff]
    %v530 = vld [vmem:[%s1 + $0xd8] sm:$0xff]
    %v531 = vld [vmem:[%s1 + $0xe0] sm:$0xff]
    %v532 = vld [vmem:[%s1 + $0xe8] sm:$0xff]
    %v533 = vld [vmem:[%s1 + $0xf0] sm:$0xff]
    %v534 = vld [vmem:[%s1 + $0xf8] sm:$0xff]
    %v535 = vld [vmem:[%s1 + $0x100] sm:$0xff]
    %v536 = vld [vmem:[%s1 + $0x108] sm:$0xff]
    %v537 = vld [vmem:[%s1 + $0x110] sm:$0xff]
    %v538 = vld [vmem:[%s1 + $0x118] sm:$0xff]
    %v539 = vld [vmem:[%s1 + $0x120] sm:$0xff]
    %v540 = vld [vmem:[%s1 + $0x128] sm:$0xff]
    %v541 = vld [vmem:[%s1 + $0x130] sm:$0xff]
    %v542 = vld [vmem:[%s1 + $0x138] sm:$0xff]
    %v543 = vld [vmem:[%s1 + $0x140] sm:$0xff]
    %v544 = vld [vmem:[%s1 + $0x148] sm:$0xff]
    %v545 = vld [vmem:[%s1 + $0x150] sm:$0xff]
    %v546 = vld [vmem:[%s1 + $0x158] sm:$0xff]
    %v547 = vld [vmem:[%s1 + $0x160] sm:$0xff]
    %v548 = vld [vmem:[%s1 + $0x168] sm:$0xff]
    %v549 = vld [vmem:[%s1 + $0x170] sm:$0xff]
    %v550 = vld [vmem:[%s1 + $0x178] sm:$0xff]
    %v551 = vld [vmem:[%s1 + $0x180] sm:$0xff]
    %v552 = vld [vmem:[%s1 + $0x188] sm:$0xff]
    %v553 = vld [vmem:[%s1 + $0x190] sm:$0xff]
    %v554 = vld [vmem:[%s1 + $0x198] sm:$0xff]
    %v555 = vld [vmem:[%s1 + $0x1a0] sm:$0xff]
    %v556 = vld [vmem:[%s1 + $0x1a8] sm:$0xff]
    %v557 = vld [vmem:[%s1 + $0x1b0] sm:$0xff]
    %v558 = vld [vmem:[%s1 + $0x1b8] sm:$0xff]
    %v559 = vld [vmem:[%s1 + $0x1c0] sm:$0xff]
    %v560 = vld [vmem:[%s1 + $0x1c8] sm:$0xff]
    %v561 = vld [vmem:[%s1 + $0x1d0] sm:$0xff]
    %v562 = vld [vmem:[%s1 + $0x1d8] sm:$0xff]
    %v563 = vld [vmem:[%s1 + $0x1e0] sm:$0xff]
    %v564 = vld [vmem:[%s1 + $0x1e8] sm:$0xff]
    %v565 = vld [vmem:[%s1 + $0x1f0] sm:$0xff]
    %v566 = vld [vmem:[%s1 + $0x1f8] sm:$0xff]
    %v567 = vld [vmem:[%s2] sm:$0xff]
    %v568 = vld [vmem:[%s2 + $0x8] sm:$0xff]
    %v569 = vld [vmem:[%s2 + $0x10] sm:$0xff]
    %v570 = vld [vmem:[%s2 + $0x18] sm:$0xff]
    %v571 = vld [vmem:[%s2 + $0x20] sm:$0xff]
    %v572 = vld [vmem:[%s2 + $0x28] sm:$0xff]
    %v573 = vld [vmem:[%s2 + $0x30] sm:$0xff]
    %v574 = vld [vmem:[%s2 + $0x38] sm:$0xff]
    %v575 = vld [vmem:[%s2 + $0x40] sm:$0xff]
    %v576 = vld [vmem:[%s2 + $0x48] sm:$0xff]
    %v577 = vld [vmem:[%s2 + $0x50] sm:$0xff]
    %v578 = vld [vmem:[%s2 + $0x58] sm:$0xff]
    %v579 = vld [vmem:[%s2 + $0x60] sm:$0xff]
    %v580 = vld [vmem:[%s2 + $0x68] sm:$0xff]
    %v581 = vld [vmem:[%s2 + $0x70] sm:$0xff]
    %v582 = vld [vmem:[%s2 + $0x78] sm:$0xff]
    %v583 = vld [vmem:[%s2 + $0x80] sm:$0xff]
    %v584 = vld [vmem:[%s2 + $0x88] sm:$0xff]
    %v585 = vld [vmem:[%s2 + $0x90] sm:$0xff]
    %v586 = vld [vmem:[%s2 + $0x98] sm:$0xff]
    %v587 = vld [vmem:[%s2 + $0xa0] sm:$0xff]
    %v588 = vld [vmem:[%s2 + $0xa8] sm:$0xff]
    %v589 = vld [vmem:[%s2 + $0xb0] sm:$0xff]
    %v590 = vld [vmem:[%s2 + $0xb8] sm:$0xff]
    %v591 = vld [vmem:[%s2 + $0xc0] sm:$0xff]
    %v592 = vld [vmem:[%s2 + $0xc8] sm:$0xff]
    %v593 = vld [vmem:[%s2 + $0xd0] sm:$0xff]
    %v594 = vld [vmem:[%s2 + $0xd8] sm:$0xff]
    %v595 = vld [vmem:[%s2 + $0xe0] sm:$0xff]
    %v596 = vld [vmem:[%s2 + $0xe8] sm:$0xff]
    %v597 = vld [vmem:[%s2 + $0xf0] sm:$0xff]
    %v598 = vld [vmem:[%s2 + $0xf8] sm:$0xff]
    %v599 = vld [vmem:[%s3] sm:$0x1]
    %v600 = vlaneseq
    %v601 = vshrl.u32 %v600, 7
    %v602 = vsub.s32 0, %v601
    %v603 = vrot.slane %v599, %v602
    %604 = vmatprep.subr.mxu0 0.0
    %605 = vmatpush1.msra.mxu0 %v582
    %606 = vmatprep.subr.mxu0 0.0
    %607 = vmatpush1.msra.mxu0 %v581
    %608 = vmatprep.subr.mxu0 0.0
    %609 = vmatpush1.msra.mxu0 %v580
    %610 = vmatprep.subr.mxu0 0.0
    %611 = vmatpush1.msra.mxu0 %v579
    %612 = vmatprep.subr.mxu0 0.0
    %613 = vmatpush1.msra.mxu0 %v578
    %614 = vmatprep.subr.mxu0 0.0
    %615 = vmatpush1.msra.mxu0 %v577
    %616 = vmatprep.subr.mxu0 0.0
    %617 = vmatpush1.msra.mxu0 %v576
    %618 = vmatprep.subr.mxu0 0.0
    %619 = vmatpush1.msra.mxu0 %v575
    %620 = vmatprep.subr.mxu0 0.0
    %621 = vmatpush1.msra.mxu0 %v574
    %622 = vmatprep.subr.mxu0 0.0
    %623 = vmatpush1.msra.mxu0 %v573
    %624 = vmatprep.subr.mxu0 0.0
    %625 = vmatpush1.msra.mxu0 %v572
    %626 = vmatprep.subr.mxu0 0.0
    %627 = vmatpush1.msra.mxu0 %v571
    %628 = vmatprep.subr.mxu0 0.0
    %629 = vmatpush1.msra.mxu0 %v570
    %630 = vmatprep.subr.mxu0 0.0
    %631 = vmatpush1.msra.mxu0 %v569
    %632 = vmatprep.subr.mxu0 0.0
    %633 = vmatpush1.msra.mxu0 %v568
    %634 = vmatprep.subr.mxu0 0.0
    %635 = vmatpush1.msra.mxu0 %v567
    %636 = vmatprep.subr.mxu0 0.0
    %637 = vmatpush2.msra.mxu0 %v598
    %638 = vmatprep.subr.mxu0 0.0
    %639 = vmatpush2.msra.mxu0 %v597
    %640 = vmatprep.subr.mxu0 0.0
    %641 = vmatpush2.msra.mxu0 %v596
    %642 = vmatprep.subr.mxu0 0.0
    %643 = vmatpush2.msra.mxu0 %v595
    %644 = vmatprep.subr.mxu0 0.0
    %645 = vmatpush2.msra.mxu0 %v594
    %646 = vmatprep.subr.mxu0 0.0
    %647 = vmatpush2.msra.mxu0 %v593
    %648 = vmatprep.subr.mxu0 0.0
    %649 = vmatpush2.msra.mxu0 %v592
    %650 = vmatprep.subr.mxu0 0.0
    %651 = vmatpush2.msra.mxu0 %v591
    %652 = vmatprep.subr.mxu0 0.0
    %653 = vmatpush2.msra.mxu0 %v590
    %654 = vmatprep.subr.mxu0 0.0
    %655 = vmatpush2.msra.mxu0 %v589
    %656 = vmatprep.subr.mxu0 0.0
    %657 = vmatpush2.msra.mxu0 %v588
    %658 = vmatprep.subr.mxu0 0.0
    %659 = vmatpush2.msra.mxu0 %v587
    %660 = vmatprep.subr.mxu0 0.0
    %661 = vmatpush2.msra.mxu0 %v586
    %662 = vmatprep.subr.mxu0 0.0
    %663 = vmatpush2.msra.mxu0 %v585
    %664 = vmatprep.subr.mxu0 0.0
    %665 = vmatpush2.msra.mxu0 %v584
    %666 = vmatprep.subr.mxu0 0.0
    %667 = vmatpush2.msra.mxu0 %v583
    %668 = vmatprep.mubr.f32.mxu0 %v504
    %669 = vmatmul.mubr.f32.gmra.mxu0 %v503
    %v670 = vpop.f32.mrf.mxu0
    %v671 = vadd.f32 %v603, %v670
    %v672 = vpop.f32.mrf.mxu0
    %673 = vmatprep.mubr.f32.mxu0 %v506
    %674 = vmatmul.mubr.f32.gmra.mxu0 %v505
    %v675 = vpop.f32.mrf.mxu0
    %v676 = vadd.f32 %v603, %v675
    %v677 = vpop.f32.mrf.mxu0
    %678 = vmatprep.mubr.f32.mxu0 %v508
    %679 = vmatmul.mubr.f32.gmra.mxu0 %v507
    %v680 = vpop.f32.mrf.mxu0
    %v681 = vadd.f32 %v603, %v680
    %v682 = vpop.f32.mrf.mxu0
    %683 = vmatprep.mubr.f32.mxu0 %v510
    %684 = vmatmul.mubr.f32.gmra.mxu0 %v509
    %v685 = vpop.f32.mrf.mxu0
    %v686 = vadd.f32 %v603, %v685
    %v687 = vpop.f32.mrf.mxu0
    %688 = vmatprep.mubr.f32.mxu0 %v512
    %689 = vmatmul.mubr.f32.gmra.mxu0 %v511
    %v690 = vpop.f32.mrf.mxu0
    %v691 = vadd.f32 %v603, %v690
    %v692 = vpop.f32.mrf.mxu0
    %693 = vmatprep.mubr.f32.mxu0 %v514
    %694 = vmatmul.mubr.f32.gmra.mxu0 %v513
    %v695 = vpop.f32.mrf.mxu0
    %v696 = vadd.f32 %v603, %v695
    %v697 = vpop.f32.mrf.mxu0
    %698 = vmatprep.mubr.f32.mxu0 %v516
    %699 = vmatmul.mubr.f32.gmra.mxu0 %v515
    %v700 = vpop.f32.mrf.mxu0
    %v701 = vadd.f32 %v603, %v700
    %v702 = vpop.f32.mrf.mxu0
    %703 = vmatprep.mubr.f32.mxu0 %v518
    %704 = vmatmul.mubr.f32.gmra.mxu0 %v517
    %v705 = vpop.f32.mrf.mxu0
    %v706 = vadd.f32 %v603, %v705
    %v707 = vpop.f32.mrf.mxu0
    %708 = vmatprep.mubr.f32.mxu0 %v520
    %709 = vmatmul.mubr.f32.gmra.mxu0 %v519
    %v710 = vpop.f32.mrf.mxu0
    %v711 = vadd.f32 %v603, %v710
    %v712 = vpop.f32.mrf.mxu0
    %713 = vmatprep.mubr.f32.mxu0 %v522
    %714 = vmatmul.mubr.f32.gmra.mxu0 %v521
    %v715 = vpop.f32.mrf.mxu0
    %v716 = vadd.f32 %v603, %v715
    %v717 = vpop.f32.mrf.mxu0
    %718 = vmatprep.mubr.f32.mxu0 %v524
    %719 = vmatmul.mubr.f32.gmra.mxu0 %v523
    %v720 = vpop.f32.mrf.mxu0
    %v721 = vadd.f32 %v603, %v720
    %v722 = vpop.f32.mrf.mxu0
    %723 = vmatprep.mubr.f32.mxu0 %v526
    %724 = vmatmul.mubr.f32.gmra.mxu0 %v525
    %v725 = vpop.f32.mrf.mxu0
    %v726 = vadd.f32 %v603, %v725
    %v727 = vpop.f32.mrf.mxu0
    %728 = vmatprep.mubr.f32.mxu0 %v528
    %729 = vmatmul.mubr.f32.gmra.mxu0 %v527
    %v730 = vpop.f32.mrf.mxu0
    %v731 = vadd.f32 %v603, %v730
    %v732 = vpop.f32.mrf.mxu0
    %733 = vmatprep.mubr.f32.mxu0 %v530
    %734 = vmatmul.mubr.f32.gmra.mxu0 %v529
    %v735 = vpop.f32.mrf.mxu0
    %v736 = vadd.f32 %v603, %v735
    %v737 = vpop.f32.mrf.mxu0
    %738 = vmatprep.mubr.f32.mxu0 %v532
    %739 = vmatmul.mubr.f32.gmra.mxu0 %v531
    %v740 = vpop.f32.mrf.mxu0
    %v741 = vadd.f32 %v603, %v740
    %v742 = vpop.f32.mrf.mxu0
    %743 = vmatprep.mubr.f32.mxu0 %v534
    %744 = vmatmul.mubr.f32.gmra.mxu0 %v533
    %v745 = vpop.f32.mrf.mxu0
    %v746 = vadd.f32 %v603, %v745
    %v747 = vpop.f32.mrf.mxu0
    %748 = vmatprep.mubr.f32.mxu0 %v536
    %749 = vmatmul.mubr.f32.gmra.mxu0 %v535
    %v750 = vpop.f32.mrf.mxu0
    %v751 = vadd.f32 %v603, %v750
    %v752 = vpop.f32.mrf.mxu0
    %753 = vmatprep.mubr.f32.mxu0 %v538
    %754 = vmatmul.mubr.f32.gmra.mxu0 %v537
    %v755 = vpop.f32.mrf.mxu0
    %v756 = vadd.f32 %v603, %v755
    %v757 = vpop.f32.mrf.mxu0
    %758 = vmatprep.mubr.f32.mxu0 %v540
    %759 = vmatmul.mubr.f32.gmra.mxu0 %v539
    %v760 = vpop.f32.mrf.mxu0
    %v761 = vadd.f32 %v603, %v760
    %v762 = vpop.f32.mrf.mxu0
    %763 = vmatprep.mubr.f32.mxu0 %v542
    %764 = vmatmul.mubr.f32.gmra.mxu0 %v541
    %v765 = vpop.f32.mrf.mxu0
    %v766 = vadd.f32 %v603, %v765
    %v767 = vpop.f32.mrf.mxu0
    %768 = vmatprep.mubr.f32.mxu0 %v544
    %769 = vmatmul.mubr.f32.gmra.mxu0 %v543
    %v770 = vpop.f32.mrf.mxu0
    %v771 = vadd.f32 %v603, %v770
    %v772 = vpop.f32.mrf.mxu0
    %773 = vmatprep.mubr.f32.mxu0 %v546
    %774 = vmatmul.mubr.f32.gmra.mxu0 %v545
    %v775 = vpop.f32.mrf.mxu0
    %v776 = vadd.f32 %v603, %v775
    %v777 = vpop.f32.mrf.mxu0
    %778 = vmatprep.mubr.f32.mxu0 %v548
    %779 = vmatmul.mubr.f32.gmra.mxu0 %v547
    %v780 = vpop.f32.mrf.mxu0
    %v781 = vadd.f32 %v603, %v780
    %v782 = vpop.f32.mrf.mxu0
    %783 = vmatprep.mubr.f32.mxu0 %v550
    %784 = vmatmul.mubr.f32.gmra.mxu0 %v549
    %v785 = vpop.f32.mrf.mxu0
    %v786 = vadd.f32 %v603, %v785
    %v787 = vpop.f32.mrf.mxu0
    %788 = vmatprep.mubr.f32.mxu0 %v552
    %789 = vmatmul.mubr.f32.gmra.mxu0 %v551
    %v790 = vpop.f32.mrf.mxu0
    %v791 = vadd.f32 %v603, %v790
    %v792 = vpop.f32.mrf.mxu0
    %793 = vmatprep.mubr.f32.mxu0 %v554
    %794 = vmatmul.mubr.f32.gmra.mxu0 %v553
    %v795 = vpop.f32.mrf.mxu0
    %v796 = vadd.f32 %v603, %v795
    %v797 = vpop.f32.mrf.mxu0
    %798 = vmatprep.mubr.f32.mxu0 %v556
    %799 = vmatmul.mubr.f32.gmra.mxu0 %v555
    %v800 = vpop.f32.mrf.mxu0
    %v801 = vadd.f32 %v603, %v800
    %v802 = vpop.f32.mrf.mxu0
    %803 = vmatprep.mubr.f32.mxu0 %v558
    %804 = vmatmul.mubr.f32.gmra.mxu0 %v557
    %v805 = vpop.f32.mrf.mxu0
    %v806 = vadd.f32 %v603, %v805
    %v807 = vpop.f32.mrf.mxu0
    %808 = vmatprep.mubr.f32.mxu0 %v560
    %809 = vmatmul.mubr.f32.gmra.mxu0 %v559
    %v810 = vpop.f32.mrf.mxu0
    %v811 = vadd.f32 %v603, %v810
    %v812 = vpop.f32.mrf.mxu0
    %813 = vmatprep.mubr.f32.mxu0 %v562
    %814 = vmatmul.mubr.f32.gmra.mxu0 %v561
    %v815 = vpop.f32.mrf.mxu0
    %v816 = vadd.f32 %v603, %v815
    %v817 = vpop.f32.mrf.mxu0
    %818 = vmatprep.mubr.f32.mxu0 %v564
    %819 = vmatmul.mubr.f32.gmra.mxu0 %v563
    %v820 = vpop.f32.mrf.mxu0
    %v821 = vadd.f32 %v603, %v820
    %v822 = vpop.f32.mrf.mxu0
    %823 = vmatprep.mubr.f32.mxu0 %v566
    %824 = vmatmul.mubr.f32.gmra.mxu0 %v565
    %v825 = vpop.f32.mrf.mxu0
    %v826 = vadd.f32 %v603, %v825
    %v827 = vpop.f32.mrf.mxu0
    %828 = vdwg.mxu0
    %v829 = vmax.f32 %v671, 0.0
    %v830 = vmax.f32 %v676, 0.0
    %v831 = vmax.f32 %v681, 0.0
    %v832 = vmax.f32 %v686, 0.0
    %v833 = vmax.f32 %v691, 0.0
    %v834 = vmax.f32 %v696, 0.0
    %v835 = vmax.f32 %v701, 0.0
    %v836 = vmax.f32 %v706, 0.0
    %v837 = vmax.f32 %v711, 0.0
    %v838 = vmax.f32 %v716, 0.0
    %v839 = vmax.f32 %v721, 0.0
    %v840 = vmax.f32 %v726, 0.0
    %v841 = vmax.f32 %v731, 0.0
    %v842 = vmax.f32 %v736, 0.0
    %v843 = vmax.f32 %v741, 0.0
    %v844 = vmax.f32 %v746, 0.0
    %v845 = vmax.f32 %v751, 0.0
    %v846 = vmax.f32 %v756, 0.0
    %v847 = vmax.f32 %v761, 0.0
    %v848 = vmax.f32 %v766, 0.0
    %v849 = vmax.f32 %v771, 0.0
    %v850 = vmax.f32 %v776, 0.0
    %v851 = vmax.f32 %v781, 0.0
    %v852 = vmax.f32 %v786, 0.0
    %v853 = vmax.f32 %v791, 0.0
    %v854 = vmax.f32 %v796, 0.0
    %v855 = vmax.f32 %v801, 0.0
    %v856 = vmax.f32 %v806, 0.0
    %v857 = vmax.f32 %v811, 0.0
    %v858 = vmax.f32 %v816, 0.0
    %v859 = vmax.f32 %v821, 0.0
    %v860 = vmax.f32 %v826, 0.0
    %862 = vset.pattern.permute.xlu0 0
    %863 = vperm.xlu0 %862, %v471
    %v864 = vpop.permute.xlu0 %863
    %867 = vset.pattern.permute.xlu0 0
    %868 = vperm.xlu0 %867, %v472
    %v869 = vpop.permute.xlu0 %868
    %872 = vset.pattern.permute.xlu0 0
    %873 = vperm.xlu0 %872, %v473
    %v874 = vpop.permute.xlu0 %873
    %877 = vset.pattern.permute.xlu0 0
    %878 = vperm.xlu0 %877, %v474
    %v879 = vpop.permute.xlu0 %878
    %882 = vset.pattern.permute.xlu0 0
    %883 = vperm.xlu0 %882, %v475
    %v884 = vpop.permute.xlu0 %883
    %887 = vset.pattern.permute.xlu0 0
    %888 = vperm.xlu0 %887, %v476
    %v889 = vpop.permute.xlu0 %888
    %892 = vset.pattern.permute.xlu0 0
    %893 = vperm.xlu0 %892, %v477
    %v894 = vpop.permute.xlu0 %893
    %897 = vset.pattern.permute.xlu0 0
    %898 = vperm.xlu0 %897, %v478
    %v899 = vpop.permute.xlu0 %898
    %902 = vset.pattern.permute.xlu0 0
    %903 = vperm.xlu0 %902, %v479
    %v904 = vpop.permute.xlu0 %903
    %907 = vset.pattern.permute.xlu0 0
    %908 = vperm.xlu0 %907, %v480
    %v909 = vpop.permute.xlu0 %908
    %912 = vset.pattern.permute.xlu0 0
    %913 = vperm.xlu0 %912, %v481
    %v914 = vpop.permute.xlu0 %913
    %917 = vset.pattern.permute.xlu0 0
    %918 = vperm.xlu0 %917, %v482
    %v919 = vpop.permute.xlu0 %918
    %922 = vset.pattern.permute.xlu0 0
    %923 = vperm.xlu0 %922, %v483
    %v924 = vpop.permute.xlu0 %923
    %927 = vset.pattern.permute.xlu0 0
    %928 = vperm.xlu0 %927, %v484
    %v929 = vpop.permute.xlu0 %928
    %932 = vset.pattern.permute.xlu0 0
    %933 = vperm.xlu0 %932, %v485
    %v934 = vpop.permute.xlu0 %933
    %937 = vset.pattern.permute.xlu0 0
    %938 = vperm.xlu0 %937, %v486
    %v939 = vpop.permute.xlu0 %938
    %942 = vset.pattern.permute.xlu0 0
    %943 = vperm.xlu0 %942, %v487
    %v944 = vpop.permute.xlu0 %943
    %947 = vset.pattern.permute.xlu0 0
    %948 = vperm.xlu0 %947, %v488
    %v949 = vpop.permute.xlu0 %948
    %952 = vset.pattern.permute.xlu0 0
    %953 = vperm.xlu0 %952, %v489
    %v954 = vpop.permute.xlu0 %953
    %957 = vset.pattern.permute.xlu0 0
    %958 = vperm.xlu0 %957, %v490
    %v959 = vpop.permute.xlu0 %958
    %962 = vset.pattern.permute.xlu0 0
    %963 = vperm.xlu0 %962, %v491
    %v964 = vpop.permute.xlu0 %963
    %967 = vset.pattern.permute.xlu0 0
    %968 = vperm.xlu0 %967, %v492
    %v969 = vpop.permute.xlu0 %968
    %972 = vset.pattern.permute.xlu0 0
    %973 = vperm.xlu0 %972, %v493
    %v974 = vpop.permute.xlu0 %973
    %977 = vset.pattern.permute.xlu0 0
    %978 = vperm.xlu0 %977, %v494
    %v979 = vpop.permute.xlu0 %978
    %982 = vset.pattern.permute.xlu0 0
    %983 = vperm.xlu0 %982, %v495
    %v984 = vpop.permute.xlu0 %983
    %987 = vset.pattern.permute.xlu0 0
    %988 = vperm.xlu0 %987, %v496
    %v989 = vpop.permute.xlu0 %988
    %992 = vset.pattern.permute.xlu0 0
    %993 = vperm.xlu0 %992, %v497
    %v994 = vpop.permute.xlu0 %993
    %997 = vset.pattern.permute.xlu0 0
    %998 = vperm.xlu0 %997, %v498
    %v999 = vpop.permute.xlu0 %998
    %1002 = vset.pattern.permute.xlu0 0
    %1003 = vperm.xlu0 %1002, %v499
    %v1004 = vpop.permute.xlu0 %1003
    %1007 = vset.pattern.permute.xlu0 0
    %1008 = vperm.xlu0 %1007, %v500
    %v1009 = vpop.permute.xlu0 %1008
    %1012 = vset.pattern.permute.xlu0 0
    %1013 = vperm.xlu0 %1012, %v501
    %v1014 = vpop.permute.xlu0 %1013
    %1017 = vset.pattern.permute.xlu0 0
    %1018 = vperm.xlu0 %1017, %v502
    %v1019 = vpop.permute.xlu0 %1018
    %v1021 = vmul.f32 %v829, %v864
    %v1022 = vmul.f32 %v830, %v869
    %v1023 = vmul.f32 %v831, %v874
    %v1024 = vmul.f32 %v832, %v879
    %v1025 = vmul.f32 %v833, %v884
    %v1026 = vmul.f32 %v834, %v889
    %v1027 = vmul.f32 %v835, %v894
    %v1028 = vmul.f32 %v836, %v899
    %v1029 = vmul.f32 %v837, %v904
    %v1030 = vmul.f32 %v838, %v909
    %v1031 = vmul.f32 %v839, %v914
    %v1032 = vmul.f32 %v840, %v919
    %v1033 = vmul.f32 %v841, %v924
    %v1034 = vmul.f32 %v842, %v929
    %v1035 = vmul.f32 %v843, %v934
    %v1036 = vmul.f32 %v844, %v939
    %v1037 = vmul.f32 %v845, %v944
    %v1038 = vmul.f32 %v846, %v949
    %v1039 = vmul.f32 %v847, %v954
    %v1040 = vmul.f32 %v848, %v959
    %v1041 = vmul.f32 %v849, %v964
    %v1042 = vmul.f32 %v850, %v969
    %v1043 = vmul.f32 %v851, %v974
    %v1044 = vmul.f32 %v852, %v979
    %v1045 = vmul.f32 %v853, %v984
    %v1046 = vmul.f32 %v854, %v989
    %v1047 = vmul.f32 %v855, %v994
    %v1048 = vmul.f32 %v856, %v999
    %v1049 = vmul.f32 %v857, %v1004
    %v1050 = vmul.f32 %v858, %v1009
    %v1051 = vmul.f32 %v859, %v1014
    %v1052 = vmul.f32 %v860, %v1019
    %vm1053 = vcmask 130048
    %v1054 = vsel %vm1053, %v1021, 0.0
    %v1055 = vsel %vm1053, %v1022, 0.0
    %v1056 = vadd.f32 %v1054, %v1055
    %v1057 = vsel %vm1053, %v1023, 0.0
    %v1058 = vadd.f32 %v1056, %v1057
    %v1059 = vsel %vm1053, %v1024, 0.0
    %v1060 = vadd.f32 %v1058, %v1059
    %v1061 = vsel %vm1053, %v1025, 0.0
    %v1062 = vadd.f32 %v1060, %v1061
    %v1063 = vsel %vm1053, %v1026, 0.0
    %v1064 = vadd.f32 %v1062, %v1063
    %v1065 = vsel %vm1053, %v1027, 0.0
    %v1066 = vadd.f32 %v1064, %v1065
    %v1067 = vsel %vm1053, %v1028, 0.0
    %v1068 = vadd.f32 %v1066, %v1067
    %v1069 = vsel %vm1053, %v1029, 0.0
    %v1070 = vadd.f32 %v1068, %v1069
    %v1071 = vsel %vm1053, %v1030, 0.0
    %v1072 = vadd.f32 %v1070, %v1071
    %v1073 = vsel %vm1053, %v1031, 0.0
    %v1074 = vadd.f32 %v1072, %v1073
    %v1075 = vsel %vm1053, %v1032, 0.0
    %v1076 = vadd.f32 %v1074, %v1075
    %v1077 = vsel %vm1053, %v1033, 0.0
    %v1078 = vadd.f32 %v1076, %v1077
    %v1079 = vsel %vm1053, %v1034, 0.0
    %v1080 = vadd.f32 %v1078, %v1079
    %v1081 = vsel %vm1053, %v1035, 0.0
    %v1082 = vadd.f32 %v1080, %v1081
    %v1083 = vsel %vm1053, %v1036, 0.0
    %v1084 = vadd.f32 %v1082, %v1083
    %v1085 = vsel %vm1053, %v1037, 0.0
    %v1086 = vadd.f32 %v1084, %v1085
    %v1087 = vsel %vm1053, %v1038, 0.0
    %v1088 = vadd.f32 %v1086, %v1087
    %v1089 = vsel %vm1053, %v1039, 0.0
    %v1090 = vadd.f32 %v1088, %v1089
    %v1091 = vsel %vm1053, %v1040, 0.0
    %v1092 = vadd.f32 %v1090, %v1091
    %v1093 = vsel %vm1053, %v1041, 0.0
    %v1094 = vadd.f32 %v1092, %v1093
    %v1095 = vsel %vm1053, %v1042, 0.0
    %v1096 = vadd.f32 %v1094, %v1095
    %v1097 = vsel %vm1053, %v1043, 0.0
    %v1098 = vadd.f32 %v1096, %v1097
    %v1099 = vsel %vm1053, %v1044, 0.0
    %v1100 = vadd.f32 %v1098, %v1099
    %v1101 = vsel %vm1053, %v1045, 0.0
    %v1102 = vadd.f32 %v1100, %v1101
    %v1103 = vsel %vm1053, %v1046, 0.0
    %v1104 = vadd.f32 %v1102, %v1103
    %v1105 = vsel %vm1053, %v1047, 0.0
    %v1106 = vadd.f32 %v1104, %v1105
    %v1107 = vsel %vm1053, %v1048, 0.0
    %v1108 = vadd.f32 %v1106, %v1107
    %v1109 = vsel %vm1053, %v1049, 0.0
    %v1110 = vadd.f32 %v1108, %v1109
    %v1111 = vsel %vm1053, %v1050, 0.0
    %v1112 = vadd.f32 %v1110, %v1111
    %v1113 = vsel %vm1053, %v1051, 0.0
    %v1114 = vadd.f32 %v1112, %v1113
    %v1115 = vsel %vm1053, %v1052, 0.0
    %v1116 = vadd.f32 %v1114, %v1115
    %v1117 = vrot.slane %v1116, 4
    %v1118 = vadd.f32 %v1116, %v1117
    %v1119 = vrot.slane %v1118, 2
    %v1120 = vadd.f32 %v1118, %v1119
    %v1121 = vrot.slane %v1120, 1
    %v1122 = vadd.f32 %v1120, %v1121
    %v1123 = vmul.f32 %v1122, 0.003968254
    %v1124 = vsub.f32 %v829, %v1123
    %v1125 = vsub.f32 %v830, %v1123
    %v1126 = vsub.f32 %v831, %v1123
    %v1127 = vsub.f32 %v832, %v1123
    %v1128 = vsub.f32 %v833, %v1123
    %v1129 = vsub.f32 %v834, %v1123
    %v1130 = vsub.f32 %v835, %v1123
    %v1131 = vsub.f32 %v836, %v1123
    %v1132 = vsub.f32 %v837, %v1123
    %v1133 = vsub.f32 %v838, %v1123
    %v1134 = vsub.f32 %v839, %v1123
    %v1135 = vsub.f32 %v840, %v1123
    %v1136 = vsub.f32 %v841, %v1123
    %v1137 = vsub.f32 %v842, %v1123
    %v1138 = vsub.f32 %v843, %v1123
    %v1139 = vsub.f32 %v844, %v1123
    %v1140 = vsub.f32 %v845, %v1123
    %v1141 = vsub.f32 %v846, %v1123
    %v1142 = vsub.f32 %v847, %v1123
    %v1143 = vsub.f32 %v848, %v1123
    %v1144 = vsub.f32 %v849, %v1123
    %v1145 = vsub.f32 %v850, %v1123
    %v1146 = vsub.f32 %v851, %v1123
    %v1147 = vsub.f32 %v852, %v1123
    %v1148 = vsub.f32 %v853, %v1123
    %v1149 = vsub.f32 %v854, %v1123
    %v1150 = vsub.f32 %v855, %v1123
    %v1151 = vsub.f32 %v856, %v1123
    %v1152 = vsub.f32 %v857, %v1123
    %v1153 = vsub.f32 %v858, %v1123
    %v1154 = vsub.f32 %v859, %v1123
    %v1155 = vsub.f32 %v860, %v1123
    %v1156 = vmul.f32 %v1124, %v864
    %v1157 = vmul.f32 %v1125, %v869
    %v1158 = vmul.f32 %v1126, %v874
    %v1159 = vmul.f32 %v1127, %v879
    %v1160 = vmul.f32 %v1128, %v884
    %v1161 = vmul.f32 %v1129, %v889
    %v1162 = vmul.f32 %v1130, %v894
    %v1163 = vmul.f32 %v1131, %v899
    %v1164 = vmul.f32 %v1132, %v904
    %v1165 = vmul.f32 %v1133, %v909
    %v1166 = vmul.f32 %v1134, %v914
    %v1167 = vmul.f32 %v1135, %v919
    %v1168 = vmul.f32 %v1136, %v924
    %v1169 = vmul.f32 %v1137, %v929
    %v1170 = vmul.f32 %v1138, %v934
    %v1171 = vmul.f32 %v1139, %v939
    %v1172 = vmul.f32 %v1140, %v944
    %v1173 = vmul.f32 %v1141, %v949
    %v1174 = vmul.f32 %v1142, %v954
    %v1175 = vmul.f32 %v1143, %v959
    %v1176 = vmul.f32 %v1144, %v964
    %v1177 = vmul.f32 %v1145, %v969
    %v1178 = vmul.f32 %v1146, %v974
    %v1179 = vmul.f32 %v1147, %v979
    %v1180 = vmul.f32 %v1148, %v984
    %v1181 = vmul.f32 %v1149, %v989
    %v1182 = vmul.f32 %v1150, %v994
    %v1183 = vmul.f32 %v1151, %v999
    %v1184 = vmul.f32 %v1152, %v1004
    %v1185 = vmul.f32 %v1153, %v1009
    %v1186 = vmul.f32 %v1154, %v1014
    %v1187 = vmul.f32 %v1155, %v1019
    %v1188 = vmul.f32 %v1156, %v1156
    %v1189 = vmul.f32 %v1157, %v1157
    %v1190 = vmul.f32 %v1158, %v1158
    %v1191 = vmul.f32 %v1159, %v1159
    %v1192 = vmul.f32 %v1160, %v1160
    %v1193 = vmul.f32 %v1161, %v1161
    %v1194 = vmul.f32 %v1162, %v1162
    %v1195 = vmul.f32 %v1163, %v1163
    %v1196 = vmul.f32 %v1164, %v1164
    %v1197 = vmul.f32 %v1165, %v1165
    %v1198 = vmul.f32 %v1166, %v1166
    %v1199 = vmul.f32 %v1167, %v1167
    %v1200 = vmul.f32 %v1168, %v1168
    %v1201 = vmul.f32 %v1169, %v1169
    %v1202 = vmul.f32 %v1170, %v1170
    %v1203 = vmul.f32 %v1171, %v1171
    %v1204 = vmul.f32 %v1172, %v1172
    %v1205 = vmul.f32 %v1173, %v1173
    %v1206 = vmul.f32 %v1174, %v1174
    %v1207 = vmul.f32 %v1175, %v1175
    %v1208 = vmul.f32 %v1176, %v1176
    %v1209 = vmul.f32 %v1177, %v1177
    %v1210 = vmul.f32 %v1178, %v1178
    %v1211 = vmul.f32 %v1179, %v1179
    %v1212 = vmul.f32 %v1180, %v1180
    %v1213 = vmul.f32 %v1181, %v1181
    %v1214 = vmul.f32 %v1182, %v1182
    %v1215 = vmul.f32 %v1183, %v1183
    %v1216 = vmul.f32 %v1184, %v1184
    %v1217 = vmul.f32 %v1185, %v1185
    %v1218 = vmul.f32 %v1186, %v1186
    %v1219 = vmul.f32 %v1187, %v1187
    %v1220 = vsel %vm1053, %v1188, 0.0
    %v1221 = vsel %vm1053, %v1189, 0.0
    %v1222 = vadd.f32 %v1220, %v1221
    %v1223 = vsel %vm1053, %v1190, 0.0
    %v1224 = vadd.f32 %v1222, %v1223
    %v1225 = vsel %vm1053, %v1191, 0.0
    %v1226 = vadd.f32 %v1224, %v1225
    %v1227 = vsel %vm1053, %v1192, 0.0
    %v1228 = vadd.f32 %v1226, %v1227
    %v1229 = vsel %vm1053, %v1193, 0.0
    %v1230 = vadd.f32 %v1228, %v1229
    %v1231 = vsel %vm1053, %v1194, 0.0
    %v1232 = vadd.f32 %v1230, %v1231
    %v1233 = vsel %vm1053, %v1195, 0.0
    %v1234 = vadd.f32 %v1232, %v1233
    %v1235 = vsel %vm1053, %v1196, 0.0
    %v1236 = vadd.f32 %v1234, %v1235
    %v1237 = vsel %vm1053, %v1197, 0.0
    %v1238 = vadd.f32 %v1236, %v1237
    %v1239 = vsel %vm1053, %v1198, 0.0
    %v1240 = vadd.f32 %v1238, %v1239
    %v1241 = vsel %vm1053, %v1199, 0.0
    %v1242 = vadd.f32 %v1240, %v1241
    %v1243 = vsel %vm1053, %v1200, 0.0
    %v1244 = vadd.f32 %v1242, %v1243
    %v1245 = vsel %vm1053, %v1201, 0.0
    %v1246 = vadd.f32 %v1244, %v1245
    %v1247 = vsel %vm1053, %v1202, 0.0
    %v1248 = vadd.f32 %v1246, %v1247
    %v1249 = vsel %vm1053, %v1203, 0.0
    %v1250 = vadd.f32 %v1248, %v1249
    %v1251 = vsel %vm1053, %v1204, 0.0
    %v1252 = vadd.f32 %v1250, %v1251
    %v1253 = vsel %vm1053, %v1205, 0.0
    %v1254 = vadd.f32 %v1252, %v1253
    %v1255 = vsel %vm1053, %v1206, 0.0
    %v1256 = vadd.f32 %v1254, %v1255
    %v1257 = vsel %vm1053, %v1207, 0.0
    %v1258 = vadd.f32 %v1256, %v1257
    %v1259 = vsel %vm1053, %v1208, 0.0
    %v1260 = vadd.f32 %v1258, %v1259
    %v1261 = vsel %vm1053, %v1209, 0.0
    %v1262 = vadd.f32 %v1260, %v1261
    %v1263 = vsel %vm1053, %v1210, 0.0
    %v1264 = vadd.f32 %v1262, %v1263
    %v1265 = vsel %vm1053, %v1211, 0.0
    %v1266 = vadd.f32 %v1264, %v1265
    %v1267 = vsel %vm1053, %v1212, 0.0
    %v1268 = vadd.f32 %v1266, %v1267
    %v1269 = vsel %vm1053, %v1213, 0.0
    %v1270 = vadd.f32 %v1268, %v1269
    %v1271 = vsel %vm1053, %v1214, 0.0
    %v1272 = vadd.f32 %v1270, %v1271
    %v1273 = vsel %vm1053, %v1215, 0.0
    %v1274 = vadd.f32 %v1272, %v1273
    %v1275 = vsel %vm1053, %v1216, 0.0
    %v1276 = vadd.f32 %v1274, %v1275
    %v1277 = vsel %vm1053, %v1217, 0.0
    %v1278 = vadd.f32 %v1276, %v1277
    %v1279 = vsel %vm1053, %v1218, 0.0
    %v1280 = vadd.f32 %v1278, %v1279
    %v1281 = vsel %vm1053, %v1219, 0.0
    %v1282 = vadd.f32 %v1280, %v1281
    %v1283 = vrot.slane %v1282, 4
    %v1284 = vadd.f32 %v1282, %v1283
    %v1285 = vrot.slane %v1284, 2
    %v1286 = vadd.f32 %v1284, %v1285
    %v1287 = vrot.slane %v1286, 1
    %v1288 = vadd.f32 %v1286, %v1287
    %v1289 = vmul.f32 %v1288, 0.003968254
    %v1290 = vld [vmem:[%s3 + $0x1] sm:$0x1]
    %v1291 = vlaneseq
    %v1292 = vshrl.u32 %v1291, 7
    %v1293 = vsub.s32 0, %v1292
    %v1294 = vrot.slane %v1290, %v1293
    %v1295 = vmul.f32 %v1294, %v1124
    %v1296 = vmul.f32 %v1294, %v1125
    %v1297 = vmul.f32 %v1294, %v1126
    %v1298 = vmul.f32 %v1294, %v1127
    %v1299 = vmul.f32 %v1294, %v1128
    %v1300 = vmul.f32 %v1294, %v1129
    %v1301 = vmul.f32 %v1294, %v1130
    %v1302 = vmul.f32 %v1294, %v1131
    %v1303 = vmul.f32 %v1294, %v1132
    %v1304 = vmul.f32 %v1294, %v1133
    %v1305 = vmul.f32 %v1294, %v1134
    %v1306 = vmul.f32 %v1294, %v1135
    %v1307 = vmul.f32 %v1294, %v1136
    %v1308 = vmul.f32 %v1294, %v1137
    %v1309 = vmul.f32 %v1294, %v1138
    %v1310 = vmul.f32 %v1294, %v1139
    %v1311 = vmul.f32 %v1294, %v1140
    %v1312 = vmul.f32 %v1294, %v1141
    %v1313 = vmul.f32 %v1294, %v1142
    %v1314 = vmul.f32 %v1294, %v1143
    %v1315 = vmul.f32 %v1294, %v1144
    %v1316 = vmul.f32 %v1294, %v1145
    %v1317 = vmul.f32 %v1294, %v1146
    %v1318 = vmul.f32 %v1294, %v1147
    %v1319 = vmul.f32 %v1294, %v1148
    %v1320 = vmul.f32 %v1294, %v1149
    %v1321 = vmul.f32 %v1294, %v1150
    %v1322 = vmul.f32 %v1294, %v1151
    %v1323 = vmul.f32 %v1294, %v1152
    %v1324 = vmul.f32 %v1294, %v1153
    %v1325 = vmul.f32 %v1294, %v1154
    %v1326 = vmul.f32 %v1294, %v1155
    %v1327 = vadd.f32 %v1289, 1e-05
    %v1328 = vrsqrt.pop %v1327
    %v1329 = vmul.f32 %v1295, %v1328
    %v1330 = vmul.f32 %v1296, %v1328
    %v1331 = vmul.f32 %v1297, %v1328
    %v1332 = vmul.f32 %v1298, %v1328
    %v1333 = vmul.f32 %v1299, %v1328
    %v1334 = vmul.f32 %v1300, %v1328
    %v1335 = vmul.f32 %v1301, %v1328
    %v1336 = vmul.f32 %v1302, %v1328
    %v1337 = vmul.f32 %v1303, %v1328
    %v1338 = vmul.f32 %v1304, %v1328
    %v1339 = vmul.f32 %v1305, %v1328
    %v1340 = vmul.f32 %v1306, %v1328
    %v1341 = vmul.f32 %v1307, %v1328
    %v1342 = vmul.f32 %v1308, %v1328
    %v1343 = vmul.f32 %v1309, %v1328
    %v1344 = vmul.f32 %v1310, %v1328
    %v1345 = vmul.f32 %v1311, %v1328
    %v1346 = vmul.f32 %v1312, %v1328
    %v1347 = vmul.f32 %v1313, %v1328
    %v1348 = vmul.f32 %v1314, %v1328
    %v1349 = vmul.f32 %v1315, %v1328
    %v1350 = vmul.f32 %v1316, %v1328
    %v1351 = vmul.f32 %v1317, %v1328
    %v1352 = vmul.f32 %v1318, %v1328
    %v1353 = vmul.f32 %v1319, %v1328
    %v1354 = vmul.f32 %v1320, %v1328
    %v1355 = vmul.f32 %v1321, %v1328
    %v1356 = vmul.f32 %v1322, %v1328
    %v1357 = vmul.f32 %v1323, %v1328
    %v1358 = vmul.f32 %v1324, %v1328
    %v1359 = vmul.f32 %v1325, %v1328
    %v1360 = vmul.f32 %v1326, %v1328
    %v1361 = vld [vmem:[%s3 + $0x2] sm:$0x1]
    %v1362 = vlaneseq
    %v1363 = vshrl.u32 %v1362, 7
    %v1364 = vsub.s32 0, %v1363
    %v1365 = vrot.slane %v1361, %v1364
    %v1366 = vadd.f32 %v1329, %v1365
    %v1367 = vadd.f32 %v1330, %v1365
    %v1368 = vadd.f32 %v1331, %v1365
    %v1369 = vadd.f32 %v1332, %v1365
    %v1370 = vadd.f32 %v1333, %v1365
    %v1371 = vadd.f32 %v1334, %v1365
    %v1372 = vadd.f32 %v1335, %v1365
    %v1373 = vadd.f32 %v1336, %v1365
    %v1374 = vadd.f32 %v1337, %v1365
    %v1375 = vadd.f32 %v1338, %v1365
    %v1376 = vadd.f32 %v1339, %v1365
    %v1377 = vadd.f32 %v1340, %v1365
    %v1378 = vadd.f32 %v1341, %v1365
    %v1379 = vadd.f32 %v1342, %v1365
    %v1380 = vadd.f32 %v1343, %v1365
    %v1381 = vadd.f32 %v1344, %v1365
    %v1382 = vadd.f32 %v1345, %v1365
    %v1383 = vadd.f32 %v1346, %v1365
    %v1384 = vadd.f32 %v1347, %v1365
    %v1385 = vadd.f32 %v1348, %v1365
    %v1386 = vadd.f32 %v1349, %v1365
    %v1387 = vadd.f32 %v1350, %v1365
    %v1388 = vadd.f32 %v1351, %v1365
    %v1389 = vadd.f32 %v1352, %v1365
    %v1390 = vadd.f32 %v1353, %v1365
    %v1391 = vadd.f32 %v1354, %v1365
    %v1392 = vadd.f32 %v1355, %v1365
    %v1393 = vadd.f32 %v1356, %v1365
    %v1394 = vadd.f32 %v1357, %v1365
    %v1395 = vadd.f32 %v1358, %v1365
    %v1396 = vadd.f32 %v1359, %v1365
    %v1397 = vadd.f32 %v1360, %v1365
    %1398 = vst.msk [vmem:[#allocation2] sm:$0xff] %vm1053, %v1366
    %1399 = vst.msk [vmem:[#allocation2 + $0x8] sm:$0xff] %vm1053, %v1367
    %1400 = vst.msk [vmem:[#allocation2 + $0x10] sm:$0xff] %vm1053, %v1368
    %1401 = vst.msk [vmem:[#allocation2 + $0x18] sm:$0xff] %vm1053, %v1369
    %1402 = vst.msk [vmem:[#allocation2 + $0x20] sm:$0xff] %vm1053, %v1370
    %1403 = vst.msk [vmem:[#allocation2 + $0x28] sm:$0xff] %vm1053, %v1371
    %1404 = vst.msk [vmem:[#allocation2 + $0x30] sm:$0xff] %vm1053, %v1372
    %1405 = vst.msk [vmem:[#allocation2 + $0x38] sm:$0xff] %vm1053, %v1373
    %1406 = vst.msk [vmem:[#allocation2 + $0x40] sm:$0xff] %vm1053, %v1374
    %1407 = vst.msk [vmem:[#allocation2 + $0x48] sm:$0xff] %vm1053, %v1375
    %1408 = vst.msk [vmem:[#allocation2 + $0x50] sm:$0xff] %vm1053, %v1376
    %1409 = vst.msk [vmem:[#allocation2 + $0x58] sm:$0xff] %vm1053, %v1377
    %1410 = vst.msk [vmem:[#allocation2 + $0x60] sm:$0xff] %vm1053, %v1378
    %1411 = vst.msk [vmem:[#allocation2 + $0x68] sm:$0xff] %vm1053, %v1379
    %1412 = vst.msk [vmem:[#allocation2 + $0x70] sm:$0xff] %vm1053, %v1380
    %1413 = vst.msk [vmem:[#allocation2 + $0x78] sm:$0xff] %vm1053, %v1381
    %1414 = vst.msk [vmem:[#allocation2 + $0x80] sm:$0xff] %vm1053, %v1382
    %1415 = vst.msk [vmem:[#allocation2 + $0x88] sm:$0xff] %vm1053, %v1383
    %1416 = vst.msk [vmem:[#allocation2 + $0x90] sm:$0xff] %vm1053, %v1384
    %1417 = vst.msk [vmem:[#allocation2 + $0x98] sm:$0xff] %vm1053, %v1385
    %1418 = vst.msk [vmem:[#allocation2 + $0xa0] sm:$0xff] %vm1053, %v1386
    %1419 = vst.msk [vmem:[#allocation2 + $0xa8] sm:$0xff] %vm1053, %v1387
    %1420 = vst.msk [vmem:[#allocation2 + $0xb0] sm:$0xff] %vm1053, %v1388
    %1421 = vst.msk [vmem:[#allocation2 + $0xb8] sm:$0xff] %vm1053, %v1389
    %1422 = vst.msk [vmem:[#allocation2 + $0xc0] sm:$0xff] %vm1053, %v1390
    %1423 = vst.msk [vmem:[#allocation2 + $0xc8] sm:$0xff] %vm1053, %v1391
    %1424 = vst.msk [vmem:[#allocation2 + $0xd0] sm:$0xff] %vm1053, %v1392
    %1425 = vst.msk [vmem:[#allocation2 + $0xd8] sm:$0xff] %vm1053, %v1393
    %1426 = vst.msk [vmem:[#allocation2 + $0xe0] sm:$0xff] %vm1053, %v1394
    %1427 = vst.msk [vmem:[#allocation2 + $0xe8] sm:$0xff] %vm1053, %v1395
    %1428 = vst.msk [vmem:[#allocation2 + $0xf0] sm:$0xff] %vm1053, %v1396
    %1429 = vst.msk [vmem:[#allocation2 + $0xf8] sm:$0xff] %vm1053, %v1397
    %1430 = vst.msk [vmem:[#allocation2 + $0x100] sm:$0xff] %vm1053, 0.0
    %1431 = vst.msk [vmem:[#allocation2 + $0x108] sm:$0xff] %vm1053, 0.0
    %1432 = vst.msk [vmem:[#allocation2 + $0x110] sm:$0xff] %vm1053, 0.0
    %1433 = vst.msk [vmem:[#allocation2 + $0x118] sm:$0xff] %vm1053, 0.0
    %1434 = vst.msk [vmem:[#allocation2 + $0x120] sm:$0xff] %vm1053, 0.0
    %1435 = vst.msk [vmem:[#allocation2 + $0x128] sm:$0xff] %vm1053, 0.0
    %1436 = vst.msk [vmem:[#allocation2 + $0x130] sm:$0xff] %vm1053, 0.0
    %1437 = vst.msk [vmem:[#allocation2 + $0x138] sm:$0xff] %vm1053, 0.0
    %v1438 = vld [vmem:[#allocation2] sm:$0xff]
    %v1439 = vld [vmem:[#allocation2 + $0x8] sm:$0xff]
    %v1440 = vld [vmem:[#allocation2 + $0x10] sm:$0xff]
    %v1441 = vld [vmem:[#allocation2 + $0x18] sm:$0xff]
    %v1442 = vld [vmem:[#allocation2 + $0x20] sm:$0xff]
    %v1443 = vld [vmem:[#allocation2 + $0x28] sm:$0xff]
    %v1444 = vld [vmem:[#allocation2 + $0x30] sm:$0xff]
    %v1445 = vld [vmem:[#allocation2 + $0x38] sm:$0xff]
    %v1446 = vld [vmem:[#allocation2 + $0x40] sm:$0xff]
    %v1447 = vld [vmem:[#allocation2 + $0x48] sm:$0xff]
    %v1448 = vld [vmem:[#allocation2 + $0x50] sm:$0xff]
    %v1449 = vld [vmem:[#allocation2 + $0x58] sm:$0xff]
    %v1450 = vld [vmem:[#allocation2 + $0x60] sm:$0xff]
    %v1451 = vld [vmem:[#allocation2 + $0x68] sm:$0xff]
    %v1452 = vld [vmem:[#allocation2 + $0x70] sm:$0xff]
    %v1453 = vld [vmem:[#allocation2 + $0x78] sm:$0xff]
    %v1454 = vld [vmem:[#allocation2 + $0x80] sm:$0xff]
    %v1455 = vld [vmem:[#allocation2 + $0x88] sm:$0xff]
    %v1456 = vld [vmem:[#allocation2 + $0x90] sm:$0xff]
    %v1457 = vld [vmem:[#allocation2 + $0x98] sm:$0xff]
    %v1458 = vld [vmem:[#allocation2 + $0xa0] sm:$0xff]
    %v1459 = vld [vmem:[#allocation2 + $0xa8] sm:$0xff]
    %v1460 = vld [vmem:[#allocation2 + $0xb0] sm:$0xff]
    %v1461 = vld [vmem:[#allocation2 + $0xb8] sm:$0xff]
    %v1462 = vld [vmem:[#allocation2 + $0xc0] sm:$0xff]
    %v1463 = vld [vmem:[#allocation2 + $0xc8] sm:$0xff]
    %v1464 = vld [vmem:[#allocation2 + $0xd0] sm:$0xff]
    %v1465 = vld [vmem:[#allocation2 + $0xd8] sm:$0xff]
    %v1466 = vld [vmem:[#allocation2 + $0xe0] sm:$0xff]
    %v1467 = vld [vmem:[#allocation2 + $0xe8] sm:$0xff]
    %v1468 = vld [vmem:[#allocation2 + $0xf0] sm:$0xff]
    %v1469 = vld [vmem:[#allocation2 + $0xf8] sm:$0xff]
    %v1470 = vld [vmem:[%s4] sm:$0xff]
    %v1471 = vld [vmem:[%s4 + $0x8] sm:$0xff]
    %v1472 = vld [vmem:[#allocation2 + $0x2] sm:$0xff]
    %v1473 = vld [vmem:[#allocation2 + $0xa] sm:$0xff]
    %v1474 = vld [vmem:[#allocation2 + $0x12] sm:$0xff]
    %v1475 = vld [vmem:[#allocation2 + $0x1a] sm:$0xff]
    %v1476 = vld [vmem:[#allocation2 + $0x22] sm:$0xff]
    %v1477 = vld [vmem:[#allocation2 + $0x2a] sm:$0xff]
    %v1478 = vld [vmem:[#allocation2 + $0x32] sm:$0xff]
    %v1479 = vld [vmem:[#allocation2 + $0x3a] sm:$0xff]
    %v1480 = vld [vmem:[#allocation2 + $0x42] sm:$0xff]
    %v1481 = vld [vmem:[#allocation2 + $0x4a] sm:$0xff]
    %v1482 = vld [vmem:[#allocation2 + $0x52] sm:$0xff]
    %v1483 = vld [vmem:[#allocation2 + $0x5a] sm:$0xff]
    %v1484 = vld [vmem:[#allocation2 + $0x62] sm:$0xff]
    %v1485 = vld [vmem:[#allocation2 + $0x6a] sm:$0xff]
    %v1486 = vld [vmem:[#allocation2 + $0x72] sm:$0xff]
    %v1487 = vld [vmem:[#allocation2 + $0x7a] sm:$0xff]
    %v1488 = vld [vmem:[#allocation2 + $0x82] sm:$0xff]
    %v1489 = vld [vmem:[#allocation2 + $0x8a] sm:$0xff]
    %v1490 = vld [vmem:[#allocation2 + $0x92] sm:$0xff]
    %v1491 = vld [vmem:[#allocation2 + $0x9a] sm:$0xff]
    %v1492 = vld [vmem:[#allocation2 + $0xa2] sm:$0xff]
    %v1493 = vld [vmem:[#allocation2 + $0xaa] sm:$0xff]
    %v1494 = vld [vmem:[#allocation2 + $0xb2] sm:$0xff]
    %v1495 = vld [vmem:[#allocation2 + $0xba] sm:$0xff]
    %v1496 = vld [vmem:[#allocation2 + $0xc2] sm:$0xff]
    %v1497 = vld [vmem:[#allocation2 + $0xca] sm:$0xff]
    %v1498 = vld [vmem:[#allocation2 + $0xd2] sm:$0xff]
    %v1499 = vld [vmem:[#allocation2 + $0xda] sm:$0xff]
    %v1500 = vld [vmem:[#allocation2 + $0xe2] sm:$0xff]
    %v1501 = vld [vmem:[#allocation2 + $0xea] sm:$0xff]
    %v1502 = vld [vmem:[#allocation2 + $0xf2] sm:$0xff]
    %v1503 = vld [vmem:[#allocation2 + $0xfa] sm:$0xff]
    %v1504 = vld [vmem:[%s4 + $0x10] sm:$0xff]
    %v1505 = vld [vmem:[%s4 + $0x18] sm:$0xff]
    %v1507 = vsel %vm1053, %v1472, 0
    %v1510 = vsel %vm1053, %v1473, 0
    %v1513 = vsel %vm1053, %v1474, 0
    %v1516 = vsel %vm1053, %v1475, 0
    %v1519 = vsel %vm1053, %v1476, 0
    %v1522 = vsel %vm1053, %v1477, 0
    %v1525 = vsel %vm1053, %v1478, 0
    %v1528 = vsel %vm1053, %v1479, 0
    %v1531 = vsel %vm1053, %v1480, 0
    %v1534 = vsel %vm1053, %v1481, 0
    %v1537 = vsel %vm1053, %v1482, 0
    %v1540 = vsel %vm1053, %v1483, 0
    %v1543 = vsel %vm1053, %v1484, 0
    %v1546 = vsel %vm1053, %v1485, 0
    %v1549 = vsel %vm1053, %v1486, 0
    %v1552 = vsel %vm1053, %v1487, 0
    %v1555 = vsel %vm1053, %v1488, 0
    %v1558 = vsel %vm1053, %v1489, 0
    %v1561 = vsel %vm1053, %v1490, 0
    %v1564 = vsel %vm1053, %v1491, 0
    %v1567 = vsel %vm1053, %v1492, 0
    %v1570 = vsel %vm1053, %v1493, 0
    %v1573 = vsel %vm1053, %v1494, 0
    %v1576 = vsel %vm1053, %v1495, 0
    %v1579 = vsel %vm1053, %v1496, 0
    %v1582 = vsel %vm1053, %v1497, 0
    %v1585 = vsel %vm1053, %v1498, 0
    %v1588 = vsel %vm1053, %v1499, 0
    %v1591 = vsel %vm1053, %v1500, 0
    %v1594 = vsel %vm1053, %v1501, 0
    %v1597 = vsel %vm1053, %v1502, 0
    %v1600 = vsel %vm1053, %v1503, 0
    %1602 = vmatprep.subr.mxu0 0.0
    %1603 = vmatpush1.msra.mxu0 0.0
    %1604 = vmatprep.subr.mxu0 0.0
    %1605 = vmatpush1.msra.mxu0 0.0
    %1606 = vmatprep.subr.mxu0 0.0
    %1607 = vmatpush1.msra.mxu0 0.0
    %1608 = vmatprep.subr.mxu0 0.0
    %1609 = vmatpush1.msra.mxu0 0.0
    %1610 = vmatprep.subr.mxu0 0.0
    %1611 = vmatpush1.msra.mxu0 0.0
    %1612 = vmatprep.subr.mxu0 0.0
    %1613 = vmatpush1.msra.mxu0 0.0
    %1614 = vmatprep.subr.mxu0 0.0
    %1615 = vmatpush1.msra.mxu0 0.0
    %1616 = vmatprep.subr.mxu0 0.0
    %1617 = vmatpush1.msra.mxu0 0.0
    %1618 = vmatprep.subr.mxu0 0.0
    %1619 = vmatpush1.msra.mxu0 0.0
    %1620 = vmatprep.subr.mxu0 0.0
    %1621 = vmatpush1.msra.mxu0 0.0
    %1622 = vmatprep.subr.mxu0 0.0
    %1623 = vmatpush1.msra.mxu0 0.0
    %1624 = vmatprep.subr.mxu0 0.0
    %1625 = vmatpush1.msra.mxu0 0.0
    %1626 = vmatprep.subr.mxu0 0.0
    %1627 = vmatpush1.msra.mxu0 0.0
    %1628 = vmatprep.subr.mxu0 0.0
    %1629 = vmatpush1.msra.mxu0 0.0
    %1630 = vmatprep.subr.mxu0 0.0
    %1631 = vmatpush1.msra.mxu0 %v1505
    %1632 = vmatprep.subr.mxu0 0.0
    %1633 = vmatpush1.msra.mxu0 %v1504
    %1634 = vmatprep.subr.mxu0 0.0
    %1635 = vmatpush2.msra.mxu0 0.0
    %1636 = vmatprep.subr.mxu0 0.0
    %1637 = vmatpush2.msra.mxu0 0.0
    %1638 = vmatprep.subr.mxu0 0.0
    %1639 = vmatpush2.msra.mxu0 0.0
    %1640 = vmatprep.subr.mxu0 0.0
    %1641 = vmatpush2.msra.mxu0 0.0
    %1642 = vmatprep.subr.mxu0 0.0
    %1643 = vmatpush2.msra.mxu0 0.0
    %1644 = vmatprep.subr.mxu0 0.0
    %1645 = vmatpush2.msra.mxu0 0.0
    %1646 = vmatprep.subr.mxu0 0.0
    %1647 = vmatpush2.msra.mxu0 0.0
    %1648 = vmatprep.subr.mxu0 0.0
    %1649 = vmatpush2.msra.mxu0 0.0
    %1650 = vmatprep.subr.mxu0 0.0
    %1651 = vmatpush2.msra.mxu0 0.0
    %1652 = vmatprep.subr.mxu0 0.0
    %1653 = vmatpush2.msra.mxu0 0.0
    %1654 = vmatprep.subr.mxu0 0.0
    %1655 = vmatpush2.msra.mxu0 0.0
    %1656 = vmatprep.subr.mxu0 0.0
    %1657 = vmatpush2.msra.mxu0 0.0
    %1658 = vmatprep.subr.mxu0 0.0
    %1659 = vmatpush2.msra.mxu0 0.0
    %1660 = vmatprep.subr.mxu0 0.0
    %1661 = vmatpush2.msra.mxu0 0.0
    %1662 = vmatprep.subr.mxu0 0.0
    %1663 = vmatpush2.msra.mxu0 0.0
    %1664 = vmatprep.subr.mxu0 0.0
    %1665 = vmatpush2.msra.mxu0 0.0
    %1666 = vmatprep.mubr.f32.mxu0 0.0
    %1667 = vmatmul.mubr.f32.gmra.mxu0 %v1507
    %v1668 = vpop.f32.mrf.mxu0
    %v1669 = vadd.f32 0.0, %v1668
    %v1670 = vpop.f32.mrf.mxu0
    %1671 = vmatprep.mubr.f32.mxu0 0.0
    %1672 = vmatmul.mubr.f32.gmra.mxu0 %v1510
    %v1673 = vpop.f32.mrf.mxu0
    %v1674 = vadd.f32 0.0, %v1673
    %v1675 = vpop.f32.mrf.mxu0
    %1676 = vmatprep.mubr.f32.mxu0 0.0
    %1677 = vmatmul.mubr.f32.gmra.mxu0 %v1513
    %v1678 = vpop.f32.mrf.mxu0
    %v1679 = vadd.f32 0.0, %v1678
    %v1680 = vpop.f32.mrf.mxu0
    %1681 = vmatprep.mubr.f32.mxu0 0.0
    %1682 = vmatmul.mubr.f32.gmra.mxu0 %v1516
    %v1683 = vpop.f32.mrf.mxu0
    %v1684 = vadd.f32 0.0, %v1683
    %v1685 = vpop.f32.mrf.mxu0
    %1686 = vmatprep.mubr.f32.mxu0 0.0
    %1687 = vmatmul.mubr.f32.gmra.mxu0 %v1519
    %v1688 = vpop.f32.mrf.mxu0
    %v1689 = vadd.f32 0.0, %v1688
    %v1690 = vpop.f32.mrf.mxu0
    %1691 = vmatprep.mubr.f32.mxu0 0.0
    %1692 = vmatmul.mubr.f32.gmra.mxu0 %v1522
    %v1693 = vpop.f32.mrf.mxu0
    %v1694 = vadd.f32 0.0, %v1693
    %v1695 = vpop.f32.mrf.mxu0
    %1696 = vmatprep.mubr.f32.mxu0 0.0
    %1697 = vmatmul.mubr.f32.gmra.mxu0 %v1525
    %v1698 = vpop.f32.mrf.mxu0
    %v1699 = vadd.f32 0.0, %v1698
    %v1700 = vpop.f32.mrf.mxu0
    %1701 = vmatprep.mubr.f32.mxu0 0.0
    %1702 = vmatmul.mubr.f32.gmra.mxu0 %v1528
    %v1703 = vpop.f32.mrf.mxu0
    %v1704 = vadd.f32 0.0, %v1703
    %v1705 = vpop.f32.mrf.mxu0
    %1706 = vmatprep.mubr.f32.mxu0 0.0
    %1707 = vmatmul.mubr.f32.gmra.mxu0 %v1531
    %v1708 = vpop.f32.mrf.mxu0
    %v1709 = vadd.f32 0.0, %v1708
    %v1710 = vpop.f32.mrf.mxu0
    %1711 = vmatprep.mubr.f32.mxu0 0.0
    %1712 = vmatmul.mubr.f32.gmra.mxu0 %v1534
    %v1713 = vpop.f32.mrf.mxu0
    %v1714 = vadd.f32 0.0, %v1713
    %v1715 = vpop.f32.mrf.mxu0
    %1716 = vmatprep.mubr.f32.mxu0 0.0
    %1717 = vmatmul.mubr.f32.gmra.mxu0 %v1537
    %v1718 = vpop.f32.mrf.mxu0
    %v1719 = vadd.f32 0.0, %v1718
    %v1720 = vpop.f32.mrf.mxu0
    %1721 = vmatprep.mubr.f32.mxu0 0.0
    %1722 = vmatmul.mubr.f32.gmra.mxu0 %v1540
    %v1723 = vpop.f32.mrf.mxu0
    %v1724 = vadd.f32 0.0, %v1723
    %v1725 = vpop.f32.mrf.mxu0
    %1726 = vmatprep.mubr.f32.mxu0 0.0
    %1727 = vmatmul.mubr.f32.gmra.mxu0 %v1543
    %v1728 = vpop.f32.mrf.mxu0
    %v1729 = vadd.f32 0.0, %v1728
    %v1730 = vpop.f32.mrf.mxu0
    %1731 = vmatprep.mubr.f32.mxu0 0.0
    %1732 = vmatmul.mubr.f32.gmra.mxu0 %v1546
    %v1733 = vpop.f32.mrf.mxu0
    %v1734 = vadd.f32 0.0, %v1733
    %v1735 = vpop.f32.mrf.mxu0
    %1736 = vmatprep.mubr.f32.mxu0 0.0
    %1737 = vmatmul.mubr.f32.gmra.mxu0 %v1549
    %v1738 = vpop.f32.mrf.mxu0
    %v1739 = vadd.f32 0.0, %v1738
    %v1740 = vpop.f32.mrf.mxu0
    %1741 = vmatprep.mubr.f32.mxu0 0.0
    %1742 = vmatmul.mubr.f32.gmra.mxu0 %v1552
    %v1743 = vpop.f32.mrf.mxu0
    %v1744 = vadd.f32 0.0, %v1743
    %v1745 = vpop.f32.mrf.mxu0
    %1746 = vmatprep.mubr.f32.mxu0 0.0
    %1747 = vmatmul.mubr.f32.gmra.mxu0 %v1555
    %v1748 = vpop.f32.mrf.mxu0
    %v1749 = vadd.f32 0.0, %v1748
    %v1750 = vpop.f32.mrf.mxu0
    %1751 = vmatprep.mubr.f32.mxu0 0.0
    %1752 = vmatmul.mubr.f32.gmra.mxu0 %v1558
    %v1753 = vpop.f32.mrf.mxu0
    %v1754 = vadd.f32 0.0, %v1753
    %v1755 = vpop.f32.mrf.mxu0
    %1756 = vmatprep.mubr.f32.mxu0 0.0
    %1757 = vmatmul.mubr.f32.gmra.mxu0 %v1561
    %v1758 = vpop.f32.mrf.mxu0
    %v1759 = vadd.f32 0.0, %v1758
    %v1760 = vpop.f32.mrf.mxu0
    %1761 = vmatprep.mubr.f32.mxu0 0.0
    %1762 = vmatmul.mubr.f32.gmra.mxu0 %v1564
    %v1763 = vpop.f32.mrf.mxu0
    %v1764 = vadd.f32 0.0, %v1763
    %v1765 = vpop.f32.mrf.mxu0
    %1766 = vmatprep.mubr.f32.mxu0 0.0
    %1767 = vmatmul.mubr.f32.gmra.mxu0 %v1567
    %v1768 = vpop.f32.mrf.mxu0
    %v1769 = vadd.f32 0.0, %v1768
    %v1770 = vpop.f32.mrf.mxu0
    %1771 = vmatprep.mubr.f32.mxu0 0.0
    %1772 = vmatmul.mubr.f32.gmra.mxu0 %v1570
    %v1773 = vpop.f32.mrf.mxu0
    %v1774 = vadd.f32 0.0, %v1773
    %v1775 = vpop.f32.mrf.mxu0
    %1776 = vmatprep.mubr.f32.mxu0 0.0
    %1777 = vmatmul.mubr.f32.gmra.mxu0 %v1573
    %v1778 = vpop.f32.mrf.mxu0
    %v1779 = vadd.f32 0.0, %v1778
    %v1780 = vpop.f32.mrf.mxu0
    %1781 = vmatprep.mubr.f32.mxu0 0.0
    %1782 = vmatmul.mubr.f32.gmra.mxu0 %v1576
    %v1783 = vpop.f32.mrf.mxu0
    %v1784 = vadd.f32 0.0, %v1783
    %v1785 = vpop.f32.mrf.mxu0
    %1786 = vmatprep.mubr.f32.mxu0 0.0
    %1787 = vmatmul.mubr.f32.gmra.mxu0 %v1579
    %v1788 = vpop.f32.mrf.mxu0
    %v1789 = vadd.f32 0.0, %v1788
    %v1790 = vpop.f32.mrf.mxu0
    %1791 = vmatprep.mubr.f32.mxu0 0.0
    %1792 = vmatmul.mubr.f32.gmra.mxu0 %v1582
    %v1793 = vpop.f32.mrf.mxu0
    %v1794 = vadd.f32 0.0, %v1793
    %v1795 = vpop.f32.mrf.mxu0
    %1796 = vmatprep.mubr.f32.mxu0 0.0
    %1797 = vmatmul.mubr.f32.gmra.mxu0 %v1585
    %v1798 = vpop.f32.mrf.mxu0
    %v1799 = vadd.f32 0.0, %v1798
    %v1800 = vpop.f32.mrf.mxu0
    %1801 = vmatprep.mubr.f32.mxu0 0.0
    %1802 = vmatmul.mubr.f32.gmra.mxu0 %v1588
    %v1803 = vpop.f32.mrf.mxu0
    %v1804 = vadd.f32 0.0, %v1803
    %v1805 = vpop.f32.mrf.mxu0
    %1806 = vmatprep.mubr.f32.mxu0 0.0
    %1807 = vmatmul.mubr.f32.gmra.mxu0 %v1591
    %v1808 = vpop.f32.mrf.mxu0
    %v1809 = vadd.f32 0.0, %v1808
    %v1810 = vpop.f32.mrf.mxu0
    %1811 = vmatprep.mubr.f32.mxu0 0.0
    %1812 = vmatmul.mubr.f32.gmra.mxu0 %v1594
    %v1813 = vpop.f32.mrf.mxu0
    %v1814 = vadd.f32 0.0, %v1813
    %v1815 = vpop.f32.mrf.mxu0
    %1816 = vmatprep.mubr.f32.mxu0 0.0
    %1817 = vmatmul.mubr.f32.gmra.mxu0 %v1597
    %v1818 = vpop.f32.mrf.mxu0
    %v1819 = vadd.f32 0.0, %v1818
    %v1820 = vpop.f32.mrf.mxu0
    %1821 = vmatprep.mubr.f32.mxu0 0.0
    %1822 = vmatmul.mubr.f32.gmra.mxu0 %v1600
    %v1823 = vpop.f32.mrf.mxu0
    %v1824 = vadd.f32 0.0, %v1823
    %v1825 = vpop.f32.mrf.mxu0
    %1826 = vdwg.mxu0
    %v1828 = vsel %vm1053, %v1438, 0
    %v1831 = vsel %vm1053, %v1439, 0
    %v1834 = vsel %vm1053, %v1440, 0
    %v1837 = vsel %vm1053, %v1441, 0
    %v1840 = vsel %vm1053, %v1442, 0
    %v1843 = vsel %vm1053, %v1443, 0
    %v1846 = vsel %vm1053, %v1444, 0
    %v1849 = vsel %vm1053, %v1445, 0
    %v1852 = vsel %vm1053, %v1446, 0
    %v1855 = vsel %vm1053, %v1447, 0
    %v1858 = vsel %vm1053, %v1448, 0
    %v1861 = vsel %vm1053, %v1449, 0
    %v1864 = vsel %vm1053, %v1450, 0
    %v1867 = vsel %vm1053, %v1451, 0
    %v1870 = vsel %vm1053, %v1452, 0
    %v1873 = vsel %vm1053, %v1453, 0
    %v1876 = vsel %vm1053, %v1454, 0
    %v1879 = vsel %vm1053, %v1455, 0
    %v1882 = vsel %vm1053, %v1456, 0
    %v1885 = vsel %vm1053, %v1457, 0
    %v1888 = vsel %vm1053, %v1458, 0
    %v1891 = vsel %vm1053, %v1459, 0
    %v1894 = vsel %vm1053, %v1460, 0
    %v1897 = vsel %vm1053, %v1461, 0
    %v1900 = vsel %vm1053, %v1462, 0
    %v1903 = vsel %vm1053, %v1463, 0
    %v1906 = vsel %vm1053, %v1464, 0
    %v1909 = vsel %vm1053, %v1465, 0
    %v1912 = vsel %vm1053, %v1466, 0
    %v1915 = vsel %vm1053, %v1467, 0
    %v1918 = vsel %vm1053, %v1468, 0
    %v1921 = vsel %vm1053, %v1469, 0
    %1923 = vmatprep.subr.mxu0 0.0
    %1924 = vmatpush1.msra.mxu0 0.0
    %1925 = vmatprep.subr.mxu0 0.0
    %1926 = vmatpush1.msra.mxu0 0.0
    %1927 = vmatprep.subr.mxu0 0.0
    %1928 = vmatpush1.msra.mxu0 0.0
    %1929 = vmatprep.subr.mxu0 0.0
    %1930 = vmatpush1.msra.mxu0 0.0
    %1931 = vmatprep.subr.mxu0 0.0
    %1932 = vmatpush1.msra.mxu0 0.0
    %1933 = vmatprep.subr.mxu0 0.0
    %1934 = vmatpush1.msra.mxu0 0.0
    %1935 = vmatprep.subr.mxu0 0.0
    %1936 = vmatpush1.msra.mxu0 0.0
    %1937 = vmatprep.subr.mxu0 0.0
    %1938 = vmatpush1.msra.mxu0 0.0
    %1939 = vmatprep.subr.mxu0 0.0
    %1940 = vmatpush1.msra.mxu0 0.0
    %1941 = vmatprep.subr.mxu0 0.0
    %1942 = vmatpush1.msra.mxu0 0.0
    %1943 = vmatprep.subr.mxu0 0.0
    %1944 = vmatpush1.msra.mxu0 0.0
    %1945 = vmatprep.subr.mxu0 0.0
    %1946 = vmatpush1.msra.mxu0 0.0
    %1947 = vmatprep.subr.mxu0 0.0
    %1948 = vmatpush1.msra.mxu0 0.0
    %1949 = vmatprep.subr.mxu0 0.0
    %1950 = vmatpush1.msra.mxu0 0.0
    %1951 = vmatprep.subr.mxu0 0.0
    %1952 = vmatpush1.msra.mxu0 %v1471
    %1953 = vmatprep.subr.mxu0 0.0
    %1954 = vmatpush1.msra.mxu0 %v1470
    %1955 = vmatprep.subr.mxu0 0.0
    %1956 = vmatpush2.msra.mxu0 0.0
    %1957 = vmatprep.subr.mxu0 0.0
    %1958 = vmatpush2.msra.mxu0 0.0
    %1959 = vmatprep.subr.mxu0 0.0
    %1960 = vmatpush2.msra.mxu0 0.0
    %1961 = vmatprep.subr.mxu0 0.0
    %1962 = vmatpush2.msra.mxu0 0.0
    %1963 = vmatprep.subr.mxu0 0.0
    %1964 = vmatpush2.msra.mxu0 0.0
    %1965 = vmatprep.subr.mxu0 0.0
    %1966 = vmatpush2.msra.mxu0 0.0
    %1967 = vmatprep.subr.mxu0 0.0
    %1968 = vmatpush2.msra.mxu0 0.0
    %1969 = vmatprep.subr.mxu0 0.0
    %1970 = vmatpush2.msra.mxu0 0.0
    %1971 = vmatprep.subr.mxu0 0.0
    %1972 = vmatpush2.msra.mxu0 0.0
    %1973 = vmatprep.subr.mxu0 0.0
    %1974 = vmatpush2.msra.mxu0 0.0
    %1975 = vmatprep.subr.mxu0 0.0
    %1976 = vmatpush2.msra.mxu0 0.0
    %1977 = vmatprep.subr.mxu0 0.0
    %1978 = vmatpush2.msra.mxu0 0.0
    %1979 = vmatprep.subr.mxu0 0.0
    %1980 = vmatpush2.msra.mxu0 0.0
    %1981 = vmatprep.subr.mxu0 0.0
    %1982 = vmatpush2.msra.mxu0 0.0
    %1983 = vmatprep.subr.mxu0 0.0
    %1984 = vmatpush2.msra.mxu0 0.0
    %1985 = vmatprep.subr.mxu0 0.0
    %1986 = vmatpush2.msra.mxu0 0.0
    %1987 = vmatprep.mubr.f32.mxu0 0.0
    %1988 = vmatmul.mubr.f32.gmra.mxu0 %v1828
    %v1989 = vpop.f32.mrf.mxu0
    %v1990 = vadd.f32 %v1669, %v1989
    %v1991 = vpop.f32.mrf.mxu0
    %1992 = vmatprep.mubr.f32.mxu0 0.0
    %1993 = vmatmul.mubr.f32.gmra.mxu0 %v1831
    %v1994 = vpop.f32.mrf.mxu0
    %v1995 = vadd.f32 %v1674, %v1994
    %v1996 = vpop.f32.mrf.mxu0
    %1997 = vmatprep.mubr.f32.mxu0 0.0
    %1998 = vmatmul.mubr.f32.gmra.mxu0 %v1834
    %v1999 = vpop.f32.mrf.mxu0
    %v2000 = vadd.f32 %v1679, %v1999
    %v2001 = vpop.f32.mrf.mxu0
    %2002 = vmatprep.mubr.f32.mxu0 0.0
    %2003 = vmatmul.mubr.f32.gmra.mxu0 %v1837
    %v2004 = vpop.f32.mrf.mxu0
    %v2005 = vadd.f32 %v1684, %v2004
    %v2006 = vpop.f32.mrf.mxu0
    %2007 = vmatprep.mubr.f32.mxu0 0.0
    %2008 = vmatmul.mubr.f32.gmra.mxu0 %v1840
    %v2009 = vpop.f32.mrf.mxu0
    %v2010 = vadd.f32 %v1689, %v2009
    %v2011 = vpop.f32.mrf.mxu0
    %2012 = vmatprep.mubr.f32.mxu0 0.0
    %2013 = vmatmul.mubr.f32.gmra.mxu0 %v1843
    %v2014 = vpop.f32.mrf.mxu0
    %v2015 = vadd.f32 %v1694, %v2014
    %v2016 = vpop.f32.mrf.mxu0
    %2017 = vmatprep.mubr.f32.mxu0 0.0
    %2018 = vmatmul.mubr.f32.gmra.mxu0 %v1846
    %v2019 = vpop.f32.mrf.mxu0
    %v2020 = vadd.f32 %v1699, %v2019
    %v2021 = vpop.f32.mrf.mxu0
    %2022 = vmatprep.mubr.f32.mxu0 0.0
    %2023 = vmatmul.mubr.f32.gmra.mxu0 %v1849
    %v2024 = vpop.f32.mrf.mxu0
    %v2025 = vadd.f32 %v1704, %v2024
    %v2026 = vpop.f32.mrf.mxu0
    %2027 = vmatprep.mubr.f32.mxu0 0.0
    %2028 = vmatmul.mubr.f32.gmra.mxu0 %v1852
    %v2029 = vpop.f32.mrf.mxu0
    %v2030 = vadd.f32 %v1709, %v2029
    %v2031 = vpop.f32.mrf.mxu0
    %2032 = vmatprep.mubr.f32.mxu0 0.0
    %2033 = vmatmul.mubr.f32.gmra.mxu0 %v1855
    %v2034 = vpop.f32.mrf.mxu0
    %v2035 = vadd.f32 %v1714, %v2034
    %v2036 = vpop.f32.mrf.mxu0
    %2037 = vmatprep.mubr.f32.mxu0 0.0
    %2038 = vmatmul.mubr.f32.gmra.mxu0 %v1858
    %v2039 = vpop.f32.mrf.mxu0
    %v2040 = vadd.f32 %v1719, %v2039
    %v2041 = vpop.f32.mrf.mxu0
    %2042 = vmatprep.mubr.f32.mxu0 0.0
    %2043 = vmatmul.mubr.f32.gmra.mxu0 %v1861
    %v2044 = vpop.f32.mrf.mxu0
    %v2045 = vadd.f32 %v1724, %v2044
    %v2046 = vpop.f32.mrf.mxu0
    %2047 = vmatprep.mubr.f32.mxu0 0.0
    %2048 = vmatmul.mubr.f32.gmra.mxu0 %v1864
    %v2049 = vpop.f32.mrf.mxu0
    %v2050 = vadd.f32 %v1729, %v2049
    %v2051 = vpop.f32.mrf.mxu0
    %2052 = vmatprep.mubr.f32.mxu0 0.0
    %2053 = vmatmul.mubr.f32.gmra.mxu0 %v1867
    %v2054 = vpop.f32.mrf.mxu0
    %v2055 = vadd.f32 %v1734, %v2054
    %v2056 = vpop.f32.mrf.mxu0
    %2057 = vmatprep.mubr.f32.mxu0 0.0
    %2058 = vmatmul.mubr.f32.gmra.mxu0 %v1870
    %v2059 = vpop.f32.mrf.mxu0
    %v2060 = vadd.f32 %v1739, %v2059
    %v2061 = vpop.f32.mrf.mxu0
    %2062 = vmatprep.mubr.f32.mxu0 0.0
    %2063 = vmatmul.mubr.f32.gmra.mxu0 %v1873
    %v2064 = vpop.f32.mrf.mxu0
    %v2065 = vadd.f32 %v1744, %v2064
    %v2066 = vpop.f32.mrf.mxu0
    %2067 = vmatprep.mubr.f32.mxu0 0.0
    %2068 = vmatmul.mubr.f32.gmra.mxu0 %v1876
    %v2069 = vpop.f32.mrf.mxu0
    %v2070 = vadd.f32 %v1749, %v2069
    %v2071 = vpop.f32.mrf.mxu0
    %2072 = vmatprep.mubr.f32.mxu0 0.0
    %2073 = vmatmul.mubr.f32.gmra.mxu0 %v1879
    %v2074 = vpop.f32.mrf.mxu0
    %v2075 = vadd.f32 %v1754, %v2074
    %v2076 = vpop.f32.mrf.mxu0
    %2077 = vmatprep.mubr.f32.mxu0 0.0
    %2078 = vmatmul.mubr.f32.gmra.mxu0 %v1882
    %v2079 = vpop.f32.mrf.mxu0
    %v2080 = vadd.f32 %v1759, %v2079
    %v2081 = vpop.f32.mrf.mxu0
    %2082 = vmatprep.mubr.f32.mxu0 0.0
    %2083 = vmatmul.mubr.f32.gmra.mxu0 %v1885
    %v2084 = vpop.f32.mrf.mxu0
    %v2085 = vadd.f32 %v1764, %v2084
    %v2086 = vpop.f32.mrf.mxu0
    %2087 = vmatprep.mubr.f32.mxu0 0.0
    %2088 = vmatmul.mubr.f32.gmra.mxu0 %v1888
    %v2089 = vpop.f32.mrf.mxu0
    %v2090 = vadd.f32 %v1769, %v2089
    %v2091 = vpop.f32.mrf.mxu0
    %2092 = vmatprep.mubr.f32.mxu0 0.0
    %2093 = vmatmul.mubr.f32.gmra.mxu0 %v1891
    %v2094 = vpop.f32.mrf.mxu0
    %v2095 = vadd.f32 %v1774, %v2094
    %v2096 = vpop.f32.mrf.mxu0
    %2097 = vmatprep.mubr.f32.mxu0 0.0
    %2098 = vmatmul.mubr.f32.gmra.mxu0 %v1894
    %v2099 = vpop.f32.mrf.mxu0
    %v2100 = vadd.f32 %v1779, %v2099
    %v2101 = vpop.f32.mrf.mxu0
    %2102 = vmatprep.mubr.f32.mxu0 0.0
    %2103 = vmatmul.mubr.f32.gmra.mxu0 %v1897
    %v2104 = vpop.f32.mrf.mxu0
    %v2105 = vadd.f32 %v1784, %v2104
    %v2106 = vpop.f32.mrf.mxu0
    %2107 = vmatprep.mubr.f32.mxu0 0.0
    %2108 = vmatmul.mubr.f32.gmra.mxu0 %v1900
    %v2109 = vpop.f32.mrf.mxu0
    %v2110 = vadd.f32 %v1789, %v2109
    %v2111 = vpop.f32.mrf.mxu0
    %2112 = vmatprep.mubr.f32.mxu0 0.0
    %2113 = vmatmul.mubr.f32.gmra.mxu0 %v1903
    %v2114 = vpop.f32.mrf.mxu0
    %v2115 = vadd.f32 %v1794, %v2114
    %v2116 = vpop.f32.mrf.mxu0
    %2117 = vmatprep.mubr.f32.mxu0 0.0
    %2118 = vmatmul.mubr.f32.gmra.mxu0 %v1906
    %v2119 = vpop.f32.mrf.mxu0
    %v2120 = vadd.f32 %v1799, %v2119
    %v2121 = vpop.f32.mrf.mxu0
    %2122 = vmatprep.mubr.f32.mxu0 0.0
    %2123 = vmatmul.mubr.f32.gmra.mxu0 %v1909
    %v2124 = vpop.f32.mrf.mxu0
    %v2125 = vadd.f32 %v1804, %v2124
    %v2126 = vpop.f32.mrf.mxu0
    %2127 = vmatprep.mubr.f32.mxu0 0.0
    %2128 = vmatmul.mubr.f32.gmra.mxu0 %v1912
    %v2129 = vpop.f32.mrf.mxu0
    %v2130 = vadd.f32 %v1809, %v2129
    %v2131 = vpop.f32.mrf.mxu0
    %2132 = vmatprep.mubr.f32.mxu0 0.0
    %2133 = vmatmul.mubr.f32.gmra.mxu0 %v1915
    %v2134 = vpop.f32.mrf.mxu0
    %v2135 = vadd.f32 %v1814, %v2134
    %v2136 = vpop.f32.mrf.mxu0
    %2137 = vmatprep.mubr.f32.mxu0 0.0
    %2138 = vmatmul.mubr.f32.gmra.mxu0 %v1918
    %v2139 = vpop.f32.mrf.mxu0
    %v2140 = vadd.f32 %v1819, %v2139
    %v2141 = vpop.f32.mrf.mxu0
    %2142 = vmatprep.mubr.f32.mxu0 0.0
    %2143 = vmatmul.mubr.f32.gmra.mxu0 %v1921
    %v2144 = vpop.f32.mrf.mxu0
    %v2145 = vadd.f32 %v1824, %v2144
    %v2146 = vpop.f32.mrf.mxu0
    %2147 = vdwg.mxu0
    %v2148 = vld [vmem:[#allocation2 + $0x4] sm:$0xff]
    %v2149 = vld [vmem:[#allocation2 + $0xc] sm:$0xff]
    %v2150 = vld [vmem:[#allocation2 + $0x14] sm:$0xff]
    %v2151 = vld [vmem:[#allocation2 + $0x1c] sm:$0xff]
    %v2152 = vld [vmem:[#allocation2 + $0x24] sm:$0xff]
    %v2153 = vld [vmem:[#allocation2 + $0x2c] sm:$0xff]
    %v2154 = vld [vmem:[#allocation2 + $0x34] sm:$0xff]
    %v2155 = vld [vmem:[#allocation2 + $0x3c] sm:$0xff]
    %v2156 = vld [vmem:[#allocation2 + $0x44] sm:$0xff]
    %v2157 = vld [vmem:[#allocation2 + $0x4c] sm:$0xff]
    %v2158 = vld [vmem:[#allocation2 + $0x54] sm:$0xff]
    %v2159 = vld [vmem:[#allocation2 + $0x5c] sm:$0xff]
    %v2160 = vld [vmem:[#allocation2 + $0x64] sm:$0xff]
    %v2161 = vld [vmem:[#allocation2 + $0x6c] sm:$0xff]
    %v2162 = vld [vmem:[#allocation2 + $0x74] sm:$0xff]
    %v2163 = vld [vmem:[#allocation2 + $0x7c] sm:$0xff]
    %v2164 = vld [vmem:[#allocation2 + $0x84] sm:$0xff]
    %v2165 = vld [vmem:[#allocation2 + $0x8c] sm:$0xff]
    %v2166 = vld [vmem:[#allocation2 + $0x94] sm:$0xff]
    %v2167 = vld [vmem:[#allocation2 + $0x9c] sm:$0xff]
    %v2168 = vld [vmem:[#allocation2 + $0xa4] sm:$0xff]
    %v2169 = vld [vmem:[#allocation2 + $0xac] sm:$0xff]
    %v2170 = vld [vmem:[#allocation2 + $0xb4] sm:$0xff]
    %v2171 = vld [vmem:[#allocation2 + $0xbc] sm:$0xff]
    %v2172 = vld [vmem:[#allocation2 + $0xc4] sm:$0xff]
    %v2173 = vld [vmem:[#allocation2 + $0xcc] sm:$0xff]
    %v2174 = vld [vmem:[#allocation2 + $0xd4] sm:$0xff]
    %v2175 = vld [vmem:[#allocation2 + $0xdc] sm:$0xff]
    %v2176 = vld [vmem:[#allocation2 + $0xe4] sm:$0xff]
    %v2177 = vld [vmem:[#allocation2 + $0xec] sm:$0xff]
    %v2178 = vld [vmem:[#allocation2 + $0xf4] sm:$0xff]
    %v2179 = vld [vmem:[#allocation2 + $0xfc] sm:$0xff]
    %v2180 = vld [vmem:[%s4 + $0x20] sm:$0xff]
    %v2181 = vld [vmem:[%s4 + $0x28] sm:$0xff]
    %v2183 = vsel %vm1053, %v2148, 0
    %v2186 = vsel %vm1053, %v2149, 0
    %v2189 = vsel %vm1053, %v2150, 0
    %v2192 = vsel %vm1053, %v2151, 0
    %v2195 = vsel %vm1053, %v2152, 0
    %v2198 = vsel %vm1053, %v2153, 0
    %v2201 = vsel %vm1053, %v2154, 0
    %v2204 = vsel %vm1053, %v2155, 0
    %v2207 = vsel %vm1053, %v2156, 0
    %v2210 = vsel %vm1053, %v2157, 0
    %v2213 = vsel %vm1053, %v2158, 0
    %v2216 = vsel %vm1053, %v2159, 0
    %v2219 = vsel %vm1053, %v2160, 0
    %v2222 = vsel %vm1053, %v2161, 0
    %v2225 = vsel %vm1053, %v2162, 0
    %v2228 = vsel %vm1053, %v2163, 0
    %v2231 = vsel %vm1053, %v2164, 0
    %v2234 = vsel %vm1053, %v2165, 0
    %v2237 = vsel %vm1053, %v2166, 0
    %v2240 = vsel %vm1053, %v2167, 0
    %v2243 = vsel %vm1053, %v2168, 0
    %v2246 = vsel %vm1053, %v2169, 0
    %v2249 = vsel %vm1053, %v2170, 0
    %v2252 = vsel %vm1053, %v2171, 0
    %v2255 = vsel %vm1053, %v2172, 0
    %v2258 = vsel %vm1053, %v2173, 0
    %v2261 = vsel %vm1053, %v2174, 0
    %v2264 = vsel %vm1053, %v2175, 0
    %v2267 = vsel %vm1053, %v2176, 0
    %v2270 = vsel %vm1053, %v2177, 0
    %v2273 = vsel %vm1053, %v2178, 0
    %v2276 = vsel %vm1053, %v2179, 0
    %2278 = vmatprep.subr.mxu0 0.0
    %2279 = vmatpush1.msra.mxu0 0.0
    %2280 = vmatprep.subr.mxu0 0.0
    %2281 = vmatpush1.msra.mxu0 0.0
    %2282 = vmatprep.subr.mxu0 0.0
    %2283 = vmatpush1.msra.mxu0 0.0
    %2284 = vmatprep.subr.mxu0 0.0
    %2285 = vmatpush1.msra.mxu0 0.0
    %2286 = vmatprep.subr.mxu0 0.0
    %2287 = vmatpush1.msra.mxu0 0.0
    %2288 = vmatprep.subr.mxu0 0.0
    %2289 = vmatpush1.msra.mxu0 0.0
    %2290 = vmatprep.subr.mxu0 0.0
    %2291 = vmatpush1.msra.mxu0 0.0
    %2292 = vmatprep.subr.mxu0 0.0
    %2293 = vmatpush1.msra.mxu0 0.0
    %2294 = vmatprep.subr.mxu0 0.0
    %2295 = vmatpush1.msra.mxu0 0.0
    %2296 = vmatprep.subr.mxu0 0.0
    %2297 = vmatpush1.msra.mxu0 0.0
    %2298 = vmatprep.subr.mxu0 0.0
    %2299 = vmatpush1.msra.mxu0 0.0
    %2300 = vmatprep.subr.mxu0 0.0
    %2301 = vmatpush1.msra.mxu0 0.0
    %2302 = vmatprep.subr.mxu0 0.0
    %2303 = vmatpush1.msra.mxu0 0.0
    %2304 = vmatprep.subr.mxu0 0.0
    %2305 = vmatpush1.msra.mxu0 0.0
    %2306 = vmatprep.subr.mxu0 0.0
    %2307 = vmatpush1.msra.mxu0 %v2181
    %2308 = vmatprep.subr.mxu0 0.0
    %2309 = vmatpush1.msra.mxu0 %v2180
    %2310 = vmatprep.subr.mxu0 0.0
    %2311 = vmatpush2.msra.mxu0 0.0
    %2312 = vmatprep.subr.mxu0 0.0
    %2313 = vmatpush2.msra.mxu0 0.0
    %2314 = vmatprep.subr.mxu0 0.0
    %2315 = vmatpush2.msra.mxu0 0.0
    %2316 = vmatprep.subr.mxu0 0.0
    %2317 = vmatpush2.msra.mxu0 0.0
    %2318 = vmatprep.subr.mxu0 0.0
    %2319 = vmatpush2.msra.mxu0 0.0
    %2320 = vmatprep.subr.mxu0 0.0
    %2321 = vmatpush2.msra.mxu0 0.0
    %2322 = vmatprep.subr.mxu0 0.0
    %2323 = vmatpush2.msra.mxu0 0.0
    %2324 = vmatprep.subr.mxu0 0.0
    %2325 = vmatpush2.msra.mxu0 0.0
    %2326 = vmatprep.subr.mxu0 0.0
    %2327 = vmatpush2.msra.mxu0 0.0
    %2328 = vmatprep.subr.mxu0 0.0
    %2329 = vmatpush2.msra.mxu0 0.0
    %2330 = vmatprep.subr.mxu0 0.0
    %2331 = vmatpush2.msra.mxu0 0.0
    %2332 = vmatprep.subr.mxu0 0.0
    %2333 = vmatpush2.msra.mxu0 0.0
    %2334 = vmatprep.subr.mxu0 0.0
    %2335 = vmatpush2.msra.mxu0 0.0
    %2336 = vmatprep.subr.mxu0 0.0
    %2337 = vmatpush2.msra.mxu0 0.0
    %2338 = vmatprep.subr.mxu0 0.0
    %2339 = vmatpush2.msra.mxu0 0.0
    %2340 = vmatprep.subr.mxu0 0.0
    %2341 = vmatpush2.msra.mxu0 0.0
    %2342 = vmatprep.mubr.f32.mxu0 0.0
    %2343 = vmatmul.mubr.f32.gmra.mxu0 %v2183
    %v2344 = vpop.f32.mrf.mxu0
    %v2345 = vadd.f32 0.0, %v2344
    %v2346 = vpop.f32.mrf.mxu0
    %2347 = vmatprep.mubr.f32.mxu0 0.0
    %2348 = vmatmul.mubr.f32.gmra.mxu0 %v2186
    %v2349 = vpop.f32.mrf.mxu0
    %v2350 = vadd.f32 0.0, %v2349
    %v2351 = vpop.f32.mrf.mxu0
    %2352 = vmatprep.mubr.f32.mxu0 0.0
    %2353 = vmatmul.mubr.f32.gmra.mxu0 %v2189
    %v2354 = vpop.f32.mrf.mxu0
    %v2355 = vadd.f32 0.0, %v2354
    %v2356 = vpop.f32.mrf.mxu0
    %2357 = vmatprep.mubr.f32.mxu0 0.0
    %2358 = vmatmul.mubr.f32.gmra.mxu0 %v2192
    %v2359 = vpop.f32.mrf.mxu0
    %v2360 = vadd.f32 0.0, %v2359
    %v2361 = vpop.f32.mrf.mxu0
    %2362 = vmatprep.mubr.f32.mxu0 0.0
    %2363 = vmatmul.mubr.f32.gmra.mxu0 %v2195
    %v2364 = vpop.f32.mrf.mxu0
    %v2365 = vadd.f32 0.0, %v2364
    %v2366 = vpop.f32.mrf.mxu0
    %2367 = vmatprep.mubr.f32.mxu0 0.0
    %2368 = vmatmul.mubr.f32.gmra.mxu0 %v2198
    %v2369 = vpop.f32.mrf.mxu0
    %v2370 = vadd.f32 0.0, %v2369
    %v2371 = vpop.f32.mrf.mxu0
    %2372 = vmatprep.mubr.f32.mxu0 0.0
    %2373 = vmatmul.mubr.f32.gmra.mxu0 %v2201
    %v2374 = vpop.f32.mrf.mxu0
    %v2375 = vadd.f32 0.0, %v2374
    %v2376 = vpop.f32.mrf.mxu0
    %2377 = vmatprep.mubr.f32.mxu0 0.0
    %2378 = vmatmul.mubr.f32.gmra.mxu0 %v2204
    %v2379 = vpop.f32.mrf.mxu0
    %v2380 = vadd.f32 0.0, %v2379
    %v2381 = vpop.f32.mrf.mxu0
    %2382 = vmatprep.mubr.f32.mxu0 0.0
    %2383 = vmatmul.mubr.f32.gmra.mxu0 %v2207
    %v2384 = vpop.f32.mrf.mxu0
    %v2385 = vadd.f32 0.0, %v2384
    %v2386 = vpop.f32.mrf.mxu0
    %2387 = vmatprep.mubr.f32.mxu0 0.0
    %2388 = vmatmul.mubr.f32.gmra.mxu0 %v2210
    %v2389 = vpop.f32.mrf.mxu0
    %v2390 = vadd.f32 0.0, %v2389
    %v2391 = vpop.f32.mrf.mxu0
    %2392 = vmatprep.mubr.f32.mxu0 0.0
    %2393 = vmatmul.mubr.f32.gmra.mxu0 %v2213
    %v2394 = vpop.f32.mrf.mxu0
    %v2395 = vadd.f32 0.0, %v2394
    %v2396 = vpop.f32.mrf.mxu0
    %2397 = vmatprep.mubr.f32.mxu0 0.0
    %2398 = vmatmul.mubr.f32.gmra.mxu0 %v2216
    %v2399 = vpop.f32.mrf.mxu0
    %v2400 = vadd.f32 0.0, %v2399
    %v2401 = vpop.f32.mrf.mxu0
    %2402 = vmatprep.mubr.f32.mxu0 0.0
    %2403 = vmatmul.mubr.f32.gmra.mxu0 %v2219
    %v2404 = vpop.f32.mrf.mxu0
    %v2405 = vadd.f32 0.0, %v2404
    %v2406 = vpop.f32.mrf.mxu0
    %2407 = vmatprep.mubr.f32.mxu0 0.0
    %2408 = vmatmul.mubr.f32.gmra.mxu0 %v2222
    %v2409 = vpop.f32.mrf.mxu0
    %v2410 = vadd.f32 0.0, %v2409
    %v2411 = vpop.f32.mrf.mxu0
    %2412 = vmatprep.mubr.f32.mxu0 0.0
    %2413 = vmatmul.mubr.f32.gmra.mxu0 %v2225
    %v2414 = vpop.f32.mrf.mxu0
    %v2415 = vadd.f32 0.0, %v2414
    %v2416 = vpop.f32.mrf.mxu0
    %2417 = vmatprep.mubr.f32.mxu0 0.0
    %2418 = vmatmul.mubr.f32.gmra.mxu0 %v2228
    %v2419 = vpop.f32.mrf.mxu0
    %v2420 = vadd.f32 0.0, %v2419
    %v2421 = vpop.f32.mrf.mxu0
    %2422 = vmatprep.mubr.f32.mxu0 0.0
    %2423 = vmatmul.mubr.f32.gmra.mxu0 %v2231
    %v2424 = vpop.f32.mrf.mxu0
    %v2425 = vadd.f32 0.0, %v2424
    %v2426 = vpop.f32.mrf.mxu0
    %2427 = vmatprep.mubr.f32.mxu0 0.0
    %2428 = vmatmul.mubr.f32.gmra.mxu0 %v2234
    %v2429 = vpop.f32.mrf.mxu0
    %v2430 = vadd.f32 0.0, %v2429
    %v2431 = vpop.f32.mrf.mxu0
    %2432 = vmatprep.mubr.f32.mxu0 0.0
    %2433 = vmatmul.mubr.f32.gmra.mxu0 %v2237
    %v2434 = vpop.f32.mrf.mxu0
    %v2435 = vadd.f32 0.0, %v2434
    %v2436 = vpop.f32.mrf.mxu0
    %2437 = vmatprep.mubr.f32.mxu0 0.0
    %2438 = vmatmul.mubr.f32.gmra.mxu0 %v2240
    %v2439 = vpop.f32.mrf.mxu0
    %v2440 = vadd.f32 0.0, %v2439
    %v2441 = vpop.f32.mrf.mxu0
    %2442 = vmatprep.mubr.f32.mxu0 0.0
    %2443 = vmatmul.mubr.f32.gmra.mxu0 %v2243
    %v2444 = vpop.f32.mrf.mxu0
    %v2445 = vadd.f32 0.0, %v2444
    %v2446 = vpop.f32.mrf.mxu0
    %2447 = vmatprep.mubr.f32.mxu0 0.0
    %2448 = vmatmul.mubr.f32.gmra.mxu0 %v2246
    %v2449 = vpop.f32.mrf.mxu0
    %v2450 = vadd.f32 0.0, %v2449
    %v2451 = vpop.f32.mrf.mxu0
    %2452 = vmatprep.mubr.f32.mxu0 0.0
    %2453 = vmatmul.mubr.f32.gmra.mxu0 %v2249
    %v2454 = vpop.f32.mrf.mxu0
    %v2455 = vadd.f32 0.0, %v2454
    %v2456 = vpop.f32.mrf.mxu0
    %2457 = vmatprep.mubr.f32.mxu0 0.0
    %2458 = vmatmul.mubr.f32.gmra.mxu0 %v2252
    %v2459 = vpop.f32.mrf.mxu0
    %v2460 = vadd.f32 0.0, %v2459
    %v2461 = vpop.f32.mrf.mxu0
    %2462 = vmatprep.mubr.f32.mxu0 0.0
    %2463 = vmatmul.mubr.f32.gmra.mxu0 %v2255
    %v2464 = vpop.f32.mrf.mxu0
    %v2465 = vadd.f32 0.0, %v2464
    %v2466 = vpop.f32.mrf.mxu0
    %2467 = vmatprep.mubr.f32.mxu0 0.0
    %2468 = vmatmul.mubr.f32.gmra.mxu0 %v2258
    %v2469 = vpop.f32.mrf.mxu0
    %v2470 = vadd.f32 0.0, %v2469
    %v2471 = vpop.f32.mrf.mxu0
    %2472 = vmatprep.mubr.f32.mxu0 0.0
    %2473 = vmatmul.mubr.f32.gmra.mxu0 %v2261
    %v2474 = vpop.f32.mrf.mxu0
    %v2475 = vadd.f32 0.0, %v2474
    %v2476 = vpop.f32.mrf.mxu0
    %2477 = vmatprep.mubr.f32.mxu0 0.0
    %2478 = vmatmul.mubr.f32.gmra.mxu0 %v2264
    %v2479 = vpop.f32.mrf.mxu0
    %v2480 = vadd.f32 0.0, %v2479
    %v2481 = vpop.f32.mrf.mxu0
    %2482 = vmatprep.mubr.f32.mxu0 0.0
    %2483 = vmatmul.mubr.f32.gmra.mxu0 %v2267
    %v2484 = vpop.f32.mrf.mxu0
    %v2485 = vadd.f32 0.0, %v2484
    %v2486 = vpop.f32.mrf.mxu0
    %2487 = vmatprep.mubr.f32.mxu0 0.0
    %2488 = vmatmul.mubr.f32.gmra.mxu0 %v2270
    %v2489 = vpop.f32.mrf.mxu0
    %v2490 = vadd.f32 0.0, %v2489
    %v2491 = vpop.f32.mrf.mxu0
    %2492 = vmatprep.mubr.f32.mxu0 0.0
    %2493 = vmatmul.mubr.f32.gmra.mxu0 %v2273
    %v2494 = vpop.f32.mrf.mxu0
    %v2495 = vadd.f32 0.0, %v2494
    %v2496 = vpop.f32.mrf.mxu0
    %2497 = vmatprep.mubr.f32.mxu0 0.0
    %2498 = vmatmul.mubr.f32.gmra.mxu0 %v2276
    %v2499 = vpop.f32.mrf.mxu0
    %v2500 = vadd.f32 0.0, %v2499
    %v2501 = vpop.f32.mrf.mxu0
    %2502 = vdwg.mxu0
    %v2503 = vadd.f32 %v1990, %v2345
    %v2504 = vadd.f32 %v1995, %v2350
    %v2505 = vadd.f32 %v2000, %v2355
    %v2506 = vadd.f32 %v2005, %v2360
    %v2507 = vadd.f32 %v2010, %v2365
    %v2508 = vadd.f32 %v2015, %v2370
    %v2509 = vadd.f32 %v2020, %v2375
    %v2510 = vadd.f32 %v2025, %v2380
    %v2511 = vadd.f32 %v2030, %v2385
    %v2512 = vadd.f32 %v2035, %v2390
    %v2513 = vadd.f32 %v2040, %v2395
    %v2514 = vadd.f32 %v2045, %v2400
    %v2515 = vadd.f32 %v2050, %v2405
    %v2516 = vadd.f32 %v2055, %v2410
    %v2517 = vadd.f32 %v2060, %v2415
    %v2518 = vadd.f32 %v2065, %v2420
    %v2519 = vadd.f32 %v2070, %v2425
    %v2520 = vadd.f32 %v2075, %v2430
    %v2521 = vadd.f32 %v2080, %v2435
    %v2522 = vadd.f32 %v2085, %v2440
    %v2523 = vadd.f32 %v2090, %v2445
    %v2524 = vadd.f32 %v2095, %v2450
    %v2525 = vadd.f32 %v2100, %v2455
    %v2526 = vadd.f32 %v2105, %v2460
    %v2527 = vadd.f32 %v2110, %v2465
    %v2528 = vadd.f32 %v2115, %v2470
    %v2529 = vadd.f32 %v2120, %v2475
    %v2530 = vadd.f32 %v2125, %v2480
    %v2531 = vadd.f32 %v2130, %v2485
    %v2532 = vadd.f32 %v2135, %v2490
    %v2533 = vadd.f32 %v2140, %v2495
    %v2534 = vadd.f32 %v2145, %v2500
    %v2535 = vld [vmem:[#allocation2 + $0x1c] sm:$0xff]
    %v2536 = vld [vmem:[#allocation2 + $0x24] sm:$0xff]
    %v2537 = vld [vmem:[#allocation2 + $0x2c] sm:$0xff]
    %v2538 = vld [vmem:[#allocation2 + $0x34] sm:$0xff]
    %v2539 = vld [vmem:[#allocation2 + $0x3c] sm:$0xff]
    %v2540 = vld [vmem:[#allocation2 + $0x44] sm:$0xff]
    %v2541 = vld [vmem:[#allocation2 + $0x4c] sm:$0xff]
    %v2542 = vld [vmem:[#allocation2 + $0x54] sm:$0xff]
    %v2543 = vld [vmem:[#allocation2 + $0x5c] sm:$0xff]
    %v2544 = vld [vmem:[#allocation2 + $0x64] sm:$0xff]
    %v2545 = vld [vmem:[#allocation2 + $0x6c] sm:$0xff]
    %v2546 = vld [vmem:[#allocation2 + $0x74] sm:$0xff]
    %v2547 = vld [vmem:[#allocation2 + $0x7c] sm:$0xff]
    %v2548 = vld [vmem:[#allocation2 + $0x84] sm:$0xff]
    %v2549 = vld [vmem:[#allocation2 + $0x8c] sm:$0xff]
    %v2550 = vld [vmem:[#allocation2 + $0x94] sm:$0xff]
    %v2551 = vld [vmem:[#allocation2 + $0x9c] sm:$0xff]
    %v2552 = vld [vmem:[#allocation2 + $0xa4] sm:$0xff]
    %v2553 = vld [vmem:[#allocation2 + $0xac] sm:$0xff]
    %v2554 = vld [vmem:[#allocation2 + $0xb4] sm:$0xff]
    %v2555 = vld [vmem:[#allocation2 + $0xbc] sm:$0xff]
    %v2556 = vld [vmem:[#allocation2 + $0xc4] sm:$0xff]
    %v2557 = vld [vmem:[#allocation2 + $0xcc] sm:$0xff]
    %v2558 = vld [vmem:[#allocation2 + $0xd4] sm:$0xff]
    %v2559 = vld [vmem:[#allocation2 + $0xdc] sm:$0xff]
    %v2560 = vld [vmem:[#allocation2 + $0xe4] sm:$0xff]
    %v2561 = vld [vmem:[#allocation2 + $0xec] sm:$0xff]
    %v2562 = vld [vmem:[#allocation2 + $0xf4] sm:$0xff]
    %v2563 = vld [vmem:[#allocation2 + $0xfc] sm:$0xff]
    %v2564 = vld [vmem:[#allocation2 + $0x104] sm:$0xff]
    %v2565 = vld [vmem:[#allocation2 + $0x10c] sm:$0xff]
    %v2566 = vld [vmem:[#allocation2 + $0x114] sm:$0xff]
    %v2567 = vld [vmem:[%s4 + $0x30] sm:$0xff]
    %v2568 = vld [vmem:[%s4 + $0x38] sm:$0xff]
    %v2570 = vsel %vm1053, %v2535, 0
    %v2573 = vsel %vm1053, %v2536, 0
    %v2576 = vsel %vm1053, %v2537, 0
    %v2579 = vsel %vm1053, %v2538, 0
    %v2582 = vsel %vm1053, %v2539, 0
    %v2585 = vsel %vm1053, %v2540, 0
    %v2588 = vsel %vm1053, %v2541, 0
    %v2591 = vsel %vm1053, %v2542, 0
    %v2594 = vsel %vm1053, %v2543, 0
    %v2597 = vsel %vm1053, %v2544, 0
    %v2600 = vsel %vm1053, %v2545, 0
    %v2603 = vsel %vm1053, %v2546, 0
    %v2606 = vsel %vm1053, %v2547, 0
    %v2609 = vsel %vm1053, %v2548, 0
    %v2612 = vsel %vm1053, %v2549, 0
    %v2615 = vsel %vm1053, %v2550, 0
    %v2618 = vsel %vm1053, %v2551, 0
    %v2621 = vsel %vm1053, %v2552, 0
    %v2624 = vsel %vm1053, %v2553, 0
    %v2627 = vsel %vm1053, %v2554, 0
    %v2630 = vsel %vm1053, %v2555, 0
    %v2633 = vsel %vm1053, %v2556, 0
    %v2636 = vsel %vm1053, %v2557, 0
    %v2639 = vsel %vm1053, %v2558, 0
    %v2642 = vsel %vm1053, %v2559, 0
    %v2645 = vsel %vm1053, %v2560, 0
    %v2648 = vsel %vm1053, %v2561, 0
    %v2651 = vsel %vm1053, %v2562, 0
    %v2654 = vsel %vm1053, %v2563, 0
    %v2657 = vsel %vm1053, %v2564, 0
    %v2660 = vsel %vm1053, %v2565, 0
    %v2663 = vsel %vm1053, %v2566, 0
    %2665 = vmatprep.subr.mxu0 0.0
    %2666 = vmatpush1.msra.mxu0 0.0
    %2667 = vmatprep.subr.mxu0 0.0
    %2668 = vmatpush1.msra.mxu0 0.0
    %2669 = vmatprep.subr.mxu0 0.0
    %2670 = vmatpush1.msra.mxu0 0.0
    %2671 = vmatprep.subr.mxu0 0.0
    %2672 = vmatpush1.msra.mxu0 0.0
    %2673 = vmatprep.subr.mxu0 0.0
    %2674 = vmatpush1.msra.mxu0 0.0
    %2675 = vmatprep.subr.mxu0 0.0
    %2676 = vmatpush1.msra.mxu0 0.0
    %2677 = vmatprep.subr.mxu0 0.0
    %2678 = vmatpush1.msra.mxu0 0.0
    %2679 = vmatprep.subr.mxu0 0.0
    %2680 = vmatpush1.msra.mxu0 0.0
    %2681 = vmatprep.subr.mxu0 0.0
    %2682 = vmatpush1.msra.mxu0 0.0
    %2683 = vmatprep.subr.mxu0 0.0
    %2684 = vmatpush1.msra.mxu0 0.0
    %2685 = vmatprep.subr.mxu0 0.0
    %2686 = vmatpush1.msra.mxu0 0.0
    %2687 = vmatprep.subr.mxu0 0.0
    %2688 = vmatpush1.msra.mxu0 0.0
    %2689 = vmatprep.subr.mxu0 0.0
    %2690 = vmatpush1.msra.mxu0 0.0
    %2691 = vmatprep.subr.mxu0 0.0
    %2692 = vmatpush1.msra.mxu0 0.0
    %2693 = vmatprep.subr.mxu0 0.0
    %2694 = vmatpush1.msra.mxu0 %v2568
    %2695 = vmatprep.subr.mxu0 0.0
    %2696 = vmatpush1.msra.mxu0 %v2567
    %2697 = vmatprep.subr.mxu0 0.0
    %2698 = vmatpush2.msra.mxu0 0.0
    %2699 = vmatprep.subr.mxu0 0.0
    %2700 = vmatpush2.msra.mxu0 0.0
    %2701 = vmatprep.subr.mxu0 0.0
    %2702 = vmatpush2.msra.mxu0 0.0
    %2703 = vmatprep.subr.mxu0 0.0
    %2704 = vmatpush2.msra.mxu0 0.0
    %2705 = vmatprep.subr.mxu0 0.0
    %2706 = vmatpush2.msra.mxu0 0.0
    %2707 = vmatprep.subr.mxu0 0.0
    %2708 = vmatpush2.msra.mxu0 0.0
    %2709 = vmatprep.subr.mxu0 0.0
    %2710 = vmatpush2.msra.mxu0 0.0
    %2711 = vmatprep.subr.mxu0 0.0
    %2712 = vmatpush2.msra.mxu0 0.0
    %2713 = vmatprep.subr.mxu0 0.0
    %2714 = vmatpush2.msra.mxu0 0.0
    %2715 = vmatprep.subr.mxu0 0.0
    %2716 = vmatpush2.msra.mxu0 0.0
    %2717 = vmatprep.subr.mxu0 0.0
    %2718 = vmatpush2.msra.mxu0 0.0
    %2719 = vmatprep.subr.mxu0 0.0
    %2720 = vmatpush2.msra.mxu0 0.0
    %2721 = vmatprep.subr.mxu0 0.0
    %2722 = vmatpush2.msra.mxu0 0.0
    %2723 = vmatprep.subr.mxu0 0.0
    %2724 = vmatpush2.msra.mxu0 0.0
    %2725 = vmatprep.subr.mxu0 0.0
    %2726 = vmatpush2.msra.mxu0 0.0
    %2727 = vmatprep.subr.mxu0 0.0
    %2728 = vmatpush2.msra.mxu0 0.0
    %2729 = vmatprep.mubr.f32.mxu0 0.0
    %2730 = vmatmul.mubr.f32.gmra.mxu0 %v2570
    %v2731 = vpop.f32.mrf.mxu0
    %v2732 = vadd.f32 0.0, %v2731
    %v2733 = vpop.f32.mrf.mxu0
    %2734 = vmatprep.mubr.f32.mxu0 0.0
    %2735 = vmatmul.mubr.f32.gmra.mxu0 %v2573
    %v2736 = vpop.f32.mrf.mxu0
    %v2737 = vadd.f32 0.0, %v2736
    %v2738 = vpop.f32.mrf.mxu0
    %2739 = vmatprep.mubr.f32.mxu0 0.0
    %2740 = vmatmul.mubr.f32.gmra.mxu0 %v2576
    %v2741 = vpop.f32.mrf.mxu0
    %v2742 = vadd.f32 0.0, %v2741
    %v2743 = vpop.f32.mrf.mxu0
    %2744 = vmatprep.mubr.f32.mxu0 0.0
    %2745 = vmatmul.mubr.f32.gmra.mxu0 %v2579
    %v2746 = vpop.f32.mrf.mxu0
    %v2747 = vadd.f32 0.0, %v2746
    %v2748 = vpop.f32.mrf.mxu0
    %2749 = vmatprep.mubr.f32.mxu0 0.0
    %2750 = vmatmul.mubr.f32.gmra.mxu0 %v2582
    %v2751 = vpop.f32.mrf.mxu0
    %v2752 = vadd.f32 0.0, %v2751
    %v2753 = vpop.f32.mrf.mxu0
    %2754 = vmatprep.mubr.f32.mxu0 0.0
    %2755 = vmatmul.mubr.f32.gmra.mxu0 %v2585
    %v2756 = vpop.f32.mrf.mxu0
    %v2757 = vadd.f32 0.0, %v2756
    %v2758 = vpop.f32.mrf.mxu0
    %2759 = vmatprep.mubr.f32.mxu0 0.0
    %2760 = vmatmul.mubr.f32.gmra.mxu0 %v2588
    %v2761 = vpop.f32.mrf.mxu0
    %v2762 = vadd.f32 0.0, %v2761
    %v2763 = vpop.f32.mrf.mxu0
    %2764 = vmatprep.mubr.f32.mxu0 0.0
    %2765 = vmatmul.mubr.f32.gmra.mxu0 %v2591
    %v2766 = vpop.f32.mrf.mxu0
    %v2767 = vadd.f32 0.0, %v2766
    %v2768 = vpop.f32.mrf.mxu0
    %2769 = vmatprep.mubr.f32.mxu0 0.0
    %2770 = vmatmul.mubr.f32.gmra.mxu0 %v2594
    %v2771 = vpop.f32.mrf.mxu0
    %v2772 = vadd.f32 0.0, %v2771
    %v2773 = vpop.f32.mrf.mxu0
    %2774 = vmatprep.mubr.f32.mxu0 0.0
    %2775 = vmatmul.mubr.f32.gmra.mxu0 %v2597
    %v2776 = vpop.f32.mrf.mxu0
    %v2777 = vadd.f32 0.0, %v2776
    %v2778 = vpop.f32.mrf.mxu0
    %2779 = vmatprep.mubr.f32.mxu0 0.0
    %2780 = vmatmul.mubr.f32.gmra.mxu0 %v2600
    %v2781 = vpop.f32.mrf.mxu0
    %v2782 = vadd.f32 0.0, %v2781
    %v2783 = vpop.f32.mrf.mxu0
    %2784 = vmatprep.mubr.f32.mxu0 0.0
    %2785 = vmatmul.mubr.f32.gmra.mxu0 %v2603
    %v2786 = vpop.f32.mrf.mxu0
    %v2787 = vadd.f32 0.0, %v2786
    %v2788 = vpop.f32.mrf.mxu0
    %2789 = vmatprep.mubr.f32.mxu0 0.0
    %2790 = vmatmul.mubr.f32.gmra.mxu0 %v2606
    %v2791 = vpop.f32.mrf.mxu0
    %v2792 = vadd.f32 0.0, %v2791
    %v2793 = vpop.f32.mrf.mxu0
    %2794 = vmatprep.mubr.f32.mxu0 0.0
    %2795 = vmatmul.mubr.f32.gmra.mxu0 %v2609
    %v2796 = vpop.f32.mrf.mxu0
    %v2797 = vadd.f32 0.0, %v2796
    %v2798 = vpop.f32.mrf.mxu0
    %2799 = vmatprep.mubr.f32.mxu0 0.0
    %2800 = vmatmul.mubr.f32.gmra.mxu0 %v2612
    %v2801 = vpop.f32.mrf.mxu0
    %v2802 = vadd.f32 0.0, %v2801
    %v2803 = vpop.f32.mrf.mxu0
    %2804 = vmatprep.mubr.f32.mxu0 0.0
    %2805 = vmatmul.mubr.f32.gmra.mxu0 %v2615
    %v2806 = vpop.f32.mrf.mxu0
    %v2807 = vadd.f32 0.0, %v2806
    %v2808 = vpop.f32.mrf.mxu0
    %2809 = vmatprep.mubr.f32.mxu0 0.0
    %2810 = vmatmul.mubr.f32.gmra.mxu0 %v2618
    %v2811 = vpop.f32.mrf.mxu0
    %v2812 = vadd.f32 0.0, %v2811
    %v2813 = vpop.f32.mrf.mxu0
    %2814 = vmatprep.mubr.f32.mxu0 0.0
    %2815 = vmatmul.mubr.f32.gmra.mxu0 %v2621
    %v2816 = vpop.f32.mrf.mxu0
    %v2817 = vadd.f32 0.0, %v2816
    %v2818 = vpop.f32.mrf.mxu0
    %2819 = vmatprep.mubr.f32.mxu0 0.0
    %2820 = vmatmul.mubr.f32.gmra.mxu0 %v2624
    %v2821 = vpop.f32.mrf.mxu0
    %v2822 = vadd.f32 0.0, %v2821
    %v2823 = vpop.f32.mrf.mxu0
    %2824 = vmatprep.mubr.f32.mxu0 0.0
    %2825 = vmatmul.mubr.f32.gmra.mxu0 %v2627
    %v2826 = vpop.f32.mrf.mxu0
    %v2827 = vadd.f32 0.0, %v2826
    %v2828 = vpop.f32.mrf.mxu0
    %2829 = vmatprep.mubr.f32.mxu0 0.0
    %2830 = vmatmul.mubr.f32.gmra.mxu0 %v2630
    %v2831 = vpop.f32.mrf.mxu0
    %v2832 = vadd.f32 0.0, %v2831
    %v2833 = vpop.f32.mrf.mxu0
    %2834 = vmatprep.mubr.f32.mxu0 0.0
    %2835 = vmatmul.mubr.f32.gmra.mxu0 %v2633
    %v2836 = vpop.f32.mrf.mxu0
    %v2837 = vadd.f32 0.0, %v2836
    %v2838 = vpop.f32.mrf.mxu0
    %2839 = vmatprep.mubr.f32.mxu0 0.0
    %2840 = vmatmul.mubr.f32.gmra.mxu0 %v2636
    %v2841 = vpop.f32.mrf.mxu0
    %v2842 = vadd.f32 0.0, %v2841
    %v2843 = vpop.f32.mrf.mxu0
    %2844 = vmatprep.mubr.f32.mxu0 0.0
    %2845 = vmatmul.mubr.f32.gmra.mxu0 %v2639
    %v2846 = vpop.f32.mrf.mxu0
    %v2847 = vadd.f32 0.0, %v2846
    %v2848 = vpop.f32.mrf.mxu0
    %2849 = vmatprep.mubr.f32.mxu0 0.0
    %2850 = vmatmul.mubr.f32.gmra.mxu0 %v2642
    %v2851 = vpop.f32.mrf.mxu0
    %v2852 = vadd.f32 0.0, %v2851
    %v2853 = vpop.f32.mrf.mxu0
    %2854 = vmatprep.mubr.f32.mxu0 0.0
    %2855 = vmatmul.mubr.f32.gmra.mxu0 %v2645
    %v2856 = vpop.f32.mrf.mxu0
    %v2857 = vadd.f32 0.0, %v2856
    %v2858 = vpop.f32.mrf.mxu0
    %2859 = vmatprep.mubr.f32.mxu0 0.0
    %2860 = vmatmul.mubr.f32.gmra.mxu0 %v2648
    %v2861 = vpop.f32.mrf.mxu0
    %v2862 = vadd.f32 0.0, %v2861
    %v2863 = vpop.f32.mrf.mxu0
    %2864 = vmatprep.mubr.f32.mxu0 0.0
    %2865 = vmatmul.mubr.f32.gmra.mxu0 %v2651
    %v2866 = vpop.f32.mrf.mxu0
    %v2867 = vadd.f32 0.0, %v2866
    %v2868 = vpop.f32.mrf.mxu0
    %2869 = vmatprep.mubr.f32.mxu0 0.0
    %2870 = vmatmul.mubr.f32.gmra.mxu0 %v2654
    %v2871 = vpop.f32.mrf.mxu0
    %v2872 = vadd.f32 0.0, %v2871
    %v2873 = vpop.f32.mrf.mxu0
    %2874 = vmatprep.mubr.f32.mxu0 0.0
    %2875 = vmatmul.mubr.f32.gmra.mxu0 %v2657
    %v2876 = vpop.f32.mrf.mxu0
    %v2877 = vadd.f32 0.0, %v2876
    %v2878 = vpop.f32.mrf.mxu0
    %2879 = vmatprep.mubr.f32.mxu0 0.0
    %2880 = vmatmul.mubr.f32.gmra.mxu0 %v2660
    %v2881 = vpop.f32.mrf.mxu0
    %v2882 = vadd.f32 0.0, %v2881
    %v2883 = vpop.f32.mrf.mxu0
    %2884 = vmatprep.mubr.f32.mxu0 0.0
    %2885 = vmatmul.mubr.f32.gmra.mxu0 %v2663
    %v2886 = vpop.f32.mrf.mxu0
    %v2887 = vadd.f32 0.0, %v2886
    %v2888 = vpop.f32.mrf.mxu0
    %2889 = vdwg.mxu0
    %v2890 = vadd.f32 %v2503, %v2732
    %v2891 = vadd.f32 %v2504, %v2737
    %v2892 = vadd.f32 %v2505, %v2742
    %v2893 = vadd.f32 %v2506, %v2747
    %v2894 = vadd.f32 %v2507, %v2752
    %v2895 = vadd.f32 %v2508, %v2757
    %v2896 = vadd.f32 %v2509, %v2762
    %v2897 = vadd.f32 %v2510, %v2767
    %v2898 = vadd.f32 %v2511, %v2772
    %v2899 = vadd.f32 %v2512, %v2777
    %v2900 = vadd.f32 %v2513, %v2782
    %v2901 = vadd.f32 %v2514, %v2787
    %v2902 = vadd.f32 %v2515, %v2792
    %v2903 = vadd.f32 %v2516, %v2797
    %v2904 = vadd.f32 %v2517, %v2802
    %v2905 = vadd.f32 %v2518, %v2807
    %v2906 = vadd.f32 %v2519, %v2812
    %v2907 = vadd.f32 %v2520, %v2817
    %v2908 = vadd.f32 %v2521, %v2822
    %v2909 = vadd.f32 %v2522, %v2827
    %v2910 = vadd.f32 %v2523, %v2832
    %v2911 = vadd.f32 %v2524, %v2837
    %v2912 = vadd.f32 %v2525, %v2842
    %v2913 = vadd.f32 %v2526, %v2847
    %v2914 = vadd.f32 %v2527, %v2852
    %v2915 = vadd.f32 %v2528, %v2857
    %v2916 = vadd.f32 %v2529, %v2862
    %v2917 = vadd.f32 %v2530, %v2867
    %v2918 = vadd.f32 %v2531, %v2872
    %v2919 = vadd.f32 %v2532, %v2877
    %v2920 = vadd.f32 %v2533, %v2882
    %v2921 = vadd.f32 %v2534, %v2887
    %v2922 = vld [vmem:[#allocation2 + $0x1e] sm:$0xff]
    %v2923 = vld [vmem:[#allocation2 + $0x26] sm:$0xff]
    %v2924 = vld [vmem:[#allocation2 + $0x2e] sm:$0xff]
    %v2925 = vld [vmem:[#allocation2 + $0x36] sm:$0xff]
    %v2926 = vld [vmem:[#allocation2 + $0x3e] sm:$0xff]
    %v2927 = vld [vmem:[#allocation2 + $0x46] sm:$0xff]
    %v2928 = vld [vmem:[#allocation2 + $0x4e] sm:$0xff]
    %v2929 = vld [vmem:[#allocation2 + $0x56] sm:$0xff]
    %v2930 = vld [vmem:[#allocation2 + $0x5e] sm:$0xff]
    %v2931 = vld [vmem:[#allocation2 + $0x66] sm:$0xff]
    %v2932 = vld [vmem:[#allocation2 + $0x6e] sm:$0xff]
    %v2933 = vld [vmem:[#allocation2 + $0x76] sm:$0xff]
    %v2934 = vld [vmem:[#allocation2 + $0x7e] sm:$0xff]
    %v2935 = vld [vmem:[#allocation2 + $0x86] sm:$0xff]
    %v2936 = vld [vmem:[#allocation2 + $0x8e] sm:$0xff]
    %v2937 = vld [vmem:[#allocation2 + $0x96] sm:$0xff]
    %v2938 = vld [vmem:[#allocation2 + $0x9e] sm:$0xff]
    %v2939 = vld [vmem:[#allocation2 + $0xa6] sm:$0xff]
    %v2940 = vld [vmem:[#allocation2 + $0xae] sm:$0xff]
    %v2941 = vld [vmem:[#allocation2 + $0xb6] sm:$0xff]
    %v2942 = vld [vmem:[#allocation2 + $0xbe] sm:$0xff]
    %v2943 = vld [vmem:[#allocation2 + $0xc6] sm:$0xff]
    %v2944 = vld [vmem:[#allocation2 + $0xce] sm:$0xff]
    %v2945 = vld [vmem:[#allocation2 + $0xd6] sm:$0xff]
    %v2946 = vld [vmem:[#allocation2 + $0xde] sm:$0xff]
    %v2947 = vld [vmem:[#allocation2 + $0xe6] sm:$0xff]
    %v2948 = vld [vmem:[#allocation2 + $0xee] sm:$0xff]
    %v2949 = vld [vmem:[#allocation2 + $0xf6] sm:$0xff]
    %v2950 = vld [vmem:[#allocation2 + $0xfe] sm:$0xff]
    %v2951 = vld [vmem:[#allocation2 + $0x106] sm:$0xff]
    %v2952 = vld [vmem:[#allocation2 + $0x10e] sm:$0xff]
    %v2953 = vld [vmem:[#allocation2 + $0x116] sm:$0xff]
    %v2954 = vld [vmem:[%s4 + $0x40] sm:$0xff]
    %v2955 = vld [vmem:[%s4 + $0x48] sm:$0xff]
    %v2957 = vsel %vm1053, %v2922, 0
    %v2960 = vsel %vm1053, %v2923, 0
    %v2963 = vsel %vm1053, %v2924, 0
    %v2966 = vsel %vm1053, %v2925, 0
    %v2969 = vsel %vm1053, %v2926, 0
    %v2972 = vsel %vm1053, %v2927, 0
    %v2975 = vsel %vm1053, %v2928, 0
    %v2978 = vsel %vm1053, %v2929, 0
    %v2981 = vsel %vm1053, %v2930, 0
    %v2984 = vsel %vm1053, %v2931, 0
    %v2987 = vsel %vm1053, %v2932, 0
    %v2990 = vsel %vm1053, %v2933, 0
    %v2993 = vsel %vm1053, %v2934, 0
    %v2996 = vsel %vm1053, %v2935, 0
    %v2999 = vsel %vm1053, %v2936, 0
    %v3002 = vsel %vm1053, %v2937, 0
    %v3005 = vsel %vm1053, %v2938, 0
    %v3008 = vsel %vm1053, %v2939, 0
    %v3011 = vsel %vm1053, %v2940, 0
    %v3014 = vsel %vm1053, %v2941, 0
    %v3017 = vsel %vm1053, %v2942, 0
    %v3020 = vsel %vm1053, %v2943, 0
    %v3023 = vsel %vm1053, %v2944, 0
    %v3026 = vsel %vm1053, %v2945, 0
    %v3029 = vsel %vm1053, %v2946, 0
    %v3032 = vsel %vm1053, %v2947, 0
    %v3035 = vsel %vm1053, %v2948, 0
    %v3038 = vsel %vm1053, %v2949, 0
    %v3041 = vsel %vm1053, %v2950, 0
    %v3044 = vsel %vm1053, %v2951, 0
    %v3047 = vsel %vm1053, %v2952, 0
    %v3050 = vsel %vm1053, %v2953, 0
    %3052 = vmatprep.subr.mxu0 0.0
    %3053 = vmatpush1.msra.mxu0 0.0
    %3054 = vmatprep.subr.mxu0 0.0
    %3055 = vmatpush1.msra.mxu0 0.0
    %3056 = vmatprep.subr.mxu0 0.0
    %3057 = vmatpush1.msra.mxu0 0.0
    %3058 = vmatprep.subr.mxu0 0.0
    %3059 = vmatpush1.msra.mxu0 0.0
    %3060 = vmatprep.subr.mxu0 0.0
    %3061 = vmatpush1.msra.mxu0 0.0
    %3062 = vmatprep.subr.mxu0 0.0
    %3063 = vmatpush1.msra.mxu0 0.0
    %3064 = vmatprep.subr.mxu0 0.0
    %3065 = vmatpush1.msra.mxu0 0.0
    %3066 = vmatprep.subr.mxu0 0.0
    %3067 = vmatpush1.msra.mxu0 0.0
    %3068 = vmatprep.subr.mxu0 0.0
    %3069 = vmatpush1.msra.mxu0 0.0
    %3070 = vmatprep.subr.mxu0 0.0
    %3071 = vmatpush1.msra.mxu0 0.0
    %3072 = vmatprep.subr.mxu0 0.0
    %3073 = vmatpush1.msra.mxu0 0.0
    %3074 = vmatprep.subr.mxu0 0.0
    %3075 = vmatpush1.msra.mxu0 0.0
    %3076 = vmatprep.subr.mxu0 0.0
    %3077 = vmatpush1.msra.mxu0 0.0
    %3078 = vmatprep.subr.mxu0 0.0
    %3079 = vmatpush1.msra.mxu0 0.0
    %3080 = vmatprep.subr.mxu0 0.0
    %3081 = vmatpush1.msra.mxu0 %v2955
    %3082 = vmatprep.subr.mxu0 0.0
    %3083 = vmatpush1.msra.mxu0 %v2954
    %3084 = vmatprep.subr.mxu0 0.0
    %3085 = vmatpush2.msra.mxu0 0.0
    %3086 = vmatprep.subr.mxu0 0.0
    %3087 = vmatpush2.msra.mxu0 0.0
    %3088 = vmatprep.subr.mxu0 0.0
    %3089 = vmatpush2.msra.mxu0 0.0
    %3090 = vmatprep.subr.mxu0 0.0
    %3091 = vmatpush2.msra.mxu0 0.0
    %3092 = vmatprep.subr.mxu0 0.0
    %3093 = vmatpush2.msra.mxu0 0.0
    %3094 = vmatprep.subr.mxu0 0.0
    %3095 = vmatpush2.msra.mxu0 0.0
    %3096 = vmatprep.subr.mxu0 0.0
    %3097 = vmatpush2.msra.mxu0 0.0
    %3098 = vmatprep.subr.mxu0 0.0
    %3099 = vmatpush2.msra.mxu0 0.0
    %3100 = vmatprep.subr.mxu0 0.0
    %3101 = vmatpush2.msra.mxu0 0.0
    %3102 = vmatprep.subr.mxu0 0.0
    %3103 = vmatpush2.msra.mxu0 0.0
    %3104 = vmatprep.subr.mxu0 0.0
    %3105 = vmatpush2.msra.mxu0 0.0
    %3106 = vmatprep.subr.mxu0 0.0
    %3107 = vmatpush2.msra.mxu0 0.0
    %3108 = vmatprep.subr.mxu0 0.0
    %3109 = vmatpush2.msra.mxu0 0.0
    %3110 = vmatprep.subr.mxu0 0.0
    %3111 = vmatpush2.msra.mxu0 0.0
    %3112 = vmatprep.subr.mxu0 0.0
    %3113 = vmatpush2.msra.mxu0 0.0
    %3114 = vmatprep.subr.mxu0 0.0
    %3115 = vmatpush2.msra.mxu0 0.0
    %3116 = vmatprep.mubr.f32.mxu0 0.0
    %3117 = vmatmul.mubr.f32.gmra.mxu0 %v2957
    %v3118 = vpop.f32.mrf.mxu0
    %v3119 = vadd.f32 0.0, %v3118
    %v3120 = vpop.f32.mrf.mxu0
    %3121 = vmatprep.mubr.f32.mxu0 0.0
    %3122 = vmatmul.mubr.f32.gmra.mxu0 %v2960
    %v3123 = vpop.f32.mrf.mxu0
    %v3124 = vadd.f32 0.0, %v3123
    %v3125 = vpop.f32.mrf.mxu0
    %3126 = vmatprep.mubr.f32.mxu0 0.0
    %3127 = vmatmul.mubr.f32.gmra.mxu0 %v2963
    %v3128 = vpop.f32.mrf.mxu0
    %v3129 = vadd.f32 0.0, %v3128
    %v3130 = vpop.f32.mrf.mxu0
    %3131 = vmatprep.mubr.f32.mxu0 0.0
    %3132 = vmatmul.mubr.f32.gmra.mxu0 %v2966
    %v3133 = vpop.f32.mrf.mxu0
    %v3134 = vadd.f32 0.0, %v3133
    %v3135 = vpop.f32.mrf.mxu0
    %3136 = vmatprep.mubr.f32.mxu0 0.0
    %3137 = vmatmul.mubr.f32.gmra.mxu0 %v2969
    %v3138 = vpop.f32.mrf.mxu0
    %v3139 = vadd.f32 0.0, %v3138
    %v3140 = vpop.f32.mrf.mxu0
    %3141 = vmatprep.mubr.f32.mxu0 0.0
    %3142 = vmatmul.mubr.f32.gmra.mxu0 %v2972
    %v3143 = vpop.f32.mrf.mxu0
    %v3144 = vadd.f32 0.0, %v3143
    %v3145 = vpop.f32.mrf.mxu0
    %3146 = vmatprep.mubr.f32.mxu0 0.0
    %3147 = vmatmul.mubr.f32.gmra.mxu0 %v2975
    %v3148 = vpop.f32.mrf.mxu0
    %v3149 = vadd.f32 0.0, %v3148
    %v3150 = vpop.f32.mrf.mxu0
    %3151 = vmatprep.mubr.f32.mxu0 0.0
    %3152 = vmatmul.mubr.f32.gmra.mxu0 %v2978
    %v3153 = vpop.f32.mrf.mxu0
    %v3154 = vadd.f32 0.0, %v3153
    %v3155 = vpop.f32.mrf.mxu0
    %3156 = vmatprep.mubr.f32.mxu0 0.0
    %3157 = vmatmul.mubr.f32.gmra.mxu0 %v2981
    %v3158 = vpop.f32.mrf.mxu0
    %v3159 = vadd.f32 0.0, %v3158
    %v3160 = vpop.f32.mrf.mxu0
    %3161 = vmatprep.mubr.f32.mxu0 0.0
    %3162 = vmatmul.mubr.f32.gmra.mxu0 %v2984
    %v3163 = vpop.f32.mrf.mxu0
    %v3164 = vadd.f32 0.0, %v3163
    %v3165 = vpop.f32.mrf.mxu0
    %3166 = vmatprep.mubr.f32.mxu0 0.0
    %3167 = vmatmul.mubr.f32.gmra.mxu0 %v2987
    %v3168 = vpop.f32.mrf.mxu0
    %v3169 = vadd.f32 0.0, %v3168
    %v3170 = vpop.f32.mrf.mxu0
    %3171 = vmatprep.mubr.f32.mxu0 0.0
    %3172 = vmatmul.mubr.f32.gmra.mxu0 %v2990
    %v3173 = vpop.f32.mrf.mxu0
    %v3174 = vadd.f32 0.0, %v3173
    %v3175 = vpop.f32.mrf.mxu0
    %3176 = vmatprep.mubr.f32.mxu0 0.0
    %3177 = vmatmul.mubr.f32.gmra.mxu0 %v2993
    %v3178 = vpop.f32.mrf.mxu0
    %v3179 = vadd.f32 0.0, %v3178
    %v3180 = vpop.f32.mrf.mxu0
    %3181 = vmatprep.mubr.f32.mxu0 0.0
    %3182 = vmatmul.mubr.f32.gmra.mxu0 %v2996
    %v3183 = vpop.f32.mrf.mxu0
    %v3184 = vadd.f32 0.0, %v3183
    %v3185 = vpop.f32.mrf.mxu0
    %3186 = vmatprep.mubr.f32.mxu0 0.0
    %3187 = vmatmul.mubr.f32.gmra.mxu0 %v2999
    %v3188 = vpop.f32.mrf.mxu0
    %v3189 = vadd.f32 0.0, %v3188
    %v3190 = vpop.f32.mrf.mxu0
    %3191 = vmatprep.mubr.f32.mxu0 0.0
    %3192 = vmatmul.mubr.f32.gmra.mxu0 %v3002
    %v3193 = vpop.f32.mrf.mxu0
    %v3194 = vadd.f32 0.0, %v3193
    %v3195 = vpop.f32.mrf.mxu0
    %3196 = vmatprep.mubr.f32.mxu0 0.0
    %3197 = vmatmul.mubr.f32.gmra.mxu0 %v3005
    %v3198 = vpop.f32.mrf.mxu0
    %v3199 = vadd.f32 0.0, %v3198
    %v3200 = vpop.f32.mrf.mxu0
    %3201 = vmatprep.mubr.f32.mxu0 0.0
    %3202 = vmatmul.mubr.f32.gmra.mxu0 %v3008
    %v3203 = vpop.f32.mrf.mxu0
    %v3204 = vadd.f32 0.0, %v3203
    %v3205 = vpop.f32.mrf.mxu0
    %3206 = vmatprep.mubr.f32.mxu0 0.0
    %3207 = vmatmul.mubr.f32.gmra.mxu0 %v3011
    %v3208 = vpop.f32.mrf.mxu0
    %v3209 = vadd.f32 0.0, %v3208
    %v3210 = vpop.f32.mrf.mxu0
    %3211 = vmatprep.mubr.f32.mxu0 0.0
    %3212 = vmatmul.mubr.f32.gmra.mxu0 %v3014
    %v3213 = vpop.f32.mrf.mxu0
    %v3214 = vadd.f32 0.0, %v3213
    %v3215 = vpop.f32.mrf.mxu0
    %3216 = vmatprep.mubr.f32.mxu0 0.0
    %3217 = vmatmul.mubr.f32.gmra.mxu0 %v3017
    %v3218 = vpop.f32.mrf.mxu0
    %v3219 = vadd.f32 0.0, %v3218
    %v3220 = vpop.f32.mrf.mxu0
    %3221 = vmatprep.mubr.f32.mxu0 0.0
    %3222 = vmatmul.mubr.f32.gmra.mxu0 %v3020
    %v3223 = vpop.f32.mrf.mxu0
    %v3224 = vadd.f32 0.0, %v3223
    %v3225 = vpop.f32.mrf.mxu0
    %3226 = vmatprep.mubr.f32.mxu0 0.0
    %3227 = vmatmul.mubr.f32.gmra.mxu0 %v3023
    %v3228 = vpop.f32.mrf.mxu0
    %v3229 = vadd.f32 0.0, %v3228
    %v3230 = vpop.f32.mrf.mxu0
    %3231 = vmatprep.mubr.f32.mxu0 0.0
    %3232 = vmatmul.mubr.f32.gmra.mxu0 %v3026
    %v3233 = vpop.f32.mrf.mxu0
    %v3234 = vadd.f32 0.0, %v3233
    %v3235 = vpop.f32.mrf.mxu0
    %3236 = vmatprep.mubr.f32.mxu0 0.0
    %3237 = vmatmul.mubr.f32.gmra.mxu0 %v3029
    %v3238 = vpop.f32.mrf.mxu0
    %v3239 = vadd.f32 0.0, %v3238
    %v3240 = vpop.f32.mrf.mxu0
    %3241 = vmatprep.mubr.f32.mxu0 0.0
    %3242 = vmatmul.mubr.f32.gmra.mxu0 %v3032
    %v3243 = vpop.f32.mrf.mxu0
    %v3244 = vadd.f32 0.0, %v3243
    %v3245 = vpop.f32.mrf.mxu0
    %3246 = vmatprep.mubr.f32.mxu0 0.0
    %3247 = vmatmul.mubr.f32.gmra.mxu0 %v3035
    %v3248 = vpop.f32.mrf.mxu0
    %v3249 = vadd.f32 0.0, %v3248
    %v3250 = vpop.f32.mrf.mxu0
    %3251 = vmatprep.mubr.f32.mxu0 0.0
    %3252 = vmatmul.mubr.f32.gmra.mxu0 %v3038
    %v3253 = vpop.f32.mrf.mxu0
    %v3254 = vadd.f32 0.0, %v3253
    %v3255 = vpop.f32.mrf.mxu0
    %3256 = vmatprep.mubr.f32.mxu0 0.0
    %3257 = vmatmul.mubr.f32.gmra.mxu0 %v3041
    %v3258 = vpop.f32.mrf.mxu0
    %v3259 = vadd.f32 0.0, %v3258
    %v3260 = vpop.f32.mrf.mxu0
    %3261 = vmatprep.mubr.f32.mxu0 0.0
    %3262 = vmatmul.mubr.f32.gmra.mxu0 %v3044
    %v3263 = vpop.f32.mrf.mxu0
    %v3264 = vadd.f32 0.0, %v3263
    %v3265 = vpop.f32.mrf.mxu0
    %3266 = vmatprep.mubr.f32.mxu0 0.0
    %3267 = vmatmul.mubr.f32.gmra.mxu0 %v3047
    %v3268 = vpop.f32.mrf.mxu0
    %v3269 = vadd.f32 0.0, %v3268
    %v3270 = vpop.f32.mrf.mxu0
    %3271 = vmatprep.mubr.f32.mxu0 0.0
    %3272 = vmatmul.mubr.f32.gmra.mxu0 %v3050
    %v3273 = vpop.f32.mrf.mxu0
    %v3274 = vadd.f32 0.0, %v3273
    %v3275 = vpop.f32.mrf.mxu0
    %3276 = vdwg.mxu0
    %v3277 = vadd.f32 %v2890, %v3119
    %v3278 = vadd.f32 %v2891, %v3124
    %v3279 = vadd.f32 %v2892, %v3129
    %v3280 = vadd.f32 %v2893, %v3134
    %v3281 = vadd.f32 %v2894, %v3139
    %v3282 = vadd.f32 %v2895, %v3144
    %v3283 = vadd.f32 %v2896, %v3149
    %v3284 = vadd.f32 %v2897, %v3154
    %v3285 = vadd.f32 %v2898, %v3159
    %v3286 = vadd.f32 %v2899, %v3164
    %v3287 = vadd.f32 %v2900, %v3169
    %v3288 = vadd.f32 %v2901, %v3174
    %v3289 = vadd.f32 %v2902, %v3179
    %v3290 = vadd.f32 %v2903, %v3184
    %v3291 = vadd.f32 %v2904, %v3189
    %v3292 = vadd.f32 %v2905, %v3194
    %v3293 = vadd.f32 %v2906, %v3199
    %v3294 = vadd.f32 %v2907, %v3204
    %v3295 = vadd.f32 %v2908, %v3209
    %v3296 = vadd.f32 %v2909, %v3214
    %v3297 = vadd.f32 %v2910, %v3219
    %v3298 = vadd.f32 %v2911, %v3224
    %v3299 = vadd.f32 %v2912, %v3229
    %v3300 = vadd.f32 %v2913, %v3234
    %v3301 = vadd.f32 %v2914, %v3239
    %v3302 = vadd.f32 %v2915, %v3244
    %v3303 = vadd.f32 %v2916, %v3249
    %v3304 = vadd.f32 %v2917, %v3254
    %v3305 = vadd.f32 %v2918, %v3259
    %v3306 = vadd.f32 %v2919, %v3264
    %v3307 = vadd.f32 %v2920, %v3269
    %v3308 = vadd.f32 %v2921, %v3274
    %v3309 = vld [vmem:[#allocation2 + $0x20] sm:$0xff]
    %v3310 = vld [vmem:[#allocation2 + $0x28] sm:$0xff]
    %v3311 = vld [vmem:[#allocation2 + $0x30] sm:$0xff]
    %v3312 = vld [vmem:[#allocation2 + $0x38] sm:$0xff]
    %v3313 = vld [vmem:[#allocation2 + $0x40] sm:$0xff]
    %v3314 = vld [vmem:[#allocation2 + $0x48] sm:$0xff]
    %v3315 = vld [vmem:[#allocation2 + $0x50] sm:$0xff]
    %v3316 = vld [vmem:[#allocation2 + $0x58] sm:$0xff]
    %v3317 = vld [vmem:[#allocation2 + $0x60] sm:$0xff]
    %v3318 = vld [vmem:[#allocation2 + $0x68] sm:$0xff]
    %v3319 = vld [vmem:[#allocation2 + $0x70] sm:$0xff]
    %v3320 = vld [vmem:[#allocation2 + $0x78] sm:$0xff]
    %v3321 = vld [vmem:[#allocation2 + $0x80] sm:$0xff]
    %v3322 = vld [vmem:[#allocation2 + $0x88] sm:$0xff]
    %v3323 = vld [vmem:[#allocation2 + $0x90] sm:$0xff]
    %v3324 = vld [vmem:[#allocation2 + $0x98] sm:$0xff]
    %v3325 = vld [vmem:[#allocation2 + $0xa0] sm:$0xff]
    %v3326 = vld [vmem:[#allocation2 + $0xa8] sm:$0xff]
    %v3327 = vld [vmem:[#allocation2 + $0xb0] sm:$0xff]
    %v3328 = vld [vmem:[#allocation2 + $0xb8] sm:$0xff]
    %v3329 = vld [vmem:[#allocation2 + $0xc0] sm:$0xff]
    %v3330 = vld [vmem:[#allocation2 + $0xc8] sm:$0xff]
    %v3331 = vld [vmem:[#allocation2 + $0xd0] sm:$0xff]
    %v3332 = vld [vmem:[#allocation2 + $0xd8] sm:$0xff]
    %v3333 = vld [vmem:[#allocation2 + $0xe0] sm:$0xff]
    %v3334 = vld [vmem:[#allocation2 + $0xe8] sm:$0xff]
    %v3335 = vld [vmem:[#allocation2 + $0xf0] sm:$0xff]
    %v3336 = vld [vmem:[#allocation2 + $0xf8] sm:$0xff]
    %v3337 = vld [vmem:[#allocation2 + $0x100] sm:$0xff]
    %v3338 = vld [vmem:[#allocation2 + $0x108] sm:$0xff]
    %v3339 = vld [vmem:[#allocation2 + $0x110] sm:$0xff]
    %v3340 = vld [vmem:[#allocation2 + $0x118] sm:$0xff]
    %v3341 = vld [vmem:[%s4 + $0x50] sm:$0xff]
    %v3342 = vld [vmem:[%s4 + $0x58] sm:$0xff]
    %v3344 = vsel %vm1053, %v3309, 0
    %v3347 = vsel %vm1053, %v3310, 0
    %v3350 = vsel %vm1053, %v3311, 0
    %v3353 = vsel %vm1053, %v3312, 0
    %v3356 = vsel %vm1053, %v3313, 0
    %v3359 = vsel %vm1053, %v3314, 0
    %v3362 = vsel %vm1053, %v3315, 0
    %v3365 = vsel %vm1053, %v3316, 0
    %v3368 = vsel %vm1053, %v3317, 0
    %v3371 = vsel %vm1053, %v3318, 0
    %v3374 = vsel %vm1053, %v3319, 0
    %v3377 = vsel %vm1053, %v3320, 0
    %v3380 = vsel %vm1053, %v3321, 0
    %v3383 = vsel %vm1053, %v3322, 0
    %v3386 = vsel %vm1053, %v3323, 0
    %v3389 = vsel %vm1053, %v3324, 0
    %v3392 = vsel %vm1053, %v3325, 0
    %v3395 = vsel %vm1053, %v3326, 0
    %v3398 = vsel %vm1053, %v3327, 0
    %v3401 = vsel %vm1053, %v3328, 0
    %v3404 = vsel %vm1053, %v3329, 0
    %v3407 = vsel %vm1053, %v3330, 0
    %v3410 = vsel %vm1053, %v3331, 0
    %v3413 = vsel %vm1053, %v3332, 0
    %v3416 = vsel %vm1053, %v3333, 0
    %v3419 = vsel %vm1053, %v3334, 0
    %v3422 = vsel %vm1053, %v3335, 0
    %v3425 = vsel %vm1053, %v3336, 0
    %v3428 = vsel %vm1053, %v3337, 0
    %v3431 = vsel %vm1053, %v3338, 0
    %v3434 = vsel %vm1053, %v3339, 0
    %v3437 = vsel %vm1053, %v3340, 0
    %3439 = vmatprep.subr.mxu0 0.0
    %3440 = vmatpush1.msra.mxu0 0.0
    %3441 = vmatprep.subr.mxu0 0.0
    %3442 = vmatpush1.msra.mxu0 0.0
    %3443 = vmatprep.subr.mxu0 0.0
    %3444 = vmatpush1.msra.mxu0 0.0
    %3445 = vmatprep.subr.mxu0 0.0
    %3446 = vmatpush1.msra.mxu0 0.0
    %3447 = vmatprep.subr.mxu0 0.0
    %3448 = vmatpush1.msra.mxu0 0.0
    %3449 = vmatprep.subr.mxu0 0.0
    %3450 = vmatpush1.msra.mxu0 0.0
    %3451 = vmatprep.subr.mxu0 0.0
    %3452 = vmatpush1.msra.mxu0 0.0
    %3453 = vmatprep.subr.mxu0 0.0
    %3454 = vmatpush1.msra.mxu0 0.0
    %3455 = vmatprep.subr.mxu0 0.0
    %3456 = vmatpush1.msra.mxu0 0.0
    %3457 = vmatprep.subr.mxu0 0.0
    %3458 = vmatpush1.msra.mxu0 0.0
    %3459 = vmatprep.subr.mxu0 0.0
    %3460 = vmatpush1.msra.mxu0 0.0
    %3461 = vmatprep.subr.mxu0 0.0
    %3462 = vmatpush1.msra.mxu0 0.0
    %3463 = vmatprep.subr.mxu0 0.0
    %3464 = vmatpush1.msra.mxu0 0.0
    %3465 = vmatprep.subr.mxu0 0.0
    %3466 = vmatpush1.msra.mxu0 0.0
    %3467 = vmatprep.subr.mxu0 0.0
    %3468 = vmatpush1.msra.mxu0 %v3342
    %3469 = vmatprep.subr.mxu0 0.0
    %3470 = vmatpush1.msra.mxu0 %v3341
    %3471 = vmatprep.subr.mxu0 0.0
    %3472 = vmatpush2.msra.mxu0 0.0
    %3473 = vmatprep.subr.mxu0 0.0
    %3474 = vmatpush2.msra.mxu0 0.0
    %3475 = vmatprep.subr.mxu0 0.0
    %3476 = vmatpush2.msra.mxu0 0.0
    %3477 = vmatprep.subr.mxu0 0.0
    %3478 = vmatpush2.msra.mxu0 0.0
    %3479 = vmatprep.subr.mxu0 0.0
    %3480 = vmatpush2.msra.mxu0 0.0
    %3481 = vmatprep.subr.mxu0 0.0
    %3482 = vmatpush2.msra.mxu0 0.0
    %3483 = vmatprep.subr.mxu0 0.0
    %3484 = vmatpush2.msra.mxu0 0.0
    %3485 = vmatprep.subr.mxu0 0.0
    %3486 = vmatpush2.msra.mxu0 0.0
    %3487 = vmatprep.subr.mxu0 0.0
    %3488 = vmatpush2.msra.mxu0 0.0
    %3489 = vmatprep.subr.mxu0 0.0
    %3490 = vmatpush2.msra.mxu0 0.0
    %3491 = vmatprep.subr.mxu0 0.0
    %3492 = vmatpush2.msra.mxu0 0.0
    %3493 = vmatprep.subr.mxu0 0.0
    %3494 = vmatpush2.msra.mxu0 0.0
    %3495 = vmatprep.subr.mxu0 0.0
    %3496 = vmatpush2.msra.mxu0 0.0
    %3497 = vmatprep.subr.mxu0 0.0
    %3498 = vmatpush2.msra.mxu0 0.0
    %3499 = vmatprep.subr.mxu0 0.0
    %3500 = vmatpush2.msra.mxu0 0.0
    %3501 = vmatprep.subr.mxu0 0.0
    %3502 = vmatpush2.msra.mxu0 0.0
    %3503 = vmatprep.mubr.f32.mxu0 0.0
    %3504 = vmatmul.mubr.f32.gmra.mxu0 %v3344
    %v3505 = vpop.f32.mrf.mxu0
    %v3506 = vadd.f32 0.0, %v3505
    %v3507 = vpop.f32.mrf.mxu0
    %3508 = vmatprep.mubr.f32.mxu0 0.0
    %3509 = vmatmul.mubr.f32.gmra.mxu0 %v3347
    %v3510 = vpop.f32.mrf.mxu0
    %v3511 = vadd.f32 0.0, %v3510
    %v3512 = vpop.f32.mrf.mxu0
    %3513 = vmatprep.mubr.f32.mxu0 0.0
    %3514 = vmatmul.mubr.f32.gmra.mxu0 %v3350
    %v3515 = vpop.f32.mrf.mxu0
    %v3516 = vadd.f32 0.0, %v3515
    %v3517 = vpop.f32.mrf.mxu0
    %3518 = vmatprep.mubr.f32.mxu0 0.0
    %3519 = vmatmul.mubr.f32.gmra.mxu0 %v3353
    %v3520 = vpop.f32.mrf.mxu0
    %v3521 = vadd.f32 0.0, %v3520
    %v3522 = vpop.f32.mrf.mxu0
    %3523 = vmatprep.mubr.f32.mxu0 0.0
    %3524 = vmatmul.mubr.f32.gmra.mxu0 %v3356
    %v3525 = vpop.f32.mrf.mxu0
    %v3526 = vadd.f32 0.0, %v3525
    %v3527 = vpop.f32.mrf.mxu0
    %3528 = vmatprep.mubr.f32.mxu0 0.0
    %3529 = vmatmul.mubr.f32.gmra.mxu0 %v3359
    %v3530 = vpop.f32.mrf.mxu0
    %v3531 = vadd.f32 0.0, %v3530
    %v3532 = vpop.f32.mrf.mxu0
    %3533 = vmatprep.mubr.f32.mxu0 0.0
    %3534 = vmatmul.mubr.f32.gmra.mxu0 %v3362
    %v3535 = vpop.f32.mrf.mxu0
    %v3536 = vadd.f32 0.0, %v3535
    %v3537 = vpop.f32.mrf.mxu0
    %3538 = vmatprep.mubr.f32.mxu0 0.0
    %3539 = vmatmul.mubr.f32.gmra.mxu0 %v3365
    %v3540 = vpop.f32.mrf.mxu0
    %v3541 = vadd.f32 0.0, %v3540
    %v3542 = vpop.f32.mrf.mxu0
    %3543 = vmatprep.mubr.f32.mxu0 0.0
    %3544 = vmatmul.mubr.f32.gmra.mxu0 %v3368
    %v3545 = vpop.f32.mrf.mxu0
    %v3546 = vadd.f32 0.0, %v3545
    %v3547 = vpop.f32.mrf.mxu0
    %3548 = vmatprep.mubr.f32.mxu0 0.0
    %3549 = vmatmul.mubr.f32.gmra.mxu0 %v3371
    %v3550 = vpop.f32.mrf.mxu0
    %v3551 = vadd.f32 0.0, %v3550
    %v3552 = vpop.f32.mrf.mxu0
    %3553 = vmatprep.mubr.f32.mxu0 0.0
    %3554 = vmatmul.mubr.f32.gmra.mxu0 %v3374
    %v3555 = vpop.f32.mrf.mxu0
    %v3556 = vadd.f32 0.0, %v3555
    %v3557 = vpop.f32.mrf.mxu0
    %3558 = vmatprep.mubr.f32.mxu0 0.0
    %3559 = vmatmul.mubr.f32.gmra.mxu0 %v3377
    %v3560 = vpop.f32.mrf.mxu0
    %v3561 = vadd.f32 0.0, %v3560
    %v3562 = vpop.f32.mrf.mxu0
    %3563 = vmatprep.mubr.f32.mxu0 0.0
    %3564 = vmatmul.mubr.f32.gmra.mxu0 %v3380
    %v3565 = vpop.f32.mrf.mxu0
    %v3566 = vadd.f32 0.0, %v3565
    %v3567 = vpop.f32.mrf.mxu0
    %3568 = vmatprep.mubr.f32.mxu0 0.0
    %3569 = vmatmul.mubr.f32.gmra.mxu0 %v3383
    %v3570 = vpop.f32.mrf.mxu0
    %v3571 = vadd.f32 0.0, %v3570
    %v3572 = vpop.f32.mrf.mxu0
    %3573 = vmatprep.mubr.f32.mxu0 0.0
    %3574 = vmatmul.mubr.f32.gmra.mxu0 %v3386
    %v3575 = vpop.f32.mrf.mxu0
    %v3576 = vadd.f32 0.0, %v3575
    %v3577 = vpop.f32.mrf.mxu0
    %3578 = vmatprep.mubr.f32.mxu0 0.0
    %3579 = vmatmul.mubr.f32.gmra.mxu0 %v3389
    %v3580 = vpop.f32.mrf.mxu0
    %v3581 = vadd.f32 0.0, %v3580
    %v3582 = vpop.f32.mrf.mxu0
    %3583 = vmatprep.mubr.f32.mxu0 0.0
    %3584 = vmatmul.mubr.f32.gmra.mxu0 %v3392
    %v3585 = vpop.f32.mrf.mxu0
    %v3586 = vadd.f32 0.0, %v3585
    %v3587 = vpop.f32.mrf.mxu0
    %3588 = vmatprep.mubr.f32.mxu0 0.0
    %3589 = vmatmul.mubr.f32.gmra.mxu0 %v3395
    %v3590 = vpop.f32.mrf.mxu0
    %v3591 = vadd.f32 0.0, %v3590
    %v3592 = vpop.f32.mrf.mxu0
    %3593 = vmatprep.mubr.f32.mxu0 0.0
    %3594 = vmatmul.mubr.f32.gmra.mxu0 %v3398
    %v3595 = vpop.f32.mrf.mxu0
    %v3596 = vadd.f32 0.0, %v3595
    %v3597 = vpop.f32.mrf.mxu0
    %3598 = vmatprep.mubr.f32.mxu0 0.0
    %3599 = vmatmul.mubr.f32.gmra.mxu0 %v3401
    %v3600 = vpop.f32.mrf.mxu0
    %v3601 = vadd.f32 0.0, %v3600
    %v3602 = vpop.f32.mrf.mxu0
    %3603 = vmatprep.mubr.f32.mxu0 0.0
    %3604 = vmatmul.mubr.f32.gmra.mxu0 %v3404
    %v3605 = vpop.f32.mrf.mxu0
    %v3606 = vadd.f32 0.0, %v3605
    %v3607 = vpop.f32.mrf.mxu0
    %3608 = vmatprep.mubr.f32.mxu0 0.0
    %3609 = vmatmul.mubr.f32.gmra.mxu0 %v3407
    %v3610 = vpop.f32.mrf.mxu0
    %v3611 = vadd.f32 0.0, %v3610
    %v3612 = vpop.f32.mrf.mxu0
    %3613 = vmatprep.mubr.f32.mxu0 0.0
    %3614 = vmatmul.mubr.f32.gmra.mxu0 %v3410
    %v3615 = vpop.f32.mrf.mxu0
    %v3616 = vadd.f32 0.0, %v3615
    %v3617 = vpop.f32.mrf.mxu0
    %3618 = vmatprep.mubr.f32.mxu0 0.0
    %3619 = vmatmul.mubr.f32.gmra.mxu0 %v3413
    %v3620 = vpop.f32.mrf.mxu0
    %v3621 = vadd.f32 0.0, %v3620
    %v3622 = vpop.f32.mrf.mxu0
    %3623 = vmatprep.mubr.f32.mxu0 0.0
    %3624 = vmatmul.mubr.f32.gmra.mxu0 %v3416
    %v3625 = vpop.f32.mrf.mxu0
    %v3626 = vadd.f32 0.0, %v3625
    %v3627 = vpop.f32.mrf.mxu0
    %3628 = vmatprep.mubr.f32.mxu0 0.0
    %3629 = vmatmul.mubr.f32.gmra.mxu0 %v3419
    %v3630 = vpop.f32.mrf.mxu0
    %v3631 = vadd.f32 0.0, %v3630
    %v3632 = vpop.f32.mrf.mxu0
    %3633 = vmatprep.mubr.f32.mxu0 0.0
    %3634 = vmatmul.mubr.f32.gmra.mxu0 %v3422
    %v3635 = vpop.f32.mrf.mxu0
    %v3636 = vadd.f32 0.0, %v3635
    %v3637 = vpop.f32.mrf.mxu0
    %3638 = vmatprep.mubr.f32.mxu0 0.0
    %3639 = vmatmul.mubr.f32.gmra.mxu0 %v3425
    %v3640 = vpop.f32.mrf.mxu0
    %v3641 = vadd.f32 0.0, %v3640
    %v3642 = vpop.f32.mrf.mxu0
    %3643 = vmatprep.mubr.f32.mxu0 0.0
    %3644 = vmatmul.mubr.f32.gmra.mxu0 %v3428
    %v3645 = vpop.f32.mrf.mxu0
    %v3646 = vadd.f32 0.0, %v3645
    %v3647 = vpop.f32.mrf.mxu0
    %3648 = vmatprep.mubr.f32.mxu0 0.0
    %3649 = vmatmul.mubr.f32.gmra.mxu0 %v3431
    %v3650 = vpop.f32.mrf.mxu0
    %v3651 = vadd.f32 0.0, %v3650
    %v3652 = vpop.f32.mrf.mxu0
    %3653 = vmatprep.mubr.f32.mxu0 0.0
    %3654 = vmatmul.mubr.f32.gmra.mxu0 %v3434
    %v3655 = vpop.f32.mrf.mxu0
    %v3656 = vadd.f32 0.0, %v3655
    %v3657 = vpop.f32.mrf.mxu0
    %3658 = vmatprep.mubr.f32.mxu0 0.0
    %3659 = vmatmul.mubr.f32.gmra.mxu0 %v3437
    %v3660 = vpop.f32.mrf.mxu0
    %v3661 = vadd.f32 0.0, %v3660
    %v3662 = vpop.f32.mrf.mxu0
    %3663 = vdwg.mxu0
    %v3664 = vadd.f32 %v3277, %v3506
    %v3665 = vadd.f32 %v3278, %v3511
    %v3666 = vadd.f32 %v3279, %v3516
    %v3667 = vadd.f32 %v3280, %v3521
    %v3668 = vadd.f32 %v3281, %v3526
    %v3669 = vadd.f32 %v3282, %v3531
    %v3670 = vadd.f32 %v3283, %v3536
    %v3671 = vadd.f32 %v3284, %v3541
    %v3672 = vadd.f32 %v3285, %v3546
    %v3673 = vadd.f32 %v3286, %v3551
    %v3674 = vadd.f32 %v3287, %v3556
    %v3675 = vadd.f32 %v3288, %v3561
    %v3676 = vadd.f32 %v3289, %v3566
    %v3677 = vadd.f32 %v3290, %v3571
    %v3678 = vadd.f32 %v3291, %v3576
    %v3679 = vadd.f32 %v3292, %v3581
    %v3680 = vadd.f32 %v3293, %v3586
    %v3681 = vadd.f32 %v3294, %v3591
    %v3682 = vadd.f32 %v3295, %v3596
    %v3683 = vadd.f32 %v3296, %v3601
    %v3684 = vadd.f32 %v3297, %v3606
    %v3685 = vadd.f32 %v3298, %v3611
    %v3686 = vadd.f32 %v3299, %v3616
    %v3687 = vadd.f32 %v3300, %v3621
    %v3688 = vadd.f32 %v3301, %v3626
    %v3689 = vadd.f32 %v3302, %v3631
    %v3690 = vadd.f32 %v3303, %v3636
    %v3691 = vadd.f32 %v3304, %v3641
    %v3692 = vadd.f32 %v3305, %v3646
    %v3693 = vadd.f32 %v3306, %v3651
    %v3694 = vadd.f32 %v3307, %v3656
    %v3695 = vadd.f32 %v3308, %v3661
    %v3696 = vld [vmem:[#allocation2 + $0x38] sm:$0xff]
    %v3697 = vld [vmem:[#allocation2 + $0x40] sm:$0xff]
    %v3698 = vld [vmem:[#allocation2 + $0x48] sm:$0xff]
    %v3699 = vld [vmem:[#allocation2 + $0x50] sm:$0xff]
    %v3700 = vld [vmem:[#allocation2 + $0x58] sm:$0xff]
    %v3701 = vld [vmem:[#allocation2 + $0x60] sm:$0xff]
    %v3702 = vld [vmem:[#allocation2 + $0x68] sm:$0xff]
    %v3703 = vld [vmem:[#allocation2 + $0x70] sm:$0xff]
    %v3704 = vld [vmem:[#allocation2 + $0x78] sm:$0xff]
    %v3705 = vld [vmem:[#allocation2 + $0x80] sm:$0xff]
    %v3706 = vld [vmem:[#allocation2 + $0x88] sm:$0xff]
    %v3707 = vld [vmem:[#allocation2 + $0x90] sm:$0xff]
    %v3708 = vld [vmem:[#allocation2 + $0x98] sm:$0xff]
    %v3709 = vld [vmem:[#allocation2 + $0xa0] sm:$0xff]
    %v3710 = vld [vmem:[#allocation2 + $0xa8] sm:$0xff]
    %v3711 = vld [vmem:[#allocation2 + $0xb0] sm:$0xff]
    %v3712 = vld [vmem:[#allocation2 + $0xb8] sm:$0xff]
    %v3713 = vld [vmem:[#allocation2 + $0xc0] sm:$0xff]
    %v3714 = vld [vmem:[#allocation2 + $0xc8] sm:$0xff]
    %v3715 = vld [vmem:[#allocation2 + $0xd0] sm:$0xff]
    %v3716 = vld [vmem:[#allocation2 + $0xd8] sm:$0xff]
    %v3717 = vld [vmem:[#allocation2 + $0xe0] sm:$0xff]
    %v3718 = vld [vmem:[#allocation2 + $0xe8] sm:$0xff]
    %v3719 = vld [vmem:[#allocation2 + $0xf0] sm:$0xff]
    %v3720 = vld [vmem:[#allocation2 + $0xf8] sm:$0xff]
    %v3721 = vld [vmem:[#allocation2 + $0x100] sm:$0xff]
    %v3722 = vld [vmem:[#allocation2 + $0x108] sm:$0xff]
    %v3723 = vld [vmem:[#allocation2 + $0x110] sm:$0xff]
    %v3724 = vld [vmem:[#allocation2 + $0x118] sm:$0xff]
    %v3725 = vld [vmem:[#allocation2 + $0x120] sm:$0xff]
    %v3726 = vld [vmem:[#allocation2 + $0x128] sm:$0xff]
    %v3727 = vld [vmem:[#allocation2 + $0x130] sm:$0xff]
    %v3728 = vld [vmem:[%s4 + $0x60] sm:$0xff]
    %v3729 = vld [vmem:[%s4 + $0x68] sm:$0xff]
    %v3731 = vsel %vm1053, %v3696, 0
    %v3734 = vsel %vm1053, %v3697, 0
    %v3737 = vsel %vm1053, %v3698, 0
    %v3740 = vsel %vm1053, %v3699, 0
    %v3743 = vsel %vm1053, %v3700, 0
    %v3746 = vsel %vm1053, %v3701, 0
    %v3749 = vsel %vm1053, %v3702, 0
    %v3752 = vsel %vm1053, %v3703, 0
    %v3755 = vsel %vm1053, %v3704, 0
    %v3758 = vsel %vm1053, %v3705, 0
    %v3761 = vsel %vm1053, %v3706, 0
    %v3764 = vsel %vm1053, %v3707, 0
    %v3767 = vsel %vm1053, %v3708, 0
    %v3770 = vsel %vm1053, %v3709, 0
    %v3773 = vsel %vm1053, %v3710, 0
    %v3776 = vsel %vm1053, %v3711, 0
    %v3779 = vsel %vm1053, %v3712, 0
    %v3782 = vsel %vm1053, %v3713, 0
    %v3785 = vsel %vm1053, %v3714, 0
    %v3788 = vsel %vm1053, %v3715, 0
    %v3791 = vsel %vm1053, %v3716, 0
    %v3794 = vsel %vm1053, %v3717, 0
    %v3797 = vsel %vm1053, %v3718, 0
    %v3800 = vsel %vm1053, %v3719, 0
    %v3803 = vsel %vm1053, %v3720, 0
    %v3806 = vsel %vm1053, %v3721, 0
    %v3809 = vsel %vm1053, %v3722, 0
    %v3812 = vsel %vm1053, %v3723, 0
    %v3815 = vsel %vm1053, %v3724, 0
    %v3818 = vsel %vm1053, %v3725, 0
    %v3821 = vsel %vm1053, %v3726, 0
    %v3824 = vsel %vm1053, %v3727, 0
    %3826 = vmatprep.subr.mxu0 0.0
    %3827 = vmatpush1.msra.mxu0 0.0
    %3828 = vmatprep.subr.mxu0 0.0
    %3829 = vmatpush1.msra.mxu0 0.0
    %3830 = vmatprep.subr.mxu0 0.0
    %3831 = vmatpush1.msra.mxu0 0.0
    %3832 = vmatprep.subr.mxu0 0.0
    %3833 = vmatpush1.msra.mxu0 0.0
    %3834 = vmatprep.subr.mxu0 0.0
    %3835 = vmatpush1.msra.mxu0 0.0
    %3836 = vmatprep.subr.mxu0 0.0
    %3837 = vmatpush1.msra.mxu0 0.0
    %3838 = vmatprep.subr.mxu0 0.0
    %3839 = vmatpush1.msra.mxu0 0.0
    %3840 = vmatprep.subr.mxu0 0.0
    %3841 = vmatpush1.msra.mxu0 0.0
    %3842 = vmatprep.subr.mxu0 0.0
    %3843 = vmatpush1.msra.mxu0 0.0
    %3844 = vmatprep.subr.mxu0 0.0
    %3845 = vmatpush1.msra.mxu0 0.0
    %3846 = vmatprep.subr.mxu0 0.0
    %3847 = vmatpush1.msra.mxu0 0.0
    %3848 = vmatprep.subr.mxu0 0.0
    %3849 = vmatpush1.msra.mxu0 0.0
    %3850 = vmatprep.subr.mxu0 0.0
    %3851 = vmatpush1.msra.mxu0 0.0
    %3852 = vmatprep.subr.mxu0 0.0
    %3853 = vmatpush1.msra.mxu0 0.0
    %3854 = vmatprep.subr.mxu0 0.0
    %3855 = vmatpush1.msra.mxu0 %v3729
    %3856 = vmatprep.subr.mxu0 0.0
    %3857 = vmatpush1.msra.mxu0 %v3728
    %3858 = vmatprep.subr.mxu0 0.0
    %3859 = vmatpush2.msra.mxu0 0.0
    %3860 = vmatprep.subr.mxu0 0.0
    %3861 = vmatpush2.msra.mxu0 0.0
    %3862 = vmatprep.subr.mxu0 0.0
    %3863 = vmatpush2.msra.mxu0 0.0
    %3864 = vmatprep.subr.mxu0 0.0
    %3865 = vmatpush2.msra.mxu0 0.0
    %3866 = vmatprep.subr.mxu0 0.0
    %3867 = vmatpush2.msra.mxu0 0.0
    %3868 = vmatprep.subr.mxu0 0.0
    %3869 = vmatpush2.msra.mxu0 0.0
    %3870 = vmatprep.subr.mxu0 0.0
    %3871 = vmatpush2.msra.mxu0 0.0
    %3872 = vmatprep.subr.mxu0 0.0
    %3873 = vmatpush2.msra.mxu0 0.0
    %3874 = vmatprep.subr.mxu0 0.0
    %3875 = vmatpush2.msra.mxu0 0.0
    %3876 = vmatprep.subr.mxu0 0.0
    %3877 = vmatpush2.msra.mxu0 0.0
    %3878 = vmatprep.subr.mxu0 0.0
    %3879 = vmatpush2.msra.mxu0 0.0
    %3880 = vmatprep.subr.mxu0 0.0
    %3881 = vmatpush2.msra.mxu0 0.0
    %3882 = vmatprep.subr.mxu0 0.0
    %3883 = vmatpush2.msra.mxu0 0.0
    %3884 = vmatprep.subr.mxu0 0.0
    %3885 = vmatpush2.msra.mxu0 0.0
    %3886 = vmatprep.subr.mxu0 0.0
    %3887 = vmatpush2.msra.mxu0 0.0
    %3888 = vmatprep.subr.mxu0 0.0
    %3889 = vmatpush2.msra.mxu0 0.0
    %3890 = vmatprep.mubr.f32.mxu0 0.0
    %3891 = vmatmul.mubr.f32.gmra.mxu0 %v3731
    %v3892 = vpop.f32.mrf.mxu0
    %v3893 = vadd.f32 0.0, %v3892
    %v3894 = vpop.f32.mrf.mxu0
    %3895 = vmatprep.mubr.f32.mxu0 0.0
    %3896 = vmatmul.mubr.f32.gmra.mxu0 %v3734
    %v3897 = vpop.f32.mrf.mxu0
    %v3898 = vadd.f32 0.0, %v3897
    %v3899 = vpop.f32.mrf.mxu0
    %3900 = vmatprep.mubr.f32.mxu0 0.0
    %3901 = vmatmul.mubr.f32.gmra.mxu0 %v3737
    %v3902 = vpop.f32.mrf.mxu0
    %v3903 = vadd.f32 0.0, %v3902
    %v3904 = vpop.f32.mrf.mxu0
    %3905 = vmatprep.mubr.f32.mxu0 0.0
    %3906 = vmatmul.mubr.f32.gmra.mxu0 %v3740
    %v3907 = vpop.f32.mrf.mxu0
    %v3908 = vadd.f32 0.0, %v3907
    %v3909 = vpop.f32.mrf.mxu0
    %3910 = vmatprep.mubr.f32.mxu0 0.0
    %3911 = vmatmul.mubr.f32.gmra.mxu0 %v3743
    %v3912 = vpop.f32.mrf.mxu0
    %v3913 = vadd.f32 0.0, %v3912
    %v3914 = vpop.f32.mrf.mxu0
    %3915 = vmatprep.mubr.f32.mxu0 0.0
    %3916 = vmatmul.mubr.f32.gmra.mxu0 %v3746
    %v3917 = vpop.f32.mrf.mxu0
    %v3918 = vadd.f32 0.0, %v3917
    %v3919 = vpop.f32.mrf.mxu0
    %3920 = vmatprep.mubr.f32.mxu0 0.0
    %3921 = vmatmul.mubr.f32.gmra.mxu0 %v3749
    %v3922 = vpop.f32.mrf.mxu0
    %v3923 = vadd.f32 0.0, %v3922
    %v3924 = vpop.f32.mrf.mxu0
    %3925 = vmatprep.mubr.f32.mxu0 0.0
    %3926 = vmatmul.mubr.f32.gmra.mxu0 %v3752
    %v3927 = vpop.f32.mrf.mxu0
    %v3928 = vadd.f32 0.0, %v3927
    %v3929 = vpop.f32.mrf.mxu0
    %3930 = vmatprep.mubr.f32.mxu0 0.0
    %3931 = vmatmul.mubr.f32.gmra.mxu0 %v3755
    %v3932 = vpop.f32.mrf.mxu0
    %v3933 = vadd.f32 0.0, %v3932
    %v3934 = vpop.f32.mrf.mxu0
    %3935 = vmatprep.mubr.f32.mxu0 0.0
    %3936 = vmatmul.mubr.f32.gmra.mxu0 %v3758
    %v3937 = vpop.f32.mrf.mxu0
    %v3938 = vadd.f32 0.0, %v3937
    %v3939 = vpop.f32.mrf.mxu0
    %3940 = vmatprep.mubr.f32.mxu0 0.0
    %3941 = vmatmul.mubr.f32.gmra.mxu0 %v3761
    %v3942 = vpop.f32.mrf.mxu0
    %v3943 = vadd.f32 0.0, %v3942
    %v3944 = vpop.f32.mrf.mxu0
    %3945 = vmatprep.mubr.f32.mxu0 0.0
    %3946 = vmatmul.mubr.f32.gmra.mxu0 %v3764
    %v3947 = vpop.f32.mrf.mxu0
    %v3948 = vadd.f32 0.0, %v3947
    %v3949 = vpop.f32.mrf.mxu0
    %3950 = vmatprep.mubr.f32.mxu0 0.0
    %3951 = vmatmul.mubr.f32.gmra.mxu0 %v3767
    %v3952 = vpop.f32.mrf.mxu0
    %v3953 = vadd.f32 0.0, %v3952
    %v3954 = vpop.f32.mrf.mxu0
    %3955 = vmatprep.mubr.f32.mxu0 0.0
    %3956 = vmatmul.mubr.f32.gmra.mxu0 %v3770
    %v3957 = vpop.f32.mrf.mxu0
    %v3958 = vadd.f32 0.0, %v3957
    %v3959 = vpop.f32.mrf.mxu0
    %3960 = vmatprep.mubr.f32.mxu0 0.0
    %3961 = vmatmul.mubr.f32.gmra.mxu0 %v3773
    %v3962 = vpop.f32.mrf.mxu0
    %v3963 = vadd.f32 0.0, %v3962
    %v3964 = vpop.f32.mrf.mxu0
    %3965 = vmatprep.mubr.f32.mxu0 0.0
    %3966 = vmatmul.mubr.f32.gmra.mxu0 %v3776
    %v3967 = vpop.f32.mrf.mxu0
    %v3968 = vadd.f32 0.0, %v3967
    %v3969 = vpop.f32.mrf.mxu0
    %3970 = vmatprep.mubr.f32.mxu0 0.0
    %3971 = vmatmul.mubr.f32.gmra.mxu0 %v3779
    %v3972 = vpop.f32.mrf.mxu0
    %v3973 = vadd.f32 0.0, %v3972
    %v3974 = vpop.f32.mrf.mxu0
    %3975 = vmatprep.mubr.f32.mxu0 0.0
    %3976 = vmatmul.mubr.f32.gmra.mxu0 %v3782
    %v3977 = vpop.f32.mrf.mxu0
    %v3978 = vadd.f32 0.0, %v3977
    %v3979 = vpop.f32.mrf.mxu0
    %3980 = vmatprep.mubr.f32.mxu0 0.0
    %3981 = vmatmul.mubr.f32.gmra.mxu0 %v3785
    %v3982 = vpop.f32.mrf.mxu0
    %v3983 = vadd.f32 0.0, %v3982
    %v3984 = vpop.f32.mrf.mxu0
    %3985 = vmatprep.mubr.f32.mxu0 0.0
    %3986 = vmatmul.mubr.f32.gmra.mxu0 %v3788
    %v3987 = vpop.f32.mrf.mxu0
    %v3988 = vadd.f32 0.0, %v3987
    %v3989 = vpop.f32.mrf.mxu0
    %3990 = vmatprep.mubr.f32.mxu0 0.0
    %3991 = vmatmul.mubr.f32.gmra.mxu0 %v3791
    %v3992 = vpop.f32.mrf.mxu0
    %v3993 = vadd.f32 0.0, %v3992
    %v3994 = vpop.f32.mrf.mxu0
    %3995 = vmatprep.mubr.f32.mxu0 0.0
    %3996 = vmatmul.mubr.f32.gmra.mxu0 %v3794
    %v3997 = vpop.f32.mrf.mxu0
    %v3998 = vadd.f32 0.0, %v3997
    %v3999 = vpop.f32.mrf.mxu0
    %4000 = vmatprep.mubr.f32.mxu0 0.0
    %4001 = vmatmul.mubr.f32.gmra.mxu0 %v3797
    %v4002 = vpop.f32.mrf.mxu0
    %v4003 = vadd.f32 0.0, %v4002
    %v4004 = vpop.f32.mrf.mxu0
    %4005 = vmatprep.mubr.f32.mxu0 0.0
    %4006 = vmatmul.mubr.f32.gmra.mxu0 %v3800
    %v4007 = vpop.f32.mrf.mxu0
    %v4008 = vadd.f32 0.0, %v4007
    %v4009 = vpop.f32.mrf.mxu0
    %4010 = vmatprep.mubr.f32.mxu0 0.0
    %4011 = vmatmul.mubr.f32.gmra.mxu0 %v3803
    %v4012 = vpop.f32.mrf.mxu0
    %v4013 = vadd.f32 0.0, %v4012
    %v4014 = vpop.f32.mrf.mxu0
    %4015 = vmatprep.mubr.f32.mxu0 0.0
    %4016 = vmatmul.mubr.f32.gmra.mxu0 %v3806
    %v4017 = vpop.f32.mrf.mxu0
    %v4018 = vadd.f32 0.0, %v4017
    %v4019 = vpop.f32.mrf.mxu0
    %4020 = vmatprep.mubr.f32.mxu0 0.0
    %4021 = vmatmul.mubr.f32.gmra.mxu0 %v3809
    %v4022 = vpop.f32.mrf.mxu0
    %v4023 = vadd.f32 0.0, %v4022
    %v4024 = vpop.f32.mrf.mxu0
    %4025 = vmatprep.mubr.f32.mxu0 0.0
    %4026 = vmatmul.mubr.f32.gmra.mxu0 %v3812
    %v4027 = vpop.f32.mrf.mxu0
    %v4028 = vadd.f32 0.0, %v4027
    %v4029 = vpop.f32.mrf.mxu0
    %4030 = vmatprep.mubr.f32.mxu0 0.0
    %4031 = vmatmul.mubr.f32.gmra.mxu0 %v3815
    %v4032 = vpop.f32.mrf.mxu0
    %v4033 = vadd.f32 0.0, %v4032
    %v4034 = vpop.f32.mrf.mxu0
    %4035 = vmatprep.mubr.f32.mxu0 0.0
    %4036 = vmatmul.mubr.f32.gmra.mxu0 %v3818
    %v4037 = vpop.f32.mrf.mxu0
    %v4038 = vadd.f32 0.0, %v4037
    %v4039 = vpop.f32.mrf.mxu0
    %4040 = vmatprep.mubr.f32.mxu0 0.0
    %4041 = vmatmul.mubr.f32.gmra.mxu0 %v3821
    %v4042 = vpop.f32.mrf.mxu0
    %v4043 = vadd.f32 0.0, %v4042
    %v4044 = vpop.f32.mrf.mxu0
    %4045 = vmatprep.mubr.f32.mxu0 0.0
    %4046 = vmatmul.mubr.f32.gmra.mxu0 %v3824
    %v4047 = vpop.f32.mrf.mxu0
    %v4048 = vadd.f32 0.0, %v4047
    %v4049 = vpop.f32.mrf.mxu0
    %4050 = vdwg.mxu0
    %v4051 = vadd.f32 %v3664, %v3893
    %v4052 = vadd.f32 %v3665, %v3898
    %v4053 = vadd.f32 %v3666, %v3903
    %v4054 = vadd.f32 %v3667, %v3908
    %v4055 = vadd.f32 %v3668, %v3913
    %v4056 = vadd.f32 %v3669, %v3918
    %v4057 = vadd.f32 %v3670, %v3923
    %v4058 = vadd.f32 %v3671, %v3928
    %v4059 = vadd.f32 %v3672, %v3933
    %v4060 = vadd.f32 %v3673, %v3938
    %v4061 = vadd.f32 %v3674, %v3943
    %v4062 = vadd.f32 %v3675, %v3948
    %v4063 = vadd.f32 %v3676, %v3953
    %v4064 = vadd.f32 %v3677, %v3958
    %v4065 = vadd.f32 %v3678, %v3963
    %v4066 = vadd.f32 %v3679, %v3968
    %v4067 = vadd.f32 %v3680, %v3973
    %v4068 = vadd.f32 %v3681, %v3978
    %v4069 = vadd.f32 %v3682, %v3983
    %v4070 = vadd.f32 %v3683, %v3988
    %v4071 = vadd.f32 %v3684, %v3993
    %v4072 = vadd.f32 %v3685, %v3998
    %v4073 = vadd.f32 %v3686, %v4003
    %v4074 = vadd.f32 %v3687, %v4008
    %v4075 = vadd.f32 %v3688, %v4013
    %v4076 = vadd.f32 %v3689, %v4018
    %v4077 = vadd.f32 %v3690, %v4023
    %v4078 = vadd.f32 %v3691, %v4028
    %v4079 = vadd.f32 %v3692, %v4033
    %v4080 = vadd.f32 %v3693, %v4038
    %v4081 = vadd.f32 %v3694, %v4043
    %v4082 = vadd.f32 %v3695, %v4048
    %v4083 = vld [vmem:[#allocation2 + $0x3a] sm:$0xff]
    %v4084 = vld [vmem:[#allocation2 + $0x42] sm:$0xff]
    %v4085 = vld [vmem:[#allocation2 + $0x4a] sm:$0xff]
    %v4086 = vld [vmem:[#allocation2 + $0x52] sm:$0xff]
    %v4087 = vld [vmem:[#allocation2 + $0x5a] sm:$0xff]
    %v4088 = vld [vmem:[#allocation2 + $0x62] sm:$0xff]
    %v4089 = vld [vmem:[#allocation2 + $0x6a] sm:$0xff]
    %v4090 = vld [vmem:[#allocation2 + $0x72] sm:$0xff]
    %v4091 = vld [vmem:[#allocation2 + $0x7a] sm:$0xff]
    %v4092 = vld [vmem:[#allocation2 + $0x82] sm:$0xff]
    %v4093 = vld [vmem:[#allocation2 + $0x8a] sm:$0xff]
    %v4094 = vld [vmem:[#allocation2 + $0x92] sm:$0xff]
    %v4095 = vld [vmem:[#allocation2 + $0x9a] sm:$0xff]
    %v4096 = vld [vmem:[#allocation2 + $0xa2] sm:$0xff]
    %v4097 = vld [vmem:[#allocation2 + $0xaa] sm:$0xff]
    %v4098 = vld [vmem:[#allocation2 + $0xb2] sm:$0xff]
    %v4099 = vld [vmem:[#allocation2 + $0xba] sm:$0xff]
    %v4100 = vld [vmem:[#allocation2 + $0xc2] sm:$0xff]
    %v4101 = vld [vmem:[#allocation2 + $0xca] sm:$0xff]
    %v4102 = vld [vmem:[#allocation2 + $0xd2] sm:$0xff]
    %v4103 = vld [vmem:[#allocation2 + $0xda] sm:$0xff]
    %v4104 = vld [vmem:[#allocation2 + $0xe2] sm:$0xff]
    %v4105 = vld [vmem:[#allocation2 + $0xea] sm:$0xff]
    %v4106 = vld [vmem:[#allocation2 + $0xf2] sm:$0xff]
    %v4107 = vld [vmem:[#allocation2 + $0xfa] sm:$0xff]
    %v4108 = vld [vmem:[#allocation2 + $0x102] sm:$0xff]
    %v4109 = vld [vmem:[#allocation2 + $0x10a] sm:$0xff]
    %v4110 = vld [vmem:[#allocation2 + $0x112] sm:$0xff]
    %v4111 = vld [vmem:[#allocation2 + $0x11a] sm:$0xff]
    %v4112 = vld [vmem:[#allocation2 + $0x122] sm:$0xff]
    %v4113 = vld [vmem:[#allocation2 + $0x12a] sm:$0xff]
    %v4114 = vld [vmem:[#allocation2 + $0x132] sm:$0xff]
    %v4115 = vld [vmem:[%s4 + $0x70] sm:$0xff]
    %v4116 = vld [vmem:[%s4 + $0x78] sm:$0xff]
    %v4118 = vsel %vm1053, %v4083, 0
    %v4121 = vsel %vm1053, %v4084, 0
    %v4124 = vsel %vm1053, %v4085, 0
    %v4127 = vsel %vm1053, %v4086, 0
    %v4130 = vsel %vm1053, %v4087, 0
    %v4133 = vsel %vm1053, %v4088, 0
    %v4136 = vsel %vm1053, %v4089, 0
    %v4139 = vsel %vm1053, %v4090, 0
    %v4142 = vsel %vm1053, %v4091, 0
    %v4145 = vsel %vm1053, %v4092, 0
    %v4148 = vsel %vm1053, %v4093, 0
    %v4151 = vsel %vm1053, %v4094, 0
    %v4154 = vsel %vm1053, %v4095, 0
    %v4157 = vsel %vm1053, %v4096, 0
    %v4160 = vsel %vm1053, %v4097, 0
    %v4163 = vsel %vm1053, %v4098, 0
    %v4166 = vsel %vm1053, %v4099, 0
    %v4169 = vsel %vm1053, %v4100, 0
    %v4172 = vsel %vm1053, %v4101, 0
    %v4175 = vsel %vm1053, %v4102, 0
    %v4178 = vsel %vm1053, %v4103, 0
    %v4181 = vsel %vm1053, %v4104, 0
    %v4184 = vsel %vm1053, %v4105, 0
    %v4187 = vsel %vm1053, %v4106, 0
    %v4190 = vsel %vm1053, %v4107, 0
    %v4193 = vsel %vm1053, %v4108, 0
    %v4196 = vsel %vm1053, %v4109, 0
    %v4199 = vsel %vm1053, %v4110, 0
    %v4202 = vsel %vm1053, %v4111, 0
    %v4205 = vsel %vm1053, %v4112, 0
    %v4208 = vsel %vm1053, %v4113, 0
    %v4211 = vsel %vm1053, %v4114, 0
    %4213 = vmatprep.subr.mxu0 0.0
    %4214 = vmatpush1.msra.mxu0 0.0
    %4215 = vmatprep.subr.mxu0 0.0
    %4216 = vmatpush1.msra.mxu0 0.0
    %4217 = vmatprep.subr.mxu0 0.0
    %4218 = vmatpush1.msra.mxu0 0.0
    %4219 = vmatprep.subr.mxu0 0.0
    %4220 = vmatpush1.msra.mxu0 0.0
    %4221 = vmatprep.subr.mxu0 0.0
    %4222 = vmatpush1.msra.mxu0 0.0
    %4223 = vmatprep.subr.mxu0 0.0
    %4224 = vmatpush1.msra.mxu0 0.0
    %4225 = vmatprep.subr.mxu0 0.0
    %4226 = vmatpush1.msra.mxu0 0.0
    %4227 = vmatprep.subr.mxu0 0.0
    %4228 = vmatpush1.msra.mxu0 0.0
    %4229 = vmatprep.subr.mxu0 0.0
    %4230 = vmatpush1.msra.mxu0 0.0
    %4231 = vmatprep.subr.mxu0 0.0
    %4232 = vmatpush1.msra.mxu0 0.0
    %4233 = vmatprep.subr.mxu0 0.0
    %4234 = vmatpush1.msra.mxu0 0.0
    %4235 = vmatprep.subr.mxu0 0.0
    %4236 = vmatpush1.msra.mxu0 0.0
    %4237 = vmatprep.subr.mxu0 0.0
    %4238 = vmatpush1.msra.mxu0 0.0
    %4239 = vmatprep.subr.mxu0 0.0
    %4240 = vmatpush1.msra.mxu0 0.0
    %4241 = vmatprep.subr.mxu0 0.0
    %4242 = vmatpush1.msra.mxu0 %v4116
    %4243 = vmatprep.subr.mxu0 0.0
    %4244 = vmatpush1.msra.mxu0 %v4115
    %4245 = vmatprep.subr.mxu0 0.0
    %4246 = vmatpush2.msra.mxu0 0.0
    %4247 = vmatprep.subr.mxu0 0.0
    %4248 = vmatpush2.msra.mxu0 0.0
    %4249 = vmatprep.subr.mxu0 0.0
    %4250 = vmatpush2.msra.mxu0 0.0
    %4251 = vmatprep.subr.mxu0 0.0
    %4252 = vmatpush2.msra.mxu0 0.0
    %4253 = vmatprep.subr.mxu0 0.0
    %4254 = vmatpush2.msra.mxu0 0.0
    %4255 = vmatprep.subr.mxu0 0.0
    %4256 = vmatpush2.msra.mxu0 0.0
    %4257 = vmatprep.subr.mxu0 0.0
    %4258 = vmatpush2.msra.mxu0 0.0
    %4259 = vmatprep.subr.mxu0 0.0
    %4260 = vmatpush2.msra.mxu0 0.0
    %4261 = vmatprep.subr.mxu0 0.0
    %4262 = vmatpush2.msra.mxu0 0.0
    %4263 = vmatprep.subr.mxu0 0.0
    %4264 = vmatpush2.msra.mxu0 0.0
    %4265 = vmatprep.subr.mxu0 0.0
    %4266 = vmatpush2.msra.mxu0 0.0
    %4267 = vmatprep.subr.mxu0 0.0
    %4268 = vmatpush2.msra.mxu0 0.0
    %4269 = vmatprep.subr.mxu0 0.0
    %4270 = vmatpush2.msra.mxu0 0.0
    %4271 = vmatprep.subr.mxu0 0.0
    %4272 = vmatpush2.msra.mxu0 0.0
    %4273 = vmatprep.subr.mxu0 0.0
    %4274 = vmatpush2.msra.mxu0 0.0
    %4275 = vmatprep.subr.mxu0 0.0
    %4276 = vmatpush2.msra.mxu0 0.0
    %4277 = vmatprep.mubr.f32.mxu0 0.0
    %4278 = vmatmul.mubr.f32.gmra.mxu0 %v4118
    %v4279 = vpop.f32.mrf.mxu0
    %v4280 = vadd.f32 0.0, %v4279
    %v4281 = vpop.f32.mrf.mxu0
    %4282 = vmatprep.mubr.f32.mxu0 0.0
    %4283 = vmatmul.mubr.f32.gmra.mxu0 %v4121
    %v4284 = vpop.f32.mrf.mxu0
    %v4285 = vadd.f32 0.0, %v4284
    %v4286 = vpop.f32.mrf.mxu0
    %4287 = vmatprep.mubr.f32.mxu0 0.0
    %4288 = vmatmul.mubr.f32.gmra.mxu0 %v4124
    %v4289 = vpop.f32.mrf.mxu0
    %v4290 = vadd.f32 0.0, %v4289
    %v4291 = vpop.f32.mrf.mxu0
    %4292 = vmatprep.mubr.f32.mxu0 0.0
    %4293 = vmatmul.mubr.f32.gmra.mxu0 %v4127
    %v4294 = vpop.f32.mrf.mxu0
    %v4295 = vadd.f32 0.0, %v4294
    %v4296 = vpop.f32.mrf.mxu0
    %4297 = vmatprep.mubr.f32.mxu0 0.0
    %4298 = vmatmul.mubr.f32.gmra.mxu0 %v4130
    %v4299 = vpop.f32.mrf.mxu0
    %v4300 = vadd.f32 0.0, %v4299
    %v4301 = vpop.f32.mrf.mxu0
    %4302 = vmatprep.mubr.f32.mxu0 0.0
    %4303 = vmatmul.mubr.f32.gmra.mxu0 %v4133
    %v4304 = vpop.f32.mrf.mxu0
    %v4305 = vadd.f32 0.0, %v4304
    %v4306 = vpop.f32.mrf.mxu0
    %4307 = vmatprep.mubr.f32.mxu0 0.0
    %4308 = vmatmul.mubr.f32.gmra.mxu0 %v4136
    %v4309 = vpop.f32.mrf.mxu0
    %v4310 = vadd.f32 0.0, %v4309
    %v4311 = vpop.f32.mrf.mxu0
    %4312 = vmatprep.mubr.f32.mxu0 0.0
    %4313 = vmatmul.mubr.f32.gmra.mxu0 %v4139
    %v4314 = vpop.f32.mrf.mxu0
    %v4315 = vadd.f32 0.0, %v4314
    %v4316 = vpop.f32.mrf.mxu0
    %4317 = vmatprep.mubr.f32.mxu0 0.0
    %4318 = vmatmul.mubr.f32.gmra.mxu0 %v4142
    %v4319 = vpop.f32.mrf.mxu0
    %v4320 = vadd.f32 0.0, %v4319
    %v4321 = vpop.f32.mrf.mxu0
    %4322 = vmatprep.mubr.f32.mxu0 0.0
    %4323 = vmatmul.mubr.f32.gmra.mxu0 %v4145
    %v4324 = vpop.f32.mrf.mxu0
    %v4325 = vadd.f32 0.0, %v4324
    %v4326 = vpop.f32.mrf.mxu0
    %4327 = vmatprep.mubr.f32.mxu0 0.0
    %4328 = vmatmul.mubr.f32.gmra.mxu0 %v4148
    %v4329 = vpop.f32.mrf.mxu0
    %v4330 = vadd.f32 0.0, %v4329
    %v4331 = vpop.f32.mrf.mxu0
    %4332 = vmatprep.mubr.f32.mxu0 0.0
    %4333 = vmatmul.mubr.f32.gmra.mxu0 %v4151
    %v4334 = vpop.f32.mrf.mxu0
    %v4335 = vadd.f32 0.0, %v4334
    %v4336 = vpop.f32.mrf.mxu0
    %4337 = vmatprep.mubr.f32.mxu0 0.0
    %4338 = vmatmul.mubr.f32.gmra.mxu0 %v4154
    %v4339 = vpop.f32.mrf.mxu0
    %v4340 = vadd.f32 0.0, %v4339
    %v4341 = vpop.f32.mrf.mxu0
    %4342 = vmatprep.mubr.f32.mxu0 0.0
    %4343 = vmatmul.mubr.f32.gmra.mxu0 %v4157
    %v4344 = vpop.f32.mrf.mxu0
    %v4345 = vadd.f32 0.0, %v4344
    %v4346 = vpop.f32.mrf.mxu0
    %4347 = vmatprep.mubr.f32.mxu0 0.0
    %4348 = vmatmul.mubr.f32.gmra.mxu0 %v4160
    %v4349 = vpop.f32.mrf.mxu0
    %v4350 = vadd.f32 0.0, %v4349
    %v4351 = vpop.f32.mrf.mxu0
    %4352 = vmatprep.mubr.f32.mxu0 0.0
    %4353 = vmatmul.mubr.f32.gmra.mxu0 %v4163
    %v4354 = vpop.f32.mrf.mxu0
    %v4355 = vadd.f32 0.0, %v4354
    %v4356 = vpop.f32.mrf.mxu0
    %4357 = vmatprep.mubr.f32.mxu0 0.0
    %4358 = vmatmul.mubr.f32.gmra.mxu0 %v4166
    %v4359 = vpop.f32.mrf.mxu0
    %v4360 = vadd.f32 0.0, %v4359
    %v4361 = vpop.f32.mrf.mxu0
    %4362 = vmatprep.mubr.f32.mxu0 0.0
    %4363 = vmatmul.mubr.f32.gmra.mxu0 %v4169
    %v4364 = vpop.f32.mrf.mxu0
    %v4365 = vadd.f32 0.0, %v4364
    %v4366 = vpop.f32.mrf.mxu0
    %4367 = vmatprep.mubr.f32.mxu0 0.0
    %4368 = vmatmul.mubr.f32.gmra.mxu0 %v4172
    %v4369 = vpop.f32.mrf.mxu0
    %v4370 = vadd.f32 0.0, %v4369
    %v4371 = vpop.f32.mrf.mxu0
    %4372 = vmatprep.mubr.f32.mxu0 0.0
    %4373 = vmatmul.mubr.f32.gmra.mxu0 %v4175
    %v4374 = vpop.f32.mrf.mxu0
    %v4375 = vadd.f32 0.0, %v4374
    %v4376 = vpop.f32.mrf.mxu0
    %4377 = vmatprep.mubr.f32.mxu0 0.0
    %4378 = vmatmul.mubr.f32.gmra.mxu0 %v4178
    %v4379 = vpop.f32.mrf.mxu0
    %v4380 = vadd.f32 0.0, %v4379
    %v4381 = vpop.f32.mrf.mxu0
    %4382 = vmatprep.mubr.f32.mxu0 0.0
    %4383 = vmatmul.mubr.f32.gmra.mxu0 %v4181
    %v4384 = vpop.f32.mrf.mxu0
    %v4385 = vadd.f32 0.0, %v4384
    %v4386 = vpop.f32.mrf.mxu0
    %4387 = vmatprep.mubr.f32.mxu0 0.0
    %4388 = vmatmul.mubr.f32.gmra.mxu0 %v4184
    %v4389 = vpop.f32.mrf.mxu0
    %v4390 = vadd.f32 0.0, %v4389
    %v4391 = vpop.f32.mrf.mxu0
    %4392 = vmatprep.mubr.f32.mxu0 0.0
    %4393 = vmatmul.mubr.f32.gmra.mxu0 %v4187
    %v4394 = vpop.f32.mrf.mxu0
    %v4395 = vadd.f32 0.0, %v4394
    %v4396 = vpop.f32.mrf.mxu0
    %4397 = vmatprep.mubr.f32.mxu0 0.0
    %4398 = vmatmul.mubr.f32.gmra.mxu0 %v4190
    %v4399 = vpop.f32.mrf.mxu0
    %v4400 = vadd.f32 0.0, %v4399
    %v4401 = vpop.f32.mrf.mxu0
    %4402 = vmatprep.mubr.f32.mxu0 0.0
    %4403 = vmatmul.mubr.f32.gmra.mxu0 %v4193
    %v4404 = vpop.f32.mrf.mxu0
    %v4405 = vadd.f32 0.0, %v4404
    %v4406 = vpop.f32.mrf.mxu0
    %4407 = vmatprep.mubr.f32.mxu0 0.0
    %4408 = vmatmul.mubr.f32.gmra.mxu0 %v4196
    %v4409 = vpop.f32.mrf.mxu0
    %v4410 = vadd.f32 0.0, %v4409
    %v4411 = vpop.f32.mrf.mxu0
    %4412 = vmatprep.mubr.f32.mxu0 0.0
    %4413 = vmatmul.mubr.f32.gmra.mxu0 %v4199
    %v4414 = vpop.f32.mrf.mxu0
    %v4415 = vadd.f32 0.0, %v4414
    %v4416 = vpop.f32.mrf.mxu0
    %4417 = vmatprep.mubr.f32.mxu0 0.0
    %4418 = vmatmul.mubr.f32.gmra.mxu0 %v4202
    %v4419 = vpop.f32.mrf.mxu0
    %v4420 = vadd.f32 0.0, %v4419
    %v4421 = vpop.f32.mrf.mxu0
    %4422 = vmatprep.mubr.f32.mxu0 0.0
    %4423 = vmatmul.mubr.f32.gmra.mxu0 %v4205
    %v4424 = vpop.f32.mrf.mxu0
    %v4425 = vadd.f32 0.0, %v4424
    %v4426 = vpop.f32.mrf.mxu0
    %4427 = vmatprep.mubr.f32.mxu0 0.0
    %4428 = vmatmul.mubr.f32.gmra.mxu0 %v4208
    %v4429 = vpop.f32.mrf.mxu0
    %v4430 = vadd.f32 0.0, %v4429
    %v4431 = vpop.f32.mrf.mxu0
    %4432 = vmatprep.mubr.f32.mxu0 0.0
    %4433 = vmatmul.mubr.f32.gmra.mxu0 %v4211
    %v4434 = vpop.f32.mrf.mxu0
    %v4435 = vadd.f32 0.0, %v4434
    %v4436 = vpop.f32.mrf.mxu0
    %4437 = vdwg.mxu0
    %v4438 = vadd.f32 %v4051, %v4280
    %v4439 = vadd.f32 %v4052, %v4285
    %v4440 = vadd.f32 %v4053, %v4290
    %v4441 = vadd.f32 %v4054, %v4295
    %v4442 = vadd.f32 %v4055, %v4300
    %v4443 = vadd.f32 %v4056, %v4305
    %v4444 = vadd.f32 %v4057, %v4310
    %v4445 = vadd.f32 %v4058, %v4315
    %v4446 = vadd.f32 %v4059, %v4320
    %v4447 = vadd.f32 %v4060, %v4325
    %v4448 = vadd.f32 %v4061, %v4330
    %v4449 = vadd.f32 %v4062, %v4335
    %v4450 = vadd.f32 %v4063, %v4340
    %v4451 = vadd.f32 %v4064, %v4345
    %v4452 = vadd.f32 %v4065, %v4350
    %v4453 = vadd.f32 %v4066, %v4355
    %v4454 = vadd.f32 %v4067, %v4360
    %v4455 = vadd.f32 %v4068, %v4365
    %v4456 = vadd.f32 %v4069, %v4370
    %v4457 = vadd.f32 %v4070, %v4375
    %v4458 = vadd.f32 %v4071, %v4380
    %v4459 = vadd.f32 %v4072, %v4385
    %v4460 = vadd.f32 %v4073, %v4390
    %v4461 = vadd.f32 %v4074, %v4395
    %v4462 = vadd.f32 %v4075, %v4400
    %v4463 = vadd.f32 %v4076, %v4405
    %v4464 = vadd.f32 %v4077, %v4410
    %v4465 = vadd.f32 %v4078, %v4415
    %v4466 = vadd.f32 %v4079, %v4420
    %v4467 = vadd.f32 %v4080, %v4425
    %v4468 = vadd.f32 %v4081, %v4430
    %v4469 = vadd.f32 %v4082, %v4435
    %v4470 = vld [vmem:[#allocation2 + $0x3c] sm:$0xff]
    %v4471 = vld [vmem:[#allocation2 + $0x44] sm:$0xff]
    %v4472 = vld [vmem:[#allocation2 + $0x4c] sm:$0xff]
    %v4473 = vld [vmem:[#allocation2 + $0x54] sm:$0xff]
    %v4474 = vld [vmem:[#allocation2 + $0x5c] sm:$0xff]
    %v4475 = vld [vmem:[#allocation2 + $0x64] sm:$0xff]
    %v4476 = vld [vmem:[#allocation2 + $0x6c] sm:$0xff]
    %v4477 = vld [vmem:[#allocation2 + $0x74] sm:$0xff]
    %v4478 = vld [vmem:[#allocation2 + $0x7c] sm:$0xff]
    %v4479 = vld [vmem:[#allocation2 + $0x84] sm:$0xff]
    %v4480 = vld [vmem:[#allocation2 + $0x8c] sm:$0xff]
    %v4481 = vld [vmem:[#allocation2 + $0x94] sm:$0xff]
    %v4482 = vld [vmem:[#allocation2 + $0x9c] sm:$0xff]
    %v4483 = vld [vmem:[#allocation2 + $0xa4] sm:$0xff]
    %v4484 = vld [vmem:[#allocation2 + $0xac] sm:$0xff]
    %v4485 = vld [vmem:[#allocation2 + $0xb4] sm:$0xff]
    %v4486 = vld [vmem:[#allocation2 + $0xbc] sm:$0xff]
    %v4487 = vld [vmem:[#allocation2 + $0xc4] sm:$0xff]
    %v4488 = vld [vmem:[#allocation2 + $0xcc] sm:$0xff]
    %v4489 = vld [vmem:[#allocation2 + $0xd4] sm:$0xff]
    %v4490 = vld [vmem:[#allocation2 + $0xdc] sm:$0xff]
    %v4491 = vld [vmem:[#allocation2 + $0xe4] sm:$0xff]
    %v4492 = vld [vmem:[#allocation2 + $0xec] sm:$0xff]
    %v4493 = vld [vmem:[#allocation2 + $0xf4] sm:$0xff]
    %v4494 = vld [vmem:[#allocation2 + $0xfc] sm:$0xff]
    %v4495 = vld [vmem:[#allocation2 + $0x104] sm:$0xff]
    %v4496 = vld [vmem:[#allocation2 + $0x10c] sm:$0xff]
    %v4497 = vld [vmem:[#allocation2 + $0x114] sm:$0xff]
    %v4498 = vld [vmem:[#allocation2 + $0x11c] sm:$0xff]
    %v4499 = vld [vmem:[#allocation2 + $0x124] sm:$0xff]
    %v4500 = vld [vmem:[#allocation2 + $0x12c] sm:$0xff]
    %v4501 = vld [vmem:[#allocation2 + $0x134] sm:$0xff]
    %v4502 = vld [vmem:[%s4 + $0x80] sm:$0xff]
    %v4503 = vld [vmem:[%s4 + $0x88] sm:$0xff]
    %v4505 = vsel %vm1053, %v4470, 0
    %v4508 = vsel %vm1053, %v4471, 0
    %v4511 = vsel %vm1053, %v4472, 0
    %v4514 = vsel %vm1053, %v4473, 0
    %v4517 = vsel %vm1053, %v4474, 0
    %v4520 = vsel %vm1053, %v4475, 0
    %v4523 = vsel %vm1053, %v4476, 0
    %v4526 = vsel %vm1053, %v4477, 0
    %v4529 = vsel %vm1053, %v4478, 0
    %v4532 = vsel %vm1053, %v4479, 0
    %v4535 = vsel %vm1053, %v4480, 0
    %v4538 = vsel %vm1053, %v4481, 0
    %v4541 = vsel %vm1053, %v4482, 0
    %v4544 = vsel %vm1053, %v4483, 0
    %v4547 = vsel %vm1053, %v4484, 0
    %v4550 = vsel %vm1053, %v4485, 0
    %v4553 = vsel %vm1053, %v4486, 0
    %v4556 = vsel %vm1053, %v4487, 0
    %v4559 = vsel %vm1053, %v4488, 0
    %v4562 = vsel %vm1053, %v4489, 0
    %v4565 = vsel %vm1053, %v4490, 0
    %v4568 = vsel %vm1053, %v4491, 0
    %v4571 = vsel %vm1053, %v4492, 0
    %v4574 = vsel %vm1053, %v4493, 0
    %v4577 = vsel %vm1053, %v4494, 0
    %v4580 = vsel %vm1053, %v4495, 0
    %v4583 = vsel %vm1053, %v4496, 0
    %v4586 = vsel %vm1053, %v4497, 0
    %v4589 = vsel %vm1053, %v4498, 0
    %v4592 = vsel %vm1053, %v4499, 0
    %v4595 = vsel %vm1053, %v4500, 0
    %v4598 = vsel %vm1053, %v4501, 0
    %4600 = vmatprep.subr.mxu0 0.0
    %4601 = vmatpush1.msra.mxu0 0.0
    %4602 = vmatprep.subr.mxu0 0.0
    %4603 = vmatpush1.msra.mxu0 0.0
    %4604 = vmatprep.subr.mxu0 0.0
    %4605 = vmatpush1.msra.mxu0 0.0
    %4606 = vmatprep.subr.mxu0 0.0
    %4607 = vmatpush1.msra.mxu0 0.0
    %4608 = vmatprep.subr.mxu0 0.0
    %4609 = vmatpush1.msra.mxu0 0.0
    %4610 = vmatprep.subr.mxu0 0.0
    %4611 = vmatpush1.msra.mxu0 0.0
    %4612 = vmatprep.subr.mxu0 0.0
    %4613 = vmatpush1.msra.mxu0 0.0
    %4614 = vmatprep.subr.mxu0 0.0
    %4615 = vmatpush1.msra.mxu0 0.0
    %4616 = vmatprep.subr.mxu0 0.0
    %4617 = vmatpush1.msra.mxu0 0.0
    %4618 = vmatprep.subr.mxu0 0.0
    %4619 = vmatpush1.msra.mxu0 0.0
    %4620 = vmatprep.subr.mxu0 0.0
    %4621 = vmatpush1.msra.mxu0 0.0
    %4622 = vmatprep.subr.mxu0 0.0
    %4623 = vmatpush1.msra.mxu0 0.0
    %4624 = vmatprep.subr.mxu0 0.0
    %4625 = vmatpush1.msra.mxu0 0.0
    %4626 = vmatprep.subr.mxu0 0.0
    %4627 = vmatpush1.msra.mxu0 0.0
    %4628 = vmatprep.subr.mxu0 0.0
    %4629 = vmatpush1.msra.mxu0 %v4503
    %4630 = vmatprep.subr.mxu0 0.0
    %4631 = vmatpush1.msra.mxu0 %v4502
    %4632 = vmatprep.subr.mxu0 0.0
    %4633 = vmatpush2.msra.mxu0 0.0
    %4634 = vmatprep.subr.mxu0 0.0
    %4635 = vmatpush2.msra.mxu0 0.0
    %4636 = vmatprep.subr.mxu0 0.0
    %4637 = vmatpush2.msra.mxu0 0.0
    %4638 = vmatprep.subr.mxu0 0.0
    %4639 = vmatpush2.msra.mxu0 0.0
    %4640 = vmatprep.subr.mxu0 0.0
    %4641 = vmatpush2.msra.mxu0 0.0
    %4642 = vmatprep.subr.mxu0 0.0
    %4643 = vmatpush2.msra.mxu0 0.0
    %4644 = vmatprep.subr.mxu0 0.0
    %4645 = vmatpush2.msra.mxu0 0.0
    %4646 = vmatprep.subr.mxu0 0.0
    %4647 = vmatpush2.msra.mxu0 0.0
    %4648 = vmatprep.subr.mxu0 0.0
    %4649 = vmatpush2.msra.mxu0 0.0
    %4650 = vmatprep.subr.mxu0 0.0
    %4651 = vmatpush2.msra.mxu0 0.0
    %4652 = vmatprep.subr.mxu0 0.0
    %4653 = vmatpush2.msra.mxu0 0.0
    %4654 = vmatprep.subr.mxu0 0.0
    %4655 = vmatpush2.msra.mxu0 0.0
    %4656 = vmatprep.subr.mxu0 0.0
    %4657 = vmatpush2.msra.mxu0 0.0
    %4658 = vmatprep.subr.mxu0 0.0
    %4659 = vmatpush2.msra.mxu0 0.0
    %4660 = vmatprep.subr.mxu0 0.0
    %4661 = vmatpush2.msra.mxu0 0.0
    %4662 = vmatprep.subr.mxu0 0.0
    %4663 = vmatpush2.msra.mxu0 0.0
    %4664 = vmatprep.mubr.f32.mxu0 0.0
    %4665 = vmatmul.mubr.f32.gmra.mxu0 %v4505
    %v4666 = vpop.f32.mrf.mxu0
    %v4667 = vadd.f32 0.0, %v4666
    %v4668 = vpop.f32.mrf.mxu0
    %4669 = vmatprep.mubr.f32.mxu0 0.0
    %4670 = vmatmul.mubr.f32.gmra.mxu0 %v4508
    %v4671 = vpop.f32.mrf.mxu0
    %v4672 = vadd.f32 0.0, %v4671
    %v4673 = vpop.f32.mrf.mxu0
    %4674 = vmatprep.mubr.f32.mxu0 0.0
    %4675 = vmatmul.mubr.f32.gmra.mxu0 %v4511
    %v4676 = vpop.f32.mrf.mxu0
    %v4677 = vadd.f32 0.0, %v4676
    %v4678 = vpop.f32.mrf.mxu0
    %4679 = vmatprep.mubr.f32.mxu0 0.0
    %4680 = vmatmul.mubr.f32.gmra.mxu0 %v4514
    %v4681 = vpop.f32.mrf.mxu0
    %v4682 = vadd.f32 0.0, %v4681
    %v4683 = vpop.f32.mrf.mxu0
    %4684 = vmatprep.mubr.f32.mxu0 0.0
    %4685 = vmatmul.mubr.f32.gmra.mxu0 %v4517
    %v4686 = vpop.f32.mrf.mxu0
    %v4687 = vadd.f32 0.0, %v4686
    %v4688 = vpop.f32.mrf.mxu0
    %4689 = vmatprep.mubr.f32.mxu0 0.0
    %4690 = vmatmul.mubr.f32.gmra.mxu0 %v4520
    %v4691 = vpop.f32.mrf.mxu0
    %v4692 = vadd.f32 0.0, %v4691
    %v4693 = vpop.f32.mrf.mxu0
    %4694 = vmatprep.mubr.f32.mxu0 0.0
    %4695 = vmatmul.mubr.f32.gmra.mxu0 %v4523
    %v4696 = vpop.f32.mrf.mxu0
    %v4697 = vadd.f32 0.0, %v4696
    %v4698 = vpop.f32.mrf.mxu0
    %4699 = vmatprep.mubr.f32.mxu0 0.0
    %4700 = vmatmul.mubr.f32.gmra.mxu0 %v4526
    %v4701 = vpop.f32.mrf.mxu0
    %v4702 = vadd.f32 0.0, %v4701
    %v4703 = vpop.f32.mrf.mxu0
    %4704 = vmatprep.mubr.f32.mxu0 0.0
    %4705 = vmatmul.mubr.f32.gmra.mxu0 %v4529
    %v4706 = vpop.f32.mrf.mxu0
    %v4707 = vadd.f32 0.0, %v4706
    %v4708 = vpop.f32.mrf.mxu0
    %4709 = vmatprep.mubr.f32.mxu0 0.0
    %4710 = vmatmul.mubr.f32.gmra.mxu0 %v4532
    %v4711 = vpop.f32.mrf.mxu0
    %v4712 = vadd.f32 0.0, %v4711
    %v4713 = vpop.f32.mrf.mxu0
    %4714 = vmatprep.mubr.f32.mxu0 0.0
    %4715 = vmatmul.mubr.f32.gmra.mxu0 %v4535
    %v4716 = vpop.f32.mrf.mxu0
    %v4717 = vadd.f32 0.0, %v4716
    %v4718 = vpop.f32.mrf.mxu0
    %4719 = vmatprep.mubr.f32.mxu0 0.0
    %4720 = vmatmul.mubr.f32.gmra.mxu0 %v4538
    %v4721 = vpop.f32.mrf.mxu0
    %v4722 = vadd.f32 0.0, %v4721
    %v4723 = vpop.f32.mrf.mxu0
    %4724 = vmatprep.mubr.f32.mxu0 0.0
    %4725 = vmatmul.mubr.f32.gmra.mxu0 %v4541
    %v4726 = vpop.f32.mrf.mxu0
    %v4727 = vadd.f32 0.0, %v4726
    %v4728 = vpop.f32.mrf.mxu0
    %4729 = vmatprep.mubr.f32.mxu0 0.0
    %4730 = vmatmul.mubr.f32.gmra.mxu0 %v4544
    %v4731 = vpop.f32.mrf.mxu0
    %v4732 = vadd.f32 0.0, %v4731
    %v4733 = vpop.f32.mrf.mxu0
    %4734 = vmatprep.mubr.f32.mxu0 0.0
    %4735 = vmatmul.mubr.f32.gmra.mxu0 %v4547
    %v4736 = vpop.f32.mrf.mxu0
    %v4737 = vadd.f32 0.0, %v4736
    %v4738 = vpop.f32.mrf.mxu0
    %4739 = vmatprep.mubr.f32.mxu0 0.0
    %4740 = vmatmul.mubr.f32.gmra.mxu0 %v4550
    %v4741 = vpop.f32.mrf.mxu0
    %v4742 = vadd.f32 0.0, %v4741
    %v4743 = vpop.f32.mrf.mxu0
    %4744 = vmatprep.mubr.f32.mxu0 0.0
    %4745 = vmatmul.mubr.f32.gmra.mxu0 %v4553
    %v4746 = vpop.f32.mrf.mxu0
    %v4747 = vadd.f32 0.0, %v4746
    %v4748 = vpop.f32.mrf.mxu0
    %4749 = vmatprep.mubr.f32.mxu0 0.0
    %4750 = vmatmul.mubr.f32.gmra.mxu0 %v4556
    %v4751 = vpop.f32.mrf.mxu0
    %v4752 = vadd.f32 0.0, %v4751
    %v4753 = vpop.f32.mrf.mxu0
    %4754 = vmatprep.mubr.f32.mxu0 0.0
    %4755 = vmatmul.mubr.f32.gmra.mxu0 %v4559
    %v4756 = vpop.f32.mrf.mxu0
    %v4757 = vadd.f32 0.0, %v4756
    %v4758 = vpop.f32.mrf.mxu0
    %4759 = vmatprep.mubr.f32.mxu0 0.0
    %4760 = vmatmul.mubr.f32.gmra.mxu0 %v4562
    %v4761 = vpop.f32.mrf.mxu0
    %v4762 = vadd.f32 0.0, %v4761
    %v4763 = vpop.f32.mrf.mxu0
    %4764 = vmatprep.mubr.f32.mxu0 0.0
    %4765 = vmatmul.mubr.f32.gmra.mxu0 %v4565
    %v4766 = vpop.f32.mrf.mxu0
    %v4767 = vadd.f32 0.0, %v4766
    %v4768 = vpop.f32.mrf.mxu0
    %4769 = vmatprep.mubr.f32.mxu0 0.0
    %4770 = vmatmul.mubr.f32.gmra.mxu0 %v4568
    %v4771 = vpop.f32.mrf.mxu0
    %v4772 = vadd.f32 0.0, %v4771
    %v4773 = vpop.f32.mrf.mxu0
    %4774 = vmatprep.mubr.f32.mxu0 0.0
    %4775 = vmatmul.mubr.f32.gmra.mxu0 %v4571
    %v4776 = vpop.f32.mrf.mxu0
    %v4777 = vadd.f32 0.0, %v4776
    %v4778 = vpop.f32.mrf.mxu0
    %4779 = vmatprep.mubr.f32.mxu0 0.0
    %4780 = vmatmul.mubr.f32.gmra.mxu0 %v4574
    %v4781 = vpop.f32.mrf.mxu0
    %v4782 = vadd.f32 0.0, %v4781
    %v4783 = vpop.f32.mrf.mxu0
    %4784 = vmatprep.mubr.f32.mxu0 0.0
    %4785 = vmatmul.mubr.f32.gmra.mxu0 %v4577
    %v4786 = vpop.f32.mrf.mxu0
    %v4787 = vadd.f32 0.0, %v4786
    %v4788 = vpop.f32.mrf.mxu0
    %4789 = vmatprep.mubr.f32.mxu0 0.0
    %4790 = vmatmul.mubr.f32.gmra.mxu0 %v4580
    %v4791 = vpop.f32.mrf.mxu0
    %v4792 = vadd.f32 0.0, %v4791
    %v4793 = vpop.f32.mrf.mxu0
    %4794 = vmatprep.mubr.f32.mxu0 0.0
    %4795 = vmatmul.mubr.f32.gmra.mxu0 %v4583
    %v4796 = vpop.f32.mrf.mxu0
    %v4797 = vadd.f32 0.0, %v4796
    %v4798 = vpop.f32.mrf.mxu0
    %4799 = vmatprep.mubr.f32.mxu0 0.0
    %4800 = vmatmul.mubr.f32.gmra.mxu0 %v4586
    %v4801 = vpop.f32.mrf.mxu0
    %v4802 = vadd.f32 0.0, %v4801
    %v4803 = vpop.f32.mrf.mxu0
    %4804 = vmatprep.mubr.f32.mxu0 0.0
    %4805 = vmatmul.mubr.f32.gmra.mxu0 %v4589
    %v4806 = vpop.f32.mrf.mxu0
    %v4807 = vadd.f32 0.0, %v4806
    %v4808 = vpop.f32.mrf.mxu0
    %4809 = vmatprep.mubr.f32.mxu0 0.0
    %4810 = vmatmul.mubr.f32.gmra.mxu0 %v4592
    %v4811 = vpop.f32.mrf.mxu0
    %v4812 = vadd.f32 0.0, %v4811
    %v4813 = vpop.f32.mrf.mxu0
    %4814 = vmatprep.mubr.f32.mxu0 0.0
    %4815 = vmatmul.mubr.f32.gmra.mxu0 %v4595
    %v4816 = vpop.f32.mrf.mxu0
    %v4817 = vadd.f32 0.0, %v4816
    %v4818 = vpop.f32.mrf.mxu0
    %4819 = vmatprep.mubr.f32.mxu0 0.0
    %4820 = vmatmul.mubr.f32.gmra.mxu0 %v4598
    %v4821 = vpop.f32.mrf.mxu0
    %v4822 = vadd.f32 0.0, %v4821
    %v4823 = vpop.f32.mrf.mxu0
    %4824 = vdwg.mxu0
    %v4825 = vadd.f32 %v4438, %v4667
    %v4826 = vadd.f32 %v4439, %v4672
    %v4827 = vadd.f32 %v4440, %v4677
    %v4828 = vadd.f32 %v4441, %v4682
    %v4829 = vadd.f32 %v4442, %v4687
    %v4830 = vadd.f32 %v4443, %v4692
    %v4831 = vadd.f32 %v4444, %v4697
    %v4832 = vadd.f32 %v4445, %v4702
    %v4833 = vadd.f32 %v4446, %v4707
    %v4834 = vadd.f32 %v4447, %v4712
    %v4835 = vadd.f32 %v4448, %v4717
    %v4836 = vadd.f32 %v4449, %v4722
    %v4837 = vadd.f32 %v4450, %v4727
    %v4838 = vadd.f32 %v4451, %v4732
    %v4839 = vadd.f32 %v4452, %v4737
    %v4840 = vadd.f32 %v4453, %v4742
    %v4841 = vadd.f32 %v4454, %v4747
    %v4842 = vadd.f32 %v4455, %v4752
    %v4843 = vadd.f32 %v4456, %v4757
    %v4844 = vadd.f32 %v4457, %v4762
    %v4845 = vadd.f32 %v4458, %v4767
    %v4846 = vadd.f32 %v4459, %v4772
    %v4847 = vadd.f32 %v4460, %v4777
    %v4848 = vadd.f32 %v4461, %v4782
    %v4849 = vadd.f32 %v4462, %v4787
    %v4850 = vadd.f32 %v4463, %v4792
    %v4851 = vadd.f32 %v4464, %v4797
    %v4852 = vadd.f32 %v4465, %v4802
    %v4853 = vadd.f32 %v4466, %v4807
    %v4854 = vadd.f32 %v4467, %v4812
    %v4855 = vadd.f32 %v4468, %v4817
    %v4856 = vadd.f32 %v4469, %v4822
    %v4857 = vld [vmem:[%s5] sm:$0x1]
    %v4858 = vlaneseq
    %v4859 = vshrl.u32 %v4858, 7
    %v4860 = vsub.s32 0, %v4859
    %v4861 = vrot.slane %v4857, %v4860
    %v4862 = vadd.f32 %v4825, %v4861
    %v4863 = vadd.f32 %v4826, %v4861
    %v4864 = vadd.f32 %v4827, %v4861
    %v4865 = vadd.f32 %v4828, %v4861
    %v4866 = vadd.f32 %v4829, %v4861
    %v4867 = vadd.f32 %v4830, %v4861
    %v4868 = vadd.f32 %v4831, %v4861
    %v4869 = vadd.f32 %v4832, %v4861
    %v4870 = vadd.f32 %v4833, %v4861
    %v4871 = vadd.f32 %v4834, %v4861
    %v4872 = vadd.f32 %v4835, %v4861
    %v4873 = vadd.f32 %v4836, %v4861
    %v4874 = vadd.f32 %v4837, %v4861
    %v4875 = vadd.f32 %v4838, %v4861
    %v4876 = vadd.f32 %v4839, %v4861
    %v4877 = vadd.f32 %v4840, %v4861
    %v4878 = vadd.f32 %v4841, %v4861
    %v4879 = vadd.f32 %v4842, %v4861
    %v4880 = vadd.f32 %v4843, %v4861
    %v4881 = vadd.f32 %v4844, %v4861
    %v4882 = vadd.f32 %v4845, %v4861
    %v4883 = vadd.f32 %v4846, %v4861
    %v4884 = vadd.f32 %v4847, %v4861
    %v4885 = vadd.f32 %v4848, %v4861
    %v4886 = vadd.f32 %v4849, %v4861
    %v4887 = vadd.f32 %v4850, %v4861
    %v4888 = vadd.f32 %v4851, %v4861
    %v4889 = vadd.f32 %v4852, %v4861
    %v4890 = vadd.f32 %v4853, %v4861
    %v4891 = vadd.f32 %v4854, %v4861
    %v4892 = vadd.f32 %v4855, %v4861
    %v4893 = vadd.f32 %v4856, %v4861
    %v4894 = vmax.f32 %v4862, 0.0
    %v4895 = vmax.f32 %v4863, 0.0
    %v4896 = vmax.f32 %v4864, 0.0
    %v4897 = vmax.f32 %v4865, 0.0
    %v4898 = vmax.f32 %v4866, 0.0
    %v4899 = vmax.f32 %v4867, 0.0
    %v4900 = vmax.f32 %v4868, 0.0
    %v4901 = vmax.f32 %v4869, 0.0
    %v4902 = vmax.f32 %v4870, 0.0
    %v4903 = vmax.f32 %v4871, 0.0
    %v4904 = vmax.f32 %v4872, 0.0
    %v4905 = vmax.f32 %v4873, 0.0
    %v4906 = vmax.f32 %v4874, 0.0
    %v4907 = vmax.f32 %v4875, 0.0
    %v4908 = vmax.f32 %v4876, 0.0
    %v4909 = vmax.f32 %v4877, 0.0
    %v4910 = vmax.f32 %v4878, 0.0
    %v4911 = vmax.f32 %v4879, 0.0
    %v4912 = vmax.f32 %v4880, 0.0
    %v4913 = vmax.f32 %v4881, 0.0
    %v4914 = vmax.f32 %v4882, 0.0
    %v4915 = vmax.f32 %v4883, 0.0
    %v4916 = vmax.f32 %v4884, 0.0
    %v4917 = vmax.f32 %v4885, 0.0
    %v4918 = vmax.f32 %v4886, 0.0
    %v4919 = vmax.f32 %v4887, 0.0
    %v4920 = vmax.f32 %v4888, 0.0
    %v4921 = vmax.f32 %v4889, 0.0
    %v4922 = vmax.f32 %v4890, 0.0
    %v4923 = vmax.f32 %v4891, 0.0
    %v4924 = vmax.f32 %v4892, 0.0
    %v4925 = vmax.f32 %v4893, 0.0
    %4926 = vset.pattern.permute.xlu0 1
    %4927 = vperm.xlu0 %4926, %v471
    %v4928 = vpop.permute.xlu0 %4927
    %4930 = vset.pattern.permute.xlu0 1
    %4931 = vperm.xlu0 %4930, %v472
    %v4932 = vpop.permute.xlu0 %4931
    %4934 = vset.pattern.permute.xlu0 1
    %4935 = vperm.xlu0 %4934, %v473
    %v4936 = vpop.permute.xlu0 %4935
    %4938 = vset.pattern.permute.xlu0 1
    %4939 = vperm.xlu0 %4938, %v474
    %v4940 = vpop.permute.xlu0 %4939
    %4942 = vset.pattern.permute.xlu0 1
    %4943 = vperm.xlu0 %4942, %v475
    %v4944 = vpop.permute.xlu0 %4943
    %4946 = vset.pattern.permute.xlu0 1
    %4947 = vperm.xlu0 %4946, %v476
    %v4948 = vpop.permute.xlu0 %4947
    %4950 = vset.pattern.permute.xlu0 1
    %4951 = vperm.xlu0 %4950, %v477
    %v4952 = vpop.permute.xlu0 %4951
    %4954 = vset.pattern.permute.xlu0 1
    %4955 = vperm.xlu0 %4954, %v478
    %v4956 = vpop.permute.xlu0 %4955
    %4958 = vset.pattern.permute.xlu0 1
    %4959 = vperm.xlu0 %4958, %v479
    %v4960 = vpop.permute.xlu0 %4959
    %4962 = vset.pattern.permute.xlu0 1
    %4963 = vperm.xlu0 %4962, %v480
    %v4964 = vpop.permute.xlu0 %4963
    %4966 = vset.pattern.permute.xlu0 1
    %4967 = vperm.xlu0 %4966, %v481
    %v4968 = vpop.permute.xlu0 %4967
    %4970 = vset.pattern.permute.xlu0 1
    %4971 = vperm.xlu0 %4970, %v482
    %v4972 = vpop.permute.xlu0 %4971
    %4974 = vset.pattern.permute.xlu0 1
    %4975 = vperm.xlu0 %4974, %v483
    %v4976 = vpop.permute.xlu0 %4975
    %4978 = vset.pattern.permute.xlu0 1
    %4979 = vperm.xlu0 %4978, %v484
    %v4980 = vpop.permute.xlu0 %4979
    %4982 = vset.pattern.permute.xlu0 1
    %4983 = vperm.xlu0 %4982, %v485
    %v4984 = vpop.permute.xlu0 %4983
    %4986 = vset.pattern.permute.xlu0 1
    %4987 = vperm.xlu0 %4986, %v486
    %v4988 = vpop.permute.xlu0 %4987
    %4990 = vset.pattern.permute.xlu0 1
    %4991 = vperm.xlu0 %4990, %v487
    %v4992 = vpop.permute.xlu0 %4991
    %4994 = vset.pattern.permute.xlu0 1
    %4995 = vperm.xlu0 %4994, %v488
    %v4996 = vpop.permute.xlu0 %4995
    %4998 = vset.pattern.permute.xlu0 1
    %4999 = vperm.xlu0 %4998, %v489
    %v5000 = vpop.permute.xlu0 %4999
    %5002 = vset.pattern.permute.xlu0 1
    %5003 = vperm.xlu0 %5002, %v490
    %v5004 = vpop.permute.xlu0 %5003
    %5006 = vset.pattern.permute.xlu0 1
    %5007 = vperm.xlu0 %5006, %v491
    %v5008 = vpop.permute.xlu0 %5007
    %5010 = vset.pattern.permute.xlu0 1
    %5011 = vperm.xlu0 %5010, %v492
    %v5012 = vpop.permute.xlu0 %5011
    %5014 = vset.pattern.permute.xlu0 1
    %5015 = vperm.xlu0 %5014, %v493
    %v5016 = vpop.permute.xlu0 %5015
    %5018 = vset.pattern.permute.xlu0 1
    %5019 = vperm.xlu0 %5018, %v494
    %v5020 = vpop.permute.xlu0 %5019
    %5022 = vset.pattern.permute.xlu0 1
    %5023 = vperm.xlu0 %5022, %v495
    %v5024 = vpop.permute.xlu0 %5023
    %5026 = vset.pattern.permute.xlu0 1
    %5027 = vperm.xlu0 %5026, %v496
    %v5028 = vpop.permute.xlu0 %5027
    %5030 = vset.pattern.permute.xlu0 1
    %5031 = vperm.xlu0 %5030, %v497
    %v5032 = vpop.permute.xlu0 %5031
    %5034 = vset.pattern.permute.xlu0 1
    %5035 = vperm.xlu0 %5034, %v498
    %v5036 = vpop.permute.xlu0 %5035
    %5038 = vset.pattern.permute.xlu0 1
    %5039 = vperm.xlu0 %5038, %v499
    %v5040 = vpop.permute.xlu0 %5039
    %5042 = vset.pattern.permute.xlu0 1
    %5043 = vperm.xlu0 %5042, %v500
    %v5044 = vpop.permute.xlu0 %5043
    %5046 = vset.pattern.permute.xlu0 1
    %5047 = vperm.xlu0 %5046, %v501
    %v5048 = vpop.permute.xlu0 %5047
    %5050 = vset.pattern.permute.xlu0 1
    %5051 = vperm.xlu0 %5050, %v502
    %v5052 = vpop.permute.xlu0 %5051
    %v5054 = vmul.f32 %v4894, %v4928
    %v5055 = vmul.f32 %v4895, %v4932
    %v5056 = vmul.f32 %v4896, %v4936
    %v5057 = vmul.f32 %v4897, %v4940
    %v5058 = vmul.f32 %v4898, %v4944
    %v5059 = vmul.f32 %v4899, %v4948
    %v5060 = vmul.f32 %v4900, %v4952
    %v5061 = vmul.f32 %v4901, %v4956
    %v5062 = vmul.f32 %v4902, %v4960
    %v5063 = vmul.f32 %v4903, %v4964
    %v5064 = vmul.f32 %v4904, %v4968
    %v5065 = vmul.f32 %v4905, %v4972
    %v5066 = vmul.f32 %v4906, %v4976
    %v5067 = vmul.f32 %v4907, %v4980
    %v5068 = vmul.f32 %v4908, %v4984
    %v5069 = vmul.f32 %v4909, %v4988
    %v5070 = vmul.f32 %v4910, %v4992
    %v5071 = vmul.f32 %v4911, %v4996
    %v5072 = vmul.f32 %v4912, %v5000
    %v5073 = vmul.f32 %v4913, %v5004
    %v5074 = vmul.f32 %v4914, %v5008
    %v5075 = vmul.f32 %v4915, %v5012
    %v5076 = vmul.f32 %v4916, %v5016
    %v5077 = vmul.f32 %v4917, %v5020
    %v5078 = vmul.f32 %v4918, %v5024
    %v5079 = vmul.f32 %v4919, %v5028
    %v5080 = vmul.f32 %v4920, %v5032
    %v5081 = vmul.f32 %v4921, %v5036
    %v5082 = vmul.f32 %v4922, %v5040
    %v5083 = vmul.f32 %v4923, %v5044
    %v5084 = vmul.f32 %v4924, %v5048
    %v5085 = vmul.f32 %v4925, %v5052
    %vm5086 = vcmask 261120
    %v5087 = vsel %vm5086, %v5054, 0.0
    %v5088 = vsel %vm5086, %v5055, 0.0
    %v5089 = vadd.f32 %v5087, %v5088
    %v5090 = vsel %vm5086, %v5056, 0.0
    %v5091 = vadd.f32 %v5089, %v5090
    %v5092 = vsel %vm5086, %v5057, 0.0
    %v5093 = vadd.f32 %v5091, %v5092
    %v5094 = vsel %vm5086, %v5058, 0.0
    %v5095 = vadd.f32 %v5093, %v5094
    %v5096 = vsel %vm5086, %v5059, 0.0
    %v5097 = vadd.f32 %v5095, %v5096
    %v5098 = vsel %vm5086, %v5060, 0.0
    %v5099 = vadd.f32 %v5097, %v5098
    %v5100 = vsel %vm5086, %v5061, 0.0
    %v5101 = vadd.f32 %v5099, %v5100
    %v5102 = vsel %vm5086, %v5062, 0.0
    %v5103 = vadd.f32 %v5101, %v5102
    %v5104 = vsel %vm5086, %v5063, 0.0
    %v5105 = vadd.f32 %v5103, %v5104
    %v5106 = vsel %vm5086, %v5064, 0.0
    %v5107 = vadd.f32 %v5105, %v5106
    %v5108 = vsel %vm5086, %v5065, 0.0
    %v5109 = vadd.f32 %v5107, %v5108
    %v5110 = vsel %vm5086, %v5066, 0.0
    %v5111 = vadd.f32 %v5109, %v5110
    %v5112 = vsel %vm5086, %v5067, 0.0
    %v5113 = vadd.f32 %v5111, %v5112
    %v5114 = vsel %vm5086, %v5068, 0.0
    %v5115 = vadd.f32 %v5113, %v5114
    %v5116 = vsel %vm5086, %v5069, 0.0
    %v5117 = vadd.f32 %v5115, %v5116
    %v5118 = vsel %vm5086, %v5070, 0.0
    %v5119 = vadd.f32 %v5117, %v5118
    %v5120 = vsel %vm5086, %v5071, 0.0
    %v5121 = vadd.f32 %v5119, %v5120
    %v5122 = vsel %vm5086, %v5072, 0.0
    %v5123 = vadd.f32 %v5121, %v5122
    %v5124 = vsel %vm5086, %v5073, 0.0
    %v5125 = vadd.f32 %v5123, %v5124
    %v5126 = vsel %vm5086, %v5074, 0.0
    %v5127 = vadd.f32 %v5125, %v5126
    %v5128 = vsel %vm5086, %v5075, 0.0
    %v5129 = vadd.f32 %v5127, %v5128
    %v5130 = vsel %vm5086, %v5076, 0.0
    %v5131 = vadd.f32 %v5129, %v5130
    %v5132 = vsel %vm5086, %v5077, 0.0
    %v5133 = vadd.f32 %v5131, %v5132
    %v5134 = vsel %vm5086, %v5078, 0.0
    %v5135 = vadd.f32 %v5133, %v5134
    %v5136 = vsel %vm5086, %v5079, 0.0
    %v5137 = vadd.f32 %v5135, %v5136
    %v5138 = vsel %vm5086, %v5080, 0.0
    %v5139 = vadd.f32 %v5137, %v5138
    %v5140 = vsel %vm5086, %v5081, 0.0
    %v5141 = vadd.f32 %v5139, %v5140
    %v5142 = vsel %vm5086, %v5082, 0.0
    %v5143 = vadd.f32 %v5141, %v5142
    %v5144 = vsel %vm5086, %v5083, 0.0
    %v5145 = vadd.f32 %v5143, %v5144
    %v5146 = vsel %vm5086, %v5084, 0.0
    %v5147 = vadd.f32 %v5145, %v5146
    %v5148 = vsel %vm5086, %v5085, 0.0
    %v5149 = vadd.f32 %v5147, %v5148
    %v5150 = vrot.slane %v5149, 4
    %v5151 = vadd.f32 %v5149, %v5150
    %v5152 = vrot.slane %v5151, 2
    %v5153 = vadd.f32 %v5151, %v5152
    %v5154 = vrot.slane %v5153, 1
    %v5155 = vadd.f32 %v5153, %v5154
    %v5156 = vmul.f32 %v5155, 0.005952381
    %v5157 = vsub.f32 %v4894, %v5156
    %v5158 = vsub.f32 %v4895, %v5156
    %v5159 = vsub.f32 %v4896, %v5156
    %v5160 = vsub.f32 %v4897, %v5156
    %v5161 = vsub.f32 %v4898, %v5156
    %v5162 = vsub.f32 %v4899, %v5156
    %v5163 = vsub.f32 %v4900, %v5156
    %v5164 = vsub.f32 %v4901, %v5156
    %v5165 = vsub.f32 %v4902, %v5156
    %v5166 = vsub.f32 %v4903, %v5156
    %v5167 = vsub.f32 %v4904, %v5156
    %v5168 = vsub.f32 %v4905, %v5156
    %v5169 = vsub.f32 %v4906, %v5156
    %v5170 = vsub.f32 %v4907, %v5156
    %v5171 = vsub.f32 %v4908, %v5156
    %v5172 = vsub.f32 %v4909, %v5156
    %v5173 = vsub.f32 %v4910, %v5156
    %v5174 = vsub.f32 %v4911, %v5156
    %v5175 = vsub.f32 %v4912, %v5156
    %v5176 = vsub.f32 %v4913, %v5156
    %v5177 = vsub.f32 %v4914, %v5156
    %v5178 = vsub.f32 %v4915, %v5156
    %v5179 = vsub.f32 %v4916, %v5156
    %v5180 = vsub.f32 %v4917, %v5156
    %v5181 = vsub.f32 %v4918, %v5156
    %v5182 = vsub.f32 %v4919, %v5156
    %v5183 = vsub.f32 %v4920, %v5156
    %v5184 = vsub.f32 %v4921, %v5156
    %v5185 = vsub.f32 %v4922, %v5156
    %v5186 = vsub.f32 %v4923, %v5156
    %v5187 = vsub.f32 %v4924, %v5156
    %v5188 = vsub.f32 %v4925, %v5156
    %v5189 = vmul.f32 %v5157, %v4928
    %v5190 = vmul.f32 %v5158, %v4932
    %v5191 = vmul.f32 %v5159, %v4936
    %v5192 = vmul.f32 %v5160, %v4940
    %v5193 = vmul.f32 %v5161, %v4944
    %v5194 = vmul.f32 %v5162, %v4948
    %v5195 = vmul.f32 %v5163, %v4952
    %v5196 = vmul.f32 %v5164, %v4956
    %v5197 = vmul.f32 %v5165, %v4960
    %v5198 = vmul.f32 %v5166, %v4964
    %v5199 = vmul.f32 %v5167, %v4968
    %v5200 = vmul.f32 %v5168, %v4972
    %v5201 = vmul.f32 %v5169, %v4976
    %v5202 = vmul.f32 %v5170, %v4980
    %v5203 = vmul.f32 %v5171, %v4984
    %v5204 = vmul.f32 %v5172, %v4988
    %v5205 = vmul.f32 %v5173, %v4992
    %v5206 = vmul.f32 %v5174, %v4996
    %v5207 = vmul.f32 %v5175, %v5000
    %v5208 = vmul.f32 %v5176, %v5004
    %v5209 = vmul.f32 %v5177, %v5008
    %v5210 = vmul.f32 %v5178, %v5012
    %v5211 = vmul.f32 %v5179, %v5016
    %v5212 = vmul.f32 %v5180, %v5020
    %v5213 = vmul.f32 %v5181, %v5024
    %v5214 = vmul.f32 %v5182, %v5028
    %v5215 = vmul.f32 %v5183, %v5032
    %v5216 = vmul.f32 %v5184, %v5036
    %v5217 = vmul.f32 %v5185, %v5040
    %v5218 = vmul.f32 %v5186, %v5044
    %v5219 = vmul.f32 %v5187, %v5048
    %v5220 = vmul.f32 %v5188, %v5052
    %v5221 = vmul.f32 %v5189, %v5189
    %v5222 = vmul.f32 %v5190, %v5190
    %v5223 = vmul.f32 %v5191, %v5191
    %v5224 = vmul.f32 %v5192, %v5192
    %v5225 = vmul.f32 %v5193, %v5193
    %v5226 = vmul.f32 %v5194, %v5194
    %v5227 = vmul.f32 %v5195, %v5195
    %v5228 = vmul.f32 %v5196, %v5196
    %v5229 = vmul.f32 %v5197, %v5197
    %v5230 = vmul.f32 %v5198, %v5198
    %v5231 = vmul.f32 %v5199, %v5199
    %v5232 = vmul.f32 %v5200, %v5200
    %v5233 = vmul.f32 %v5201, %v5201
    %v5234 = vmul.f32 %v5202, %v5202
    %v5235 = vmul.f32 %v5203, %v5203
    %v5236 = vmul.f32 %v5204, %v5204
    %v5237 = vmul.f32 %v5205, %v5205
    %v5238 = vmul.f32 %v5206, %v5206
    %v5239 = vmul.f32 %v5207, %v5207
    %v5240 = vmul.f32 %v5208, %v5208
    %v5241 = vmul.f32 %v5209, %v5209
    %v5242 = vmul.f32 %v5210, %v5210
    %v5243 = vmul.f32 %v5211, %v5211
    %v5244 = vmul.f32 %v5212, %v5212
    %v5245 = vmul.f32 %v5213, %v5213
    %v5246 = vmul.f32 %v5214, %v5214
    %v5247 = vmul.f32 %v5215, %v5215
    %v5248 = vmul.f32 %v5216, %v5216
    %v5249 = vmul.f32 %v5217, %v5217
    %v5250 = vmul.f32 %v5218, %v5218
    %v5251 = vmul.f32 %v5219, %v5219
    %v5252 = vmul.f32 %v5220, %v5220
    %v5253 = vsel %vm5086, %v5221, 0.0
    %v5254 = vsel %vm5086, %v5222, 0.0
    %v5255 = vadd.f32 %v5253, %v5254
    %v5256 = vsel %vm5086, %v5223, 0.0
    %v5257 = vadd.f32 %v5255, %v5256
    %v5258 = vsel %vm5086, %v5224, 0.0
    %v5259 = vadd.f32 %v5257, %v5258
    %v5260 = vsel %vm5086, %v5225, 0.0
    %v5261 = vadd.f32 %v5259, %v5260
    %v5262 = vsel %vm5086, %v5226, 0.0
    %v5263 = vadd.f32 %v5261, %v5262
    %v5264 = vsel %vm5086, %v5227, 0.0
    %v5265 = vadd.f32 %v5263, %v5264
    %v5266 = vsel %vm5086, %v5228, 0.0
    %v5267 = vadd.f32 %v5265, %v5266
    %v5268 = vsel %vm5086, %v5229, 0.0
    %v5269 = vadd.f32 %v5267, %v5268
    %v5270 = vsel %vm5086, %v5230, 0.0
    %v5271 = vadd.f32 %v5269, %v5270
    %v5272 = vsel %vm5086, %v5231, 0.0
    %v5273 = vadd.f32 %v5271, %v5272
    %v5274 = vsel %vm5086, %v5232, 0.0
    %v5275 = vadd.f32 %v5273, %v5274
    %v5276 = vsel %vm5086, %v5233, 0.0
    %v5277 = vadd.f32 %v5275, %v5276
    %v5278 = vsel %vm5086, %v5234, 0.0
    %v5279 = vadd.f32 %v5277, %v5278
    %v5280 = vsel %vm5086, %v5235, 0.0
    %v5281 = vadd.f32 %v5279, %v5280
    %v5282 = vsel %vm5086, %v5236, 0.0
    %v5283 = vadd.f32 %v5281, %v5282
    %v5284 = vsel %vm5086, %v5237, 0.0
    %v5285 = vadd.f32 %v5283, %v5284
    %v5286 = vsel %vm5086, %v5238, 0.0
    %v5287 = vadd.f32 %v5285, %v5286
    %v5288 = vsel %vm5086, %v5239, 0.0
    %v5289 = vadd.f32 %v5287, %v5288
    %v5290 = vsel %vm5086, %v5240, 0.0
    %v5291 = vadd.f32 %v5289, %v5290
    %v5292 = vsel %vm5086, %v5241, 0.0
    %v5293 = vadd.f32 %v5291, %v5292
    %v5294 = vsel %vm5086, %v5242, 0.0
    %v5295 = vadd.f32 %v5293, %v5294
    %v5296 = vsel %vm5086, %v5243, 0.0
    %v5297 = vadd.f32 %v5295, %v5296
    %v5298 = vsel %vm5086, %v5244, 0.0
    %v5299 = vadd.f32 %v5297, %v5298
    %v5300 = vsel %vm5086, %v5245, 0.0
    %v5301 = vadd.f32 %v5299, %v5300
    %v5302 = vsel %vm5086, %v5246, 0.0
    %v5303 = vadd.f32 %v5301, %v5302
    %v5304 = vsel %vm5086, %v5247, 0.0
    %v5305 = vadd.f32 %v5303, %v5304
    %v5306 = vsel %vm5086, %v5248, 0.0
    %v5307 = vadd.f32 %v5305, %v5306
    %v5308 = vsel %vm5086, %v5249, 0.0
    %v5309 = vadd.f32 %v5307, %v5308
    %v5310 = vsel %vm5086, %v5250, 0.0
    %v5311 = vadd.f32 %v5309, %v5310
    %v5312 = vsel %vm5086, %v5251, 0.0
    %v5313 = vadd.f32 %v5311, %v5312
    %v5314 = vsel %vm5086, %v5252, 0.0
    %v5315 = vadd.f32 %v5313, %v5314
    %v5316 = vrot.slane %v5315, 4
    %v5317 = vadd.f32 %v5315, %v5316
    %v5318 = vrot.slane %v5317, 2
    %v5319 = vadd.f32 %v5317, %v5318
    %v5320 = vrot.slane %v5319, 1
    %v5321 = vadd.f32 %v5319, %v5320
    %v5322 = vmul.f32 %v5321, 0.005952381
    %v5323 = vld [vmem:[%s5 + $0x1] sm:$0x1]
    %v5324 = vlaneseq
    %v5325 = vshrl.u32 %v5324, 7
    %v5326 = vsub.s32 0, %v5325
    %v5327 = vrot.slane %v5323, %v5326
    %v5328 = vmul.f32 %v5327, %v5157
    %v5329 = vmul.f32 %v5327, %v5158
    %v5330 = vmul.f32 %v5327, %v5159
    %v5331 = vmul.f32 %v5327, %v5160
    %v5332 = vmul.f32 %v5327, %v5161
    %v5333 = vmul.f32 %v5327, %v5162
    %v5334 = vmul.f32 %v5327, %v5163
    %v5335 = vmul.f32 %v5327, %v5164
    %v5336 = vmul.f32 %v5327, %v5165
    %v5337 = vmul.f32 %v5327, %v5166
    %v5338 = vmul.f32 %v5327, %v5167
    %v5339 = vmul.f32 %v5327, %v5168
    %v5340 = vmul.f32 %v5327, %v5169
    %v5341 = vmul.f32 %v5327, %v5170
    %v5342 = vmul.f32 %v5327, %v5171
    %v5343 = vmul.f32 %v5327, %v5172
    %v5344 = vmul.f32 %v5327, %v5173
    %v5345 = vmul.f32 %v5327, %v5174
    %v5346 = vmul.f32 %v5327, %v5175
    %v5347 = vmul.f32 %v5327, %v5176
    %v5348 = vmul.f32 %v5327, %v5177
    %v5349 = vmul.f32 %v5327, %v5178
    %v5350 = vmul.f32 %v5327, %v5179
    %v5351 = vmul.f32 %v5327, %v5180
    %v5352 = vmul.f32 %v5327, %v5181
    %v5353 = vmul.f32 %v5327, %v5182
    %v5354 = vmul.f32 %v5327, %v5183
    %v5355 = vmul.f32 %v5327, %v5184
    %v5356 = vmul.f32 %v5327, %v5185
    %v5357 = vmul.f32 %v5327, %v5186
    %v5358 = vmul.f32 %v5327, %v5187
    %v5359 = vmul.f32 %v5327, %v5188
    %v5360 = vadd.f32 %v5322, 1e-05
    %v5361 = vrsqrt.pop %v5360
    %v5362 = vmul.f32 %v5328, %v5361
    %v5363 = vmul.f32 %v5329, %v5361
    %v5364 = vmul.f32 %v5330, %v5361
    %v5365 = vmul.f32 %v5331, %v5361
    %v5366 = vmul.f32 %v5332, %v5361
    %v5367 = vmul.f32 %v5333, %v5361
    %v5368 = vmul.f32 %v5334, %v5361
    %v5369 = vmul.f32 %v5335, %v5361
    %v5370 = vmul.f32 %v5336, %v5361
    %v5371 = vmul.f32 %v5337, %v5361
    %v5372 = vmul.f32 %v5338, %v5361
    %v5373 = vmul.f32 %v5339, %v5361
    %v5374 = vmul.f32 %v5340, %v5361
    %v5375 = vmul.f32 %v5341, %v5361
    %v5376 = vmul.f32 %v5342, %v5361
    %v5377 = vmul.f32 %v5343, %v5361
    %v5378 = vmul.f32 %v5344, %v5361
    %v5379 = vmul.f32 %v5345, %v5361
    %v5380 = vmul.f32 %v5346, %v5361
    %v5381 = vmul.f32 %v5347, %v5361
    %v5382 = vmul.f32 %v5348, %v5361
    %v5383 = vmul.f32 %v5349, %v5361
    %v5384 = vmul.f32 %v5350, %v5361
    %v5385 = vmul.f32 %v5351, %v5361
    %v5386 = vmul.f32 %v5352, %v5361
    %v5387 = vmul.f32 %v5353, %v5361
    %v5388 = vmul.f32 %v5354, %v5361
    %v5389 = vmul.f32 %v5355, %v5361
    %v5390 = vmul.f32 %v5356, %v5361
    %v5391 = vmul.f32 %v5357, %v5361
    %v5392 = vmul.f32 %v5358, %v5361
    %v5393 = vmul.f32 %v5359, %v5361
    %v5394 = vld [vmem:[%s5 + $0x2] sm:$0x1]
    %v5395 = vlaneseq
    %v5396 = vshrl.u32 %v5395, 7
    %v5397 = vsub.s32 0, %v5396
    %v5398 = vrot.slane %v5394, %v5397
    %v5399 = vadd.f32 %v5362, %v5398
    %v5400 = vadd.f32 %v5363, %v5398
    %v5401 = vadd.f32 %v5364, %v5398
    %v5402 = vadd.f32 %v5365, %v5398
    %v5403 = vadd.f32 %v5366, %v5398
    %v5404 = vadd.f32 %v5367, %v5398
    %v5405 = vadd.f32 %v5368, %v5398
    %v5406 = vadd.f32 %v5369, %v5398
    %v5407 = vadd.f32 %v5370, %v5398
    %v5408 = vadd.f32 %v5371, %v5398
    %v5409 = vadd.f32 %v5372, %v5398
    %v5410 = vadd.f32 %v5373, %v5398
    %v5411 = vadd.f32 %v5374, %v5398
    %v5412 = vadd.f32 %v5375, %v5398
    %v5413 = vadd.f32 %v5376, %v5398
    %v5414 = vadd.f32 %v5377, %v5398
    %v5415 = vadd.f32 %v5378, %v5398
    %v5416 = vadd.f32 %v5379, %v5398
    %v5417 = vadd.f32 %v5380, %v5398
    %v5418 = vadd.f32 %v5381, %v5398
    %v5419 = vadd.f32 %v5382, %v5398
    %v5420 = vadd.f32 %v5383, %v5398
    %v5421 = vadd.f32 %v5384, %v5398
    %v5422 = vadd.f32 %v5385, %v5398
    %v5423 = vadd.f32 %v5386, %v5398
    %v5424 = vadd.f32 %v5387, %v5398
    %v5425 = vadd.f32 %v5388, %v5398
    %v5426 = vadd.f32 %v5389, %v5398
    %v5427 = vadd.f32 %v5390, %v5398
    %v5428 = vadd.f32 %v5391, %v5398
    %v5429 = vadd.f32 %v5392, %v5398
    %v5430 = vadd.f32 %v5393, %v5398
    %5431 = vst.msk [vmem:[#allocation3] sm:$0xff] %vm5086, %v5399
    %5432 = vst.msk [vmem:[#allocation3 + $0x8] sm:$0xff] %vm5086, %v5400
    %5433 = vst.msk [vmem:[#allocation3 + $0x10] sm:$0xff] %vm5086, %v5401
    %5434 = vst.msk [vmem:[#allocation3 + $0x18] sm:$0xff] %vm5086, %v5402
    %5435 = vst.msk [vmem:[#allocation3 + $0x20] sm:$0xff] %vm5086, %v5403
    %5436 = vst.msk [vmem:[#allocation3 + $0x28] sm:$0xff] %vm5086, %v5404
    %5437 = vst.msk [vmem:[#allocation3 + $0x30] sm:$0xff] %vm5086, %v5405
    %5438 = vst.msk [vmem:[#allocation3 + $0x38] sm:$0xff] %vm5086, %v5406
    %5439 = vst.msk [vmem:[#allocation3 + $0x40] sm:$0xff] %vm5086, %v5407
    %5440 = vst.msk [vmem:[#allocation3 + $0x48] sm:$0xff] %vm5086, %v5408
    %5441 = vst.msk [vmem:[#allocation3 + $0x50] sm:$0xff] %vm5086, %v5409
    %5442 = vst.msk [vmem:[#allocation3 + $0x58] sm:$0xff] %vm5086, %v5410
    %5443 = vst.msk [vmem:[#allocation3 + $0x60] sm:$0xff] %vm5086, %v5411
    %5444 = vst.msk [vmem:[#allocation3 + $0x68] sm:$0xff] %vm5086, %v5412
    %5445 = vst.msk [vmem:[#allocation3 + $0x70] sm:$0xff] %vm5086, %v5413
    %5446 = vst.msk [vmem:[#allocation3 + $0x78] sm:$0xff] %vm5086, %v5414
    %5447 = vst.msk [vmem:[#allocation3 + $0x80] sm:$0xff] %vm5086, %v5415
    %5448 = vst.msk [vmem:[#allocation3 + $0x88] sm:$0xff] %vm5086, %v5416
    %5449 = vst.msk [vmem:[#allocation3 + $0x90] sm:$0xff] %vm5086, %v5417
    %5450 = vst.msk [vmem:[#allocation3 + $0x98] sm:$0xff] %vm5086, %v5418
    %5451 = vst.msk [vmem:[#allocation3 + $0xa0] sm:$0xff] %vm5086, %v5419
    %5452 = vst.msk [vmem:[#allocation3 + $0xa8] sm:$0xff] %vm5086, %v5420
    %5453 = vst.msk [vmem:[#allocation3 + $0xb0] sm:$0xff] %vm5086, %v5421
    %5454 = vst.msk [vmem:[#allocation3 + $0xb8] sm:$0xff] %vm5086, %v5422
    %5455 = vst.msk [vmem:[#allocation3 + $0xc0] sm:$0xff] %vm5086, %v5423
    %5456 = vst.msk [vmem:[#allocation3 + $0xc8] sm:$0xff] %vm5086, %v5424
    %5457 = vst.msk [vmem:[#allocation3 + $0xd0] sm:$0xff] %vm5086, %v5425
    %5458 = vst.msk [vmem:[#allocation3 + $0xd8] sm:$0xff] %vm5086, %v5426
    %5459 = vst.msk [vmem:[#allocation3 + $0xe0] sm:$0xff] %vm5086, %v5427
    %5460 = vst.msk [vmem:[#allocation3 + $0xe8] sm:$0xff] %vm5086, %v5428
    %5461 = vst.msk [vmem:[#allocation3 + $0xf0] sm:$0xff] %vm5086, %v5429
    %5462 = vst.msk [vmem:[#allocation3 + $0xf8] sm:$0xff] %vm5086, %v5430
    %s5463 = smul.u32 4, 336
    %s5464 = smul.u32 %s5463, 1
    %s5465 = sshll.u32 %s5464, 4
    %5466 = dma.done [#allocation6], %s5465
    %v5467 = vld [vmem:[#allocation3] sm:$0x3]
    %v5468 = vpack.c.bf16 %v5467, %v5467
    %v5469 = vld [vmem:[#allocation4] sm:$0xf]
    %v5470 = vld [vmem:[#allocation4 + $0x4] sm:$0xf]
    %v5471 = vld [vmem:[#allocation4 + $0x8] sm:$0xf]
    %v5472 = vld [vmem:[#allocation4 + $0xc] sm:$0xf]
    %v5473 = vld [vmem:[#allocation3 + $0x2] sm:$0x3]
    %v5474 = vpack.c.bf16 %v5473, %v5473
    %v5475 = vld [vmem:[#allocation4 + $0x10] sm:$0xf]
    %v5476 = vld [vmem:[#allocation4 + $0x14] sm:$0xf]
    %v5477 = vld [vmem:[#allocation4 + $0x18] sm:$0xf]
    %v5478 = vld [vmem:[#allocation4 + $0x1c] sm:$0xf]
    %v5483 = vunpack.c.l.b16 %v5475
    %v5484 = vunpack.c.l.b16 %v5476
    %v5485 = vunpack.c.l.b16 %v5477
    %v5486 = vunpack.c.l.b16 %v5478
    %v5487 = vpack.c.b16 %v5484, %v5483
    %v5488 = vpack.c.b16 %v5486, %v5485
    %v5492 = vsel %vm5086, %v5474, 0
    %5494 = vmatprep.subr.bf16.mxu0 0
    %5495 = vmatpush1.bf16.msra.mxu0 0
    %5496 = vmatprep.subr.bf16.mxu0 0
    %5497 = vmatpush1.bf16.msra.mxu0 0
    %5498 = vmatprep.subr.bf16.mxu0 0
    %5499 = vmatpush1.bf16.msra.mxu0 0
    %5500 = vmatprep.subr.bf16.mxu0 0
    %5501 = vmatpush1.bf16.msra.mxu0 0
    %5502 = vmatprep.subr.bf16.mxu0 0
    %5503 = vmatpush1.bf16.msra.mxu0 0
    %5504 = vmatprep.subr.bf16.mxu0 0
    %5505 = vmatpush1.bf16.msra.mxu0 0
    %5506 = vmatprep.subr.bf16.mxu0 0
    %5507 = vmatpush1.bf16.msra.mxu0 %v5488
    %5508 = vmatprep.subr.bf16.mxu0 0
    %5509 = vmatpush1.bf16.msra.mxu0 %v5487
    %5510 = vmatprep.subr.bf16.mxu0 0
    %5511 = vmatpush2.bf16.msra.mxu0 0
    %5512 = vmatprep.subr.bf16.mxu0 0
    %5513 = vmatpush2.bf16.msra.mxu0 0
    %5514 = vmatprep.subr.bf16.mxu0 0
    %5515 = vmatpush2.bf16.msra.mxu0 0
    %5516 = vmatprep.subr.bf16.mxu0 0
    %5517 = vmatpush2.bf16.msra.mxu0 0
    %5518 = vmatprep.subr.bf16.mxu0 0
    %5519 = vmatpush2.bf16.msra.mxu0 0
    %5520 = vmatprep.subr.bf16.mxu0 0
    %5521 = vmatpush2.bf16.msra.mxu0 0
    %5522 = vmatprep.subr.bf16.mxu0 0
    %5523 = vmatpush2.bf16.msra.mxu0 0
    %5524 = vmatprep.subr.bf16.mxu0 0
    %5525 = vmatpush2.bf16.msra.mxu0 0
    %5526 = vmatprep.mubr.bf16.mxu0 0
    %5527 = vmatmul.mubr.bf16.gmra.mxu0 %v5492
    %v5528 = vpop.f32.mrf.mxu0
    %v5529 = vadd.f32 0.0, %v5528
    %v5530 = vpop.f32.mrf.mxu0
    %v5531 = vpop.f32.mrf.mxu0
    %v5532 = vpop.f32.mrf.mxu0
    %5533 = vdwg.mxu0
    %v5538 = vunpack.c.l.b16 %v5469
    %v5539 = vunpack.c.l.b16 %v5470
    %v5540 = vunpack.c.l.b16 %v5471
    %v5541 = vunpack.c.l.b16 %v5472
    %v5542 = vpack.c.b16 %v5539, %v5538
    %v5543 = vpack.c.b16 %v5541, %v5540
    %v5547 = vsel %vm5086, %v5468, 0
    %5549 = vmatprep.subr.bf16.mxu0 0
    %5550 = vmatpush1.bf16.msra.mxu0 0
    %5551 = vmatprep.subr.bf16.mxu0 0
    %5552 = vmatpush1.bf16.msra.mxu0 0
    %5553 = vmatprep.subr.bf16.mxu0 0
    %5554 = vmatpush1.bf16.msra.mxu0 0
    %5555 = vmatprep.subr.bf16.mxu0 0
    %5556 = vmatpush1.bf16.msra.mxu0 0
    %5557 = vmatprep.subr.bf16.mxu0 0
    %5558 = vmatpush1.bf16.msra.mxu0 0
    %5559 = vmatprep.subr.bf16.mxu0 0
    %5560 = vmatpush1.bf16.msra.mxu0 0
    %5561 = vmatprep.subr.bf16.mxu0 0
    %5562 = vmatpush1.bf16.msra.mxu0 %v5543
    %5563 = vmatprep.subr.bf16.mxu0 0
    %5564 = vmatpush1.bf16.msra.mxu0 %v5542
    %5565 = vmatprep.subr.bf16.mxu0 0
    %5566 = vmatpush2.bf16.msra.mxu0 0
    %5567 = vmatprep.subr.bf16.mxu0 0
    %5568 = vmatpush2.bf16.msra.mxu0 0
    %5569 = vmatprep.subr.bf16.mxu0 0
    %5570 = vmatpush2.bf16.msra.mxu0 0
    %5571 = vmatprep.subr.bf16.mxu0 0
    %5572 = vmatpush2.bf16.msra.mxu0 0
    %5573 = vmatprep.subr.bf16.mxu0 0
    %5574 = vmatpush2.bf16.msra.mxu0 0
    %5575 = vmatprep.subr.bf16.mxu0 0
    %5576 = vmatpush2.bf16.msra.mxu0 0
    %5577 = vmatprep.subr.bf16.mxu0 0
    %5578 = vmatpush2.bf16.msra.mxu0 0
    %5579 = vmatprep.subr.bf16.mxu0 0
    %5580 = vmatpush2.bf16.msra.mxu0 0
    %5581 = vmatprep.mubr.bf16.mxu0 0
    %5582 = vmatmul.mubr.bf16.gmra.mxu0 %v5547
    %v5583 = vpop.f32.mrf.mxu0
    %v5584 = vadd.f32 %v5529, %v5583
    %v5585 = vpop.f32.mrf.mxu0
    %v5586 = vpop.f32.mrf.mxu0
    %v5587 = vpop.f32.mrf.mxu0
    %5588 = vdwg.mxu0
    %v5589 = vld [vmem:[#allocation3 + $0x4] sm:$0x3]
    %v5590 = vpack.c.bf16 %v5589, %v5589
    %v5591 = vld [vmem:[#allocation4 + $0x20] sm:$0xf]
    %v5592 = vld [vmem:[#allocation4 + $0x24] sm:$0xf]
    %v5593 = vld [vmem:[#allocation4 + $0x28] sm:$0xf]
    %v5594 = vld [vmem:[#allocation4 + $0x2c] sm:$0xf]
    %v5599 = vunpack.c.l.b16 %v5591
    %v5600 = vunpack.c.l.b16 %v5592
    %v5601 = vunpack.c.l.b16 %v5593
    %v5602 = vunpack.c.l.b16 %v5594
    %v5603 = vpack.c.b16 %v5600, %v5599
    %v5604 = vpack.c.b16 %v5602, %v5601
    %v5608 = vsel %vm5086, %v5590, 0
    %5610 = vmatprep.subr.bf16.mxu0 0
    %5611 = vmatpush1.bf16.msra.mxu0 0
    %5612 = vmatprep.subr.bf16.mxu0 0
    %5613 = vmatpush1.bf16.msra.mxu0 0
    %5614 = vmatprep.subr.bf16.mxu0 0
    %5615 = vmatpush1.bf16.msra.mxu0 0
    %5616 = vmatprep.subr.bf16.mxu0 0
    %5617 = vmatpush1.bf16.msra.mxu0 0
    %5618 = vmatprep.subr.bf16.mxu0 0
    %5619 = vmatpush1.bf16.msra.mxu0 0
    %5620 = vmatprep.subr.bf16.mxu0 0
    %5621 = vmatpush1.bf16.msra.mxu0 0
    %5622 = vmatprep.subr.bf16.mxu0 0
    %5623 = vmatpush1.bf16.msra.mxu0 %v5604
    %5624 = vmatprep.subr.bf16.mxu0 0
    %5625 = vmatpush1.bf16.msra.mxu0 %v5603
    %5626 = vmatprep.subr.bf16.mxu0 0
    %5627 = vmatpush2.bf16.msra.mxu0 0
    %5628 = vmatprep.subr.bf16.mxu0 0
    %5629 = vmatpush2.bf16.msra.mxu0 0
    %5630 = vmatprep.subr.bf16.mxu0 0
    %5631 = vmatpush2.bf16.msra.mxu0 0
    %5632 = vmatprep.subr.bf16.mxu0 0
    %5633 = vmatpush2.bf16.msra.mxu0 0
    %5634 = vmatprep.subr.bf16.mxu0 0
    %5635 = vmatpush2.bf16.msra.mxu0 0
    %5636 = vmatprep.subr.bf16.mxu0 0
    %5637 = vmatpush2.bf16.msra.mxu0 0
    %5638 = vmatprep.subr.bf16.mxu0 0
    %5639 = vmatpush2.bf16.msra.mxu0 0
    %5640 = vmatprep.subr.bf16.mxu0 0
    %5641 = vmatpush2.bf16.msra.mxu0 0
    %5642 = vmatprep.mubr.bf16.mxu0 0
    %5643 = vmatmul.mubr.bf16.gmra.mxu0 %v5608
    %v5644 = vpop.f32.mrf.mxu0
    %v5645 = vadd.f32 0.0, %v5644
    %v5646 = vpop.f32.mrf.mxu0
    %v5647 = vpop.f32.mrf.mxu0
    %v5648 = vpop.f32.mrf.mxu0
    %5649 = vdwg.mxu0
    %v5650 = vadd.f32 %v5584, %v5645
    %v5651 = vld [vmem:[#allocation3 + $0x6] sm:$0x3]
    %v5652 = vpack.c.bf16 %v5651, %v5651
    %v5653 = vld [vmem:[#allocation4 + $0x30] sm:$0xf]
    %v5654 = vld [vmem:[#allocation4 + $0x34] sm:$0xf]
    %v5655 = vld [vmem:[#allocation4 + $0x38] sm:$0xf]
    %v5656 = vld [vmem:[#allocation4 + $0x3c] sm:$0xf]
    %v5661 = vunpack.c.l.b16 %v5653
    %v5662 = vunpack.c.l.b16 %v5654
    %v5663 = vunpack.c.l.b16 %v5655
    %v5664 = vunpack.c.l.b16 %v5656
    %v5665 = vpack.c.b16 %v5662, %v5661
    %v5666 = vpack.c.b16 %v5664, %v5663
    %v5670 = vsel %vm5086, %v5652, 0
    %5672 = vmatprep.subr.bf16.mxu0 0
    %5673 = vmatpush1.bf16.msra.mxu0 0
    %5674 = vmatprep.subr.bf16.mxu0 0
    %5675 = vmatpush1.bf16.msra.mxu0 0
    %5676 = vmatprep.subr.bf16.mxu0 0
    %5677 = vmatpush1.bf16.msra.mxu0 0
    %5678 = vmatprep.subr.bf16.mxu0 0
    %5679 = vmatpush1.bf16.msra.mxu0 0
    %5680 = vmatprep.subr.bf16.mxu0 0
    %5681 = vmatpush1.bf16.msra.mxu0 0
    %5682 = vmatprep.subr.bf16.mxu0 0
    %5683 = vmatpush1.bf16.msra.mxu0 0
    %5684 = vmatprep.subr.bf16.mxu0 0
    %5685 = vmatpush1.bf16.msra.mxu0 %v5666
    %5686 = vmatprep.subr.bf16.mxu0 0
    %5687 = vmatpush1.bf16.msra.mxu0 %v5665
    %5688 = vmatprep.subr.bf16.mxu0 0
    %5689 = vmatpush2.bf16.msra.mxu0 0
    %5690 = vmatprep.subr.bf16.mxu0 0
    %5691 = vmatpush2.bf16.msra.mxu0 0
    %5692 = vmatprep.subr.bf16.mxu0 0
    %5693 = vmatpush2.bf16.msra.mxu0 0
    %5694 = vmatprep.subr.bf16.mxu0 0
    %5695 = vmatpush2.bf16.msra.mxu0 0
    %5696 = vmatprep.subr.bf16.mxu0 0
    %5697 = vmatpush2.bf16.msra.mxu0 0
    %5698 = vmatprep.subr.bf16.mxu0 0
    %5699 = vmatpush2.bf16.msra.mxu0 0
    %5700 = vmatprep.subr.bf16.mxu0 0
    %5701 = vmatpush2.bf16.msra.mxu0 0
    %5702 = vmatprep.subr.bf16.mxu0 0
    %5703 = vmatpush2.bf16.msra.mxu0 0
    %5704 = vmatprep.mubr.bf16.mxu0 0
    %5705 = vmatmul.mubr.bf16.gmra.mxu0 %v5670
    %v5706 = vpop.f32.mrf.mxu0
    %v5707 = vadd.f32 0.0, %v5706
    %v5708 = vpop.f32.mrf.mxu0
    %v5709 = vpop.f32.mrf.mxu0
    %v5710 = vpop.f32.mrf.mxu0
    %5711 = vdwg.mxu0
    %v5712 = vadd.f32 %v5650, %v5707
    %v5713 = vld [vmem:[#allocation3 + $0x8] sm:$0x3]
    %v5714 = vpack.c.bf16 %v5713, %v5713
    %v5715 = vld [vmem:[#allocation4 + $0x40] sm:$0xf]
    %v5716 = vld [vmem:[#allocation4 + $0x44] sm:$0xf]
    %v5717 = vld [vmem:[#allocation4 + $0x48] sm:$0xf]
    %v5718 = vld [vmem:[#allocation4 + $0x4c] sm:$0xf]
    %v5723 = vunpack.c.l.b16 %v5715
    %v5724 = vunpack.c.l.b16 %v5716
    %v5725 = vunpack.c.l.b16 %v5717
    %v5726 = vunpack.c.l.b16 %v5718
    %v5727 = vpack.c.b16 %v5724, %v5723
    %v5728 = vpack.c.b16 %v5726, %v5725
    %v5732 = vsel %vm5086, %v5714, 0
    %5734 = vmatprep.subr.bf16.mxu0 0
    %5735 = vmatpush1.bf16.msra.mxu0 0
    %5736 = vmatprep.subr.bf16.mxu0 0
    %5737 = vmatpush1.bf16.msra.mxu0 0
    %5738 = vmatprep.subr.bf16.mxu0 0
    %5739 = vmatpush1.bf16.msra.mxu0 0
    %5740 = vmatprep.subr.bf16.mxu0 0
    %5741 = vmatpush1.bf16.msra.mxu0 0
    %5742 = vmatprep.subr.bf16.mxu0 0
    %5743 = vmatpush1.bf16.msra.mxu0 0
    %5744 = vmatprep.subr.bf16.mxu0 0
    %5745 = vmatpush1.bf16.msra.mxu0 0
    %5746 = vmatprep.subr.bf16.mxu0 0
    %5747 = vmatpush1.bf16.msra.mxu0 %v5728
    %5748 = vmatprep.subr.bf16.mxu0 0
    %5749 = vmatpush1.bf16.msra.mxu0 %v5727
    %5750 = vmatprep.subr.bf16.mxu0 0
    %5751 = vmatpush2.bf16.msra.mxu0 0
    %5752 = vmatprep.subr.bf16.mxu0 0
    %5753 = vmatpush2.bf16.msra.mxu0 0
    %5754 = vmatprep.subr.bf16.mxu0 0
    %5755 = vmatpush2.bf16.msra.mxu0 0
    %5756 = vmatprep.subr.bf16.mxu0 0
    %5757 = vmatpush2.bf16.msra.mxu0 0
    %5758 = vmatprep.subr.bf16.mxu0 0
    %5759 = vmatpush2.bf16.msra.mxu0 0
    %5760 = vmatprep.subr.bf16.mxu0 0
    %5761 = vmatpush2.bf16.msra.mxu0 0
    %5762 = vmatprep.subr.bf16.mxu0 0
    %5763 = vmatpush2.bf16.msra.mxu0 0
    %5764 = vmatprep.subr.bf16.mxu0 0
    %5765 = vmatpush2.bf16.msra.mxu0 0
    %5766 = vmatprep.mubr.bf16.mxu0 0
    %5767 = vmatmul.mubr.bf16.gmra.mxu0 %v5732
    %v5768 = vpop.f32.mrf.mxu0
    %v5769 = vadd.f32 0.0, %v5768
    %v5770 = vpop.f32.mrf.mxu0
    %v5771 = vpop.f32.mrf.mxu0
    %v5772 = vpop.f32.mrf.mxu0
    %5773 = vdwg.mxu0
    %v5774 = vadd.f32 %v5712, %v5769
    %v5775 = vld [vmem:[#allocation3 + $0xa] sm:$0x3]
    %v5776 = vpack.c.bf16 %v5775, %v5775
    %v5777 = vld [vmem:[#allocation4 + $0x50] sm:$0xf]
    %v5778 = vld [vmem:[#allocation4 + $0x54] sm:$0xf]
    %v5779 = vld [vmem:[#allocation4 + $0x58] sm:$0xf]
    %v5780 = vld [vmem:[#allocation4 + $0x5c] sm:$0xf]
    %v5785 = vunpack.c.l.b16 %v5777
    %v5786 = vunpack.c.l.b16 %v5778
    %v5787 = vunpack.c.l.b16 %v5779
    %v5788 = vunpack.c.l.b16 %v5780
    %v5789 = vpack.c.b16 %v5786, %v5785
    %v5790 = vpack.c.b16 %v5788, %v5787
    %v5794 = vsel %vm5086, %v5776, 0
    %5796 = vmatprep.subr.bf16.mxu0 0
    %5797 = vmatpush1.bf16.msra.mxu0 0
    %5798 = vmatprep.subr.bf16.mxu0 0
    %5799 = vmatpush1.bf16.msra.mxu0 0
    %5800 = vmatprep.subr.bf16.mxu0 0
    %5801 = vmatpush1.bf16.msra.mxu0 0
    %5802 = vmatprep.subr.bf16.mxu0 0
    %5803 = vmatpush1.bf16.msra.mxu0 0
    %5804 = vmatprep.subr.bf16.mxu0 0
    %5805 = vmatpush1.bf16.msra.mxu0 0
    %5806 = vmatprep.subr.bf16.mxu0 0
    %5807 = vmatpush1.bf16.msra.mxu0 0
    %5808 = vmatprep.subr.bf16.mxu0 0
    %5809 = vmatpush1.bf16.msra.mxu0 %v5790
    %5810 = vmatprep.subr.bf16.mxu0 0
    %5811 = vmatpush1.bf16.msra.mxu0 %v5789
    %5812 = vmatprep.subr.bf16.mxu0 0
    %5813 = vmatpush2.bf16.msra.mxu0 0
    %5814 = vmatprep.subr.bf16.mxu0 0
    %5815 = vmatpush2.bf16.msra.mxu0 0
    %5816 = vmatprep.subr.bf16.mxu0 0
    %5817 = vmatpush2.bf16.msra.mxu0 0
    %5818 = vmatprep.subr.bf16.mxu0 0
    %5819 = vmatpush2.bf16.msra.mxu0 0
    %5820 = vmatprep.subr.bf16.mxu0 0
    %5821 = vmatpush2.bf16.msra.mxu0 0
    %5822 = vmatprep.subr.bf16.mxu0 0
    %5823 = vmatpush2.bf16.msra.mxu0 0
    %5824 = vmatprep.subr.bf16.mxu0 0
    %5825 = vmatpush2.bf16.msra.mxu0 0
    %5826 = vmatprep.subr.bf16.mxu0 0
    %5827 = vmatpush2.bf16.msra.mxu0 0
    %5828 = vmatprep.mubr.bf16.mxu0 0
    %5829 = vmatmul.mubr.bf16.gmra.mxu0 %v5794
    %v5830 = vpop.f32.mrf.mxu0
    %v5831 = vadd.f32 0.0, %v5830
    %v5832 = vpop.f32.mrf.mxu0
    %v5833 = vpop.f32.mrf.mxu0
    %v5834 = vpop.f32.mrf.mxu0
    %5835 = vdwg.mxu0
    %v5836 = vadd.f32 %v5774, %v5831
    %v5837 = vld [vmem:[#allocation3 + $0xc] sm:$0x3]
    %v5838 = vpack.c.bf16 %v5837, %v5837
    %v5839 = vld [vmem:[#allocation4 + $0x60] sm:$0xf]
    %v5840 = vld [vmem:[#allocation4 + $0x64] sm:$0xf]
    %v5841 = vld [vmem:[#allocation4 + $0x68] sm:$0xf]
    %v5842 = vld [vmem:[#allocation4 + $0x6c] sm:$0xf]
    %v5847 = vunpack.c.l.b16 %v5839
    %v5848 = vunpack.c.l.b16 %v5840
    %v5849 = vunpack.c.l.b16 %v5841
    %v5850 = vunpack.c.l.b16 %v5842
    %v5851 = vpack.c.b16 %v5848, %v5847
    %v5852 = vpack.c.b16 %v5850, %v5849
    %v5856 = vsel %vm5086, %v5838, 0
    %5858 = vmatprep.subr.bf16.mxu0 0
    %5859 = vmatpush1.bf16.msra.mxu0 0
    %5860 = vmatprep.subr.bf16.mxu0 0
    %5861 = vmatpush1.bf16.msra.mxu0 0
    %5862 = vmatprep.subr.bf16.mxu0 0
    %5863 = vmatpush1.bf16.msra.mxu0 0
    %5864 = vmatprep.subr.bf16.mxu0 0
    %5865 = vmatpush1.bf16.msra.mxu0 0
    %5866 = vmatprep.subr.bf16.mxu0 0
    %5867 = vmatpush1.bf16.msra.mxu0 0
    %5868 = vmatprep.subr.bf16.mxu0 0
    %5869 = vmatpush1.bf16.msra.mxu0 0
    %5870 = vmatprep.subr.bf16.mxu0 0
    %5871 = vmatpush1.bf16.msra.mxu0 %v5852
    %5872 = vmatprep.subr.bf16.mxu0 0
    %5873 = vmatpush1.bf16.msra.mxu0 %v5851
    %5874 = vmatprep.subr.bf16.mxu0 0
    %5875 = vmatpush2.bf16.msra.mxu0 0
    %5876 = vmatprep.subr.bf16.mxu0 0
    %5877 = vmatpush2.bf16.msra.mxu0 0
    %5878 = vmatprep.subr.bf16.mxu0 0
    %5879 = vmatpush2.bf16.msra.mxu0 0
    %5880 = vmatprep.subr.bf16.mxu0 0
    %5881 = vmatpush2.bf16.msra.mxu0 0
    %5882 = vmatprep.subr.bf16.mxu0 0
    %5883 = vmatpush2.bf16.msra.mxu0 0
    %5884 = vmatprep.subr.bf16.mxu0 0
    %5885 = vmatpush2.bf16.msra.mxu0 0
    %5886 = vmatprep.subr.bf16.mxu0 0
    %5887 = vmatpush2.bf16.msra.mxu0 0
    %5888 = vmatprep.subr.bf16.mxu0 0
    %5889 = vmatpush2.bf16.msra.mxu0 0
    %5890 = vmatprep.mubr.bf16.mxu0 0
    %5891 = vmatmul.mubr.bf16.gmra.mxu0 %v5856
    %v5892 = vpop.f32.mrf.mxu0
    %v5893 = vadd.f32 0.0, %v5892
    %v5894 = vpop.f32.mrf.mxu0
    %v5895 = vpop.f32.mrf.mxu0
    %v5896 = vpop.f32.mrf.mxu0
    %5897 = vdwg.mxu0
    %v5898 = vadd.f32 %v5836, %v5893
    %v5899 = vld [vmem:[#allocation3 + $0xe] sm:$0x3]
    %v5900 = vpack.c.bf16 %v5899, %v5899
    %v5901 = vld [vmem:[#allocation4 + $0x70] sm:$0xf]
    %v5902 = vld [vmem:[#allocation4 + $0x74] sm:$0xf]
    %v5903 = vld [vmem:[#allocation4 + $0x78] sm:$0xf]
    %v5904 = vld [vmem:[#allocation4 + $0x7c] sm:$0xf]
    %v5909 = vunpack.c.l.b16 %v5901
    %v5910 = vunpack.c.l.b16 %v5902
    %v5911 = vunpack.c.l.b16 %v5903
    %v5912 = vunpack.c.l.b16 %v5904
    %v5913 = vpack.c.b16 %v5910, %v5909
    %v5914 = vpack.c.b16 %v5912, %v5911
    %v5918 = vsel %vm5086, %v5900, 0
    %5920 = vmatprep.subr.bf16.mxu0 0
    %5921 = vmatpush1.bf16.msra.mxu0 0
    %5922 = vmatprep.subr.bf16.mxu0 0
    %5923 = vmatpush1.bf16.msra.mxu0 0
    %5924 = vmatprep.subr.bf16.mxu0 0
    %5925 = vmatpush1.bf16.msra.mxu0 0
    %5926 = vmatprep.subr.bf16.mxu0 0
    %5927 = vmatpush1.bf16.msra.mxu0 0
    %5928 = vmatprep.subr.bf16.mxu0 0
    %5929 = vmatpush1.bf16.msra.mxu0 0
    %5930 = vmatprep.subr.bf16.mxu0 0
    %5931 = vmatpush1.bf16.msra.mxu0 0
    %5932 = vmatprep.subr.bf16.mxu0 0
    %5933 = vmatpush1.bf16.msra.mxu0 %v5914
    %5934 = vmatprep.subr.bf16.mxu0 0
    %5935 = vmatpush1.bf16.msra.mxu0 %v5913
    %5936 = vmatprep.subr.bf16.mxu0 0
    %5937 = vmatpush2.bf16.msra.mxu0 0
    %5938 = vmatprep.subr.bf16.mxu0 0
    %5939 = vmatpush2.bf16.msra.mxu0 0
    %5940 = vmatprep.subr.bf16.mxu0 0
    %5941 = vmatpush2.bf16.msra.mxu0 0
    %5942 = vmatprep.subr.bf16.mxu0 0
    %5943 = vmatpush2.bf16.msra.mxu0 0
    %5944 = vmatprep.subr.bf16.mxu0 0
    %5945 = vmatpush2.bf16.msra.mxu0 0
    %5946 = vmatprep.subr.bf16.mxu0 0
    %5947 = vmatpush2.bf16.msra.mxu0 0
    %5948 = vmatprep.subr.bf16.mxu0 0
    %5949 = vmatpush2.bf16.msra.mxu0 0
    %5950 = vmatprep.subr.bf16.mxu0 0
    %5951 = vmatpush2.bf16.msra.mxu0 0
    %5952 = vmatprep.mubr.bf16.mxu0 0
    %5953 = vmatmul.mubr.bf16.gmra.mxu0 %v5918
    %v5954 = vpop.f32.mrf.mxu0
    %v5955 = vadd.f32 0.0, %v5954
    %v5956 = vpop.f32.mrf.mxu0
    %v5957 = vpop.f32.mrf.mxu0
    %v5958 = vpop.f32.mrf.mxu0
    %5959 = vdwg.mxu0
    %v5960 = vadd.f32 %v5898, %v5955
    %v5961 = vld [vmem:[#allocation3 + $0x10] sm:$0x3]
    %v5962 = vpack.c.bf16 %v5961, %v5961
    %v5963 = vld [vmem:[#allocation4 + $0x80] sm:$0xf]
    %v5964 = vld [vmem:[#allocation4 + $0x84] sm:$0xf]
    %v5965 = vld [vmem:[#allocation4 + $0x88] sm:$0xf]
    %v5966 = vld [vmem:[#allocation4 + $0x8c] sm:$0xf]
    %v5971 = vunpack.c.l.b16 %v5963
    %v5972 = vunpack.c.l.b16 %v5964
    %v5973 = vunpack.c.l.b16 %v5965
    %v5974 = vunpack.c.l.b16 %v5966
    %v5975 = vpack.c.b16 %v5972, %v5971
    %v5976 = vpack.c.b16 %v5974, %v5973
    %v5980 = vsel %vm5086, %v5962, 0
    %5982 = vmatprep.subr.bf16.mxu0 0
    %5983 = vmatpush1.bf16.msra.mxu0 0
    %5984 = vmatprep.subr.bf16.mxu0 0
    %5985 = vmatpush1.bf16.msra.mxu0 0
    %5986 = vmatprep.subr.bf16.mxu0 0
    %5987 = vmatpush1.bf16.msra.mxu0 0
    %5988 = vmatprep.subr.bf16.mxu0 0
    %5989 = vmatpush1.bf16.msra.mxu0 0
    %5990 = vmatprep.subr.bf16.mxu0 0
    %5991 = vmatpush1.bf16.msra.mxu0 0
    %5992 = vmatprep.subr.bf16.mxu0 0
    %5993 = vmatpush1.bf16.msra.mxu0 0
    %5994 = vmatprep.subr.bf16.mxu0 0
    %5995 = vmatpush1.bf16.msra.mxu0 %v5976
    %5996 = vmatprep.subr.bf16.mxu0 0
    %5997 = vmatpush1.bf16.msra.mxu0 %v5975
    %5998 = vmatprep.subr.bf16.mxu0 0
    %5999 = vmatpush2.bf16.msra.mxu0 0
    %6000 = vmatprep.subr.bf16.mxu0 0
    %6001 = vmatpush2.bf16.msra.mxu0 0
    %6002 = vmatprep.subr.bf16.mxu0 0
    %6003 = vmatpush2.bf16.msra.mxu0 0
    %6004 = vmatprep.subr.bf16.mxu0 0
    %6005 = vmatpush2.bf16.msra.mxu0 0
    %6006 = vmatprep.subr.bf16.mxu0 0
    %6007 = vmatpush2.bf16.msra.mxu0 0
    %6008 = vmatprep.subr.bf16.mxu0 0
    %6009 = vmatpush2.bf16.msra.mxu0 0
    %6010 = vmatprep.subr.bf16.mxu0 0
    %6011 = vmatpush2.bf16.msra.mxu0 0
    %6012 = vmatprep.subr.bf16.mxu0 0
    %6013 = vmatpush2.bf16.msra.mxu0 0
    %6014 = vmatprep.mubr.bf16.mxu0 0
    %6015 = vmatmul.mubr.bf16.gmra.mxu0 %v5980
    %v6016 = vpop.f32.mrf.mxu0
    %v6017 = vadd.f32 0.0, %v6016
    %v6018 = vpop.f32.mrf.mxu0
    %v6019 = vpop.f32.mrf.mxu0
    %v6020 = vpop.f32.mrf.mxu0
    %6021 = vdwg.mxu0
    %v6022 = vadd.f32 %v5960, %v6017
    %v6023 = vld [vmem:[#allocation3 + $0x12] sm:$0x3]
    %v6024 = vpack.c.bf16 %v6023, %v6023
    %v6025 = vld [vmem:[#allocation4 + $0x90] sm:$0xf]
    %v6026 = vld [vmem:[#allocation4 + $0x94] sm:$0xf]
    %v6027 = vld [vmem:[#allocation4 + $0x98] sm:$0xf]
    %v6028 = vld [vmem:[#allocation4 + $0x9c] sm:$0xf]
    %v6033 = vunpack.c.l.b16 %v6025
    %v6034 = vunpack.c.l.b16 %v6026
    %v6035 = vunpack.c.l.b16 %v6027
    %v6036 = vunpack.c.l.b16 %v6028
    %v6037 = vpack.c.b16 %v6034, %v6033
    %v6038 = vpack.c.b16 %v6036, %v6035
    %v6042 = vsel %vm5086, %v6024, 0
    %6044 = vmatprep.subr.bf16.mxu0 0
    %6045 = vmatpush1.bf16.msra.mxu0 0
    %6046 = vmatprep.subr.bf16.mxu0 0
    %6047 = vmatpush1.bf16.msra.mxu0 0
    %6048 = vmatprep.subr.bf16.mxu0 0
    %6049 = vmatpush1.bf16.msra.mxu0 0
    %6050 = vmatprep.subr.bf16.mxu0 0
    %6051 = vmatpush1.bf16.msra.mxu0 0
    %6052 = vmatprep.subr.bf16.mxu0 0
    %6053 = vmatpush1.bf16.msra.mxu0 0
    %6054 = vmatprep.subr.bf16.mxu0 0
    %6055 = vmatpush1.bf16.msra.mxu0 0
    %6056 = vmatprep.subr.bf16.mxu0 0
    %6057 = vmatpush1.bf16.msra.mxu0 %v6038
    %6058 = vmatprep.subr.bf16.mxu0 0
    %6059 = vmatpush1.bf16.msra.mxu0 %v6037
    %6060 = vmatprep.subr.bf16.mxu0 0
    %6061 = vmatpush2.bf16.msra.mxu0 0
    %6062 = vmatprep.subr.bf16.mxu0 0
    %6063 = vmatpush2.bf16.msra.mxu0 0
    %6064 = vmatprep.subr.bf16.mxu0 0
    %6065 = vmatpush2.bf16.msra.mxu0 0
    %6066 = vmatprep.subr.bf16.mxu0 0
    %6067 = vmatpush2.bf16.msra.mxu0 0
    %6068 = vmatprep.subr.bf16.mxu0 0
    %6069 = vmatpush2.bf16.msra.mxu0 0
    %6070 = vmatprep.subr.bf16.mxu0 0
    %6071 = vmatpush2.bf16.msra.mxu0 0
    %6072 = vmatprep.subr.bf16.mxu0 0
    %6073 = vmatpush2.bf16.msra.mxu0 0
    %6074 = vmatprep.subr.bf16.mxu0 0
    %6075 = vmatpush2.bf16.msra.mxu0 0
    %6076 = vmatprep.mubr.bf16.mxu0 0
    %6077 = vmatmul.mubr.bf16.gmra.mxu0 %v6042
    %v6078 = vpop.f32.mrf.mxu0
    %v6079 = vadd.f32 0.0, %v6078
    %v6080 = vpop.f32.mrf.mxu0
    %v6081 = vpop.f32.mrf.mxu0
    %v6082 = vpop.f32.mrf.mxu0
    %6083 = vdwg.mxu0
    %v6084 = vadd.f32 %v6022, %v6079
    %v6085 = vld [vmem:[#allocation3 + $0x14] sm:$0x3]
    %v6086 = vpack.c.bf16 %v6085, %v6085
    %v6087 = vld [vmem:[#allocation4 + $0xa0] sm:$0xf]
    %v6088 = vld [vmem:[#allocation4 + $0xa4] sm:$0xf]
    %v6089 = vld [vmem:[#allocation4 + $0xa8] sm:$0xf]
    %v6090 = vld [vmem:[#allocation4 + $0xac] sm:$0xf]
    %v6095 = vunpack.c.l.b16 %v6087
    %v6096 = vunpack.c.l.b16 %v6088
    %v6097 = vunpack.c.l.b16 %v6089
    %v6098 = vunpack.c.l.b16 %v6090
    %v6099 = vpack.c.b16 %v6096, %v6095
    %v6100 = vpack.c.b16 %v6098, %v6097
    %v6104 = vsel %vm5086, %v6086, 0
    %6106 = vmatprep.subr.bf16.mxu0 0
    %6107 = vmatpush1.bf16.msra.mxu0 0
    %6108 = vmatprep.subr.bf16.mxu0 0
    %6109 = vmatpush1.bf16.msra.mxu0 0
    %6110 = vmatprep.subr.bf16.mxu0 0
    %6111 = vmatpush1.bf16.msra.mxu0 0
    %6112 = vmatprep.subr.bf16.mxu0 0
    %6113 = vmatpush1.bf16.msra.mxu0 0
    %6114 = vmatprep.subr.bf16.mxu0 0
    %6115 = vmatpush1.bf16.msra.mxu0 0
    %6116 = vmatprep.subr.bf16.mxu0 0
    %6117 = vmatpush1.bf16.msra.mxu0 0
    %6118 = vmatprep.subr.bf16.mxu0 0
    %6119 = vmatpush1.bf16.msra.mxu0 %v6100
    %6120 = vmatprep.subr.bf16.mxu0 0
    %6121 = vmatpush1.bf16.msra.mxu0 %v6099
    %6122 = vmatprep.subr.bf16.mxu0 0
    %6123 = vmatpush2.bf16.msra.mxu0 0
    %6124 = vmatprep.subr.bf16.mxu0 0
    %6125 = vmatpush2.bf16.msra.mxu0 0
    %6126 = vmatprep.subr.bf16.mxu0 0
    %6127 = vmatpush2.bf16.msra.mxu0 0
    %6128 = vmatprep.subr.bf16.mxu0 0
    %6129 = vmatpush2.bf16.msra.mxu0 0
    %6130 = vmatprep.subr.bf16.mxu0 0
    %6131 = vmatpush2.bf16.msra.mxu0 0
    %6132 = vmatprep.subr.bf16.mxu0 0
    %6133 = vmatpush2.bf16.msra.mxu0 0
    %6134 = vmatprep.subr.bf16.mxu0 0
    %6135 = vmatpush2.bf16.msra.mxu0 0
    %6136 = vmatprep.subr.bf16.mxu0 0
    %6137 = vmatpush2.bf16.msra.mxu0 0
    %6138 = vmatprep.mubr.bf16.mxu0 0
    %6139 = vmatmul.mubr.bf16.gmra.mxu0 %v6104
    %v6140 = vpop.f32.mrf.mxu0
    %v6141 = vadd.f32 0.0, %v6140
    %v6142 = vpop.f32.mrf.mxu0
    %v6143 = vpop.f32.mrf.mxu0
    %v6144 = vpop.f32.mrf.mxu0
    %6145 = vdwg.mxu0
    %v6146 = vadd.f32 %v6084, %v6141
    %v6147 = vld [vmem:[#allocation3 + $0x16] sm:$0x3]
    %v6148 = vpack.c.bf16 %v6147, %v6147
    %v6149 = vld [vmem:[#allocation4 + $0xb0] sm:$0xf]
    %v6150 = vld [vmem:[#allocation4 + $0xb4] sm:$0xf]
    %v6151 = vld [vmem:[#allocation4 + $0xb8] sm:$0xf]
    %v6152 = vld [vmem:[#allocation4 + $0xbc] sm:$0xf]
    %v6157 = vunpack.c.l.b16 %v6149
    %v6158 = vunpack.c.l.b16 %v6150
    %v6159 = vunpack.c.l.b16 %v6151
    %v6160 = vunpack.c.l.b16 %v6152
    %v6161 = vpack.c.b16 %v6158, %v6157
    %v6162 = vpack.c.b16 %v6160, %v6159
    %v6166 = vsel %vm5086, %v6148, 0
    %6168 = vmatprep.subr.bf16.mxu0 0
    %6169 = vmatpush1.bf16.msra.mxu0 0
    %6170 = vmatprep.subr.bf16.mxu0 0
    %6171 = vmatpush1.bf16.msra.mxu0 0
    %6172 = vmatprep.subr.bf16.mxu0 0
    %6173 = vmatpush1.bf16.msra.mxu0 0
    %6174 = vmatprep.subr.bf16.mxu0 0
    %6175 = vmatpush1.bf16.msra.mxu0 0
    %6176 = vmatprep.subr.bf16.mxu0 0
    %6177 = vmatpush1.bf16.msra.mxu0 0
    %6178 = vmatprep.subr.bf16.mxu0 0
    %6179 = vmatpush1.bf16.msra.mxu0 0
    %6180 = vmatprep.subr.bf16.mxu0 0
    %6181 = vmatpush1.bf16.msra.mxu0 %v6162
    %6182 = vmatprep.subr.bf16.mxu0 0
    %6183 = vmatpush1.bf16.msra.mxu0 %v6161
    %6184 = vmatprep.subr.bf16.mxu0 0
    %6185 = vmatpush2.bf16.msra.mxu0 0
    %6186 = vmatprep.subr.bf16.mxu0 0
    %6187 = vmatpush2.bf16.msra.mxu0 0
    %6188 = vmatprep.subr.bf16.mxu0 0
    %6189 = vmatpush2.bf16.msra.mxu0 0
    %6190 = vmatprep.subr.bf16.mxu0 0
    %6191 = vmatpush2.bf16.msra.mxu0 0
    %6192 = vmatprep.subr.bf16.mxu0 0
    %6193 = vmatpush2.bf16.msra.mxu0 0
    %6194 = vmatprep.subr.bf16.mxu0 0
    %6195 = vmatpush2.bf16.msra.mxu0 0
    %6196 = vmatprep.subr.bf16.mxu0 0
    %6197 = vmatpush2.bf16.msra.mxu0 0
    %6198 = vmatprep.subr.bf16.mxu0 0
    %6199 = vmatpush2.bf16.msra.mxu0 0
    %6200 = vmatprep.mubr.bf16.mxu0 0
    %6201 = vmatmul.mubr.bf16.gmra.mxu0 %v6166
    %v6202 = vpop.f32.mrf.mxu0
    %v6203 = vadd.f32 0.0, %v6202
    %v6204 = vpop.f32.mrf.mxu0
    %v6205 = vpop.f32.mrf.mxu0
    %v6206 = vpop.f32.mrf.mxu0
    %6207 = vdwg.mxu0
    %v6208 = vadd.f32 %v6146, %v6203
    %v6209 = vld [vmem:[#allocation3 + $0x1c] sm:$0x3]
    %v6210 = vpack.c.bf16 %v6209, %v6209
    %v6211 = vld [vmem:[#allocation4 + $0xc0] sm:$0xf]
    %v6212 = vld [vmem:[#allocation4 + $0xc4] sm:$0xf]
    %v6213 = vld [vmem:[#allocation4 + $0xc8] sm:$0xf]
    %v6214 = vld [vmem:[#allocation4 + $0xcc] sm:$0xf]
    %v6219 = vunpack.c.l.b16 %v6211
    %v6220 = vunpack.c.l.b16 %v6212
    %v6221 = vunpack.c.l.b16 %v6213
    %v6222 = vunpack.c.l.b16 %v6214
    %v6223 = vpack.c.b16 %v6220, %v6219
    %v6224 = vpack.c.b16 %v6222, %v6221
    %v6228 = vsel %vm5086, %v6210, 0
    %6230 = vmatprep.subr.bf16.mxu0 0
    %6231 = vmatpush1.bf16.msra.mxu0 0
    %6232 = vmatprep.subr.bf16.mxu0 0
    %6233 = vmatpush1.bf16.msra.mxu0 0
    %6234 = vmatprep.subr.bf16.mxu0 0
    %6235 = vmatpush1.bf16.msra.mxu0 0
    %6236 = vmatprep.subr.bf16.mxu0 0
    %6237 = vmatpush1.bf16.msra.mxu0 0
    %6238 = vmatprep.subr.bf16.mxu0 0
    %6239 = vmatpush1.bf16.msra.mxu0 0
    %6240 = vmatprep.subr.bf16.mxu0 0
    %6241 = vmatpush1.bf16.msra.mxu0 0
    %6242 = vmatprep.subr.bf16.mxu0 0
    %6243 = vmatpush1.bf16.msra.mxu0 %v6224
    %6244 = vmatprep.subr.bf16.mxu0 0
    %6245 = vmatpush1.bf16.msra.mxu0 %v6223
    %6246 = vmatprep.subr.bf16.mxu0 0
    %6247 = vmatpush2.bf16.msra.mxu0 0
    %6248 = vmatprep.subr.bf16.mxu0 0
    %6249 = vmatpush2.bf16.msra.mxu0 0
    %6250 = vmatprep.subr.bf16.mxu0 0
    %6251 = vmatpush2.bf16.msra.mxu0 0
    %6252 = vmatprep.subr.bf16.mxu0 0
    %6253 = vmatpush2.bf16.msra.mxu0 0
    %6254 = vmatprep.subr.bf16.mxu0 0
    %6255 = vmatpush2.bf16.msra.mxu0 0
    %6256 = vmatprep.subr.bf16.mxu0 0
    %6257 = vmatpush2.bf16.msra.mxu0 0
    %6258 = vmatprep.subr.bf16.mxu0 0
    %6259 = vmatpush2.bf16.msra.mxu0 0
    %6260 = vmatprep.subr.bf16.mxu0 0
    %6261 = vmatpush2.bf16.msra.mxu0 0
    %6262 = vmatprep.mubr.bf16.mxu0 0
    %6263 = vmatmul.mubr.bf16.gmra.mxu0 %v6228
    %v6264 = vpop.f32.mrf.mxu0
    %v6265 = vadd.f32 0.0, %v6264
    %v6266 = vpop.f32.mrf.mxu0
    %v6267 = vpop.f32.mrf.mxu0
    %v6268 = vpop.f32.mrf.mxu0
    %6269 = vdwg.mxu0
    %v6270 = vadd.f32 %v6208, %v6265
    %v6271 = vld [vmem:[#allocation3 + $0x1e] sm:$0x3]
    %v6272 = vpack.c.bf16 %v6271, %v6271
    %v6273 = vld [vmem:[#allocation4 + $0xd0] sm:$0xf]
    %v6274 = vld [vmem:[#allocation4 + $0xd4] sm:$0xf]
    %v6275 = vld [vmem:[#allocation4 + $0xd8] sm:$0xf]
    %v6276 = vld [vmem:[#allocation4 + $0xdc] sm:$0xf]
    %v6281 = vunpack.c.l.b16 %v6273
    %v6282 = vunpack.c.l.b16 %v6274
    %v6283 = vunpack.c.l.b16 %v6275
    %v6284 = vunpack.c.l.b16 %v6276
    %v6285 = vpack.c.b16 %v6282, %v6281
    %v6286 = vpack.c.b16 %v6284, %v6283
    %v6290 = vsel %vm5086, %v6272, 0
    %6292 = vmatprep.subr.bf16.mxu0 0
    %6293 = vmatpush1.bf16.msra.mxu0 0
    %6294 = vmatprep.subr.bf16.mxu0 0
    %6295 = vmatpush1.bf16.msra.mxu0 0
    %6296 = vmatprep.subr.bf16.mxu0 0
    %6297 = vmatpush1.bf16.msra.mxu0 0
    %6298 = vmatprep.subr.bf16.mxu0 0
    %6299 = vmatpush1.bf16.msra.mxu0 0
    %6300 = vmatprep.subr.bf16.mxu0 0
    %6301 = vmatpush1.bf16.msra.mxu0 0
    %6302 = vmatprep.subr.bf16.mxu0 0
    %6303 = vmatpush1.bf16.msra.mxu0 0
    %6304 = vmatprep.subr.bf16.mxu0 0
    %6305 = vmatpush1.bf16.msra.mxu0 %v6286
    %6306 = vmatprep.subr.bf16.mxu0 0
    %6307 = vmatpush1.bf16.msra.mxu0 %v6285
    %6308 = vmatprep.subr.bf16.mxu0 0
    %6309 = vmatpush2.bf16.msra.mxu0 0
    %6310 = vmatprep.subr.bf16.mxu0 0
    %6311 = vmatpush2.bf16.msra.mxu0 0
    %6312 = vmatprep.subr.bf16.mxu0 0
    %6313 = vmatpush2.bf16.msra.mxu0 0
    %6314 = vmatprep.subr.bf16.mxu0 0
    %6315 = vmatpush2.bf16.msra.mxu0 0
    %6316 = vmatprep.subr.bf16.mxu0 0
    %6317 = vmatpush2.bf16.msra.mxu0 0
    %6318 = vmatprep.subr.bf16.mxu0 0
    %6319 = vmatpush2.bf16.msra.mxu0 0
    %6320 = vmatprep.subr.bf16.mxu0 0
    %6321 = vmatpush2.bf16.msra.mxu0 0
    %6322 = vmatprep.subr.bf16.mxu0 0
    %6323 = vmatpush2.bf16.msra.mxu0 0
    %6324 = vmatprep.mubr.bf16.mxu0 0
    %6325 = vmatmul.mubr.bf16.gmra.mxu0 %v6290
    %v6326 = vpop.f32.mrf.mxu0
    %v6327 = vadd.f32 0.0, %v6326
    %v6328 = vpop.f32.mrf.mxu0
    %v6329 = vpop.f32.mrf.mxu0
    %v6330 = vpop.f32.mrf.mxu0
    %6331 = vdwg.mxu0
    %v6332 = vadd.f32 %v6270, %v6327
    %v6333 = vld [vmem:[#allocation3 + $0x20] sm:$0x3]
    %v6334 = vpack.c.bf16 %v6333, %v6333
    %v6335 = vld [vmem:[#allocation4 + $0xe0] sm:$0xf]
    %v6336 = vld [vmem:[#allocation4 + $0xe4] sm:$0xf]
    %v6337 = vld [vmem:[#allocation4 + $0xe8] sm:$0xf]
    %v6338 = vld [vmem:[#allocation4 + $0xec] sm:$0xf]
    %v6343 = vunpack.c.l.b16 %v6335
    %v6344 = vunpack.c.l.b16 %v6336
    %v6345 = vunpack.c.l.b16 %v6337
    %v6346 = vunpack.c.l.b16 %v6338
    %v6347 = vpack.c.b16 %v6344, %v6343
    %v6348 = vpack.c.b16 %v6346, %v6345
    %v6352 = vsel %vm5086, %v6334, 0
    %6354 = vmatprep.subr.bf16.mxu0 0
    %6355 = vmatpush1.bf16.msra.mxu0 0
    %6356 = vmatprep.subr.bf16.mxu0 0
    %6357 = vmatpush1.bf16.msra.mxu0 0
    %6358 = vmatprep.subr.bf16.mxu0 0
    %6359 = vmatpush1.bf16.msra.mxu0 0
    %6360 = vmatprep.subr.bf16.mxu0 0
    %6361 = vmatpush1.bf16.msra.mxu0 0
    %6362 = vmatprep.subr.bf16.mxu0 0
    %6363 = vmatpush1.bf16.msra.mxu0 0
    %6364 = vmatprep.subr.bf16.mxu0 0
    %6365 = vmatpush1.bf16.msra.mxu0 0
    %6366 = vmatprep.subr.bf16.mxu0 0
    %6367 = vmatpush1.bf16.msra.mxu0 %v6348
    %6368 = vmatprep.subr.bf16.mxu0 0
    %6369 = vmatpush1.bf16.msra.mxu0 %v6347
    %6370 = vmatprep.subr.bf16.mxu0 0
    %6371 = vmatpush2.bf16.msra.mxu0 0
    %6372 = vmatprep.subr.bf16.mxu0 0
    %6373 = vmatpush2.bf16.msra.mxu0 0
    %6374 = vmatprep.subr.bf16.mxu0 0
    %6375 = vmatpush2.bf16.msra.mxu0 0
    %6376 = vmatprep.subr.bf16.mxu0 0
    %6377 = vmatpush2.bf16.msra.mxu0 0
    %6378 = vmatprep.subr.bf16.mxu0 0
    %6379 = vmatpush2.bf16.msra.mxu0 0
    %6380 = vmatprep.subr.bf16.mxu0 0
    %6381 = vmatpush2.bf16.msra.mxu0 0
    %6382 = vmatprep.subr.bf16.mxu0 0
    %6383 = vmatpush2.bf16.msra.mxu0 0
    %6384 = vmatprep.subr.bf16.mxu0 0
    %6385 = vmatpush2.bf16.msra.mxu0 0
    %6386 = vmatprep.mubr.bf16.mxu0 0
    %6387 = vmatmul.mubr.bf16.gmra.mxu0 %v6352
    %v6388 = vpop.f32.mrf.mxu0
    %v6389 = vadd.f32 0.0, %v6388
    %v6390 = vpop.f32.mrf.mxu0
    %v6391 = vpop.f32.mrf.mxu0
    %v6392 = vpop.f32.mrf.mxu0
    %6393 = vdwg.mxu0
    %v6394 = vadd.f32 %v6332, %v6389
    %v6395 = vld [vmem:[#allocation3 + $0x22] sm:$0x3]
    %v6396 = vpack.c.bf16 %v6395, %v6395
    %v6397 = vld [vmem:[#allocation4 + $0xf0] sm:$0xf]
    %v6398 = vld [vmem:[#allocation4 + $0xf4] sm:$0xf]
    %v6399 = vld [vmem:[#allocation4 + $0xf8] sm:$0xf]
    %v6400 = vld [vmem:[#allocation4 + $0xfc] sm:$0xf]
    %v6405 = vunpack.c.l.b16 %v6397
    %v6406 = vunpack.c.l.b16 %v6398
    %v6407 = vunpack.c.l.b16 %v6399
    %v6408 = vunpack.c.l.b16 %v6400
    %v6409 = vpack.c.b16 %v6406, %v6405
    %v6410 = vpack.c.b16 %v6408, %v6407
    %v6414 = vsel %vm5086, %v6396, 0
    %6416 = vmatprep.subr.bf16.mxu0 0
    %6417 = vmatpush1.bf16.msra.mxu0 0
    %6418 = vmatprep.subr.bf16.mxu0 0
    %6419 = vmatpush1.bf16.msra.mxu0 0
    %6420 = vmatprep.subr.bf16.mxu0 0
    %6421 = vmatpush1.bf16.msra.mxu0 0
    %6422 = vmatprep.subr.bf16.mxu0 0
    %6423 = vmatpush1.bf16.msra.mxu0 0
    %6424 = vmatprep.subr.bf16.mxu0 0
    %6425 = vmatpush1.bf16.msra.mxu0 0
    %6426 = vmatprep.subr.bf16.mxu0 0
    %6427 = vmatpush1.bf16.msra.mxu0 0
    %6428 = vmatprep.subr.bf16.mxu0 0
    %6429 = vmatpush1.bf16.msra.mxu0 %v6410
    %6430 = vmatprep.subr.bf16.mxu0 0
    %6431 = vmatpush1.bf16.msra.mxu0 %v6409
    %6432 = vmatprep.subr.bf16.mxu0 0
    %6433 = vmatpush2.bf16.msra.mxu0 0
    %6434 = vmatprep.subr.bf16.mxu0 0
    %6435 = vmatpush2.bf16.msra.mxu0 0
    %6436 = vmatprep.subr.bf16.mxu0 0
    %6437 = vmatpush2.bf16.msra.mxu0 0
    %6438 = vmatprep.subr.bf16.mxu0 0
    %6439 = vmatpush2.bf16.msra.mxu0 0
    %6440 = vmatprep.subr.bf16.mxu0 0
    %6441 = vmatpush2.bf16.msra.mxu0 0
    %6442 = vmatprep.subr.bf16.mxu0 0
    %6443 = vmatpush2.bf16.msra.mxu0 0
    %6444 = vmatprep.subr.bf16.mxu0 0
    %6445 = vmatpush2.bf16.msra.mxu0 0
    %6446 = vmatprep.subr.bf16.mxu0 0
    %6447 = vmatpush2.bf16.msra.mxu0 0
    %6448 = vmatprep.mubr.bf16.mxu0 0
    %6449 = vmatmul.mubr.bf16.gmra.mxu0 %v6414
    %v6450 = vpop.f32.mrf.mxu0
    %v6451 = vadd.f32 0.0, %v6450
    %v6452 = vpop.f32.mrf.mxu0
    %v6453 = vpop.f32.mrf.mxu0
    %v6454 = vpop.f32.mrf.mxu0
    %6455 = vdwg.mxu0
    %v6456 = vadd.f32 %v6394, %v6451
    %v6457 = vld [vmem:[#allocation3 + $0x24] sm:$0x3]
    %v6458 = vpack.c.bf16 %v6457, %v6457
    %v6459 = vld [vmem:[#allocation4 + $0x100] sm:$0xf]
    %v6460 = vld [vmem:[#allocation4 + $0x104] sm:$0xf]
    %v6461 = vld [vmem:[#allocation4 + $0x108] sm:$0xf]
    %v6462 = vld [vmem:[#allocation4 + $0x10c] sm:$0xf]
    %v6467 = vunpack.c.l.b16 %v6459
    %v6468 = vunpack.c.l.b16 %v6460
    %v6469 = vunpack.c.l.b16 %v6461
    %v6470 = vunpack.c.l.b16 %v6462
    %v6471 = vpack.c.b16 %v6468, %v6467
    %v6472 = vpack.c.b16 %v6470, %v6469
    %v6476 = vsel %vm5086, %v6458, 0
    %6478 = vmatprep.subr.bf16.mxu0 0
    %6479 = vmatpush1.bf16.msra.mxu0 0
    %6480 = vmatprep.subr.bf16.mxu0 0
    %6481 = vmatpush1.bf16.msra.mxu0 0
    %6482 = vmatprep.subr.bf16.mxu0 0
    %6483 = vmatpush1.bf16.msra.mxu0 0
    %6484 = vmatprep.subr.bf16.mxu0 0
    %6485 = vmatpush1.bf16.msra.mxu0 0
    %6486 = vmatprep.subr.bf16.mxu0 0
    %6487 = vmatpush1.bf16.msra.mxu0 0
    %6488 = vmatprep.subr.bf16.mxu0 0
    %6489 = vmatpush1.bf16.msra.mxu0 0
    %6490 = vmatprep.subr.bf16.mxu0 0
    %6491 = vmatpush1.bf16.msra.mxu0 %v6472
    %6492 = vmatprep.subr.bf16.mxu0 0
    %6493 = vmatpush1.bf16.msra.mxu0 %v6471
    %6494 = vmatprep.subr.bf16.mxu0 0
    %6495 = vmatpush2.bf16.msra.mxu0 0
    %6496 = vmatprep.subr.bf16.mxu0 0
    %6497 = vmatpush2.bf16.msra.mxu0 0
    %6498 = vmatprep.subr.bf16.mxu0 0
    %6499 = vmatpush2.bf16.msra.mxu0 0
    %6500 = vmatprep.subr.bf16.mxu0 0
    %6501 = vmatpush2.bf16.msra.mxu0 0
    %6502 = vmatprep.subr.bf16.mxu0 0
    %6503 = vmatpush2.bf16.msra.mxu0 0
    %6504 = vmatprep.subr.bf16.mxu0 0
    %6505 = vmatpush2.bf16.msra.mxu0 0
    %6506 = vmatprep.subr.bf16.mxu0 0
    %6507 = vmatpush2.bf16.msra.mxu0 0
    %6508 = vmatprep.subr.bf16.mxu0 0
    %6509 = vmatpush2.bf16.msra.mxu0 0
    %6510 = vmatprep.mubr.bf16.mxu0 0
    %6511 = vmatmul.mubr.bf16.gmra.mxu0 %v6476
    %v6512 = vpop.f32.mrf.mxu0
    %v6513 = vadd.f32 0.0, %v6512
    %v6514 = vpop.f32.mrf.mxu0
    %v6515 = vpop.f32.mrf.mxu0
    %v6516 = vpop.f32.mrf.mxu0
    %6517 = vdwg.mxu0
    %v6518 = vadd.f32 %v6456, %v6513
    %v6519 = vld [vmem:[#allocation3 + $0x26] sm:$0x3]
    %v6520 = vpack.c.bf16 %v6519, %v6519
    %v6521 = vld [vmem:[#allocation4 + $0x110] sm:$0xf]
    %v6522 = vld [vmem:[#allocation4 + $0x114] sm:$0xf]
    %v6523 = vld [vmem:[#allocation4 + $0x118] sm:$0xf]
    %v6524 = vld [vmem:[#allocation4 + $0x11c] sm:$0xf]
    %v6529 = vunpack.c.l.b16 %v6521
    %v6530 = vunpack.c.l.b16 %v6522
    %v6531 = vunpack.c.l.b16 %v6523
    %v6532 = vunpack.c.l.b16 %v6524
    %v6533 = vpack.c.b16 %v6530, %v6529
    %v6534 = vpack.c.b16 %v6532, %v6531
    %v6538 = vsel %vm5086, %v6520, 0
    %6540 = vmatprep.subr.bf16.mxu0 0
    %6541 = vmatpush1.bf16.msra.mxu0 0
    %6542 = vmatprep.subr.bf16.mxu0 0
    %6543 = vmatpush1.bf16.msra.mxu0 0
    %6544 = vmatprep.subr.bf16.mxu0 0
    %6545 = vmatpush1.bf16.msra.mxu0 0
    %6546 = vmatprep.subr.bf16.mxu0 0
    %6547 = vmatpush1.bf16.msra.mxu0 0
    %6548 = vmatprep.subr.bf16.mxu0 0
    %6549 = vmatpush1.bf16.msra.mxu0 0
    %6550 = vmatprep.subr.bf16.mxu0 0
    %6551 = vmatpush1.bf16.msra.mxu0 0
    %6552 = vmatprep.subr.bf16.mxu0 0
    %6553 = vmatpush1.bf16.msra.mxu0 %v6534
    %6554 = vmatprep.subr.bf16.mxu0 0
    %6555 = vmatpush1.bf16.msra.mxu0 %v6533
    %6556 = vmatprep.subr.bf16.mxu0 0
    %6557 = vmatpush2.bf16.msra.mxu0 0
    %6558 = vmatprep.subr.bf16.mxu0 0
    %6559 = vmatpush2.bf16.msra.mxu0 0
    %6560 = vmatprep.subr.bf16.mxu0 0
    %6561 = vmatpush2.bf16.msra.mxu0 0
    %6562 = vmatprep.subr.bf16.mxu0 0
    %6563 = vmatpush2.bf16.msra.mxu0 0
    %6564 = vmatprep.subr.bf16.mxu0 0
    %6565 = vmatpush2.bf16.msra.mxu0 0
    %6566 = vmatprep.subr.bf16.mxu0 0
    %6567 = vmatpush2.bf16.msra.mxu0 0
    %6568 = vmatprep.subr.bf16.mxu0 0
    %6569 = vmatpush2.bf16.msra.mxu0 0
    %6570 = vmatprep.subr.bf16.mxu0 0
    %6571 = vmatpush2.bf16.msra.mxu0 0
    %6572 = vmatprep.mubr.bf16.mxu0 0
    %6573 = vmatmul.mubr.bf16.gmra.mxu0 %v6538
    %v6574 = vpop.f32.mrf.mxu0
    %v6575 = vadd.f32 0.0, %v6574
    %v6576 = vpop.f32.mrf.mxu0
    %v6577 = vpop.f32.mrf.mxu0
    %v6578 = vpop.f32.mrf.mxu0
    %6579 = vdwg.mxu0
    %v6580 = vadd.f32 %v6518, %v6575
    %v6581 = vld [vmem:[#allocation3 + $0x28] sm:$0x3]
    %v6582 = vpack.c.bf16 %v6581, %v6581
    %v6583 = vld [vmem:[#allocation4 + $0x120] sm:$0xf]
    %v6584 = vld [vmem:[#allocation4 + $0x124] sm:$0xf]
    %v6585 = vld [vmem:[#allocation4 + $0x128] sm:$0xf]
    %v6586 = vld [vmem:[#allocation4 + $0x12c] sm:$0xf]
    %v6591 = vunpack.c.l.b16 %v6583
    %v6592 = vunpack.c.l.b16 %v6584
    %v6593 = vunpack.c.l.b16 %v6585
    %v6594 = vunpack.c.l.b16 %v6586
    %v6595 = vpack.c.b16 %v6592, %v6591
    %v6596 = vpack.c.b16 %v6594, %v6593
    %v6600 = vsel %vm5086, %v6582, 0
    %6602 = vmatprep.subr.bf16.mxu0 0
    %6603 = vmatpush1.bf16.msra.mxu0 0
    %6604 = vmatprep.subr.bf16.mxu0 0
    %6605 = vmatpush1.bf16.msra.mxu0 0
    %6606 = vmatprep.subr.bf16.mxu0 0
    %6607 = vmatpush1.bf16.msra.mxu0 0
    %6608 = vmatprep.subr.bf16.mxu0 0
    %6609 = vmatpush1.bf16.msra.mxu0 0
    %6610 = vmatprep.subr.bf16.mxu0 0
    %6611 = vmatpush1.bf16.msra.mxu0 0
    %6612 = vmatprep.subr.bf16.mxu0 0
    %6613 = vmatpush1.bf16.msra.mxu0 0
    %6614 = vmatprep.subr.bf16.mxu0 0
    %6615 = vmatpush1.bf16.msra.mxu0 %v6596
    %6616 = vmatprep.subr.bf16.mxu0 0
    %6617 = vmatpush1.bf16.msra.mxu0 %v6595
    %6618 = vmatprep.subr.bf16.mxu0 0
    %6619 = vmatpush2.bf16.msra.mxu0 0
    %6620 = vmatprep.subr.bf16.mxu0 0
    %6621 = vmatpush2.bf16.msra.mxu0 0
    %6622 = vmatprep.subr.bf16.mxu0 0
    %6623 = vmatpush2.bf16.msra.mxu0 0
    %6624 = vmatprep.subr.bf16.mxu0 0
    %6625 = vmatpush2.bf16.msra.mxu0 0
    %6626 = vmatprep.subr.bf16.mxu0 0
    %6627 = vmatpush2.bf16.msra.mxu0 0
    %6628 = vmatprep.subr.bf16.mxu0 0
    %6629 = vmatpush2.bf16.msra.mxu0 0
    %6630 = vmatprep.subr.bf16.mxu0 0
    %6631 = vmatpush2.bf16.msra.mxu0 0
    %6632 = vmatprep.subr.bf16.mxu0 0
    %6633 = vmatpush2.bf16.msra.mxu0 0
    %6634 = vmatprep.mubr.bf16.mxu0 0
    %6635 = vmatmul.mubr.bf16.gmra.mxu0 %v6600
    %v6636 = vpop.f32.mrf.mxu0
    %v6637 = vadd.f32 0.0, %v6636
    %v6638 = vpop.f32.mrf.mxu0
    %v6639 = vpop.f32.mrf.mxu0
    %v6640 = vpop.f32.mrf.mxu0
    %6641 = vdwg.mxu0
    %v6642 = vadd.f32 %v6580, %v6637
    %v6643 = vld [vmem:[#allocation3 + $0x2a] sm:$0x3]
    %v6644 = vpack.c.bf16 %v6643, %v6643
    %v6645 = vld [vmem:[#allocation4 + $0x130] sm:$0xf]
    %v6646 = vld [vmem:[#allocation4 + $0x134] sm:$0xf]
    %v6647 = vld [vmem:[#allocation4 + $0x138] sm:$0xf]
    %v6648 = vld [vmem:[#allocation4 + $0x13c] sm:$0xf]
    %v6653 = vunpack.c.l.b16 %v6645
    %v6654 = vunpack.c.l.b16 %v6646
    %v6655 = vunpack.c.l.b16 %v6647
    %v6656 = vunpack.c.l.b16 %v6648
    %v6657 = vpack.c.b16 %v6654, %v6653
    %v6658 = vpack.c.b16 %v6656, %v6655
    %v6662 = vsel %vm5086, %v6644, 0
    %6664 = vmatprep.subr.bf16.mxu0 0
    %6665 = vmatpush1.bf16.msra.mxu0 0
    %6666 = vmatprep.subr.bf16.mxu0 0
    %6667 = vmatpush1.bf16.msra.mxu0 0
    %6668 = vmatprep.subr.bf16.mxu0 0
    %6669 = vmatpush1.bf16.msra.mxu0 0
    %6670 = vmatprep.subr.bf16.mxu0 0
    %6671 = vmatpush1.bf16.msra.mxu0 0
    %6672 = vmatprep.subr.bf16.mxu0 0
    %6673 = vmatpush1.bf16.msra.mxu0 0
    %6674 = vmatprep.subr.bf16.mxu0 0
    %6675 = vmatpush1.bf16.msra.mxu0 0
    %6676 = vmatprep.subr.bf16.mxu0 0
    %6677 = vmatpush1.bf16.msra.mxu0 %v6658
    %6678 = vmatprep.subr.bf16.mxu0 0
    %6679 = vmatpush1.bf16.msra.mxu0 %v6657
    %6680 = vmatprep.subr.bf16.mxu0 0
    %6681 = vmatpush2.bf16.msra.mxu0 0
    %6682 = vmatprep.subr.bf16.mxu0 0
    %6683 = vmatpush2.bf16.msra.mxu0 0
    %6684 = vmatprep.subr.bf16.mxu0 0
    %6685 = vmatpush2.bf16.msra.mxu0 0
    %6686 = vmatprep.subr.bf16.mxu0 0
    %6687 = vmatpush2.bf16.msra.mxu0 0
    %6688 = vmatprep.subr.bf16.mxu0 0
    %6689 = vmatpush2.bf16.msra.mxu0 0
    %6690 = vmatprep.subr.bf16.mxu0 0
    %6691 = vmatpush2.bf16.msra.mxu0 0
    %6692 = vmatprep.subr.bf16.mxu0 0
    %6693 = vmatpush2.bf16.msra.mxu0 0
    %6694 = vmatprep.subr.bf16.mxu0 0
    %6695 = vmatpush2.bf16.msra.mxu0 0
    %6696 = vmatprep.mubr.bf16.mxu0 0
    %6697 = vmatmul.mubr.bf16.gmra.mxu0 %v6662
    %v6698 = vpop.f32.mrf.mxu0
    %v6699 = vadd.f32 0.0, %v6698
    %v6700 = vpop.f32.mrf.mxu0
    %v6701 = vpop.f32.mrf.mxu0
    %v6702 = vpop.f32.mrf.mxu0
    %6703 = vdwg.mxu0
    %v6704 = vadd.f32 %v6642, %v6699
    %v6705 = vld [vmem:[#allocation3 + $0x2c] sm:$0x3]
    %v6706 = vpack.c.bf16 %v6705, %v6705
    %v6707 = vld [vmem:[#allocation4 + $0x140] sm:$0xf]
    %v6708 = vld [vmem:[#allocation4 + $0x144] sm:$0xf]
    %v6709 = vld [vmem:[#allocation4 + $0x148] sm:$0xf]
    %v6710 = vld [vmem:[#allocation4 + $0x14c] sm:$0xf]
    %v6715 = vunpack.c.l.b16 %v6707
    %v6716 = vunpack.c.l.b16 %v6708
    %v6717 = vunpack.c.l.b16 %v6709
    %v6718 = vunpack.c.l.b16 %v6710
    %v6719 = vpack.c.b16 %v6716, %v6715
    %v6720 = vpack.c.b16 %v6718, %v6717
    %v6724 = vsel %vm5086, %v6706, 0
    %6726 = vmatprep.subr.bf16.mxu0 0
    %6727 = vmatpush1.bf16.msra.mxu0 0
    %6728 = vmatprep.subr.bf16.mxu0 0
    %6729 = vmatpush1.bf16.msra.mxu0 0
    %6730 = vmatprep.subr.bf16.mxu0 0
    %6731 = vmatpush1.bf16.msra.mxu0 0
    %6732 = vmatprep.subr.bf16.mxu0 0
    %6733 = vmatpush1.bf16.msra.mxu0 0
    %6734 = vmatprep.subr.bf16.mxu0 0
    %6735 = vmatpush1.bf16.msra.mxu0 0
    %6736 = vmatprep.subr.bf16.mxu0 0
    %6737 = vmatpush1.bf16.msra.mxu0 0
    %6738 = vmatprep.subr.bf16.mxu0 0
    %6739 = vmatpush1.bf16.msra.mxu0 %v6720
    %6740 = vmatprep.subr.bf16.mxu0 0
    %6741 = vmatpush1.bf16.msra.mxu0 %v6719
    %6742 = vmatprep.subr.bf16.mxu0 0
    %6743 = vmatpush2.bf16.msra.mxu0 0
    %6744 = vmatprep.subr.bf16.mxu0 0
    %6745 = vmatpush2.bf16.msra.mxu0 0
    %6746 = vmatprep.subr.bf16.mxu0 0
    %6747 = vmatpush2.bf16.msra.mxu0 0
    %6748 = vmatprep.subr.bf16.mxu0 0
    %6749 = vmatpush2.bf16.msra.mxu0 0
    %6750 = vmatprep.subr.bf16.mxu0 0
    %6751 = vmatpush2.bf16.msra.mxu0 0
    %6752 = vmatprep.subr.bf16.mxu0 0
    %6753 = vmatpush2.bf16.msra.mxu0 0
    %6754 = vmatprep.subr.bf16.mxu0 0
    %6755 = vmatpush2.bf16.msra.mxu0 0
    %6756 = vmatprep.subr.bf16.mxu0 0
    %6757 = vmatpush2.bf16.msra.mxu0 0
    %6758 = vmatprep.mubr.bf16.mxu0 0
    %6759 = vmatmul.mubr.bf16.gmra.mxu0 %v6724
    %v6760 = vpop.f32.mrf.mxu0
    %v6761 = vadd.f32 0.0, %v6760
    %v6762 = vpop.f32.mrf.mxu0
    %v6763 = vpop.f32.mrf.mxu0
    %v6764 = vpop.f32.mrf.mxu0
    %6765 = vdwg.mxu0
    %v6766 = vadd.f32 %v6704, %v6761
    %v6767 = vld [vmem:[#allocation3 + $0x2e] sm:$0x3]
    %v6768 = vpack.c.bf16 %v6767, %v6767
    %v6769 = vld [vmem:[#allocation4 + $0x150] sm:$0xf]
    %v6770 = vld [vmem:[#allocation4 + $0x154] sm:$0xf]
    %v6771 = vld [vmem:[#allocation4 + $0x158] sm:$0xf]
    %v6772 = vld [vmem:[#allocation4 + $0x15c] sm:$0xf]
    %v6777 = vunpack.c.l.b16 %v6769
    %v6778 = vunpack.c.l.b16 %v6770
    %v6779 = vunpack.c.l.b16 %v6771
    %v6780 = vunpack.c.l.b16 %v6772
    %v6781 = vpack.c.b16 %v6778, %v6777
    %v6782 = vpack.c.b16 %v6780, %v6779
    %v6786 = vsel %vm5086, %v6768, 0
    %6788 = vmatprep.subr.bf16.mxu0 0
    %6789 = vmatpush1.bf16.msra.mxu0 0
    %6790 = vmatprep.subr.bf16.mxu0 0
    %6791 = vmatpush1.bf16.msra.mxu0 0
    %6792 = vmatprep.subr.bf16.mxu0 0
    %6793 = vmatpush1.bf16.msra.mxu0 0
    %6794 = vmatprep.subr.bf16.mxu0 0
    %6795 = vmatpush1.bf16.msra.mxu0 0
    %6796 = vmatprep.subr.bf16.mxu0 0
    %6797 = vmatpush1.bf16.msra.mxu0 0
    %6798 = vmatprep.subr.bf16.mxu0 0
    %6799 = vmatpush1.bf16.msra.mxu0 0
    %6800 = vmatprep.subr.bf16.mxu0 0
    %6801 = vmatpush1.bf16.msra.mxu0 %v6782
    %6802 = vmatprep.subr.bf16.mxu0 0
    %6803 = vmatpush1.bf16.msra.mxu0 %v6781
    %6804 = vmatprep.subr.bf16.mxu0 0
    %6805 = vmatpush2.bf16.msra.mxu0 0
    %6806 = vmatprep.subr.bf16.mxu0 0
    %6807 = vmatpush2.bf16.msra.mxu0 0
    %6808 = vmatprep.subr.bf16.mxu0 0
    %6809 = vmatpush2.bf16.msra.mxu0 0
    %6810 = vmatprep.subr.bf16.mxu0 0
    %6811 = vmatpush2.bf16.msra.mxu0 0
    %6812 = vmatprep.subr.bf16.mxu0 0
    %6813 = vmatpush2.bf16.msra.mxu0 0
    %6814 = vmatprep.subr.bf16.mxu0 0
    %6815 = vmatpush2.bf16.msra.mxu0 0
    %6816 = vmatprep.subr.bf16.mxu0 0
    %6817 = vmatpush2.bf16.msra.mxu0 0
    %6818 = vmatprep.subr.bf16.mxu0 0
    %6819 = vmatpush2.bf16.msra.mxu0 0
    %6820 = vmatprep.mubr.bf16.mxu0 0
    %6821 = vmatmul.mubr.bf16.gmra.mxu0 %v6786
    %v6822 = vpop.f32.mrf.mxu0
    %v6823 = vadd.f32 0.0, %v6822
    %v6824 = vpop.f32.mrf.mxu0
    %v6825 = vpop.f32.mrf.mxu0
    %v6826 = vpop.f32.mrf.mxu0
    %6827 = vdwg.mxu0
    %v6828 = vadd.f32 %v6766, %v6823
    %v6829 = vld [vmem:[#allocation3 + $0x30] sm:$0x3]
    %v6830 = vpack.c.bf16 %v6829, %v6829
    %v6831 = vld [vmem:[#allocation4 + $0x160] sm:$0xf]
    %v6832 = vld [vmem:[#allocation4 + $0x164] sm:$0xf]
    %v6833 = vld [vmem:[#allocation4 + $0x168] sm:$0xf]
    %v6834 = vld [vmem:[#allocation4 + $0x16c] sm:$0xf]
    %v6839 = vunpack.c.l.b16 %v6831
    %v6840 = vunpack.c.l.b16 %v6832
    %v6841 = vunpack.c.l.b16 %v6833
    %v6842 = vunpack.c.l.b16 %v6834
    %v6843 = vpack.c.b16 %v6840, %v6839
    %v6844 = vpack.c.b16 %v6842, %v6841
    %v6848 = vsel %vm5086, %v6830, 0
    %6850 = vmatprep.subr.bf16.mxu0 0
    %6851 = vmatpush1.bf16.msra.mxu0 0
    %6852 = vmatprep.subr.bf16.mxu0 0
    %6853 = vmatpush1.bf16.msra.mxu0 0
    %6854 = vmatprep.subr.bf16.mxu0 0
    %6855 = vmatpush1.bf16.msra.mxu0 0
    %6856 = vmatprep.subr.bf16.mxu0 0
    %6857 = vmatpush1.bf16.msra.mxu0 0
    %6858 = vmatprep.subr.bf16.mxu0 0
    %6859 = vmatpush1.bf16.msra.mxu0 0
    %6860 = vmatprep.subr.bf16.mxu0 0
    %6861 = vmatpush1.bf16.msra.mxu0 0
    %6862 = vmatprep.subr.bf16.mxu0 0
    %6863 = vmatpush1.bf16.msra.mxu0 %v6844
    %6864 = vmatprep.subr.bf16.mxu0 0
    %6865 = vmatpush1.bf16.msra.mxu0 %v6843
    %6866 = vmatprep.subr.bf16.mxu0 0
    %6867 = vmatpush2.bf16.msra.mxu0 0
    %6868 = vmatprep.subr.bf16.mxu0 0
    %6869 = vmatpush2.bf16.msra.mxu0 0
    %6870 = vmatprep.subr.bf16.mxu0 0
    %6871 = vmatpush2.bf16.msra.mxu0 0
    %6872 = vmatprep.subr.bf16.mxu0 0
    %6873 = vmatpush2.bf16.msra.mxu0 0
    %6874 = vmatprep.subr.bf16.mxu0 0
    %6875 = vmatpush2.bf16.msra.mxu0 0
    %6876 = vmatprep.subr.bf16.mxu0 0
    %6877 = vmatpush2.bf16.msra.mxu0 0
    %6878 = vmatprep.subr.bf16.mxu0 0
    %6879 = vmatpush2.bf16.msra.mxu0 0
    %6880 = vmatprep.subr.bf16.mxu0 0
    %6881 = vmatpush2.bf16.msra.mxu0 0
    %6882 = vmatprep.mubr.bf16.mxu0 0
    %6883 = vmatmul.mubr.bf16.gmra.mxu0 %v6848
    %v6884 = vpop.f32.mrf.mxu0
    %v6885 = vadd.f32 0.0, %v6884
    %v6886 = vpop.f32.mrf.mxu0
    %v6887 = vpop.f32.mrf.mxu0
    %v6888 = vpop.f32.mrf.mxu0
    %6889 = vdwg.mxu0
    %v6890 = vadd.f32 %v6828, %v6885
    %v6891 = vld [vmem:[#allocation3 + $0x32] sm:$0x3]
    %v6892 = vpack.c.bf16 %v6891, %v6891
    %v6893 = vld [vmem:[#allocation4 + $0x170] sm:$0xf]
    %v6894 = vld [vmem:[#allocation4 + $0x174] sm:$0xf]
    %v6895 = vld [vmem:[#allocation4 + $0x178] sm:$0xf]
    %v6896 = vld [vmem:[#allocation4 + $0x17c] sm:$0xf]
    %v6901 = vunpack.c.l.b16 %v6893
    %v6902 = vunpack.c.l.b16 %v6894
    %v6903 = vunpack.c.l.b16 %v6895
    %v6904 = vunpack.c.l.b16 %v6896
    %v6905 = vpack.c.b16 %v6902, %v6901
    %v6906 = vpack.c.b16 %v6904, %v6903
    %v6910 = vsel %vm5086, %v6892, 0
    %6912 = vmatprep.subr.bf16.mxu0 0
    %6913 = vmatpush1.bf16.msra.mxu0 0
    %6914 = vmatprep.subr.bf16.mxu0 0
    %6915 = vmatpush1.bf16.msra.mxu0 0
    %6916 = vmatprep.subr.bf16.mxu0 0
    %6917 = vmatpush1.bf16.msra.mxu0 0
    %6918 = vmatprep.subr.bf16.mxu0 0
    %6919 = vmatpush1.bf16.msra.mxu0 0
    %6920 = vmatprep.subr.bf16.mxu0 0
    %6921 = vmatpush1.bf16.msra.mxu0 0
    %6922 = vmatprep.subr.bf16.mxu0 0
    %6923 = vmatpush1.bf16.msra.mxu0 0
    %6924 = vmatprep.subr.bf16.mxu0 0
    %6925 = vmatpush1.bf16.msra.mxu0 %v6906
    %6926 = vmatprep.subr.bf16.mxu0 0
    %6927 = vmatpush1.bf16.msra.mxu0 %v6905
    %6928 = vmatprep.subr.bf16.mxu0 0
    %6929 = vmatpush2.bf16.msra.mxu0 0
    %6930 = vmatprep.subr.bf16.mxu0 0
    %6931 = vmatpush2.bf16.msra.mxu0 0
    %6932 = vmatprep.subr.bf16.mxu0 0
    %6933 = vmatpush2.bf16.msra.mxu0 0
    %6934 = vmatprep.subr.bf16.mxu0 0
    %6935 = vmatpush2.bf16.msra.mxu0 0
    %6936 = vmatprep.subr.bf16.mxu0 0
    %6937 = vmatpush2.bf16.msra.mxu0 0
    %6938 = vmatprep.subr.bf16.mxu0 0
    %6939 = vmatpush2.bf16.msra.mxu0 0
    %6940 = vmatprep.subr.bf16.mxu0 0
    %6941 = vmatpush2.bf16.msra.mxu0 0
    %6942 = vmatprep.subr.bf16.mxu0 0
    %6943 = vmatpush2.bf16.msra.mxu0 0
    %6944 = vmatprep.mubr.bf16.mxu0 0
    %6945 = vmatmul.mubr.bf16.gmra.mxu0 %v6910
    %v6946 = vpop.f32.mrf.mxu0
    %v6947 = vadd.f32 0.0, %v6946
    %v6948 = vpop.f32.mrf.mxu0
    %v6949 = vpop.f32.mrf.mxu0
    %v6950 = vpop.f32.mrf.mxu0
    %6951 = vdwg.mxu0
    %v6952 = vadd.f32 %v6890, %v6947
    %v6953 = vld [vmem:[#allocation3 + $0x38] sm:$0x3]
    %v6954 = vpack.c.bf16 %v6953, %v6953
    %v6955 = vld [vmem:[#allocation4 + $0x180] sm:$0xf]
    %v6956 = vld [vmem:[#allocation4 + $0x184] sm:$0xf]
    %v6957 = vld [vmem:[#allocation4 + $0x188] sm:$0xf]
    %v6958 = vld [vmem:[#allocation4 + $0x18c] sm:$0xf]
    %v6963 = vunpack.c.l.b16 %v6955
    %v6964 = vunpack.c.l.b16 %v6956
    %v6965 = vunpack.c.l.b16 %v6957
    %v6966 = vunpack.c.l.b16 %v6958
    %v6967 = vpack.c.b16 %v6964, %v6963
    %v6968 = vpack.c.b16 %v6966, %v6965
    %v6972 = vsel %vm5086, %v6954, 0
    %6974 = vmatprep.subr.bf16.mxu0 0
    %6975 = vmatpush1.bf16.msra.mxu0 0
    %6976 = vmatprep.subr.bf16.mxu0 0
    %6977 = vmatpush1.bf16.msra.mxu0 0
    %6978 = vmatprep.subr.bf16.mxu0 0
    %6979 = vmatpush1.bf16.msra.mxu0 0
    %6980 = vmatprep.subr.bf16.mxu0 0
    %6981 = vmatpush1.bf16.msra.mxu0 0
    %6982 = vmatprep.subr.bf16.mxu0 0
    %6983 = vmatpush1.bf16.msra.mxu0 0
    %6984 = vmatprep.subr.bf16.mxu0 0
    %6985 = vmatpush1.bf16.msra.mxu0 0
    %6986 = vmatprep.subr.bf16.mxu0 0
    %6987 = vmatpush1.bf16.msra.mxu0 %v6968
    %6988 = vmatprep.subr.bf16.mxu0 0
    %6989 = vmatpush1.bf16.msra.mxu0 %v6967
    %6990 = vmatprep.subr.bf16.mxu0 0
    %6991 = vmatpush2.bf16.msra.mxu0 0
    %6992 = vmatprep.subr.bf16.mxu0 0
    %6993 = vmatpush2.bf16.msra.mxu0 0
    %6994 = vmatprep.subr.bf16.mxu0 0
    %6995 = vmatpush2.bf16.msra.mxu0 0
    %6996 = vmatprep.subr.bf16.mxu0 0
    %6997 = vmatpush2.bf16.msra.mxu0 0
    %6998 = vmatprep.subr.bf16.mxu0 0
    %6999 = vmatpush2.bf16.msra.mxu0 0
    %7000 = vmatprep.subr.bf16.mxu0 0
    %7001 = vmatpush2.bf16.msra.mxu0 0
    %7002 = vmatprep.subr.bf16.mxu0 0
    %7003 = vmatpush2.bf16.msra.mxu0 0
    %7004 = vmatprep.subr.bf16.mxu0 0
    %7005 = vmatpush2.bf16.msra.mxu0 0
    %7006 = vmatprep.mubr.bf16.mxu0 0
    %7007 = vmatmul.mubr.bf16.gmra.mxu0 %v6972
    %v7008 = vpop.f32.mrf.mxu0
    %v7009 = vadd.f32 0.0, %v7008
    %v7010 = vpop.f32.mrf.mxu0
    %v7011 = vpop.f32.mrf.mxu0
    %v7012 = vpop.f32.mrf.mxu0
    %7013 = vdwg.mxu0
    %v7014 = vadd.f32 %v6952, %v7009
    %v7015 = vld [vmem:[#allocation3 + $0x3a] sm:$0x3]
    %v7016 = vpack.c.bf16 %v7015, %v7015
    %v7017 = vld [vmem:[#allocation4 + $0x190] sm:$0xf]
    %v7018 = vld [vmem:[#allocation4 + $0x194] sm:$0xf]
    %v7019 = vld [vmem:[#allocation4 + $0x198] sm:$0xf]
    %v7020 = vld [vmem:[#allocation4 + $0x19c] sm:$0xf]
    %v7025 = vunpack.c.l.b16 %v7017
    %v7026 = vunpack.c.l.b16 %v7018
    %v7027 = vunpack.c.l.b16 %v7019
    %v7028 = vunpack.c.l.b16 %v7020
    %v7029 = vpack.c.b16 %v7026, %v7025
    %v7030 = vpack.c.b16 %v7028, %v7027
    %v7034 = vsel %vm5086, %v7016, 0
    %7036 = vmatprep.subr.bf16.mxu0 0
    %7037 = vmatpush1.bf16.msra.mxu0 0
    %7038 = vmatprep.subr.bf16.mxu0 0
    %7039 = vmatpush1.bf16.msra.mxu0 0
    %7040 = vmatprep.subr.bf16.mxu0 0
    %7041 = vmatpush1.bf16.msra.mxu0 0
    %7042 = vmatprep.subr.bf16.mxu0 0
    %7043 = vmatpush1.bf16.msra.mxu0 0
    %7044 = vmatprep.subr.bf16.mxu0 0
    %7045 = vmatpush1.bf16.msra.mxu0 0
    %7046 = vmatprep.subr.bf16.mxu0 0
    %7047 = vmatpush1.bf16.msra.mxu0 0
    %7048 = vmatprep.subr.bf16.mxu0 0
    %7049 = vmatpush1.bf16.msra.mxu0 %v7030
    %7050 = vmatprep.subr.bf16.mxu0 0
    %7051 = vmatpush1.bf16.msra.mxu0 %v7029
    %7052 = vmatprep.subr.bf16.mxu0 0
    %7053 = vmatpush2.bf16.msra.mxu0 0
    %7054 = vmatprep.subr.bf16.mxu0 0
    %7055 = vmatpush2.bf16.msra.mxu0 0
    %7056 = vmatprep.subr.bf16.mxu0 0
    %7057 = vmatpush2.bf16.msra.mxu0 0
    %7058 = vmatprep.subr.bf16.mxu0 0
    %7059 = vmatpush2.bf16.msra.mxu0 0
    %7060 = vmatprep.subr.bf16.mxu0 0
    %7061 = vmatpush2.bf16.msra.mxu0 0
    %7062 = vmatprep.subr.bf16.mxu0 0
    %7063 = vmatpush2.bf16.msra.mxu0 0
    %7064 = vmatprep.subr.bf16.mxu0 0
    %7065 = vmatpush2.bf16.msra.mxu0 0
    %7066 = vmatprep.subr.bf16.mxu0 0
    %7067 = vmatpush2.bf16.msra.mxu0 0
    %7068 = vmatprep.mubr.bf16.mxu0 0
    %7069 = vmatmul.mubr.bf16.gmra.mxu0 %v7034
    %v7070 = vpop.f32.mrf.mxu0
    %v7071 = vadd.f32 0.0, %v7070
    %v7072 = vpop.f32.mrf.mxu0
    %v7073 = vpop.f32.mrf.mxu0
    %v7074 = vpop.f32.mrf.mxu0
    %7075 = vdwg.mxu0
    %v7076 = vadd.f32 %v7014, %v7071
    %v7077 = vld [vmem:[#allocation3 + $0x3c] sm:$0x3]
    %v7078 = vpack.c.bf16 %v7077, %v7077
    %v7079 = vld [vmem:[#allocation4 + $0x1a0] sm:$0xf]
    %v7080 = vld [vmem:[#allocation4 + $0x1a4] sm:$0xf]
    %v7081 = vld [vmem:[#allocation4 + $0x1a8] sm:$0xf]
    %v7082 = vld [vmem:[#allocation4 + $0x1ac] sm:$0xf]
    %v7087 = vunpack.c.l.b16 %v7079
    %v7088 = vunpack.c.l.b16 %v7080
    %v7089 = vunpack.c.l.b16 %v7081
    %v7090 = vunpack.c.l.b16 %v7082
    %v7091 = vpack.c.b16 %v7088, %v7087
    %v7092 = vpack.c.b16 %v7090, %v7089
    %v7096 = vsel %vm5086, %v7078, 0
    %7098 = vmatprep.subr.bf16.mxu0 0
    %7099 = vmatpush1.bf16.msra.mxu0 0
    %7100 = vmatprep.subr.bf16.mxu0 0
    %7101 = vmatpush1.bf16.msra.mxu0 0
    %7102 = vmatprep.subr.bf16.mxu0 0
    %7103 = vmatpush1.bf16.msra.mxu0 0
    %7104 = vmatprep.subr.bf16.mxu0 0
    %7105 = vmatpush1.bf16.msra.mxu0 0
    %7106 = vmatprep.subr.bf16.mxu0 0
    %7107 = vmatpush1.bf16.msra.mxu0 0
    %7108 = vmatprep.subr.bf16.mxu0 0
    %7109 = vmatpush1.bf16.msra.mxu0 0
    %7110 = vmatprep.subr.bf16.mxu0 0
    %7111 = vmatpush1.bf16.msra.mxu0 %v7092
    %7112 = vmatprep.subr.bf16.mxu0 0
    %7113 = vmatpush1.bf16.msra.mxu0 %v7091
    %7114 = vmatprep.subr.bf16.mxu0 0
    %7115 = vmatpush2.bf16.msra.mxu0 0
    %7116 = vmatprep.subr.bf16.mxu0 0
    %7117 = vmatpush2.bf16.msra.mxu0 0
    %7118 = vmatprep.subr.bf16.mxu0 0
    %7119 = vmatpush2.bf16.msra.mxu0 0
    %7120 = vmatprep.subr.bf16.mxu0 0
    %7121 = vmatpush2.bf16.msra.mxu0 0
    %7122 = vmatprep.subr.bf16.mxu0 0
    %7123 = vmatpush2.bf16.msra.mxu0 0
    %7124 = vmatprep.subr.bf16.mxu0 0
    %7125 = vmatpush2.bf16.msra.mxu0 0
    %7126 = vmatprep.subr.bf16.mxu0 0
    %7127 = vmatpush2.bf16.msra.mxu0 0
    %7128 = vmatprep.subr.bf16.mxu0 0
    %7129 = vmatpush2.bf16.msra.mxu0 0
    %7130 = vmatprep.mubr.bf16.mxu0 0
    %7131 = vmatmul.mubr.bf16.gmra.mxu0 %v7096
    %v7132 = vpop.f32.mrf.mxu0
    %v7133 = vadd.f32 0.0, %v7132
    %v7134 = vpop.f32.mrf.mxu0
    %v7135 = vpop.f32.mrf.mxu0
    %v7136 = vpop.f32.mrf.mxu0
    %7137 = vdwg.mxu0
    %v7138 = vadd.f32 %v7076, %v7133
    %v7139 = vld [vmem:[#allocation3 + $0x3e] sm:$0x3]
    %v7140 = vpack.c.bf16 %v7139, %v7139
    %v7141 = vld [vmem:[#allocation4 + $0x1b0] sm:$0xf]
    %v7142 = vld [vmem:[#allocation4 + $0x1b4] sm:$0xf]
    %v7143 = vld [vmem:[#allocation4 + $0x1b8] sm:$0xf]
    %v7144 = vld [vmem:[#allocation4 + $0x1bc] sm:$0xf]
    %v7149 = vunpack.c.l.b16 %v7141
    %v7150 = vunpack.c.l.b16 %v7142
    %v7151 = vunpack.c.l.b16 %v7143
    %v7152 = vunpack.c.l.b16 %v7144
    %v7153 = vpack.c.b16 %v7150, %v7149
    %v7154 = vpack.c.b16 %v7152, %v7151
    %v7158 = vsel %vm5086, %v7140, 0
    %7160 = vmatprep.subr.bf16.mxu0 0
    %7161 = vmatpush1.bf16.msra.mxu0 0
    %7162 = vmatprep.subr.bf16.mxu0 0
    %7163 = vmatpush1.bf16.msra.mxu0 0
    %7164 = vmatprep.subr.bf16.mxu0 0
    %7165 = vmatpush1.bf16.msra.mxu0 0
    %7166 = vmatprep.subr.bf16.mxu0 0
    %7167 = vmatpush1.bf16.msra.mxu0 0
    %7168 = vmatprep.subr.bf16.mxu0 0
    %7169 = vmatpush1.bf16.msra.mxu0 0
    %7170 = vmatprep.subr.bf16.mxu0 0
    %7171 = vmatpush1.bf16.msra.mxu0 0
    %7172 = vmatprep.subr.bf16.mxu0 0
    %7173 = vmatpush1.bf16.msra.mxu0 %v7154
    %7174 = vmatprep.subr.bf16.mxu0 0
    %7175 = vmatpush1.bf16.msra.mxu0 %v7153
    %7176 = vmatprep.subr.bf16.mxu0 0
    %7177 = vmatpush2.bf16.msra.mxu0 0
    %7178 = vmatprep.subr.bf16.mxu0 0
    %7179 = vmatpush2.bf16.msra.mxu0 0
    %7180 = vmatprep.subr.bf16.mxu0 0
    %7181 = vmatpush2.bf16.msra.mxu0 0
    %7182 = vmatprep.subr.bf16.mxu0 0
    %7183 = vmatpush2.bf16.msra.mxu0 0
    %7184 = vmatprep.subr.bf16.mxu0 0
    %7185 = vmatpush2.bf16.msra.mxu0 0
    %7186 = vmatprep.subr.bf16.mxu0 0
    %7187 = vmatpush2.bf16.msra.mxu0 0
    %7188 = vmatprep.subr.bf16.mxu0 0
    %7189 = vmatpush2.bf16.msra.mxu0 0
    %7190 = vmatprep.subr.bf16.mxu0 0
    %7191 = vmatpush2.bf16.msra.mxu0 0
    %7192 = vmatprep.mubr.bf16.mxu0 0
    %7193 = vmatmul.mubr.bf16.gmra.mxu0 %v7158
    %v7194 = vpop.f32.mrf.mxu0
    %v7195 = vadd.f32 0.0, %v7194
    %v7196 = vpop.f32.mrf.mxu0
    %v7197 = vpop.f32.mrf.mxu0
    %v7198 = vpop.f32.mrf.mxu0
    %7199 = vdwg.mxu0
    %v7200 = vadd.f32 %v7138, %v7195
    %v7201 = vld [vmem:[#allocation3 + $0x40] sm:$0x3]
    %v7202 = vpack.c.bf16 %v7201, %v7201
    %v7203 = vld [vmem:[#allocation4 + $0x1c0] sm:$0xf]
    %v7204 = vld [vmem:[#allocation4 + $0x1c4] sm:$0xf]
    %v7205 = vld [vmem:[#allocation4 + $0x1c8] sm:$0xf]
    %v7206 = vld [vmem:[#allocation4 + $0x1cc] sm:$0xf]
    %v7211 = vunpack.c.l.b16 %v7203
    %v7212 = vunpack.c.l.b16 %v7204
    %v7213 = vunpack.c.l.b16 %v7205
    %v7214 = vunpack.c.l.b16 %v7206
    %v7215 = vpack.c.b16 %v7212, %v7211
    %v7216 = vpack.c.b16 %v7214, %v7213
    %v7220 = vsel %vm5086, %v7202, 0
    %7222 = vmatprep.subr.bf16.mxu0 0
    %7223 = vmatpush1.bf16.msra.mxu0 0
    %7224 = vmatprep.subr.bf16.mxu0 0
    %7225 = vmatpush1.bf16.msra.mxu0 0
    %7226 = vmatprep.subr.bf16.mxu0 0
    %7227 = vmatpush1.bf16.msra.mxu0 0
    %7228 = vmatprep.subr.bf16.mxu0 0
    %7229 = vmatpush1.bf16.msra.mxu0 0
    %7230 = vmatprep.subr.bf16.mxu0 0
    %7231 = vmatpush1.bf16.msra.mxu0 0
    %7232 = vmatprep.subr.bf16.mxu0 0
    %7233 = vmatpush1.bf16.msra.mxu0 0
    %7234 = vmatprep.subr.bf16.mxu0 0
    %7235 = vmatpush1.bf16.msra.mxu0 %v7216
    %7236 = vmatprep.subr.bf16.mxu0 0
    %7237 = vmatpush1.bf16.msra.mxu0 %v7215
    %7238 = vmatprep.subr.bf16.mxu0 0
    %7239 = vmatpush2.bf16.msra.mxu0 0
    %7240 = vmatprep.subr.bf16.mxu0 0
    %7241 = vmatpush2.bf16.msra.mxu0 0
    %7242 = vmatprep.subr.bf16.mxu0 0
    %7243 = vmatpush2.bf16.msra.mxu0 0
    %7244 = vmatprep.subr.bf16.mxu0 0
    %7245 = vmatpush2.bf16.msra.mxu0 0
    %7246 = vmatprep.subr.bf16.mxu0 0
    %7247 = vmatpush2.bf16.msra.mxu0 0
    %7248 = vmatprep.subr.bf16.mxu0 0
    %7249 = vmatpush2.bf16.msra.mxu0 0
    %7250 = vmatprep.subr.bf16.mxu0 0
    %7251 = vmatpush2.bf16.msra.mxu0 0
    %7252 = vmatprep.subr.bf16.mxu0 0
    %7253 = vmatpush2.bf16.msra.mxu0 0
    %7254 = vmatprep.mubr.bf16.mxu0 0
    %7255 = vmatmul.mubr.bf16.gmra.mxu0 %v7220
    %v7256 = vpop.f32.mrf.mxu0
    %v7257 = vadd.f32 0.0, %v7256
    %v7258 = vpop.f32.mrf.mxu0
    %v7259 = vpop.f32.mrf.mxu0
    %v7260 = vpop.f32.mrf.mxu0
    %7261 = vdwg.mxu0
    %v7262 = vadd.f32 %v7200, %v7257
    %v7263 = vld [vmem:[#allocation3 + $0x42] sm:$0x3]
    %v7264 = vpack.c.bf16 %v7263, %v7263
    %v7265 = vld [vmem:[#allocation4 + $0x1d0] sm:$0xf]
    %v7266 = vld [vmem:[#allocation4 + $0x1d4] sm:$0xf]
    %v7267 = vld [vmem:[#allocation4 + $0x1d8] sm:$0xf]
    %v7268 = vld [vmem:[#allocation4 + $0x1dc] sm:$0xf]
    %v7273 = vunpack.c.l.b16 %v7265
    %v7274 = vunpack.c.l.b16 %v7266
    %v7275 = vunpack.c.l.b16 %v7267
    %v7276 = vunpack.c.l.b16 %v7268
    %v7277 = vpack.c.b16 %v7274, %v7273
    %v7278 = vpack.c.b16 %v7276, %v7275
    %v7282 = vsel %vm5086, %v7264, 0
    %7284 = vmatprep.subr.bf16.mxu0 0
    %7285 = vmatpush1.bf16.msra.mxu0 0
    %7286 = vmatprep.subr.bf16.mxu0 0
    %7287 = vmatpush1.bf16.msra.mxu0 0
    %7288 = vmatprep.subr.bf16.mxu0 0
    %7289 = vmatpush1.bf16.msra.mxu0 0
    %7290 = vmatprep.subr.bf16.mxu0 0
    %7291 = vmatpush1.bf16.msra.mxu0 0
    %7292 = vmatprep.subr.bf16.mxu0 0
    %7293 = vmatpush1.bf16.msra.mxu0 0
    %7294 = vmatprep.subr.bf16.mxu0 0
    %7295 = vmatpush1.bf16.msra.mxu0 0
    %7296 = vmatprep.subr.bf16.mxu0 0
    %7297 = vmatpush1.bf16.msra.mxu0 %v7278
    %7298 = vmatprep.subr.bf16.mxu0 0
    %7299 = vmatpush1.bf16.msra.mxu0 %v7277
    %7300 = vmatprep.subr.bf16.mxu0 0
    %7301 = vmatpush2.bf16.msra.mxu0 0
    %7302 = vmatprep.subr.bf16.mxu0 0
    %7303 = vmatpush2.bf16.msra.mxu0 0
    %7304 = vmatprep.subr.bf16.mxu0 0
    %7305 = vmatpush2.bf16.msra.mxu0 0
    %7306 = vmatprep.subr.bf16.mxu0 0
    %7307 = vmatpush2.bf16.msra.mxu0 0
    %7308 = vmatprep.subr.bf16.mxu0 0
    %7309 = vmatpush2.bf16.msra.mxu0 0
    %7310 = vmatprep.subr.bf16.mxu0 0
    %7311 = vmatpush2.bf16.msra.mxu0 0
    %7312 = vmatprep.subr.bf16.mxu0 0
    %7313 = vmatpush2.bf16.msra.mxu0 0
    %7314 = vmatprep.subr.bf16.mxu0 0
    %7315 = vmatpush2.bf16.msra.mxu0 0
    %7316 = vmatprep.mubr.bf16.mxu0 0
    %7317 = vmatmul.mubr.bf16.gmra.mxu0 %v7282
    %v7318 = vpop.f32.mrf.mxu0
    %v7319 = vadd.f32 0.0, %v7318
    %v7320 = vpop.f32.mrf.mxu0
    %v7321 = vpop.f32.mrf.mxu0
    %v7322 = vpop.f32.mrf.mxu0
    %7323 = vdwg.mxu0
    %v7324 = vadd.f32 %v7262, %v7319
    %v7325 = vld [vmem:[#allocation3 + $0x44] sm:$0x3]
    %v7326 = vpack.c.bf16 %v7325, %v7325
    %v7327 = vld [vmem:[#allocation4 + $0x1e0] sm:$0xf]
    %v7328 = vld [vmem:[#allocation4 + $0x1e4] sm:$0xf]
    %v7329 = vld [vmem:[#allocation4 + $0x1e8] sm:$0xf]
    %v7330 = vld [vmem:[#allocation4 + $0x1ec] sm:$0xf]
    %v7335 = vunpack.c.l.b16 %v7327
    %v7336 = vunpack.c.l.b16 %v7328
    %v7337 = vunpack.c.l.b16 %v7329
    %v7338 = vunpack.c.l.b16 %v7330
    %v7339 = vpack.c.b16 %v7336, %v7335
    %v7340 = vpack.c.b16 %v7338, %v7337
    %v7344 = vsel %vm5086, %v7326, 0
    %7346 = vmatprep.subr.bf16.mxu0 0
    %7347 = vmatpush1.bf16.msra.mxu0 0
    %7348 = vmatprep.subr.bf16.mxu0 0
    %7349 = vmatpush1.bf16.msra.mxu0 0
    %7350 = vmatprep.subr.bf16.mxu0 0
    %7351 = vmatpush1.bf16.msra.mxu0 0
    %7352 = vmatprep.subr.bf16.mxu0 0
    %7353 = vmatpush1.bf16.msra.mxu0 0
    %7354 = vmatprep.subr.bf16.mxu0 0
    %7355 = vmatpush1.bf16.msra.mxu0 0
    %7356 = vmatprep.subr.bf16.mxu0 0
    %7357 = vmatpush1.bf16.msra.mxu0 0
    %7358 = vmatprep.subr.bf16.mxu0 0
    %7359 = vmatpush1.bf16.msra.mxu0 %v7340
    %7360 = vmatprep.subr.bf16.mxu0 0
    %7361 = vmatpush1.bf16.msra.mxu0 %v7339
    %7362 = vmatprep.subr.bf16.mxu0 0
    %7363 = vmatpush2.bf16.msra.mxu0 0
    %7364 = vmatprep.subr.bf16.mxu0 0
    %7365 = vmatpush2.bf16.msra.mxu0 0
    %7366 = vmatprep.subr.bf16.mxu0 0
    %7367 = vmatpush2.bf16.msra.mxu0 0
    %7368 = vmatprep.subr.bf16.mxu0 0
    %7369 = vmatpush2.bf16.msra.mxu0 0
    %7370 = vmatprep.subr.bf16.mxu0 0
    %7371 = vmatpush2.bf16.msra.mxu0 0
    %7372 = vmatprep.subr.bf16.mxu0 0
    %7373 = vmatpush2.bf16.msra.mxu0 0
    %7374 = vmatprep.subr.bf16.mxu0 0
    %7375 = vmatpush2.bf16.msra.mxu0 0
    %7376 = vmatprep.subr.bf16.mxu0 0
    %7377 = vmatpush2.bf16.msra.mxu0 0
    %7378 = vmatprep.mubr.bf16.mxu0 0
    %7379 = vmatmul.mubr.bf16.gmra.mxu0 %v7344
    %v7380 = vpop.f32.mrf.mxu0
    %v7381 = vadd.f32 0.0, %v7380
    %v7382 = vpop.f32.mrf.mxu0
    %v7383 = vpop.f32.mrf.mxu0
    %v7384 = vpop.f32.mrf.mxu0
    %7385 = vdwg.mxu0
    %v7386 = vadd.f32 %v7324, %v7381
    %v7387 = vld [vmem:[#allocation3 + $0x46] sm:$0x3]
    %v7388 = vpack.c.bf16 %v7387, %v7387
    %v7389 = vld [vmem:[#allocation4 + $0x1f0] sm:$0xf]
    %v7390 = vld [vmem:[#allocation4 + $0x1f4] sm:$0xf]
    %v7391 = vld [vmem:[#allocation4 + $0x1f8] sm:$0xf]
    %v7392 = vld [vmem:[#allocation4 + $0x1fc] sm:$0xf]
    %v7397 = vunpack.c.l.b16 %v7389
    %v7398 = vunpack.c.l.b16 %v7390
    %v7399 = vunpack.c.l.b16 %v7391
    %v7400 = vunpack.c.l.b16 %v7392
    %v7401 = vpack.c.b16 %v7398, %v7397
    %v7402 = vpack.c.b16 %v7400, %v7399
    %v7406 = vsel %vm5086, %v7388, 0
    %7408 = vmatprep.subr.bf16.mxu0 0
    %7409 = vmatpush1.bf16.msra.mxu0 0
    %7410 = vmatprep.subr.bf16.mxu0 0
    %7411 = vmatpush1.bf16.msra.mxu0 0
    %7412 = vmatprep.subr.bf16.mxu0 0
    %7413 = vmatpush1.bf16.msra.mxu0 0
    %7414 = vmatprep.subr.bf16.mxu0 0
    %7415 = vmatpush1.bf16.msra.mxu0 0
    %7416 = vmatprep.subr.bf16.mxu0 0
    %7417 = vmatpush1.bf16.msra.mxu0 0
    %7418 = vmatprep.subr.bf16.mxu0 0
    %7419 = vmatpush1.bf16.msra.mxu0 0
    %7420 = vmatprep.subr.bf16.mxu0 0
    %7421 = vmatpush1.bf16.msra.mxu0 %v7402
    %7422 = vmatprep.subr.bf16.mxu0 0
    %7423 = vmatpush1.bf16.msra.mxu0 %v7401
    %7424 = vmatprep.subr.bf16.mxu0 0
    %7425 = vmatpush2.bf16.msra.mxu0 0
    %7426 = vmatprep.subr.bf16.mxu0 0
    %7427 = vmatpush2.bf16.msra.mxu0 0
    %7428 = vmatprep.subr.bf16.mxu0 0
    %7429 = vmatpush2.bf16.msra.mxu0 0
    %7430 = vmatprep.subr.bf16.mxu0 0
    %7431 = vmatpush2.bf16.msra.mxu0 0
    %7432 = vmatprep.subr.bf16.mxu0 0
    %7433 = vmatpush2.bf16.msra.mxu0 0
    %7434 = vmatprep.subr.bf16.mxu0 0
    %7435 = vmatpush2.bf16.msra.mxu0 0
    %7436 = vmatprep.subr.bf16.mxu0 0
    %7437 = vmatpush2.bf16.msra.mxu0 0
    %7438 = vmatprep.subr.bf16.mxu0 0
    %7439 = vmatpush2.bf16.msra.mxu0 0
    %7440 = vmatprep.mubr.bf16.mxu0 0
    %7441 = vmatmul.mubr.bf16.gmra.mxu0 %v7406
    %v7442 = vpop.f32.mrf.mxu0
    %v7443 = vadd.f32 0.0, %v7442
    %v7444 = vpop.f32.mrf.mxu0
    %v7445 = vpop.f32.mrf.mxu0
    %v7446 = vpop.f32.mrf.mxu0
    %7447 = vdwg.mxu0
    %v7448 = vadd.f32 %v7386, %v7443
    %v7449 = vld [vmem:[#allocation3 + $0x48] sm:$0x3]
    %v7450 = vpack.c.bf16 %v7449, %v7449
    %v7451 = vld [vmem:[#allocation4 + $0x200] sm:$0xf]
    %v7452 = vld [vmem:[#allocation4 + $0x204] sm:$0xf]
    %v7453 = vld [vmem:[#allocation4 + $0x208] sm:$0xf]
    %v7454 = vld [vmem:[#allocation4 + $0x20c] sm:$0xf]
    %v7459 = vunpack.c.l.b16 %v7451
    %v7460 = vunpack.c.l.b16 %v7452
    %v7461 = vunpack.c.l.b16 %v7453
    %v7462 = vunpack.c.l.b16 %v7454
    %v7463 = vpack.c.b16 %v7460, %v7459
    %v7464 = vpack.c.b16 %v7462, %v7461
    %v7468 = vsel %vm5086, %v7450, 0
    %7470 = vmatprep.subr.bf16.mxu0 0
    %7471 = vmatpush1.bf16.msra.mxu0 0
    %7472 = vmatprep.subr.bf16.mxu0 0
    %7473 = vmatpush1.bf16.msra.mxu0 0
    %7474 = vmatprep.subr.bf16.mxu0 0
    %7475 = vmatpush1.bf16.msra.mxu0 0
    %7476 = vmatprep.subr.bf16.mxu0 0
    %7477 = vmatpush1.bf16.msra.mxu0 0
    %7478 = vmatprep.subr.bf16.mxu0 0
    %7479 = vmatpush1.bf16.msra.mxu0 0
    %7480 = vmatprep.subr.bf16.mxu0 0
    %7481 = vmatpush1.bf16.msra.mxu0 0
    %7482 = vmatprep.subr.bf16.mxu0 0
    %7483 = vmatpush1.bf16.msra.mxu0 %v7464
    %7484 = vmatprep.subr.bf16.mxu0 0
    %7485 = vmatpush1.bf16.msra.mxu0 %v7463
    %7486 = vmatprep.subr.bf16.mxu0 0
    %7487 = vmatpush2.bf16.msra.mxu0 0
    %7488 = vmatprep.subr.bf16.mxu0 0
    %7489 = vmatpush2.bf16.msra.mxu0 0
    %7490 = vmatprep.subr.bf16.mxu0 0
    %7491 = vmatpush2.bf16.msra.mxu0 0
    %7492 = vmatprep.subr.bf16.mxu0 0
    %7493 = vmatpush2.bf16.msra.mxu0 0
    %7494 = vmatprep.subr.bf16.mxu0 0
    %7495 = vmatpush2.bf16.msra.mxu0 0
    %7496 = vmatprep.subr.bf16.mxu0 0
    %7497 = vmatpush2.bf16.msra.mxu0 0
    %7498 = vmatprep.subr.bf16.mxu0 0
    %7499 = vmatpush2.bf16.msra.mxu0 0
    %7500 = vmatprep.subr.bf16.mxu0 0
    %7501 = vmatpush2.bf16.msra.mxu0 0
    %7502 = vmatprep.mubr.bf16.mxu0 0
    %7503 = vmatmul.mubr.bf16.gmra.mxu0 %v7468
    %v7504 = vpop.f32.mrf.mxu0
    %v7505 = vadd.f32 0.0, %v7504
    %v7506 = vpop.f32.mrf.mxu0
    %v7507 = vpop.f32.mrf.mxu0
    %v7508 = vpop.f32.mrf.mxu0
    %7509 = vdwg.mxu0
    %v7510 = vadd.f32 %v7448, %v7505
    %v7511 = vld [vmem:[#allocation3 + $0x4a] sm:$0x3]
    %v7512 = vpack.c.bf16 %v7511, %v7511
    %v7513 = vld [vmem:[#allocation4 + $0x210] sm:$0xf]
    %v7514 = vld [vmem:[#allocation4 + $0x214] sm:$0xf]
    %v7515 = vld [vmem:[#allocation4 + $0x218] sm:$0xf]
    %v7516 = vld [vmem:[#allocation4 + $0x21c] sm:$0xf]
    %v7521 = vunpack.c.l.b16 %v7513
    %v7522 = vunpack.c.l.b16 %v7514
    %v7523 = vunpack.c.l.b16 %v7515
    %v7524 = vunpack.c.l.b16 %v7516
    %v7525 = vpack.c.b16 %v7522, %v7521
    %v7526 = vpack.c.b16 %v7524, %v7523
    %v7530 = vsel %vm5086, %v7512, 0
    %7532 = vmatprep.subr.bf16.mxu0 0
    %7533 = vmatpush1.bf16.msra.mxu0 0
    %7534 = vmatprep.subr.bf16.mxu0 0
    %7535 = vmatpush1.bf16.msra.mxu0 0
    %7536 = vmatprep.subr.bf16.mxu0 0
    %7537 = vmatpush1.bf16.msra.mxu0 0
    %7538 = vmatprep.subr.bf16.mxu0 0
    %7539 = vmatpush1.bf16.msra.mxu0 0
    %7540 = vmatprep.subr.bf16.mxu0 0
    %7541 = vmatpush1.bf16.msra.mxu0 0
    %7542 = vmatprep.subr.bf16.mxu0 0
    %7543 = vmatpush1.bf16.msra.mxu0 0
    %7544 = vmatprep.subr.bf16.mxu0 0
    %7545 = vmatpush1.bf16.msra.mxu0 %v7526
    %7546 = vmatprep.subr.bf16.mxu0 0
    %7547 = vmatpush1.bf16.msra.mxu0 %v7525
    %7548 = vmatprep.subr.bf16.mxu0 0
    %7549 = vmatpush2.bf16.msra.mxu0 0
    %7550 = vmatprep.subr.bf16.mxu0 0
    %7551 = vmatpush2.bf16.msra.mxu0 0
    %7552 = vmatprep.subr.bf16.mxu0 0
    %7553 = vmatpush2.bf16.msra.mxu0 0
    %7554 = vmatprep.subr.bf16.mxu0 0
    %7555 = vmatpush2.bf16.msra.mxu0 0
    %7556 = vmatprep.subr.bf16.mxu0 0
    %7557 = vmatpush2.bf16.msra.mxu0 0
    %7558 = vmatprep.subr.bf16.mxu0 0
    %7559 = vmatpush2.bf16.msra.mxu0 0
    %7560 = vmatprep.subr.bf16.mxu0 0
    %7561 = vmatpush2.bf16.msra.mxu0 0
    %7562 = vmatprep.subr.bf16.mxu0 0
    %7563 = vmatpush2.bf16.msra.mxu0 0
    %7564 = vmatprep.mubr.bf16.mxu0 0
    %7565 = vmatmul.mubr.bf16.gmra.mxu0 %v7530
    %v7566 = vpop.f32.mrf.mxu0
    %v7567 = vadd.f32 0.0, %v7566
    %v7568 = vpop.f32.mrf.mxu0
    %v7569 = vpop.f32.mrf.mxu0
    %v7570 = vpop.f32.mrf.mxu0
    %7571 = vdwg.mxu0
    %v7572 = vadd.f32 %v7510, %v7567
    %v7573 = vld [vmem:[#allocation3 + $0x4c] sm:$0x3]
    %v7574 = vpack.c.bf16 %v7573, %v7573
    %v7575 = vld [vmem:[#allocation4 + $0x220] sm:$0xf]
    %v7576 = vld [vmem:[#allocation4 + $0x224] sm:$0xf]
    %v7577 = vld [vmem:[#allocation4 + $0x228] sm:$0xf]
    %v7578 = vld [vmem:[#allocation4 + $0x22c] sm:$0xf]
    %v7583 = vunpack.c.l.b16 %v7575
    %v7584 = vunpack.c.l.b16 %v7576
    %v7585 = vunpack.c.l.b16 %v7577
    %v7586 = vunpack.c.l.b16 %v7578
    %v7587 = vpack.c.b16 %v7584, %v7583
    %v7588 = vpack.c.b16 %v7586, %v7585
    %v7592 = vsel %vm5086, %v7574, 0
    %7594 = vmatprep.subr.bf16.mxu0 0
    %7595 = vmatpush1.bf16.msra.mxu0 0
    %7596 = vmatprep.subr.bf16.mxu0 0
    %7597 = vmatpush1.bf16.msra.mxu0 0
    %7598 = vmatprep.subr.bf16.mxu0 0
    %7599 = vmatpush1.bf16.msra.mxu0 0
    %7600 = vmatprep.subr.bf16.mxu0 0
    %7601 = vmatpush1.bf16.msra.mxu0 0
    %7602 = vmatprep.subr.bf16.mxu0 0
    %7603 = vmatpush1.bf16.msra.mxu0 0
    %7604 = vmatprep.subr.bf16.mxu0 0
    %7605 = vmatpush1.bf16.msra.mxu0 0
    %7606 = vmatprep.subr.bf16.mxu0 0
    %7607 = vmatpush1.bf16.msra.mxu0 %v7588
    %7608 = vmatprep.subr.bf16.mxu0 0
    %7609 = vmatpush1.bf16.msra.mxu0 %v7587
    %7610 = vmatprep.subr.bf16.mxu0 0
    %7611 = vmatpush2.bf16.msra.mxu0 0
    %7612 = vmatprep.subr.bf16.mxu0 0
    %7613 = vmatpush2.bf16.msra.mxu0 0
    %7614 = vmatprep.subr.bf16.mxu0 0
    %7615 = vmatpush2.bf16.msra.mxu0 0
    %7616 = vmatprep.subr.bf16.mxu0 0
    %7617 = vmatpush2.bf16.msra.mxu0 0
    %7618 = vmatprep.subr.bf16.mxu0 0
    %7619 = vmatpush2.bf16.msra.mxu0 0
    %7620 = vmatprep.subr.bf16.mxu0 0
    %7621 = vmatpush2.bf16.msra.mxu0 0
    %7622 = vmatprep.subr.bf16.mxu0 0
    %7623 = vmatpush2.bf16.msra.mxu0 0
    %7624 = vmatprep.subr.bf16.mxu0 0
    %7625 = vmatpush2.bf16.msra.mxu0 0
    %7626 = vmatprep.mubr.bf16.mxu0 0
    %7627 = vmatmul.mubr.bf16.gmra.mxu0 %v7592
    %v7628 = vpop.f32.mrf.mxu0
    %v7629 = vadd.f32 0.0, %v7628
    %v7630 = vpop.f32.mrf.mxu0
    %v7631 = vpop.f32.mrf.mxu0
    %v7632 = vpop.f32.mrf.mxu0
    %7633 = vdwg.mxu0
    %v7634 = vadd.f32 %v7572, %v7629
    %v7635 = vld [vmem:[#allocation3 + $0x4e] sm:$0x3]
    %v7636 = vpack.c.bf16 %v7635, %v7635
    %v7637 = vld [vmem:[#allocation4 + $0x230] sm:$0xf]
    %v7638 = vld [vmem:[#allocation4 + $0x234] sm:$0xf]
    %v7639 = vld [vmem:[#allocation4 + $0x238] sm:$0xf]
    %v7640 = vld [vmem:[#allocation4 + $0x23c] sm:$0xf]
    %v7645 = vunpack.c.l.b16 %v7637
    %v7646 = vunpack.c.l.b16 %v7638
    %v7647 = vunpack.c.l.b16 %v7639
    %v7648 = vunpack.c.l.b16 %v7640
    %v7649 = vpack.c.b16 %v7646, %v7645
    %v7650 = vpack.c.b16 %v7648, %v7647
    %v7654 = vsel %vm5086, %v7636, 0
    %7656 = vmatprep.subr.bf16.mxu0 0
    %7657 = vmatpush1.bf16.msra.mxu0 0
    %7658 = vmatprep.subr.bf16.mxu0 0
    %7659 = vmatpush1.bf16.msra.mxu0 0
    %7660 = vmatprep.subr.bf16.mxu0 0
    %7661 = vmatpush1.bf16.msra.mxu0 0
    %7662 = vmatprep.subr.bf16.mxu0 0
    %7663 = vmatpush1.bf16.msra.mxu0 0
    %7664 = vmatprep.subr.bf16.mxu0 0
    %7665 = vmatpush1.bf16.msra.mxu0 0
    %7666 = vmatprep.subr.bf16.mxu0 0
    %7667 = vmatpush1.bf16.msra.mxu0 0
    %7668 = vmatprep.subr.bf16.mxu0 0
    %7669 = vmatpush1.bf16.msra.mxu0 %v7650
    %7670 = vmatprep.subr.bf16.mxu0 0
    %7671 = vmatpush1.bf16.msra.mxu0 %v7649
    %7672 = vmatprep.subr.bf16.mxu0 0
    %7673 = vmatpush2.bf16.msra.mxu0 0
    %7674 = vmatprep.subr.bf16.mxu0 0
    %7675 = vmatpush2.bf16.msra.mxu0 0
    %7676 = vmatprep.subr.bf16.mxu0 0
    %7677 = vmatpush2.bf16.msra.mxu0 0
    %7678 = vmatprep.subr.bf16.mxu0 0
    %7679 = vmatpush2.bf16.msra.mxu0 0
    %7680 = vmatprep.subr.bf16.mxu0 0
    %7681 = vmatpush2.bf16.msra.mxu0 0
    %7682 = vmatprep.subr.bf16.mxu0 0
    %7683 = vmatpush2.bf16.msra.mxu0 0
    %7684 = vmatprep.subr.bf16.mxu0 0
    %7685 = vmatpush2.bf16.msra.mxu0 0
    %7686 = vmatprep.subr.bf16.mxu0 0
    %7687 = vmatpush2.bf16.msra.mxu0 0
    %7688 = vmatprep.mubr.bf16.mxu0 0
    %7689 = vmatmul.mubr.bf16.gmra.mxu0 %v7654
    %v7690 = vpop.f32.mrf.mxu0
    %v7691 = vadd.f32 0.0, %v7690
    %v7692 = vpop.f32.mrf.mxu0
    %v7693 = vpop.f32.mrf.mxu0
    %v7694 = vpop.f32.mrf.mxu0
    %7695 = vdwg.mxu0
    %v7696 = vadd.f32 %v7634, %v7691
    %v7697 = vld [vmem:[#allocation3 + $0x54] sm:$0x3]
    %v7698 = vpack.c.bf16 %v7697, %v7697
    %v7699 = vld [vmem:[#allocation4 + $0x240] sm:$0xf]
    %v7700 = vld [vmem:[#allocation4 + $0x244] sm:$0xf]
    %v7701 = vld [vmem:[#allocation4 + $0x248] sm:$0xf]
    %v7702 = vld [vmem:[#allocation4 + $0x24c] sm:$0xf]
    %v7707 = vunpack.c.l.b16 %v7699
    %v7708 = vunpack.c.l.b16 %v7700
    %v7709 = vunpack.c.l.b16 %v7701
    %v7710 = vunpack.c.l.b16 %v7702
    %v7711 = vpack.c.b16 %v7708, %v7707
    %v7712 = vpack.c.b16 %v7710, %v7709
    %v7716 = vsel %vm5086, %v7698, 0
    %7718 = vmatprep.subr.bf16.mxu0 0
    %7719 = vmatpush1.bf16.msra.mxu0 0
    %7720 = vmatprep.subr.bf16.mxu0 0
    %7721 = vmatpush1.bf16.msra.mxu0 0
    %7722 = vmatprep.subr.bf16.mxu0 0
    %7723 = vmatpush1.bf16.msra.mxu0 0
    %7724 = vmatprep.subr.bf16.mxu0 0
    %7725 = vmatpush1.bf16.msra.mxu0 0
    %7726 = vmatprep.subr.bf16.mxu0 0
    %7727 = vmatpush1.bf16.msra.mxu0 0
    %7728 = vmatprep.subr.bf16.mxu0 0
    %7729 = vmatpush1.bf16.msra.mxu0 0
    %7730 = vmatprep.subr.bf16.mxu0 0
    %7731 = vmatpush1.bf16.msra.mxu0 %v7712
    %7732 = vmatprep.subr.bf16.mxu0 0
    %7733 = vmatpush1.bf16.msra.mxu0 %v7711
    %7734 = vmatprep.subr.bf16.mxu0 0
    %7735 = vmatpush2.bf16.msra.mxu0 0
    %7736 = vmatprep.subr.bf16.mxu0 0
    %7737 = vmatpush2.bf16.msra.mxu0 0
    %7738 = vmatprep.subr.bf16.mxu0 0
    %7739 = vmatpush2.bf16.msra.mxu0 0
    %7740 = vmatprep.subr.bf16.mxu0 0
    %7741 = vmatpush2.bf16.msra.mxu0 0
    %7742 = vmatprep.subr.bf16.mxu0 0
    %7743 = vmatpush2.bf16.msra.mxu0 0
    %7744 = vmatprep.subr.bf16.mxu0 0
    %7745 = vmatpush2.bf16.msra.mxu0 0
    %7746 = vmatprep.subr.bf16.mxu0 0
    %7747 = vmatpush2.bf16.msra.mxu0 0
    %7748 = vmatprep.subr.bf16.mxu0 0
    %7749 = vmatpush2.bf16.msra.mxu0 0
    %7750 = vmatprep.mubr.bf16.mxu0 0
    %7751 = vmatmul.mubr.bf16.gmra.mxu0 %v7716
    %v7752 = vpop.f32.mrf.mxu0
    %v7753 = vadd.f32 0.0, %v7752
    %v7754 = vpop.f32.mrf.mxu0
    %v7755 = vpop.f32.mrf.mxu0
    %v7756 = vpop.f32.mrf.mxu0
    %7757 = vdwg.mxu0
    %v7758 = vadd.f32 %v7696, %v7753
    %v7759 = vld [vmem:[#allocation3 + $0x56] sm:$0x3]
    %v7760 = vpack.c.bf16 %v7759, %v7759
    %v7761 = vld [vmem:[#allocation4 + $0x250] sm:$0xf]
    %v7762 = vld [vmem:[#allocation4 + $0x254] sm:$0xf]
    %v7763 = vld [vmem:[#allocation4 + $0x258] sm:$0xf]
    %v7764 = vld [vmem:[#allocation4 + $0x25c] sm:$0xf]
    %v7769 = vunpack.c.l.b16 %v7761
    %v7770 = vunpack.c.l.b16 %v7762
    %v7771 = vunpack.c.l.b16 %v7763
    %v7772 = vunpack.c.l.b16 %v7764
    %v7773 = vpack.c.b16 %v7770, %v7769
    %v7774 = vpack.c.b16 %v7772, %v7771
    %v7778 = vsel %vm5086, %v7760, 0
    %7780 = vmatprep.subr.bf16.mxu0 0
    %7781 = vmatpush1.bf16.msra.mxu0 0
    %7782 = vmatprep.subr.bf16.mxu0 0
    %7783 = vmatpush1.bf16.msra.mxu0 0
    %7784 = vmatprep.subr.bf16.mxu0 0
    %7785 = vmatpush1.bf16.msra.mxu0 0
    %7786 = vmatprep.subr.bf16.mxu0 0
    %7787 = vmatpush1.bf16.msra.mxu0 0
    %7788 = vmatprep.subr.bf16.mxu0 0
    %7789 = vmatpush1.bf16.msra.mxu0 0
    %7790 = vmatprep.subr.bf16.mxu0 0
    %7791 = vmatpush1.bf16.msra.mxu0 0
    %7792 = vmatprep.subr.bf16.mxu0 0
    %7793 = vmatpush1.bf16.msra.mxu0 %v7774
    %7794 = vmatprep.subr.bf16.mxu0 0
    %7795 = vmatpush1.bf16.msra.mxu0 %v7773
    %7796 = vmatprep.subr.bf16.mxu0 0
    %7797 = vmatpush2.bf16.msra.mxu0 0
    %7798 = vmatprep.subr.bf16.mxu0 0
    %7799 = vmatpush2.bf16.msra.mxu0 0
    %7800 = vmatprep.subr.bf16.mxu0 0
    %7801 = vmatpush2.bf16.msra.mxu0 0
    %7802 = vmatprep.subr.bf16.mxu0 0
    %7803 = vmatpush2.bf16.msra.mxu0 0
    %7804 = vmatprep.subr.bf16.mxu0 0
    %7805 = vmatpush2.bf16.msra.mxu0 0
    %7806 = vmatprep.subr.bf16.mxu0 0
    %7807 = vmatpush2.bf16.msra.mxu0 0
    %7808 = vmatprep.subr.bf16.mxu0 0
    %7809 = vmatpush2.bf16.msra.mxu0 0
    %7810 = vmatprep.subr.bf16.mxu0 0
    %7811 = vmatpush2.bf16.msra.mxu0 0
    %7812 = vmatprep.mubr.bf16.mxu0 0
    %7813 = vmatmul.mubr.bf16.gmra.mxu0 %v7778
    %v7814 = vpop.f32.mrf.mxu0
    %v7815 = vadd.f32 0.0, %v7814
    %v7816 = vpop.f32.mrf.mxu0
    %v7817 = vpop.f32.mrf.mxu0
    %v7818 = vpop.f32.mrf.mxu0
    %7819 = vdwg.mxu0
    %v7820 = vadd.f32 %v7758, %v7815
    %v7821 = vld [vmem:[#allocation3 + $0x58] sm:$0x3]
    %v7822 = vpack.c.bf16 %v7821, %v7821
    %v7823 = vld [vmem:[#allocation4 + $0x260] sm:$0xf]
    %v7824 = vld [vmem:[#allocation4 + $0x264] sm:$0xf]
    %v7825 = vld [vmem:[#allocation4 + $0x268] sm:$0xf]
    %v7826 = vld [vmem:[#allocation4 + $0x26c] sm:$0xf]
    %v7831 = vunpack.c.l.b16 %v7823
    %v7832 = vunpack.c.l.b16 %v7824
    %v7833 = vunpack.c.l.b16 %v7825
    %v7834 = vunpack.c.l.b16 %v7826
    %v7835 = vpack.c.b16 %v7832, %v7831
    %v7836 = vpack.c.b16 %v7834, %v7833
    %v7840 = vsel %vm5086, %v7822, 0
    %7842 = vmatprep.subr.bf16.mxu0 0
    %7843 = vmatpush1.bf16.msra.mxu0 0
    %7844 = vmatprep.subr.bf16.mxu0 0
    %7845 = vmatpush1.bf16.msra.mxu0 0
    %7846 = vmatprep.subr.bf16.mxu0 0
    %7847 = vmatpush1.bf16.msra.mxu0 0
    %7848 = vmatprep.subr.bf16.mxu0 0
    %7849 = vmatpush1.bf16.msra.mxu0 0
    %7850 = vmatprep.subr.bf16.mxu0 0
    %7851 = vmatpush1.bf16.msra.mxu0 0
    %7852 = vmatprep.subr.bf16.mxu0 0
    %7853 = vmatpush1.bf16.msra.mxu0 0
    %7854 = vmatprep.subr.bf16.mxu0 0
    %7855 = vmatpush1.bf16.msra.mxu0 %v7836
    %7856 = vmatprep.subr.bf16.mxu0 0
    %7857 = vmatpush1.bf16.msra.mxu0 %v7835
    %7858 = vmatprep.subr.bf16.mxu0 0
    %7859 = vmatpush2.bf16.msra.mxu0 0
    %7860 = vmatprep.subr.bf16.mxu0 0
    %7861 = vmatpush2.bf16.msra.mxu0 0
    %7862 = vmatprep.subr.bf16.mxu0 0
    %7863 = vmatpush2.bf16.msra.mxu0 0
    %7864 = vmatprep.subr.bf16.mxu0 0
    %7865 = vmatpush2.bf16.msra.mxu0 0
    %7866 = vmatprep.subr.bf16.mxu0 0
    %7867 = vmatpush2.bf16.msra.mxu0 0
    %7868 = vmatprep.subr.bf16.mxu0 0
    %7869 = vmatpush2.bf16.msra.mxu0 0
    %7870 = vmatprep.subr.bf16.mxu0 0
    %7871 = vmatpush2.bf16.msra.mxu0 0
    %7872 = vmatprep.subr.bf16.mxu0 0
    %7873 = vmatpush2.bf16.msra.mxu0 0
    %7874 = vmatprep.mubr.bf16.mxu0 0
    %7875 = vmatmul.mubr.bf16.gmra.mxu0 %v7840
    %v7876 = vpop.f32.mrf.mxu0
    %v7877 = vadd.f32 0.0, %v7876
    %v7878 = vpop.f32.mrf.mxu0
    %v7879 = vpop.f32.mrf.mxu0
    %v7880 = vpop.f32.mrf.mxu0
    %7881 = vdwg.mxu0
    %v7882 = vadd.f32 %v7820, %v7877
    %v7883 = vld [vmem:[#allocation3 + $0x5a] sm:$0x3]
    %v7884 = vpack.c.bf16 %v7883, %v7883
    %v7885 = vld [vmem:[#allocation4 + $0x270] sm:$0xf]
    %v7886 = vld [vmem:[#allocation4 + $0x274] sm:$0xf]
    %v7887 = vld [vmem:[#allocation4 + $0x278] sm:$0xf]
    %v7888 = vld [vmem:[#allocation4 + $0x27c] sm:$0xf]
    %v7893 = vunpack.c.l.b16 %v7885
    %v7894 = vunpack.c.l.b16 %v7886
    %v7895 = vunpack.c.l.b16 %v7887
    %v7896 = vunpack.c.l.b16 %v7888
    %v7897 = vpack.c.b16 %v7894, %v7893
    %v7898 = vpack.c.b16 %v7896, %v7895
    %v7902 = vsel %vm5086, %v7884, 0
    %7904 = vmatprep.subr.bf16.mxu0 0
    %7905 = vmatpush1.bf16.msra.mxu0 0
    %7906 = vmatprep.subr.bf16.mxu0 0
    %7907 = vmatpush1.bf16.msra.mxu0 0
    %7908 = vmatprep.subr.bf16.mxu0 0
    %7909 = vmatpush1.bf16.msra.mxu0 0
    %7910 = vmatprep.subr.bf16.mxu0 0
    %7911 = vmatpush1.bf16.msra.mxu0 0
    %7912 = vmatprep.subr.bf16.mxu0 0
    %7913 = vmatpush1.bf16.msra.mxu0 0
    %7914 = vmatprep.subr.bf16.mxu0 0
    %7915 = vmatpush1.bf16.msra.mxu0 0
    %7916 = vmatprep.subr.bf16.mxu0 0
    %7917 = vmatpush1.bf16.msra.mxu0 %v7898
    %7918 = vmatprep.subr.bf16.mxu0 0
    %7919 = vmatpush1.bf16.msra.mxu0 %v7897
    %7920 = vmatprep.subr.bf16.mxu0 0
    %7921 = vmatpush2.bf16.msra.mxu0 0
    %7922 = vmatprep.subr.bf16.mxu0 0
    %7923 = vmatpush2.bf16.msra.mxu0 0
    %7924 = vmatprep.subr.bf16.mxu0 0
    %7925 = vmatpush2.bf16.msra.mxu0 0
    %7926 = vmatprep.subr.bf16.mxu0 0
    %7927 = vmatpush2.bf16.msra.mxu0 0
    %7928 = vmatprep.subr.bf16.mxu0 0
    %7929 = vmatpush2.bf16.msra.mxu0 0
    %7930 = vmatprep.subr.bf16.mxu0 0
    %7931 = vmatpush2.bf16.msra.mxu0 0
    %7932 = vmatprep.subr.bf16.mxu0 0
    %7933 = vmatpush2.bf16.msra.mxu0 0
    %7934 = vmatprep.subr.bf16.mxu0 0
    %7935 = vmatpush2.bf16.msra.mxu0 0
    %7936 = vmatprep.mubr.bf16.mxu0 0
    %7937 = vmatmul.mubr.bf16.gmra.mxu0 %v7902
    %v7938 = vpop.f32.mrf.mxu0
    %v7939 = vadd.f32 0.0, %v7938
    %v7940 = vpop.f32.mrf.mxu0
    %v7941 = vpop.f32.mrf.mxu0
    %v7942 = vpop.f32.mrf.mxu0
    %7943 = vdwg.mxu0
    %v7944 = vadd.f32 %v7882, %v7939
    %v7945 = vld [vmem:[#allocation3 + $0x5c] sm:$0x3]
    %v7946 = vpack.c.bf16 %v7945, %v7945
    %v7947 = vld [vmem:[#allocation4 + $0x280] sm:$0xf]
    %v7948 = vld [vmem:[#allocation4 + $0x284] sm:$0xf]
    %v7949 = vld [vmem:[#allocation4 + $0x288] sm:$0xf]
    %v7950 = vld [vmem:[#allocation4 + $0x28c] sm:$0xf]
    %v7955 = vunpack.c.l.b16 %v7947
    %v7956 = vunpack.c.l.b16 %v7948
    %v7957 = vunpack.c.l.b16 %v7949
    %v7958 = vunpack.c.l.b16 %v7950
    %v7959 = vpack.c.b16 %v7956, %v7955
    %v7960 = vpack.c.b16 %v7958, %v7957
    %v7964 = vsel %vm5086, %v7946, 0
    %7966 = vmatprep.subr.bf16.mxu0 0
    %7967 = vmatpush1.bf16.msra.mxu0 0
    %7968 = vmatprep.subr.bf16.mxu0 0
    %7969 = vmatpush1.bf16.msra.mxu0 0
    %7970 = vmatprep.subr.bf16.mxu0 0
    %7971 = vmatpush1.bf16.msra.mxu0 0
    %7972 = vmatprep.subr.bf16.mxu0 0
    %7973 = vmatpush1.bf16.msra.mxu0 0
    %7974 = vmatprep.subr.bf16.mxu0 0
    %7975 = vmatpush1.bf16.msra.mxu0 0
    %7976 = vmatprep.subr.bf16.mxu0 0
    %7977 = vmatpush1.bf16.msra.mxu0 0
    %7978 = vmatprep.subr.bf16.mxu0 0
    %7979 = vmatpush1.bf16.msra.mxu0 %v7960
    %7980 = vmatprep.subr.bf16.mxu0 0
    %7981 = vmatpush1.bf16.msra.mxu0 %v7959
    %7982 = vmatprep.subr.bf16.mxu0 0
    %7983 = vmatpush2.bf16.msra.mxu0 0
    %7984 = vmatprep.subr.bf16.mxu0 0
    %7985 = vmatpush2.bf16.msra.mxu0 0
    %7986 = vmatprep.subr.bf16.mxu0 0
    %7987 = vmatpush2.bf16.msra.mxu0 0
    %7988 = vmatprep.subr.bf16.mxu0 0
    %7989 = vmatpush2.bf16.msra.mxu0 0
    %7990 = vmatprep.subr.bf16.mxu0 0
    %7991 = vmatpush2.bf16.msra.mxu0 0
    %7992 = vmatprep.subr.bf16.mxu0 0
    %7993 = vmatpush2.bf16.msra.mxu0 0
    %7994 = vmatprep.subr.bf16.mxu0 0
    %7995 = vmatpush2.bf16.msra.mxu0 0
    %7996 = vmatprep.subr.bf16.mxu0 0
    %7997 = vmatpush2.bf16.msra.mxu0 0
    %7998 = vmatprep.mubr.bf16.mxu0 0
    %7999 = vmatmul.mubr.bf16.gmra.mxu0 %v7964
    %v8000 = vpop.f32.mrf.mxu0
    %v8001 = vadd.f32 0.0, %v8000
    %v8002 = vpop.f32.mrf.mxu0
    %v8003 = vpop.f32.mrf.mxu0
    %v8004 = vpop.f32.mrf.mxu0
    %8005 = vdwg.mxu0
    %v8006 = vadd.f32 %v7944, %v8001
    %v8007 = vld [vmem:[#allocation3 + $0x5e] sm:$0x3]
    %v8008 = vpack.c.bf16 %v8007, %v8007
    %v8009 = vld [vmem:[#allocation4 + $0x290] sm:$0xf]
    %v8010 = vld [vmem:[#allocation4 + $0x294] sm:$0xf]
    %v8011 = vld [vmem:[#allocation4 + $0x298] sm:$0xf]
    %v8012 = vld [vmem:[#allocation4 + $0x29c] sm:$0xf]
    %v8017 = vunpack.c.l.b16 %v8009
    %v8018 = vunpack.c.l.b16 %v8010
    %v8019 = vunpack.c.l.b16 %v8011
    %v8020 = vunpack.c.l.b16 %v8012
    %v8021 = vpack.c.b16 %v8018, %v8017
    %v8022 = vpack.c.b16 %v8020, %v8019
    %v8026 = vsel %vm5086, %v8008, 0
    %8028 = vmatprep.subr.bf16.mxu0 0
    %8029 = vmatpush1.bf16.msra.mxu0 0
    %8030 = vmatprep.subr.bf16.mxu0 0
    %8031 = vmatpush1.bf16.msra.mxu0 0
    %8032 = vmatprep.subr.bf16.mxu0 0
    %8033 = vmatpush1.bf16.msra.mxu0 0
    %8034 = vmatprep.subr.bf16.mxu0 0
    %8035 = vmatpush1.bf16.msra.mxu0 0
    %8036 = vmatprep.subr.bf16.mxu0 0
    %8037 = vmatpush1.bf16.msra.mxu0 0
    %8038 = vmatprep.subr.bf16.mxu0 0
    %8039 = vmatpush1.bf16.msra.mxu0 0
    %8040 = vmatprep.subr.bf16.mxu0 0
    %8041 = vmatpush1.bf16.msra.mxu0 %v8022
    %8042 = vmatprep.subr.bf16.mxu0 0
    %8043 = vmatpush1.bf16.msra.mxu0 %v8021
    %8044 = vmatprep.subr.bf16.mxu0 0
    %8045 = vmatpush2.bf16.msra.mxu0 0
    %8046 = vmatprep.subr.bf16.mxu0 0
    %8047 = vmatpush2.bf16.msra.mxu0 0
    %8048 = vmatprep.subr.bf16.mxu0 0
    %8049 = vmatpush2.bf16.msra.mxu0 0
    %8050 = vmatprep.subr.bf16.mxu0 0
    %8051 = vmatpush2.bf16.msra.mxu0 0
    %8052 = vmatprep.subr.bf16.mxu0 0
    %8053 = vmatpush2.bf16.msra.mxu0 0
    %8054 = vmatprep.subr.bf16.mxu0 0
    %8055 = vmatpush2.bf16.msra.mxu0 0
    %8056 = vmatprep.subr.bf16.mxu0 0
    %8057 = vmatpush2.bf16.msra.mxu0 0
    %8058 = vmatprep.subr.bf16.mxu0 0
    %8059 = vmatpush2.bf16.msra.mxu0 0
    %8060 = vmatprep.mubr.bf16.mxu0 0
    %8061 = vmatmul.mubr.bf16.gmra.mxu0 %v8026
    %v8062 = vpop.f32.mrf.mxu0
    %v8063 = vadd.f32 0.0, %v8062
    %v8064 = vpop.f32.mrf.mxu0
    %v8065 = vpop.f32.mrf.mxu0
    %v8066 = vpop.f32.mrf.mxu0
    %8067 = vdwg.mxu0
    %v8068 = vadd.f32 %v8006, %v8063
    %v8069 = vld [vmem:[#allocation3 + $0x60] sm:$0x3]
    %v8070 = vpack.c.bf16 %v8069, %v8069
    %v8071 = vld [vmem:[#allocation4 + $0x2a0] sm:$0xf]
    %v8072 = vld [vmem:[#allocation4 + $0x2a4] sm:$0xf]
    %v8073 = vld [vmem:[#allocation4 + $0x2a8] sm:$0xf]
    %v8074 = vld [vmem:[#allocation4 + $0x2ac] sm:$0xf]
    %v8079 = vunpack.c.l.b16 %v8071
    %v8080 = vunpack.c.l.b16 %v8072
    %v8081 = vunpack.c.l.b16 %v8073
    %v8082 = vunpack.c.l.b16 %v8074
    %v8083 = vpack.c.b16 %v8080, %v8079
    %v8084 = vpack.c.b16 %v8082, %v8081
    %v8088 = vsel %vm5086, %v8070, 0
    %8090 = vmatprep.subr.bf16.mxu0 0
    %8091 = vmatpush1.bf16.msra.mxu0 0
    %8092 = vmatprep.subr.bf16.mxu0 0
    %8093 = vmatpush1.bf16.msra.mxu0 0
    %8094 = vmatprep.subr.bf16.mxu0 0
    %8095 = vmatpush1.bf16.msra.mxu0 0
    %8096 = vmatprep.subr.bf16.mxu0 0
    %8097 = vmatpush1.bf16.msra.mxu0 0
    %8098 = vmatprep.subr.bf16.mxu0 0
    %8099 = vmatpush1.bf16.msra.mxu0 0
    %8100 = vmatprep.subr.bf16.mxu0 0
    %8101 = vmatpush1.bf16.msra.mxu0 0
    %8102 = vmatprep.subr.bf16.mxu0 0
    %8103 = vmatpush1.bf16.msra.mxu0 %v8084
    %8104 = vmatprep.subr.bf16.mxu0 0
    %8105 = vmatpush1.bf16.msra.mxu0 %v8083
    %8106 = vmatprep.subr.bf16.mxu0 0
    %8107 = vmatpush2.bf16.msra.mxu0 0
    %8108 = vmatprep.subr.bf16.mxu0 0
    %8109 = vmatpush2.bf16.msra.mxu0 0
    %8110 = vmatprep.subr.bf16.mxu0 0
    %8111 = vmatpush2.bf16.msra.mxu0 0
    %8112 = vmatprep.subr.bf16.mxu0 0
    %8113 = vmatpush2.bf16.msra.mxu0 0
    %8114 = vmatprep.subr.bf16.mxu0 0
    %8115 = vmatpush2.bf16.msra.mxu0 0
    %8116 = vmatprep.subr.bf16.mxu0 0
    %8117 = vmatpush2.bf16.msra.mxu0 0
    %8118 = vmatprep.subr.bf16.mxu0 0
    %8119 = vmatpush2.bf16.msra.mxu0 0
    %8120 = vmatprep.subr.bf16.mxu0 0
    %8121 = vmatpush2.bf16.msra.mxu0 0
    %8122 = vmatprep.mubr.bf16.mxu0 0
    %8123 = vmatmul.mubr.bf16.gmra.mxu0 %v8088
    %v8124 = vpop.f32.mrf.mxu0
    %v8125 = vadd.f32 0.0, %v8124
    %v8126 = vpop.f32.mrf.mxu0
    %v8127 = vpop.f32.mrf.mxu0
    %v8128 = vpop.f32.mrf.mxu0
    %8129 = vdwg.mxu0
    %v8130 = vadd.f32 %v8068, %v8125
    %v8131 = vld [vmem:[#allocation3 + $0x62] sm:$0x3]
    %v8132 = vpack.c.bf16 %v8131, %v8131
    %v8133 = vld [vmem:[#allocation4 + $0x2b0] sm:$0xf]
    %v8134 = vld [vmem:[#allocation4 + $0x2b4] sm:$0xf]
    %v8135 = vld [vmem:[#allocation4 + $0x2b8] sm:$0xf]
    %v8136 = vld [vmem:[#allocation4 + $0x2bc] sm:$0xf]
    %v8141 = vunpack.c.l.b16 %v8133
    %v8142 = vunpack.c.l.b16 %v8134
    %v8143 = vunpack.c.l.b16 %v8135
    %v8144 = vunpack.c.l.b16 %v8136
    %v8145 = vpack.c.b16 %v8142, %v8141
    %v8146 = vpack.c.b16 %v8144, %v8143
    %v8150 = vsel %vm5086, %v8132, 0
    %8152 = vmatprep.subr.bf16.mxu0 0
    %8153 = vmatpush1.bf16.msra.mxu0 0
    %8154 = vmatprep.subr.bf16.mxu0 0
    %8155 = vmatpush1.bf16.msra.mxu0 0
    %8156 = vmatprep.subr.bf16.mxu0 0
    %8157 = vmatpush1.bf16.msra.mxu0 0
    %8158 = vmatprep.subr.bf16.mxu0 0
    %8159 = vmatpush1.bf16.msra.mxu0 0
    %8160 = vmatprep.subr.bf16.mxu0 0
    %8161 = vmatpush1.bf16.msra.mxu0 0
    %8162 = vmatprep.subr.bf16.mxu0 0
    %8163 = vmatpush1.bf16.msra.mxu0 0
    %8164 = vmatprep.subr.bf16.mxu0 0
    %8165 = vmatpush1.bf16.msra.mxu0 %v8146
    %8166 = vmatprep.subr.bf16.mxu0 0
    %8167 = vmatpush1.bf16.msra.mxu0 %v8145
    %8168 = vmatprep.subr.bf16.mxu0 0
    %8169 = vmatpush2.bf16.msra.mxu0 0
    %8170 = vmatprep.subr.bf16.mxu0 0
    %8171 = vmatpush2.bf16.msra.mxu0 0
    %8172 = vmatprep.subr.bf16.mxu0 0
    %8173 = vmatpush2.bf16.msra.mxu0 0
    %8174 = vmatprep.subr.bf16.mxu0 0
    %8175 = vmatpush2.bf16.msra.mxu0 0
    %8176 = vmatprep.subr.bf16.mxu0 0
    %8177 = vmatpush2.bf16.msra.mxu0 0
    %8178 = vmatprep.subr.bf16.mxu0 0
    %8179 = vmatpush2.bf16.msra.mxu0 0
    %8180 = vmatprep.subr.bf16.mxu0 0
    %8181 = vmatpush2.bf16.msra.mxu0 0
    %8182 = vmatprep.subr.bf16.mxu0 0
    %8183 = vmatpush2.bf16.msra.mxu0 0
    %8184 = vmatprep.mubr.bf16.mxu0 0
    %8185 = vmatmul.mubr.bf16.gmra.mxu0 %v8150
    %v8186 = vpop.f32.mrf.mxu0
    %v8187 = vadd.f32 0.0, %v8186
    %v8188 = vpop.f32.mrf.mxu0
    %v8189 = vpop.f32.mrf.mxu0
    %v8190 = vpop.f32.mrf.mxu0
    %8191 = vdwg.mxu0
    %v8192 = vadd.f32 %v8130, %v8187
    %v8193 = vld [vmem:[#allocation3 + $0x64] sm:$0x3]
    %v8194 = vpack.c.bf16 %v8193, %v8193
    %v8195 = vld [vmem:[#allocation4 + $0x2c0] sm:$0xf]
    %v8196 = vld [vmem:[#allocation4 + $0x2c4] sm:$0xf]
    %v8197 = vld [vmem:[#allocation4 + $0x2c8] sm:$0xf]
    %v8198 = vld [vmem:[#allocation4 + $0x2cc] sm:$0xf]
    %v8203 = vunpack.c.l.b16 %v8195
    %v8204 = vunpack.c.l.b16 %v8196
    %v8205 = vunpack.c.l.b16 %v8197
    %v8206 = vunpack.c.l.b16 %v8198
    %v8207 = vpack.c.b16 %v8204, %v8203
    %v8208 = vpack.c.b16 %v8206, %v8205
    %v8212 = vsel %vm5086, %v8194, 0
    %8214 = vmatprep.subr.bf16.mxu0 0
    %8215 = vmatpush1.bf16.msra.mxu0 0
    %8216 = vmatprep.subr.bf16.mxu0 0
    %8217 = vmatpush1.bf16.msra.mxu0 0
    %8218 = vmatprep.subr.bf16.mxu0 0
    %8219 = vmatpush1.bf16.msra.mxu0 0
    %8220 = vmatprep.subr.bf16.mxu0 0
    %8221 = vmatpush1.bf16.msra.mxu0 0
    %8222 = vmatprep.subr.bf16.mxu0 0
    %8223 = vmatpush1.bf16.msra.mxu0 0
    %8224 = vmatprep.subr.bf16.mxu0 0
    %8225 = vmatpush1.bf16.msra.mxu0 0
    %8226 = vmatprep.subr.bf16.mxu0 0
    %8227 = vmatpush1.bf16.msra.mxu0 %v8208
    %8228 = vmatprep.subr.bf16.mxu0 0
    %8229 = vmatpush1.bf16.msra.mxu0 %v8207
    %8230 = vmatprep.subr.bf16.mxu0 0
    %8231 = vmatpush2.bf16.msra.mxu0 0
    %8232 = vmatprep.subr.bf16.mxu0 0
    %8233 = vmatpush2.bf16.msra.mxu0 0
    %8234 = vmatprep.subr.bf16.mxu0 0
    %8235 = vmatpush2.bf16.msra.mxu0 0
    %8236 = vmatprep.subr.bf16.mxu0 0
    %8237 = vmatpush2.bf16.msra.mxu0 0
    %8238 = vmatprep.subr.bf16.mxu0 0
    %8239 = vmatpush2.bf16.msra.mxu0 0
    %8240 = vmatprep.subr.bf16.mxu0 0
    %8241 = vmatpush2.bf16.msra.mxu0 0
    %8242 = vmatprep.subr.bf16.mxu0 0
    %8243 = vmatpush2.bf16.msra.mxu0 0
    %8244 = vmatprep.subr.bf16.mxu0 0
    %8245 = vmatpush2.bf16.msra.mxu0 0
    %8246 = vmatprep.mubr.bf16.mxu0 0
    %8247 = vmatmul.mubr.bf16.gmra.mxu0 %v8212
    %v8248 = vpop.f32.mrf.mxu0
    %v8249 = vadd.f32 0.0, %v8248
    %v8250 = vpop.f32.mrf.mxu0
    %v8251 = vpop.f32.mrf.mxu0
    %v8252 = vpop.f32.mrf.mxu0
    %8253 = vdwg.mxu0
    %v8254 = vadd.f32 %v8192, %v8249
    %v8255 = vld [vmem:[#allocation3 + $0x66] sm:$0x3]
    %v8256 = vpack.c.bf16 %v8255, %v8255
    %v8257 = vld [vmem:[#allocation4 + $0x2d0] sm:$0xf]
    %v8258 = vld [vmem:[#allocation4 + $0x2d4] sm:$0xf]
    %v8259 = vld [vmem:[#allocation4 + $0x2d8] sm:$0xf]
    %v8260 = vld [vmem:[#allocation4 + $0x2dc] sm:$0xf]
    %v8265 = vunpack.c.l.b16 %v8257
    %v8266 = vunpack.c.l.b16 %v8258
    %v8267 = vunpack.c.l.b16 %v8259
    %v8268 = vunpack.c.l.b16 %v8260
    %v8269 = vpack.c.b16 %v8266, %v8265
    %v8270 = vpack.c.b16 %v8268, %v8267
    %v8274 = vsel %vm5086, %v8256, 0
    %8276 = vmatprep.subr.bf16.mxu0 0
    %8277 = vmatpush1.bf16.msra.mxu0 0
    %8278 = vmatprep.subr.bf16.mxu0 0
    %8279 = vmatpush1.bf16.msra.mxu0 0
    %8280 = vmatprep.subr.bf16.mxu0 0
    %8281 = vmatpush1.bf16.msra.mxu0 0
    %8282 = vmatprep.subr.bf16.mxu0 0
    %8283 = vmatpush1.bf16.msra.mxu0 0
    %8284 = vmatprep.subr.bf16.mxu0 0
    %8285 = vmatpush1.bf16.msra.mxu0 0
    %8286 = vmatprep.subr.bf16.mxu0 0
    %8287 = vmatpush1.bf16.msra.mxu0 0
    %8288 = vmatprep.subr.bf16.mxu0 0
    %8289 = vmatpush1.bf16.msra.mxu0 %v8270
    %8290 = vmatprep.subr.bf16.mxu0 0
    %8291 = vmatpush1.bf16.msra.mxu0 %v8269
    %8292 = vmatprep.subr.bf16.mxu0 0
    %8293 = vmatpush2.bf16.msra.mxu0 0
    %8294 = vmatprep.subr.bf16.mxu0 0
    %8295 = vmatpush2.bf16.msra.mxu0 0
    %8296 = vmatprep.subr.bf16.mxu0 0
    %8297 = vmatpush2.bf16.msra.mxu0 0
    %8298 = vmatprep.subr.bf16.mxu0 0
    %8299 = vmatpush2.bf16.msra.mxu0 0
    %8300 = vmatprep.subr.bf16.mxu0 0
    %8301 = vmatpush2.bf16.msra.mxu0 0
    %8302 = vmatprep.subr.bf16.mxu0 0
    %8303 = vmatpush2.bf16.msra.mxu0 0
    %8304 = vmatprep.subr.bf16.mxu0 0
    %8305 = vmatpush2.bf16.msra.mxu0 0
    %8306 = vmatprep.subr.bf16.mxu0 0
    %8307 = vmatpush2.bf16.msra.mxu0 0
    %8308 = vmatprep.mubr.bf16.mxu0 0
    %8309 = vmatmul.mubr.bf16.gmra.mxu0 %v8274
    %v8310 = vpop.f32.mrf.mxu0
    %v8311 = vadd.f32 0.0, %v8310
    %v8312 = vpop.f32.mrf.mxu0
    %v8313 = vpop.f32.mrf.mxu0
    %v8314 = vpop.f32.mrf.mxu0
    %8315 = vdwg.mxu0
    %v8316 = vadd.f32 %v8254, %v8311
    %v8317 = vld [vmem:[#allocation3 + $0x68] sm:$0x3]
    %v8318 = vpack.c.bf16 %v8317, %v8317
    %v8319 = vld [vmem:[#allocation4 + $0x2e0] sm:$0xf]
    %v8320 = vld [vmem:[#allocation4 + $0x2e4] sm:$0xf]
    %v8321 = vld [vmem:[#allocation4 + $0x2e8] sm:$0xf]
    %v8322 = vld [vmem:[#allocation4 + $0x2ec] sm:$0xf]
    %v8327 = vunpack.c.l.b16 %v8319
    %v8328 = vunpack.c.l.b16 %v8320
    %v8329 = vunpack.c.l.b16 %v8321
    %v8330 = vunpack.c.l.b16 %v8322
    %v8331 = vpack.c.b16 %v8328, %v8327
    %v8332 = vpack.c.b16 %v8330, %v8329
    %v8336 = vsel %vm5086, %v8318, 0
    %8338 = vmatprep.subr.bf16.mxu0 0
    %8339 = vmatpush1.bf16.msra.mxu0 0
    %8340 = vmatprep.subr.bf16.mxu0 0
    %8341 = vmatpush1.bf16.msra.mxu0 0
    %8342 = vmatprep.subr.bf16.mxu0 0
    %8343 = vmatpush1.bf16.msra.mxu0 0
    %8344 = vmatprep.subr.bf16.mxu0 0
    %8345 = vmatpush1.bf16.msra.mxu0 0
    %8346 = vmatprep.subr.bf16.mxu0 0
    %8347 = vmatpush1.bf16.msra.mxu0 0
    %8348 = vmatprep.subr.bf16.mxu0 0
    %8349 = vmatpush1.bf16.msra.mxu0 0
    %8350 = vmatprep.subr.bf16.mxu0 0
    %8351 = vmatpush1.bf16.msra.mxu0 %v8332
    %8352 = vmatprep.subr.bf16.mxu0 0
    %8353 = vmatpush1.bf16.msra.mxu0 %v8331
    %8354 = vmatprep.subr.bf16.mxu0 0
    %8355 = vmatpush2.bf16.msra.mxu0 0
    %8356 = vmatprep.subr.bf16.mxu0 0
    %8357 = vmatpush2.bf16.msra.mxu0 0
    %8358 = vmatprep.subr.bf16.mxu0 0
    %8359 = vmatpush2.bf16.msra.mxu0 0
    %8360 = vmatprep.subr.bf16.mxu0 0
    %8361 = vmatpush2.bf16.msra.mxu0 0
    %8362 = vmatprep.subr.bf16.mxu0 0
    %8363 = vmatpush2.bf16.msra.mxu0 0
    %8364 = vmatprep.subr.bf16.mxu0 0
    %8365 = vmatpush2.bf16.msra.mxu0 0
    %8366 = vmatprep.subr.bf16.mxu0 0
    %8367 = vmatpush2.bf16.msra.mxu0 0
    %8368 = vmatprep.subr.bf16.mxu0 0
    %8369 = vmatpush2.bf16.msra.mxu0 0
    %8370 = vmatprep.mubr.bf16.mxu0 0
    %8371 = vmatmul.mubr.bf16.gmra.mxu0 %v8336
    %v8372 = vpop.f32.mrf.mxu0
    %v8373 = vadd.f32 0.0, %v8372
    %v8374 = vpop.f32.mrf.mxu0
    %v8375 = vpop.f32.mrf.mxu0
    %v8376 = vpop.f32.mrf.mxu0
    %8377 = vdwg.mxu0
    %v8378 = vadd.f32 %v8316, %v8373
    %v8379 = vld [vmem:[#allocation3 + $0x6a] sm:$0x3]
    %v8380 = vpack.c.bf16 %v8379, %v8379
    %v8381 = vld [vmem:[#allocation4 + $0x2f0] sm:$0xf]
    %v8382 = vld [vmem:[#allocation4 + $0x2f4] sm:$0xf]
    %v8383 = vld [vmem:[#allocation4 + $0x2f8] sm:$0xf]
    %v8384 = vld [vmem:[#allocation4 + $0x2fc] sm:$0xf]
    %v8389 = vunpack.c.l.b16 %v8381
    %v8390 = vunpack.c.l.b16 %v8382
    %v8391 = vunpack.c.l.b16 %v8383
    %v8392 = vunpack.c.l.b16 %v8384
    %v8393 = vpack.c.b16 %v8390, %v8389
    %v8394 = vpack.c.b16 %v8392, %v8391
    %v8398 = vsel %vm5086, %v8380, 0
    %8400 = vmatprep.subr.bf16.mxu0 0
    %8401 = vmatpush1.bf16.msra.mxu0 0
    %8402 = vmatprep.subr.bf16.mxu0 0
    %8403 = vmatpush1.bf16.msra.mxu0 0
    %8404 = vmatprep.subr.bf16.mxu0 0
    %8405 = vmatpush1.bf16.msra.mxu0 0
    %8406 = vmatprep.subr.bf16.mxu0 0
    %8407 = vmatpush1.bf16.msra.mxu0 0
    %8408 = vmatprep.subr.bf16.mxu0 0
    %8409 = vmatpush1.bf16.msra.mxu0 0
    %8410 = vmatprep.subr.bf16.mxu0 0
    %8411 = vmatpush1.bf16.msra.mxu0 0
    %8412 = vmatprep.subr.bf16.mxu0 0
    %8413 = vmatpush1.bf16.msra.mxu0 %v8394
    %8414 = vmatprep.subr.bf16.mxu0 0
    %8415 = vmatpush1.bf16.msra.mxu0 %v8393
    %8416 = vmatprep.subr.bf16.mxu0 0
    %8417 = vmatpush2.bf16.msra.mxu0 0
    %8418 = vmatprep.subr.bf16.mxu0 0
    %8419 = vmatpush2.bf16.msra.mxu0 0
    %8420 = vmatprep.subr.bf16.mxu0 0
    %8421 = vmatpush2.bf16.msra.mxu0 0
    %8422 = vmatprep.subr.bf16.mxu0 0
    %8423 = vmatpush2.bf16.msra.mxu0 0
    %8424 = vmatprep.subr.bf16.mxu0 0
    %8425 = vmatpush2.bf16.msra.mxu0 0
    %8426 = vmatprep.subr.bf16.mxu0 0
    %8427 = vmatpush2.bf16.msra.mxu0 0
    %8428 = vmatprep.subr.bf16.mxu0 0
    %8429 = vmatpush2.bf16.msra.mxu0 0
    %8430 = vmatprep.subr.bf16.mxu0 0
    %8431 = vmatpush2.bf16.msra.mxu0 0
    %8432 = vmatprep.mubr.bf16.mxu0 0
    %8433 = vmatmul.mubr.bf16.gmra.mxu0 %v8398
    %v8434 = vpop.f32.mrf.mxu0
    %v8435 = vadd.f32 0.0, %v8434
    %v8436 = vpop.f32.mrf.mxu0
    %v8437 = vpop.f32.mrf.mxu0
    %v8438 = vpop.f32.mrf.mxu0
    %8439 = vdwg.mxu0
    %v8440 = vadd.f32 %v8378, %v8435
    %v8441 = vld [vmem:[#allocation3 + $0x70] sm:$0x3]
    %v8442 = vpack.c.bf16 %v8441, %v8441
    %v8443 = vld [vmem:[#allocation4 + $0x300] sm:$0xf]
    %v8444 = vld [vmem:[#allocation4 + $0x304] sm:$0xf]
    %v8445 = vld [vmem:[#allocation4 + $0x308] sm:$0xf]
    %v8446 = vld [vmem:[#allocation4 + $0x30c] sm:$0xf]
    %v8451 = vunpack.c.l.b16 %v8443
    %v8452 = vunpack.c.l.b16 %v8444
    %v8453 = vunpack.c.l.b16 %v8445
    %v8454 = vunpack.c.l.b16 %v8446
    %v8455 = vpack.c.b16 %v8452, %v8451
    %v8456 = vpack.c.b16 %v8454, %v8453
    %v8460 = vsel %vm5086, %v8442, 0
    %8462 = vmatprep.subr.bf16.mxu0 0
    %8463 = vmatpush1.bf16.msra.mxu0 0
    %8464 = vmatprep.subr.bf16.mxu0 0
    %8465 = vmatpush1.bf16.msra.mxu0 0
    %8466 = vmatprep.subr.bf16.mxu0 0
    %8467 = vmatpush1.bf16.msra.mxu0 0
    %8468 = vmatprep.subr.bf16.mxu0 0
    %8469 = vmatpush1.bf16.msra.mxu0 0
    %8470 = vmatprep.subr.bf16.mxu0 0
    %8471 = vmatpush1.bf16.msra.mxu0 0
    %8472 = vmatprep.subr.bf16.mxu0 0
    %8473 = vmatpush1.bf16.msra.mxu0 0
    %8474 = vmatprep.subr.bf16.mxu0 0
    %8475 = vmatpush1.bf16.msra.mxu0 %v8456
    %8476 = vmatprep.subr.bf16.mxu0 0
    %8477 = vmatpush1.bf16.msra.mxu0 %v8455
    %8478 = vmatprep.subr.bf16.mxu0 0
    %8479 = vmatpush2.bf16.msra.mxu0 0
    %8480 = vmatprep.subr.bf16.mxu0 0
    %8481 = vmatpush2.bf16.msra.mxu0 0
    %8482 = vmatprep.subr.bf16.mxu0 0
    %8483 = vmatpush2.bf16.msra.mxu0 0
    %8484 = vmatprep.subr.bf16.mxu0 0
    %8485 = vmatpush2.bf16.msra.mxu0 0
    %8486 = vmatprep.subr.bf16.mxu0 0
    %8487 = vmatpush2.bf16.msra.mxu0 0
    %8488 = vmatprep.subr.bf16.mxu0 0
    %8489 = vmatpush2.bf16.msra.mxu0 0
    %8490 = vmatprep.subr.bf16.mxu0 0
    %8491 = vmatpush2.bf16.msra.mxu0 0
    %8492 = vmatprep.subr.bf16.mxu0 0
    %8493 = vmatpush2.bf16.msra.mxu0 0
    %8494 = vmatprep.mubr.bf16.mxu0 0
    %8495 = vmatmul.mubr.bf16.gmra.mxu0 %v8460
    %v8496 = vpop.f32.mrf.mxu0
    %v8497 = vadd.f32 0.0, %v8496
    %v8498 = vpop.f32.mrf.mxu0
    %v8499 = vpop.f32.mrf.mxu0
    %v8500 = vpop.f32.mrf.mxu0
    %8501 = vdwg.mxu0
    %v8502 = vadd.f32 %v8440, %v8497
    %v8503 = vld [vmem:[#allocation3 + $0x72] sm:$0x3]
    %v8504 = vpack.c.bf16 %v8503, %v8503
    %v8505 = vld [vmem:[#allocation4 + $0x310] sm:$0xf]
    %v8506 = vld [vmem:[#allocation4 + $0x314] sm:$0xf]
    %v8507 = vld [vmem:[#allocation4 + $0x318] sm:$0xf]
    %v8508 = vld [vmem:[#allocation4 + $0x31c] sm:$0xf]
    %v8513 = vunpack.c.l.b16 %v8505
    %v8514 = vunpack.c.l.b16 %v8506
    %v8515 = vunpack.c.l.b16 %v8507
    %v8516 = vunpack.c.l.b16 %v8508
    %v8517 = vpack.c.b16 %v8514, %v8513
    %v8518 = vpack.c.b16 %v8516, %v8515
    %v8522 = vsel %vm5086, %v8504, 0
    %8524 = vmatprep.subr.bf16.mxu0 0
    %8525 = vmatpush1.bf16.msra.mxu0 0
    %8526 = vmatprep.subr.bf16.mxu0 0
    %8527 = vmatpush1.bf16.msra.mxu0 0
    %8528 = vmatprep.subr.bf16.mxu0 0
    %8529 = vmatpush1.bf16.msra.mxu0 0
    %8530 = vmatprep.subr.bf16.mxu0 0
    %8531 = vmatpush1.bf16.msra.mxu0 0
    %8532 = vmatprep.subr.bf16.mxu0 0
    %8533 = vmatpush1.bf16.msra.mxu0 0
    %8534 = vmatprep.subr.bf16.mxu0 0
    %8535 = vmatpush1.bf16.msra.mxu0 0
    %8536 = vmatprep.subr.bf16.mxu0 0
    %8537 = vmatpush1.bf16.msra.mxu0 %v8518
    %8538 = vmatprep.subr.bf16.mxu0 0
    %8539 = vmatpush1.bf16.msra.mxu0 %v8517
    %8540 = vmatprep.subr.bf16.mxu0 0
    %8541 = vmatpush2.bf16.msra.mxu0 0
    %8542 = vmatprep.subr.bf16.mxu0 0
    %8543 = vmatpush2.bf16.msra.mxu0 0
    %8544 = vmatprep.subr.bf16.mxu0 0
    %8545 = vmatpush2.bf16.msra.mxu0 0
    %8546 = vmatprep.subr.bf16.mxu0 0
    %8547 = vmatpush2.bf16.msra.mxu0 0
    %8548 = vmatprep.subr.bf16.mxu0 0
    %8549 = vmatpush2.bf16.msra.mxu0 0
    %8550 = vmatprep.subr.bf16.mxu0 0
    %8551 = vmatpush2.bf16.msra.mxu0 0
    %8552 = vmatprep.subr.bf16.mxu0 0
    %8553 = vmatpush2.bf16.msra.mxu0 0
    %8554 = vmatprep.subr.bf16.mxu0 0
    %8555 = vmatpush2.bf16.msra.mxu0 0
    %8556 = vmatprep.mubr.bf16.mxu0 0
    %8557 = vmatmul.mubr.bf16.gmra.mxu0 %v8522
    %v8558 = vpop.f32.mrf.mxu0
    %v8559 = vadd.f32 0.0, %v8558
    %v8560 = vpop.f32.mrf.mxu0
    %v8561 = vpop.f32.mrf.mxu0
    %v8562 = vpop.f32.mrf.mxu0
    %8563 = vdwg.mxu0
    %v8564 = vadd.f32 %v8502, %v8559
    %v8565 = vld [vmem:[#allocation3 + $0x74] sm:$0x3]
    %v8566 = vpack.c.bf16 %v8565, %v8565
    %v8567 = vld [vmem:[#allocation4 + $0x320] sm:$0xf]
    %v8568 = vld [vmem:[#allocation4 + $0x324] sm:$0xf]
    %v8569 = vld [vmem:[#allocation4 + $0x328] sm:$0xf]
    %v8570 = vld [vmem:[#allocation4 + $0x32c] sm:$0xf]
    %v8575 = vunpack.c.l.b16 %v8567
    %v8576 = vunpack.c.l.b16 %v8568
    %v8577 = vunpack.c.l.b16 %v8569
    %v8578 = vunpack.c.l.b16 %v8570
    %v8579 = vpack.c.b16 %v8576, %v8575
    %v8580 = vpack.c.b16 %v8578, %v8577
    %v8584 = vsel %vm5086, %v8566, 0
    %8586 = vmatprep.subr.bf16.mxu0 0
    %8587 = vmatpush1.bf16.msra.mxu0 0
    %8588 = vmatprep.subr.bf16.mxu0 0
    %8589 = vmatpush1.bf16.msra.mxu0 0
    %8590 = vmatprep.subr.bf16.mxu0 0
    %8591 = vmatpush1.bf16.msra.mxu0 0
    %8592 = vmatprep.subr.bf16.mxu0 0
    %8593 = vmatpush1.bf16.msra.mxu0 0
    %8594 = vmatprep.subr.bf16.mxu0 0
    %8595 = vmatpush1.bf16.msra.mxu0 0
    %8596 = vmatprep.subr.bf16.mxu0 0
    %8597 = vmatpush1.bf16.msra.mxu0 0
    %8598 = vmatprep.subr.bf16.mxu0 0
    %8599 = vmatpush1.bf16.msra.mxu0 %v8580
    %8600 = vmatprep.subr.bf16.mxu0 0
    %8601 = vmatpush1.bf16.msra.mxu0 %v8579
    %8602 = vmatprep.subr.bf16.mxu0 0
    %8603 = vmatpush2.bf16.msra.mxu0 0
    %8604 = vmatprep.subr.bf16.mxu0 0
    %8605 = vmatpush2.bf16.msra.mxu0 0
    %8606 = vmatprep.subr.bf16.mxu0 0
    %8607 = vmatpush2.bf16.msra.mxu0 0
    %8608 = vmatprep.subr.bf16.mxu0 0
    %8609 = vmatpush2.bf16.msra.mxu0 0
    %8610 = vmatprep.subr.bf16.mxu0 0
    %8611 = vmatpush2.bf16.msra.mxu0 0
    %8612 = vmatprep.subr.bf16.mxu0 0
    %8613 = vmatpush2.bf16.msra.mxu0 0
    %8614 = vmatprep.subr.bf16.mxu0 0
    %8615 = vmatpush2.bf16.msra.mxu0 0
    %8616 = vmatprep.subr.bf16.mxu0 0
    %8617 = vmatpush2.bf16.msra.mxu0 0
    %8618 = vmatprep.mubr.bf16.mxu0 0
    %8619 = vmatmul.mubr.bf16.gmra.mxu0 %v8584
    %v8620 = vpop.f32.mrf.mxu0
    %v8621 = vadd.f32 0.0, %v8620
    %v8622 = vpop.f32.mrf.mxu0
    %v8623 = vpop.f32.mrf.mxu0
    %v8624 = vpop.f32.mrf.mxu0
    %8625 = vdwg.mxu0
    %v8626 = vadd.f32 %v8564, %v8621
    %v8627 = vld [vmem:[#allocation3 + $0x76] sm:$0x3]
    %v8628 = vpack.c.bf16 %v8627, %v8627
    %v8629 = vld [vmem:[#allocation4 + $0x330] sm:$0xf]
    %v8630 = vld [vmem:[#allocation4 + $0x334] sm:$0xf]
    %v8631 = vld [vmem:[#allocation4 + $0x338] sm:$0xf]
    %v8632 = vld [vmem:[#allocation4 + $0x33c] sm:$0xf]
    %v8637 = vunpack.c.l.b16 %v8629
    %v8638 = vunpack.c.l.b16 %v8630
    %v8639 = vunpack.c.l.b16 %v8631
    %v8640 = vunpack.c.l.b16 %v8632
    %v8641 = vpack.c.b16 %v8638, %v8637
    %v8642 = vpack.c.b16 %v8640, %v8639
    %v8646 = vsel %vm5086, %v8628, 0
    %8648 = vmatprep.subr.bf16.mxu0 0
    %8649 = vmatpush1.bf16.msra.mxu0 0
    %8650 = vmatprep.subr.bf16.mxu0 0
    %8651 = vmatpush1.bf16.msra.mxu0 0
    %8652 = vmatprep.subr.bf16.mxu0 0
    %8653 = vmatpush1.bf16.msra.mxu0 0
    %8654 = vmatprep.subr.bf16.mxu0 0
    %8655 = vmatpush1.bf16.msra.mxu0 0
    %8656 = vmatprep.subr.bf16.mxu0 0
    %8657 = vmatpush1.bf16.msra.mxu0 0
    %8658 = vmatprep.subr.bf16.mxu0 0
    %8659 = vmatpush1.bf16.msra.mxu0 0
    %8660 = vmatprep.subr.bf16.mxu0 0
    %8661 = vmatpush1.bf16.msra.mxu0 %v8642
    %8662 = vmatprep.subr.bf16.mxu0 0
    %8663 = vmatpush1.bf16.msra.mxu0 %v8641
    %8664 = vmatprep.subr.bf16.mxu0 0
    %8665 = vmatpush2.bf16.msra.mxu0 0
    %8666 = vmatprep.subr.bf16.mxu0 0
    %8667 = vmatpush2.bf16.msra.mxu0 0
    %8668 = vmatprep.subr.bf16.mxu0 0
    %8669 = vmatpush2.bf16.msra.mxu0 0
    %8670 = vmatprep.subr.bf16.mxu0 0
    %8671 = vmatpush2.bf16.msra.mxu0 0
    %8672 = vmatprep.subr.bf16.mxu0 0
    %8673 = vmatpush2.bf16.msra.mxu0 0
    %8674 = vmatprep.subr.bf16.mxu0 0
    %8675 = vmatpush2.bf16.msra.mxu0 0
    %8676 = vmatprep.subr.bf16.mxu0 0
    %8677 = vmatpush2.bf16.msra.mxu0 0
    %8678 = vmatprep.subr.bf16.mxu0 0
    %8679 = vmatpush2.bf16.msra.mxu0 0
    %8680 = vmatprep.mubr.bf16.mxu0 0
    %8681 = vmatmul.mubr.bf16.gmra.mxu0 %v8646
    %v8682 = vpop.f32.mrf.mxu0
    %v8683 = vadd.f32 0.0, %v8682
    %v8684 = vpop.f32.mrf.mxu0
    %v8685 = vpop.f32.mrf.mxu0
    %v8686 = vpop.f32.mrf.mxu0
    %8687 = vdwg.mxu0
    %v8688 = vadd.f32 %v8626, %v8683
    %v8689 = vld [vmem:[#allocation3 + $0x78] sm:$0x3]
    %v8690 = vpack.c.bf16 %v8689, %v8689
    %v8691 = vld [vmem:[#allocation4 + $0x340] sm:$0xf]
    %v8692 = vld [vmem:[#allocation4 + $0x344] sm:$0xf]
    %v8693 = vld [vmem:[#allocation4 + $0x348] sm:$0xf]
    %v8694 = vld [vmem:[#allocation4 + $0x34c] sm:$0xf]
    %v8699 = vunpack.c.l.b16 %v8691
    %v8700 = vunpack.c.l.b16 %v8692
    %v8701 = vunpack.c.l.b16 %v8693
    %v8702 = vunpack.c.l.b16 %v8694
    %v8703 = vpack.c.b16 %v8700, %v8699
    %v8704 = vpack.c.b16 %v8702, %v8701
    %v8708 = vsel %vm5086, %v8690, 0
    %8710 = vmatprep.subr.bf16.mxu0 0
    %8711 = vmatpush1.bf16.msra.mxu0 0
    %8712 = vmatprep.subr.bf16.mxu0 0
    %8713 = vmatpush1.bf16.msra.mxu0 0
    %8714 = vmatprep.subr.bf16.mxu0 0
    %8715 = vmatpush1.bf16.msra.mxu0 0
    %8716 = vmatprep.subr.bf16.mxu0 0
    %8717 = vmatpush1.bf16.msra.mxu0 0
    %8718 = vmatprep.subr.bf16.mxu0 0
    %8719 = vmatpush1.bf16.msra.mxu0 0
    %8720 = vmatprep.subr.bf16.mxu0 0
    %8721 = vmatpush1.bf16.msra.mxu0 0
    %8722 = vmatprep.subr.bf16.mxu0 0
    %8723 = vmatpush1.bf16.msra.mxu0 %v8704
    %8724 = vmatprep.subr.bf16.mxu0 0
    %8725 = vmatpush1.bf16.msra.mxu0 %v8703
    %8726 = vmatprep.subr.bf16.mxu0 0
    %8727 = vmatpush2.bf16.msra.mxu0 0
    %8728 = vmatprep.subr.bf16.mxu0 0
    %8729 = vmatpush2.bf16.msra.mxu0 0
    %8730 = vmatprep.subr.bf16.mxu0 0
    %8731 = vmatpush2.bf16.msra.mxu0 0
    %8732 = vmatprep.subr.bf16.mxu0 0
    %8733 = vmatpush2.bf16.msra.mxu0 0
    %8734 = vmatprep.subr.bf16.mxu0 0
    %8735 = vmatpush2.bf16.msra.mxu0 0
    %8736 = vmatprep.subr.bf16.mxu0 0
    %8737 = vmatpush2.bf16.msra.mxu0 0
    %8738 = vmatprep.subr.bf16.mxu0 0
    %8739 = vmatpush2.bf16.msra.mxu0 0
    %8740 = vmatprep.subr.bf16.mxu0 0
    %8741 = vmatpush2.bf16.msra.mxu0 0
    %8742 = vmatprep.mubr.bf16.mxu0 0
    %8743 = vmatmul.mubr.bf16.gmra.mxu0 %v8708
    %v8744 = vpop.f32.mrf.mxu0
    %v8745 = vadd.f32 0.0, %v8744
    %v8746 = vpop.f32.mrf.mxu0
    %v8747 = vpop.f32.mrf.mxu0
    %v8748 = vpop.f32.mrf.mxu0
    %8749 = vdwg.mxu0
    %v8750 = vadd.f32 %v8688, %v8745
    %v8751 = vld [vmem:[#allocation3 + $0x7a] sm:$0x3]
    %v8752 = vpack.c.bf16 %v8751, %v8751
    %v8753 = vld [vmem:[#allocation4 + $0x350] sm:$0xf]
    %v8754 = vld [vmem:[#allocation4 + $0x354] sm:$0xf]
    %v8755 = vld [vmem:[#allocation4 + $0x358] sm:$0xf]
    %v8756 = vld [vmem:[#allocation4 + $0x35c] sm:$0xf]
    %v8761 = vunpack.c.l.b16 %v8753
    %v8762 = vunpack.c.l.b16 %v8754
    %v8763 = vunpack.c.l.b16 %v8755
    %v8764 = vunpack.c.l.b16 %v8756
    %v8765 = vpack.c.b16 %v8762, %v8761
    %v8766 = vpack.c.b16 %v8764, %v8763
    %v8770 = vsel %vm5086, %v8752, 0
    %8772 = vmatprep.subr.bf16.mxu0 0
    %8773 = vmatpush1.bf16.msra.mxu0 0
    %8774 = vmatprep.subr.bf16.mxu0 0
    %8775 = vmatpush1.bf16.msra.mxu0 0
    %8776 = vmatprep.subr.bf16.mxu0 0
    %8777 = vmatpush1.bf16.msra.mxu0 0
    %8778 = vmatprep.subr.bf16.mxu0 0
    %8779 = vmatpush1.bf16.msra.mxu0 0
    %8780 = vmatprep.subr.bf16.mxu0 0
    %8781 = vmatpush1.bf16.msra.mxu0 0
    %8782 = vmatprep.subr.bf16.mxu0 0
    %8783 = vmatpush1.bf16.msra.mxu0 0
    %8784 = vmatprep.subr.bf16.mxu0 0
    %8785 = vmatpush1.bf16.msra.mxu0 %v8766
    %8786 = vmatprep.subr.bf16.mxu0 0
    %8787 = vmatpush1.bf16.msra.mxu0 %v8765
    %8788 = vmatprep.subr.bf16.mxu0 0
    %8789 = vmatpush2.bf16.msra.mxu0 0
    %8790 = vmatprep.subr.bf16.mxu0 0
    %8791 = vmatpush2.bf16.msra.mxu0 0
    %8792 = vmatprep.subr.bf16.mxu0 0
    %8793 = vmatpush2.bf16.msra.mxu0 0
    %8794 = vmatprep.subr.bf16.mxu0 0
    %8795 = vmatpush2.bf16.msra.mxu0 0
    %8796 = vmatprep.subr.bf16.mxu0 0
    %8797 = vmatpush2.bf16.msra.mxu0 0
    %8798 = vmatprep.subr.bf16.mxu0 0
    %8799 = vmatpush2.bf16.msra.mxu0 0
    %8800 = vmatprep.subr.bf16.mxu0 0
    %8801 = vmatpush2.bf16.msra.mxu0 0
    %8802 = vmatprep.subr.bf16.mxu0 0
    %8803 = vmatpush2.bf16.msra.mxu0 0
    %8804 = vmatprep.mubr.bf16.mxu0 0
    %8805 = vmatmul.mubr.bf16.gmra.mxu0 %v8770
    %v8806 = vpop.f32.mrf.mxu0
    %v8807 = vadd.f32 0.0, %v8806
    %v8808 = vpop.f32.mrf.mxu0
    %v8809 = vpop.f32.mrf.mxu0
    %v8810 = vpop.f32.mrf.mxu0
    %8811 = vdwg.mxu0
    %v8812 = vadd.f32 %v8750, %v8807
    %v8813 = vld [vmem:[#allocation3 + $0x7c] sm:$0x3]
    %v8814 = vpack.c.bf16 %v8813, %v8813
    %v8815 = vld [vmem:[#allocation4 + $0x360] sm:$0xf]
    %v8816 = vld [vmem:[#allocation4 + $0x364] sm:$0xf]
    %v8817 = vld [vmem:[#allocation4 + $0x368] sm:$0xf]
    %v8818 = vld [vmem:[#allocation4 + $0x36c] sm:$0xf]
    %v8823 = vunpack.c.l.b16 %v8815
    %v8824 = vunpack.c.l.b16 %v8816
    %v8825 = vunpack.c.l.b16 %v8817
    %v8826 = vunpack.c.l.b16 %v8818
    %v8827 = vpack.c.b16 %v8824, %v8823
    %v8828 = vpack.c.b16 %v8826, %v8825
    %v8832 = vsel %vm5086, %v8814, 0
    %8834 = vmatprep.subr.bf16.mxu0 0
    %8835 = vmatpush1.bf16.msra.mxu0 0
    %8836 = vmatprep.subr.bf16.mxu0 0
    %8837 = vmatpush1.bf16.msra.mxu0 0
    %8838 = vmatprep.subr.bf16.mxu0 0
    %8839 = vmatpush1.bf16.msra.mxu0 0
    %8840 = vmatprep.subr.bf16.mxu0 0
    %8841 = vmatpush1.bf16.msra.mxu0 0
    %8842 = vmatprep.subr.bf16.mxu0 0
    %8843 = vmatpush1.bf16.msra.mxu0 0
    %8844 = vmatprep.subr.bf16.mxu0 0
    %8845 = vmatpush1.bf16.msra.mxu0 0
    %8846 = vmatprep.subr.bf16.mxu0 0
    %8847 = vmatpush1.bf16.msra.mxu0 %v8828
    %8848 = vmatprep.subr.bf16.mxu0 0
    %8849 = vmatpush1.bf16.msra.mxu0 %v8827
    %8850 = vmatprep.subr.bf16.mxu0 0
    %8851 = vmatpush2.bf16.msra.mxu0 0
    %8852 = vmatprep.subr.bf16.mxu0 0
    %8853 = vmatpush2.bf16.msra.mxu0 0
    %8854 = vmatprep.subr.bf16.mxu0 0
    %8855 = vmatpush2.bf16.msra.mxu0 0
    %8856 = vmatprep.subr.bf16.mxu0 0
    %8857 = vmatpush2.bf16.msra.mxu0 0
    %8858 = vmatprep.subr.bf16.mxu0 0
    %8859 = vmatpush2.bf16.msra.mxu0 0
    %8860 = vmatprep.subr.bf16.mxu0 0
    %8861 = vmatpush2.bf16.msra.mxu0 0
    %8862 = vmatprep.subr.bf16.mxu0 0
    %8863 = vmatpush2.bf16.msra.mxu0 0
    %8864 = vmatprep.subr.bf16.mxu0 0
    %8865 = vmatpush2.bf16.msra.mxu0 0
    %8866 = vmatprep.mubr.bf16.mxu0 0
    %8867 = vmatmul.mubr.bf16.gmra.mxu0 %v8832
    %v8868 = vpop.f32.mrf.mxu0
    %v8869 = vadd.f32 0.0, %v8868
    %v8870 = vpop.f32.mrf.mxu0
    %v8871 = vpop.f32.mrf.mxu0
    %v8872 = vpop.f32.mrf.mxu0
    %8873 = vdwg.mxu0
    %v8874 = vadd.f32 %v8812, %v8869
    %v8875 = vld [vmem:[#allocation3 + $0x7e] sm:$0x3]
    %v8876 = vpack.c.bf16 %v8875, %v8875
    %v8877 = vld [vmem:[#allocation4 + $0x370] sm:$0xf]
    %v8878 = vld [vmem:[#allocation4 + $0x374] sm:$0xf]
    %v8879 = vld [vmem:[#allocation4 + $0x378] sm:$0xf]
    %v8880 = vld [vmem:[#allocation4 + $0x37c] sm:$0xf]
    %v8885 = vunpack.c.l.b16 %v8877
    %v8886 = vunpack.c.l.b16 %v8878
    %v8887 = vunpack.c.l.b16 %v8879
    %v8888 = vunpack.c.l.b16 %v8880
    %v8889 = vpack.c.b16 %v8886, %v8885
    %v8890 = vpack.c.b16 %v8888, %v8887
    %v8894 = vsel %vm5086, %v8876, 0
    %8896 = vmatprep.subr.bf16.mxu0 0
    %8897 = vmatpush1.bf16.msra.mxu0 0
    %8898 = vmatprep.subr.bf16.mxu0 0
    %8899 = vmatpush1.bf16.msra.mxu0 0
    %8900 = vmatprep.subr.bf16.mxu0 0
    %8901 = vmatpush1.bf16.msra.mxu0 0
    %8902 = vmatprep.subr.bf16.mxu0 0
    %8903 = vmatpush1.bf16.msra.mxu0 0
    %8904 = vmatprep.subr.bf16.mxu0 0
    %8905 = vmatpush1.bf16.msra.mxu0 0
    %8906 = vmatprep.subr.bf16.mxu0 0
    %8907 = vmatpush1.bf16.msra.mxu0 0
    %8908 = vmatprep.subr.bf16.mxu0 0
    %8909 = vmatpush1.bf16.msra.mxu0 %v8890
    %8910 = vmatprep.subr.bf16.mxu0 0
    %8911 = vmatpush1.bf16.msra.mxu0 %v8889
    %8912 = vmatprep.subr.bf16.mxu0 0
    %8913 = vmatpush2.bf16.msra.mxu0 0
    %8914 = vmatprep.subr.bf16.mxu0 0
    %8915 = vmatpush2.bf16.msra.mxu0 0
    %8916 = vmatprep.subr.bf16.mxu0 0
    %8917 = vmatpush2.bf16.msra.mxu0 0
    %8918 = vmatprep.subr.bf16.mxu0 0
    %8919 = vmatpush2.bf16.msra.mxu0 0
    %8920 = vmatprep.subr.bf16.mxu0 0
    %8921 = vmatpush2.bf16.msra.mxu0 0
    %8922 = vmatprep.subr.bf16.mxu0 0
    %8923 = vmatpush2.bf16.msra.mxu0 0
    %8924 = vmatprep.subr.bf16.mxu0 0
    %8925 = vmatpush2.bf16.msra.mxu0 0
    %8926 = vmatprep.subr.bf16.mxu0 0
    %8927 = vmatpush2.bf16.msra.mxu0 0
    %8928 = vmatprep.mubr.bf16.mxu0 0
    %8929 = vmatmul.mubr.bf16.gmra.mxu0 %v8894
    %v8930 = vpop.f32.mrf.mxu0
    %v8931 = vadd.f32 0.0, %v8930
    %v8932 = vpop.f32.mrf.mxu0
    %v8933 = vpop.f32.mrf.mxu0
    %v8934 = vpop.f32.mrf.mxu0
    %8935 = vdwg.mxu0
    %v8936 = vadd.f32 %v8874, %v8931
    %v8937 = vld [vmem:[#allocation3 + $0x80] sm:$0x3]
    %v8938 = vpack.c.bf16 %v8937, %v8937
    %v8939 = vld [vmem:[#allocation4 + $0x380] sm:$0xf]
    %v8940 = vld [vmem:[#allocation4 + $0x384] sm:$0xf]
    %v8941 = vld [vmem:[#allocation4 + $0x388] sm:$0xf]
    %v8942 = vld [vmem:[#allocation4 + $0x38c] sm:$0xf]
    %v8947 = vunpack.c.l.b16 %v8939
    %v8948 = vunpack.c.l.b16 %v8940
    %v8949 = vunpack.c.l.b16 %v8941
    %v8950 = vunpack.c.l.b16 %v8942
    %v8951 = vpack.c.b16 %v8948, %v8947
    %v8952 = vpack.c.b16 %v8950, %v8949
    %v8956 = vsel %vm5086, %v8938, 0
    %8958 = vmatprep.subr.bf16.mxu0 0
    %8959 = vmatpush1.bf16.msra.mxu0 0
    %8960 = vmatprep.subr.bf16.mxu0 0
    %8961 = vmatpush1.bf16.msra.mxu0 0
    %8962 = vmatprep.subr.bf16.mxu0 0
    %8963 = vmatpush1.bf16.msra.mxu0 0
    %8964 = vmatprep.subr.bf16.mxu0 0
    %8965 = vmatpush1.bf16.msra.mxu0 0
    %8966 = vmatprep.subr.bf16.mxu0 0
    %8967 = vmatpush1.bf16.msra.mxu0 0
    %8968 = vmatprep.subr.bf16.mxu0 0
    %8969 = vmatpush1.bf16.msra.mxu0 0
    %8970 = vmatprep.subr.bf16.mxu0 0
    %8971 = vmatpush1.bf16.msra.mxu0 %v8952
    %8972 = vmatprep.subr.bf16.mxu0 0
    %8973 = vmatpush1.bf16.msra.mxu0 %v8951
    %8974 = vmatprep.subr.bf16.mxu0 0
    %8975 = vmatpush2.bf16.msra.mxu0 0
    %8976 = vmatprep.subr.bf16.mxu0 0
    %8977 = vmatpush2.bf16.msra.mxu0 0
    %8978 = vmatprep.subr.bf16.mxu0 0
    %8979 = vmatpush2.bf16.msra.mxu0 0
    %8980 = vmatprep.subr.bf16.mxu0 0
    %8981 = vmatpush2.bf16.msra.mxu0 0
    %8982 = vmatprep.subr.bf16.mxu0 0
    %8983 = vmatpush2.bf16.msra.mxu0 0
    %8984 = vmatprep.subr.bf16.mxu0 0
    %8985 = vmatpush2.bf16.msra.mxu0 0
    %8986 = vmatprep.subr.bf16.mxu0 0
    %8987 = vmatpush2.bf16.msra.mxu0 0
    %8988 = vmatprep.subr.bf16.mxu0 0
    %8989 = vmatpush2.bf16.msra.mxu0 0
    %8990 = vmatprep.mubr.bf16.mxu0 0
    %8991 = vmatmul.mubr.bf16.gmra.mxu0 %v8956
    %v8992 = vpop.f32.mrf.mxu0
    %v8993 = vadd.f32 0.0, %v8992
    %v8994 = vpop.f32.mrf.mxu0
    %v8995 = vpop.f32.mrf.mxu0
    %v8996 = vpop.f32.mrf.mxu0
    %8997 = vdwg.mxu0
    %v8998 = vadd.f32 %v8936, %v8993
    %v8999 = vld [vmem:[#allocation3 + $0x82] sm:$0x3]
    %v9000 = vpack.c.bf16 %v8999, %v8999
    %v9001 = vld [vmem:[#allocation4 + $0x390] sm:$0xf]
    %v9002 = vld [vmem:[#allocation4 + $0x394] sm:$0xf]
    %v9003 = vld [vmem:[#allocation4 + $0x398] sm:$0xf]
    %v9004 = vld [vmem:[#allocation4 + $0x39c] sm:$0xf]
    %v9009 = vunpack.c.l.b16 %v9001
    %v9010 = vunpack.c.l.b16 %v9002
    %v9011 = vunpack.c.l.b16 %v9003
    %v9012 = vunpack.c.l.b16 %v9004
    %v9013 = vpack.c.b16 %v9010, %v9009
    %v9014 = vpack.c.b16 %v9012, %v9011
    %v9018 = vsel %vm5086, %v9000, 0
    %9020 = vmatprep.subr.bf16.mxu0 0
    %9021 = vmatpush1.bf16.msra.mxu0 0
    %9022 = vmatprep.subr.bf16.mxu0 0
    %9023 = vmatpush1.bf16.msra.mxu0 0
    %9024 = vmatprep.subr.bf16.mxu0 0
    %9025 = vmatpush1.bf16.msra.mxu0 0
    %9026 = vmatprep.subr.bf16.mxu0 0
    %9027 = vmatpush1.bf16.msra.mxu0 0
    %9028 = vmatprep.subr.bf16.mxu0 0
    %9029 = vmatpush1.bf16.msra.mxu0 0
    %9030 = vmatprep.subr.bf16.mxu0 0
    %9031 = vmatpush1.bf16.msra.mxu0 0
    %9032 = vmatprep.subr.bf16.mxu0 0
    %9033 = vmatpush1.bf16.msra.mxu0 %v9014
    %9034 = vmatprep.subr.bf16.mxu0 0
    %9035 = vmatpush1.bf16.msra.mxu0 %v9013
    %9036 = vmatprep.subr.bf16.mxu0 0
    %9037 = vmatpush2.bf16.msra.mxu0 0
    %9038 = vmatprep.subr.bf16.mxu0 0
    %9039 = vmatpush2.bf16.msra.mxu0 0
    %9040 = vmatprep.subr.bf16.mxu0 0
    %9041 = vmatpush2.bf16.msra.mxu0 0
    %9042 = vmatprep.subr.bf16.mxu0 0
    %9043 = vmatpush2.bf16.msra.mxu0 0
    %9044 = vmatprep.subr.bf16.mxu0 0
    %9045 = vmatpush2.bf16.msra.mxu0 0
    %9046 = vmatprep.subr.bf16.mxu0 0
    %9047 = vmatpush2.bf16.msra.mxu0 0
    %9048 = vmatprep.subr.bf16.mxu0 0
    %9049 = vmatpush2.bf16.msra.mxu0 0
    %9050 = vmatprep.subr.bf16.mxu0 0
    %9051 = vmatpush2.bf16.msra.mxu0 0
    %9052 = vmatprep.mubr.bf16.mxu0 0
    %9053 = vmatmul.mubr.bf16.gmra.mxu0 %v9018
    %v9054 = vpop.f32.mrf.mxu0
    %v9055 = vadd.f32 0.0, %v9054
    %v9056 = vpop.f32.mrf.mxu0
    %v9057 = vpop.f32.mrf.mxu0
    %v9058 = vpop.f32.mrf.mxu0
    %9059 = vdwg.mxu0
    %v9060 = vadd.f32 %v8998, %v9055
    %v9061 = vld [vmem:[#allocation3 + $0x84] sm:$0x3]
    %v9062 = vpack.c.bf16 %v9061, %v9061
    %v9063 = vld [vmem:[#allocation4 + $0x3a0] sm:$0xf]
    %v9064 = vld [vmem:[#allocation4 + $0x3a4] sm:$0xf]
    %v9065 = vld [vmem:[#allocation4 + $0x3a8] sm:$0xf]
    %v9066 = vld [vmem:[#allocation4 + $0x3ac] sm:$0xf]
    %v9071 = vunpack.c.l.b16 %v9063
    %v9072 = vunpack.c.l.b16 %v9064
    %v9073 = vunpack.c.l.b16 %v9065
    %v9074 = vunpack.c.l.b16 %v9066
    %v9075 = vpack.c.b16 %v9072, %v9071
    %v9076 = vpack.c.b16 %v9074, %v9073
    %v9080 = vsel %vm5086, %v9062, 0
    %9082 = vmatprep.subr.bf16.mxu0 0
    %9083 = vmatpush1.bf16.msra.mxu0 0
    %9084 = vmatprep.subr.bf16.mxu0 0
    %9085 = vmatpush1.bf16.msra.mxu0 0
    %9086 = vmatprep.subr.bf16.mxu0 0
    %9087 = vmatpush1.bf16.msra.mxu0 0
    %9088 = vmatprep.subr.bf16.mxu0 0
    %9089 = vmatpush1.bf16.msra.mxu0 0
    %9090 = vmatprep.subr.bf16.mxu0 0
    %9091 = vmatpush1.bf16.msra.mxu0 0
    %9092 = vmatprep.subr.bf16.mxu0 0
    %9093 = vmatpush1.bf16.msra.mxu0 0
    %9094 = vmatprep.subr.bf16.mxu0 0
    %9095 = vmatpush1.bf16.msra.mxu0 %v9076
    %9096 = vmatprep.subr.bf16.mxu0 0
    %9097 = vmatpush1.bf16.msra.mxu0 %v9075
    %9098 = vmatprep.subr.bf16.mxu0 0
    %9099 = vmatpush2.bf16.msra.mxu0 0
    %9100 = vmatprep.subr.bf16.mxu0 0
    %9101 = vmatpush2.bf16.msra.mxu0 0
    %9102 = vmatprep.subr.bf16.mxu0 0
    %9103 = vmatpush2.bf16.msra.mxu0 0
    %9104 = vmatprep.subr.bf16.mxu0 0
    %9105 = vmatpush2.bf16.msra.mxu0 0
    %9106 = vmatprep.subr.bf16.mxu0 0
    %9107 = vmatpush2.bf16.msra.mxu0 0
    %9108 = vmatprep.subr.bf16.mxu0 0
    %9109 = vmatpush2.bf16.msra.mxu0 0
    %9110 = vmatprep.subr.bf16.mxu0 0
    %9111 = vmatpush2.bf16.msra.mxu0 0
    %9112 = vmatprep.subr.bf16.mxu0 0
    %9113 = vmatpush2.bf16.msra.mxu0 0
    %9114 = vmatprep.mubr.bf16.mxu0 0
    %9115 = vmatmul.mubr.bf16.gmra.mxu0 %v9080
    %v9116 = vpop.f32.mrf.mxu0
    %v9117 = vadd.f32 0.0, %v9116
    %v9118 = vpop.f32.mrf.mxu0
    %v9119 = vpop.f32.mrf.mxu0
    %v9120 = vpop.f32.mrf.mxu0
    %9121 = vdwg.mxu0
    %v9122 = vadd.f32 %v9060, %v9117
    %v9123 = vld [vmem:[#allocation3 + $0x86] sm:$0x3]
    %v9124 = vpack.c.bf16 %v9123, %v9123
    %v9125 = vld [vmem:[#allocation4 + $0x3b0] sm:$0xf]
    %v9126 = vld [vmem:[#allocation4 + $0x3b4] sm:$0xf]
    %v9127 = vld [vmem:[#allocation4 + $0x3b8] sm:$0xf]
    %v9128 = vld [vmem:[#allocation4 + $0x3bc] sm:$0xf]
    %v9133 = vunpack.c.l.b16 %v9125
    %v9134 = vunpack.c.l.b16 %v9126
    %v9135 = vunpack.c.l.b16 %v9127
    %v9136 = vunpack.c.l.b16 %v9128
    %v9137 = vpack.c.b16 %v9134, %v9133
    %v9138 = vpack.c.b16 %v9136, %v9135
    %v9142 = vsel %vm5086, %v9124, 0
    %9144 = vmatprep.subr.bf16.mxu0 0
    %9145 = vmatpush1.bf16.msra.mxu0 0
    %9146 = vmatprep.subr.bf16.mxu0 0
    %9147 = vmatpush1.bf16.msra.mxu0 0
    %9148 = vmatprep.subr.bf16.mxu0 0
    %9149 = vmatpush1.bf16.msra.mxu0 0
    %9150 = vmatprep.subr.bf16.mxu0 0
    %9151 = vmatpush1.bf16.msra.mxu0 0
    %9152 = vmatprep.subr.bf16.mxu0 0
    %9153 = vmatpush1.bf16.msra.mxu0 0
    %9154 = vmatprep.subr.bf16.mxu0 0
    %9155 = vmatpush1.bf16.msra.mxu0 0
    %9156 = vmatprep.subr.bf16.mxu0 0
    %9157 = vmatpush1.bf16.msra.mxu0 %v9138
    %9158 = vmatprep.subr.bf16.mxu0 0
    %9159 = vmatpush1.bf16.msra.mxu0 %v9137
    %9160 = vmatprep.subr.bf16.mxu0 0
    %9161 = vmatpush2.bf16.msra.mxu0 0
    %9162 = vmatprep.subr.bf16.mxu0 0
    %9163 = vmatpush2.bf16.msra.mxu0 0
    %9164 = vmatprep.subr.bf16.mxu0 0
    %9165 = vmatpush2.bf16.msra.mxu0 0
    %9166 = vmatprep.subr.bf16.mxu0 0
    %9167 = vmatpush2.bf16.msra.mxu0 0
    %9168 = vmatprep.subr.bf16.mxu0 0
    %9169 = vmatpush2.bf16.msra.mxu0 0
    %9170 = vmatprep.subr.bf16.mxu0 0
    %9171 = vmatpush2.bf16.msra.mxu0 0
    %9172 = vmatprep.subr.bf16.mxu0 0
    %9173 = vmatpush2.bf16.msra.mxu0 0
    %9174 = vmatprep.subr.bf16.mxu0 0
    %9175 = vmatpush2.bf16.msra.mxu0 0
    %9176 = vmatprep.mubr.bf16.mxu0 0
    %9177 = vmatmul.mubr.bf16.gmra.mxu0 %v9142
    %v9178 = vpop.f32.mrf.mxu0
    %v9179 = vadd.f32 0.0, %v9178
    %v9180 = vpop.f32.mrf.mxu0
    %v9181 = vpop.f32.mrf.mxu0
    %v9182 = vpop.f32.mrf.mxu0
    %9183 = vdwg.mxu0
    %v9184 = vadd.f32 %v9122, %v9179
    %v9185 = vld [vmem:[#allocation3 + $0x8c] sm:$0x3]
    %v9186 = vpack.c.bf16 %v9185, %v9185
    %v9187 = vld [vmem:[#allocation4 + $0x3c0] sm:$0xf]
    %v9188 = vld [vmem:[#allocation4 + $0x3c4] sm:$0xf]
    %v9189 = vld [vmem:[#allocation4 + $0x3c8] sm:$0xf]
    %v9190 = vld [vmem:[#allocation4 + $0x3cc] sm:$0xf]
    %v9195 = vunpack.c.l.b16 %v9187
    %v9196 = vunpack.c.l.b16 %v9188
    %v9197 = vunpack.c.l.b16 %v9189
    %v9198 = vunpack.c.l.b16 %v9190
    %v9199 = vpack.c.b16 %v9196, %v9195
    %v9200 = vpack.c.b16 %v9198, %v9197
    %v9204 = vsel %vm5086, %v9186, 0
    %9206 = vmatprep.subr.bf16.mxu0 0
    %9207 = vmatpush1.bf16.msra.mxu0 0
    %9208 = vmatprep.subr.bf16.mxu0 0
    %9209 = vmatpush1.bf16.msra.mxu0 0
    %9210 = vmatprep.subr.bf16.mxu0 0
    %9211 = vmatpush1.bf16.msra.mxu0 0
    %9212 = vmatprep.subr.bf16.mxu0 0
    %9213 = vmatpush1.bf16.msra.mxu0 0
    %9214 = vmatprep.subr.bf16.mxu0 0
    %9215 = vmatpush1.bf16.msra.mxu0 0
    %9216 = vmatprep.subr.bf16.mxu0 0
    %9217 = vmatpush1.bf16.msra.mxu0 0
    %9218 = vmatprep.subr.bf16.mxu0 0
    %9219 = vmatpush1.bf16.msra.mxu0 %v9200
    %9220 = vmatprep.subr.bf16.mxu0 0
    %9221 = vmatpush1.bf16.msra.mxu0 %v9199
    %9222 = vmatprep.subr.bf16.mxu0 0
    %9223 = vmatpush2.bf16.msra.mxu0 0
    %9224 = vmatprep.subr.bf16.mxu0 0
    %9225 = vmatpush2.bf16.msra.mxu0 0
    %9226 = vmatprep.subr.bf16.mxu0 0
    %9227 = vmatpush2.bf16.msra.mxu0 0
    %9228 = vmatprep.subr.bf16.mxu0 0
    %9229 = vmatpush2.bf16.msra.mxu0 0
    %9230 = vmatprep.subr.bf16.mxu0 0
    %9231 = vmatpush2.bf16.msra.mxu0 0
    %9232 = vmatprep.subr.bf16.mxu0 0
    %9233 = vmatpush2.bf16.msra.mxu0 0
    %9234 = vmatprep.subr.bf16.mxu0 0
    %9235 = vmatpush2.bf16.msra.mxu0 0
    %9236 = vmatprep.subr.bf16.mxu0 0
    %9237 = vmatpush2.bf16.msra.mxu0 0
    %9238 = vmatprep.mubr.bf16.mxu0 0
    %9239 = vmatmul.mubr.bf16.gmra.mxu0 %v9204
    %v9240 = vpop.f32.mrf.mxu0
    %v9241 = vadd.f32 0.0, %v9240
    %v9242 = vpop.f32.mrf.mxu0
    %v9243 = vpop.f32.mrf.mxu0
    %v9244 = vpop.f32.mrf.mxu0
    %9245 = vdwg.mxu0
    %v9246 = vadd.f32 %v9184, %v9241
    %v9247 = vld [vmem:[#allocation3 + $0x8e] sm:$0x3]
    %v9248 = vpack.c.bf16 %v9247, %v9247
    %v9249 = vld [vmem:[#allocation4 + $0x3d0] sm:$0xf]
    %v9250 = vld [vmem:[#allocation4 + $0x3d4] sm:$0xf]
    %v9251 = vld [vmem:[#allocation4 + $0x3d8] sm:$0xf]
    %v9252 = vld [vmem:[#allocation4 + $0x3dc] sm:$0xf]
    %v9257 = vunpack.c.l.b16 %v9249
    %v9258 = vunpack.c.l.b16 %v9250
    %v9259 = vunpack.c.l.b16 %v9251
    %v9260 = vunpack.c.l.b16 %v9252
    %v9261 = vpack.c.b16 %v9258, %v9257
    %v9262 = vpack.c.b16 %v9260, %v9259
    %v9266 = vsel %vm5086, %v9248, 0
    %9268 = vmatprep.subr.bf16.mxu0 0
    %9269 = vmatpush1.bf16.msra.mxu0 0
    %9270 = vmatprep.subr.bf16.mxu0 0
    %9271 = vmatpush1.bf16.msra.mxu0 0
    %9272 = vmatprep.subr.bf16.mxu0 0
    %9273 = vmatpush1.bf16.msra.mxu0 0
    %9274 = vmatprep.subr.bf16.mxu0 0
    %9275 = vmatpush1.bf16.msra.mxu0 0
    %9276 = vmatprep.subr.bf16.mxu0 0
    %9277 = vmatpush1.bf16.msra.mxu0 0
    %9278 = vmatprep.subr.bf16.mxu0 0
    %9279 = vmatpush1.bf16.msra.mxu0 0
    %9280 = vmatprep.subr.bf16.mxu0 0
    %9281 = vmatpush1.bf16.msra.mxu0 %v9262
    %9282 = vmatprep.subr.bf16.mxu0 0
    %9283 = vmatpush1.bf16.msra.mxu0 %v9261
    %9284 = vmatprep.subr.bf16.mxu0 0
    %9285 = vmatpush2.bf16.msra.mxu0 0
    %9286 = vmatprep.subr.bf16.mxu0 0
    %9287 = vmatpush2.bf16.msra.mxu0 0
    %9288 = vmatprep.subr.bf16.mxu0 0
    %9289 = vmatpush2.bf16.msra.mxu0 0
    %9290 = vmatprep.subr.bf16.mxu0 0
    %9291 = vmatpush2.bf16.msra.mxu0 0
    %9292 = vmatprep.subr.bf16.mxu0 0
    %9293 = vmatpush2.bf16.msra.mxu0 0
    %9294 = vmatprep.subr.bf16.mxu0 0
    %9295 = vmatpush2.bf16.msra.mxu0 0
    %9296 = vmatprep.subr.bf16.mxu0 0
    %9297 = vmatpush2.bf16.msra.mxu0 0
    %9298 = vmatprep.subr.bf16.mxu0 0
    %9299 = vmatpush2.bf16.msra.mxu0 0
    %9300 = vmatprep.mubr.bf16.mxu0 0
    %9301 = vmatmul.mubr.bf16.gmra.mxu0 %v9266
    %v9302 = vpop.f32.mrf.mxu0
    %v9303 = vadd.f32 0.0, %v9302
    %v9304 = vpop.f32.mrf.mxu0
    %v9305 = vpop.f32.mrf.mxu0
    %v9306 = vpop.f32.mrf.mxu0
    %9307 = vdwg.mxu0
    %v9308 = vadd.f32 %v9246, %v9303
    %v9309 = vld [vmem:[#allocation3 + $0x90] sm:$0x3]
    %v9310 = vpack.c.bf16 %v9309, %v9309
    %v9311 = vld [vmem:[#allocation4 + $0x3e0] sm:$0xf]
    %v9312 = vld [vmem:[#allocation4 + $0x3e4] sm:$0xf]
    %v9313 = vld [vmem:[#allocation4 + $0x3e8] sm:$0xf]
    %v9314 = vld [vmem:[#allocation4 + $0x3ec] sm:$0xf]
    %v9319 = vunpack.c.l.b16 %v9311
    %v9320 = vunpack.c.l.b16 %v9312
    %v9321 = vunpack.c.l.b16 %v9313
    %v9322 = vunpack.c.l.b16 %v9314
    %v9323 = vpack.c.b16 %v9320, %v9319
    %v9324 = vpack.c.b16 %v9322, %v9321
    %v9328 = vsel %vm5086, %v9310, 0
    %9330 = vmatprep.subr.bf16.mxu0 0
    %9331 = vmatpush1.bf16.msra.mxu0 0
    %9332 = vmatprep.subr.bf16.mxu0 0
    %9333 = vmatpush1.bf16.msra.mxu0 0
    %9334 = vmatprep.subr.bf16.mxu0 0
    %9335 = vmatpush1.bf16.msra.mxu0 0
    %9336 = vmatprep.subr.bf16.mxu0 0
    %9337 = vmatpush1.bf16.msra.mxu0 0
    %9338 = vmatprep.subr.bf16.mxu0 0
    %9339 = vmatpush1.bf16.msra.mxu0 0
    %9340 = vmatprep.subr.bf16.mxu0 0
    %9341 = vmatpush1.bf16.msra.mxu0 0
    %9342 = vmatprep.subr.bf16.mxu0 0
    %9343 = vmatpush1.bf16.msra.mxu0 %v9324
    %9344 = vmatprep.subr.bf16.mxu0 0
    %9345 = vmatpush1.bf16.msra.mxu0 %v9323
    %9346 = vmatprep.subr.bf16.mxu0 0
    %9347 = vmatpush2.bf16.msra.mxu0 0
    %9348 = vmatprep.subr.bf16.mxu0 0
    %9349 = vmatpush2.bf16.msra.mxu0 0
    %9350 = vmatprep.subr.bf16.mxu0 0
    %9351 = vmatpush2.bf16.msra.mxu0 0
    %9352 = vmatprep.subr.bf16.mxu0 0
    %9353 = vmatpush2.bf16.msra.mxu0 0
    %9354 = vmatprep.subr.bf16.mxu0 0
    %9355 = vmatpush2.bf16.msra.mxu0 0
    %9356 = vmatprep.subr.bf16.mxu0 0
    %9357 = vmatpush2.bf16.msra.mxu0 0
    %9358 = vmatprep.subr.bf16.mxu0 0
    %9359 = vmatpush2.bf16.msra.mxu0 0
    %9360 = vmatprep.subr.bf16.mxu0 0
    %9361 = vmatpush2.bf16.msra.mxu0 0
    %9362 = vmatprep.mubr.bf16.mxu0 0
    %9363 = vmatmul.mubr.bf16.gmra.mxu0 %v9328
    %v9364 = vpop.f32.mrf.mxu0
    %v9365 = vadd.f32 0.0, %v9364
    %v9366 = vpop.f32.mrf.mxu0
    %v9367 = vpop.f32.mrf.mxu0
    %v9368 = vpop.f32.mrf.mxu0
    %9369 = vdwg.mxu0
    %v9370 = vadd.f32 %v9308, %v9365
    %v9371 = vld [vmem:[#allocation3 + $0x92] sm:$0x3]
    %v9372 = vpack.c.bf16 %v9371, %v9371
    %v9373 = vld [vmem:[#allocation4 + $0x3f0] sm:$0xf]
    %v9374 = vld [vmem:[#allocation4 + $0x3f4] sm:$0xf]
    %v9375 = vld [vmem:[#allocation4 + $0x3f8] sm:$0xf]
    %v9376 = vld [vmem:[#allocation4 + $0x3fc] sm:$0xf]
    %v9381 = vunpack.c.l.b16 %v9373
    %v9382 = vunpack.c.l.b16 %v9374
    %v9383 = vunpack.c.l.b16 %v9375
    %v9384 = vunpack.c.l.b16 %v9376
    %v9385 = vpack.c.b16 %v9382, %v9381
    %v9386 = vpack.c.b16 %v9384, %v9383
    %v9390 = vsel %vm5086, %v9372, 0
    %9392 = vmatprep.subr.bf16.mxu0 0
    %9393 = vmatpush1.bf16.msra.mxu0 0
    %9394 = vmatprep.subr.bf16.mxu0 0
    %9395 = vmatpush1.bf16.msra.mxu0 0
    %9396 = vmatprep.subr.bf16.mxu0 0
    %9397 = vmatpush1.bf16.msra.mxu0 0
    %9398 = vmatprep.subr.bf16.mxu0 0
    %9399 = vmatpush1.bf16.msra.mxu0 0
    %9400 = vmatprep.subr.bf16.mxu0 0
    %9401 = vmatpush1.bf16.msra.mxu0 0
    %9402 = vmatprep.subr.bf16.mxu0 0
    %9403 = vmatpush1.bf16.msra.mxu0 0
    %9404 = vmatprep.subr.bf16.mxu0 0
    %9405 = vmatpush1.bf16.msra.mxu0 %v9386
    %9406 = vmatprep.subr.bf16.mxu0 0
    %9407 = vmatpush1.bf16.msra.mxu0 %v9385
    %9408 = vmatprep.subr.bf16.mxu0 0
    %9409 = vmatpush2.bf16.msra.mxu0 0
    %9410 = vmatprep.subr.bf16.mxu0 0
    %9411 = vmatpush2.bf16.msra.mxu0 0
    %9412 = vmatprep.subr.bf16.mxu0 0
    %9413 = vmatpush2.bf16.msra.mxu0 0
    %9414 = vmatprep.subr.bf16.mxu0 0
    %9415 = vmatpush2.bf16.msra.mxu0 0
    %9416 = vmatprep.subr.bf16.mxu0 0
    %9417 = vmatpush2.bf16.msra.mxu0 0
    %9418 = vmatprep.subr.bf16.mxu0 0
    %9419 = vmatpush2.bf16.msra.mxu0 0
    %9420 = vmatprep.subr.bf16.mxu0 0
    %9421 = vmatpush2.bf16.msra.mxu0 0
    %9422 = vmatprep.subr.bf16.mxu0 0
    %9423 = vmatpush2.bf16.msra.mxu0 0
    %9424 = vmatprep.mubr.bf16.mxu0 0
    %9425 = vmatmul.mubr.bf16.gmra.mxu0 %v9390
    %v9426 = vpop.f32.mrf.mxu0
    %v9427 = vadd.f32 0.0, %v9426
    %v9428 = vpop.f32.mrf.mxu0
    %v9429 = vpop.f32.mrf.mxu0
    %v9430 = vpop.f32.mrf.mxu0
    %9431 = vdwg.mxu0
    %v9432 = vadd.f32 %v9370, %v9427
    %v9433 = vld [vmem:[#allocation3 + $0x94] sm:$0x3]
    %v9434 = vpack.c.bf16 %v9433, %v9433
    %v9435 = vld [vmem:[#allocation4 + $0x400] sm:$0xf]
    %v9436 = vld [vmem:[#allocation4 + $0x404] sm:$0xf]
    %v9437 = vld [vmem:[#allocation4 + $0x408] sm:$0xf]
    %v9438 = vld [vmem:[#allocation4 + $0x40c] sm:$0xf]
    %v9443 = vunpack.c.l.b16 %v9435
    %v9444 = vunpack.c.l.b16 %v9436
    %v9445 = vunpack.c.l.b16 %v9437
    %v9446 = vunpack.c.l.b16 %v9438
    %v9447 = vpack.c.b16 %v9444, %v9443
    %v9448 = vpack.c.b16 %v9446, %v9445
    %v9452 = vsel %vm5086, %v9434, 0
    %9454 = vmatprep.subr.bf16.mxu0 0
    %9455 = vmatpush1.bf16.msra.mxu0 0
    %9456 = vmatprep.subr.bf16.mxu0 0
    %9457 = vmatpush1.bf16.msra.mxu0 0
    %9458 = vmatprep.subr.bf16.mxu0 0
    %9459 = vmatpush1.bf16.msra.mxu0 0
    %9460 = vmatprep.subr.bf16.mxu0 0
    %9461 = vmatpush1.bf16.msra.mxu0 0
    %9462 = vmatprep.subr.bf16.mxu0 0
    %9463 = vmatpush1.bf16.msra.mxu0 0
    %9464 = vmatprep.subr.bf16.mxu0 0
    %9465 = vmatpush1.bf16.msra.mxu0 0
    %9466 = vmatprep.subr.bf16.mxu0 0
    %9467 = vmatpush1.bf16.msra.mxu0 %v9448
    %9468 = vmatprep.subr.bf16.mxu0 0
    %9469 = vmatpush1.bf16.msra.mxu0 %v9447
    %9470 = vmatprep.subr.bf16.mxu0 0
    %9471 = vmatpush2.bf16.msra.mxu0 0
    %9472 = vmatprep.subr.bf16.mxu0 0
    %9473 = vmatpush2.bf16.msra.mxu0 0
    %9474 = vmatprep.subr.bf16.mxu0 0
    %9475 = vmatpush2.bf16.msra.mxu0 0
    %9476 = vmatprep.subr.bf16.mxu0 0
    %9477 = vmatpush2.bf16.msra.mxu0 0
    %9478 = vmatprep.subr.bf16.mxu0 0
    %9479 = vmatpush2.bf16.msra.mxu0 0
    %9480 = vmatprep.subr.bf16.mxu0 0
    %9481 = vmatpush2.bf16.msra.mxu0 0
    %9482 = vmatprep.subr.bf16.mxu0 0
    %9483 = vmatpush2.bf16.msra.mxu0 0
    %9484 = vmatprep.subr.bf16.mxu0 0
    %9485 = vmatpush2.bf16.msra.mxu0 0
    %9486 = vmatprep.mubr.bf16.mxu0 0
    %9487 = vmatmul.mubr.bf16.gmra.mxu0 %v9452
    %v9488 = vpop.f32.mrf.mxu0
    %v9489 = vadd.f32 0.0, %v9488
    %v9490 = vpop.f32.mrf.mxu0
    %v9491 = vpop.f32.mrf.mxu0
    %v9492 = vpop.f32.mrf.mxu0
    %9493 = vdwg.mxu0
    %v9494 = vadd.f32 %v9432, %v9489
    %v9495 = vld [vmem:[#allocation3 + $0x96] sm:$0x3]
    %v9496 = vpack.c.bf16 %v9495, %v9495
    %v9497 = vld [vmem:[#allocation4 + $0x410] sm:$0xf]
    %v9498 = vld [vmem:[#allocation4 + $0x414] sm:$0xf]
    %v9499 = vld [vmem:[#allocation4 + $0x418] sm:$0xf]
    %v9500 = vld [vmem:[#allocation4 + $0x41c] sm:$0xf]
    %v9505 = vunpack.c.l.b16 %v9497
    %v9506 = vunpack.c.l.b16 %v9498
    %v9507 = vunpack.c.l.b16 %v9499
    %v9508 = vunpack.c.l.b16 %v9500
    %v9509 = vpack.c.b16 %v9506, %v9505
    %v9510 = vpack.c.b16 %v9508, %v9507
    %v9514 = vsel %vm5086, %v9496, 0
    %9516 = vmatprep.subr.bf16.mxu0 0
    %9517 = vmatpush1.bf16.msra.mxu0 0
    %9518 = vmatprep.subr.bf16.mxu0 0
    %9519 = vmatpush1.bf16.msra.mxu0 0
    %9520 = vmatprep.subr.bf16.mxu0 0
    %9521 = vmatpush1.bf16.msra.mxu0 0
    %9522 = vmatprep.subr.bf16.mxu0 0
    %9523 = vmatpush1.bf16.msra.mxu0 0
    %9524 = vmatprep.subr.bf16.mxu0 0
    %9525 = vmatpush1.bf16.msra.mxu0 0
    %9526 = vmatprep.subr.bf16.mxu0 0
    %9527 = vmatpush1.bf16.msra.mxu0 0
    %9528 = vmatprep.subr.bf16.mxu0 0
    %9529 = vmatpush1.bf16.msra.mxu0 %v9510
    %9530 = vmatprep.subr.bf16.mxu0 0
    %9531 = vmatpush1.bf16.msra.mxu0 %v9509
    %9532 = vmatprep.subr.bf16.mxu0 0
    %9533 = vmatpush2.bf16.msra.mxu0 0
    %9534 = vmatprep.subr.bf16.mxu0 0
    %9535 = vmatpush2.bf16.msra.mxu0 0
    %9536 = vmatprep.subr.bf16.mxu0 0
    %9537 = vmatpush2.bf16.msra.mxu0 0
    %9538 = vmatprep.subr.bf16.mxu0 0
    %9539 = vmatpush2.bf16.msra.mxu0 0
    %9540 = vmatprep.subr.bf16.mxu0 0
    %9541 = vmatpush2.bf16.msra.mxu0 0
    %9542 = vmatprep.subr.bf16.mxu0 0
    %9543 = vmatpush2.bf16.msra.mxu0 0
    %9544 = vmatprep.subr.bf16.mxu0 0
    %9545 = vmatpush2.bf16.msra.mxu0 0
    %9546 = vmatprep.subr.bf16.mxu0 0
    %9547 = vmatpush2.bf16.msra.mxu0 0
    %9548 = vmatprep.mubr.bf16.mxu0 0
    %9549 = vmatmul.mubr.bf16.gmra.mxu0 %v9514
    %v9550 = vpop.f32.mrf.mxu0
    %v9551 = vadd.f32 0.0, %v9550
    %v9552 = vpop.f32.mrf.mxu0
    %v9553 = vpop.f32.mrf.mxu0
    %v9554 = vpop.f32.mrf.mxu0
    %9555 = vdwg.mxu0
    %v9556 = vadd.f32 %v9494, %v9551
    %v9557 = vld [vmem:[#allocation3 + $0x98] sm:$0x3]
    %v9558 = vpack.c.bf16 %v9557, %v9557
    %v9559 = vld [vmem:[#allocation4 + $0x420] sm:$0xf]
    %v9560 = vld [vmem:[#allocation4 + $0x424] sm:$0xf]
    %v9561 = vld [vmem:[#allocation4 + $0x428] sm:$0xf]
    %v9562 = vld [vmem:[#allocation4 + $0x42c] sm:$0xf]
    %v9567 = vunpack.c.l.b16 %v9559
    %v9568 = vunpack.c.l.b16 %v9560
    %v9569 = vunpack.c.l.b16 %v9561
    %v9570 = vunpack.c.l.b16 %v9562
    %v9571 = vpack.c.b16 %v9568, %v9567
    %v9572 = vpack.c.b16 %v9570, %v9569
    %v9576 = vsel %vm5086, %v9558, 0
    %9578 = vmatprep.subr.bf16.mxu0 0
    %9579 = vmatpush1.bf16.msra.mxu0 0
    %9580 = vmatprep.subr.bf16.mxu0 0
    %9581 = vmatpush1.bf16.msra.mxu0 0
    %9582 = vmatprep.subr.bf16.mxu0 0
    %9583 = vmatpush1.bf16.msra.mxu0 0
    %9584 = vmatprep.subr.bf16.mxu0 0
    %9585 = vmatpush1.bf16.msra.mxu0 0
    %9586 = vmatprep.subr.bf16.mxu0 0
    %9587 = vmatpush1.bf16.msra.mxu0 0
    %9588 = vmatprep.subr.bf16.mxu0 0
    %9589 = vmatpush1.bf16.msra.mxu0 0
    %9590 = vmatprep.subr.bf16.mxu0 0
    %9591 = vmatpush1.bf16.msra.mxu0 %v9572
    %9592 = vmatprep.subr.bf16.mxu0 0
    %9593 = vmatpush1.bf16.msra.mxu0 %v9571
    %9594 = vmatprep.subr.bf16.mxu0 0
    %9595 = vmatpush2.bf16.msra.mxu0 0
    %9596 = vmatprep.subr.bf16.mxu0 0
    %9597 = vmatpush2.bf16.msra.mxu0 0
    %9598 = vmatprep.subr.bf16.mxu0 0
    %9599 = vmatpush2.bf16.msra.mxu0 0
    %9600 = vmatprep.subr.bf16.mxu0 0
    %9601 = vmatpush2.bf16.msra.mxu0 0
    %9602 = vmatprep.subr.bf16.mxu0 0
    %9603 = vmatpush2.bf16.msra.mxu0 0
    %9604 = vmatprep.subr.bf16.mxu0 0
    %9605 = vmatpush2.bf16.msra.mxu0 0
    %9606 = vmatprep.subr.bf16.mxu0 0
    %9607 = vmatpush2.bf16.msra.mxu0 0
    %9608 = vmatprep.subr.bf16.mxu0 0
    %9609 = vmatpush2.bf16.msra.mxu0 0
    %9610 = vmatprep.mubr.bf16.mxu0 0
    %9611 = vmatmul.mubr.bf16.gmra.mxu0 %v9576
    %v9612 = vpop.f32.mrf.mxu0
    %v9613 = vadd.f32 0.0, %v9612
    %v9614 = vpop.f32.mrf.mxu0
    %v9615 = vpop.f32.mrf.mxu0
    %v9616 = vpop.f32.mrf.mxu0
    %9617 = vdwg.mxu0
    %v9618 = vadd.f32 %v9556, %v9613
    %v9619 = vld [vmem:[#allocation3 + $0x9a] sm:$0x3]
    %v9620 = vpack.c.bf16 %v9619, %v9619
    %v9621 = vld [vmem:[#allocation4 + $0x430] sm:$0xf]
    %v9622 = vld [vmem:[#allocation4 + $0x434] sm:$0xf]
    %v9623 = vld [vmem:[#allocation4 + $0x438] sm:$0xf]
    %v9624 = vld [vmem:[#allocation4 + $0x43c] sm:$0xf]
    %v9629 = vunpack.c.l.b16 %v9621
    %v9630 = vunpack.c.l.b16 %v9622
    %v9631 = vunpack.c.l.b16 %v9623
    %v9632 = vunpack.c.l.b16 %v9624
    %v9633 = vpack.c.b16 %v9630, %v9629
    %v9634 = vpack.c.b16 %v9632, %v9631
    %v9638 = vsel %vm5086, %v9620, 0
    %9640 = vmatprep.subr.bf16.mxu0 0
    %9641 = vmatpush1.bf16.msra.mxu0 0
    %9642 = vmatprep.subr.bf16.mxu0 0
    %9643 = vmatpush1.bf16.msra.mxu0 0
    %9644 = vmatprep.subr.bf16.mxu0 0
    %9645 = vmatpush1.bf16.msra.mxu0 0
    %9646 = vmatprep.subr.bf16.mxu0 0
    %9647 = vmatpush1.bf16.msra.mxu0 0
    %9648 = vmatprep.subr.bf16.mxu0 0
    %9649 = vmatpush1.bf16.msra.mxu0 0
    %9650 = vmatprep.subr.bf16.mxu0 0
    %9651 = vmatpush1.bf16.msra.mxu0 0
    %9652 = vmatprep.subr.bf16.mxu0 0
    %9653 = vmatpush1.bf16.msra.mxu0 %v9634
    %9654 = vmatprep.subr.bf16.mxu0 0
    %9655 = vmatpush1.bf16.msra.mxu0 %v9633
    %9656 = vmatprep.subr.bf16.mxu0 0
    %9657 = vmatpush2.bf16.msra.mxu0 0
    %9658 = vmatprep.subr.bf16.mxu0 0
    %9659 = vmatpush2.bf16.msra.mxu0 0
    %9660 = vmatprep.subr.bf16.mxu0 0
    %9661 = vmatpush2.bf16.msra.mxu0 0
    %9662 = vmatprep.subr.bf16.mxu0 0
    %9663 = vmatpush2.bf16.msra.mxu0 0
    %9664 = vmatprep.subr.bf16.mxu0 0
    %9665 = vmatpush2.bf16.msra.mxu0 0
    %9666 = vmatprep.subr.bf16.mxu0 0
    %9667 = vmatpush2.bf16.msra.mxu0 0
    %9668 = vmatprep.subr.bf16.mxu0 0
    %9669 = vmatpush2.bf16.msra.mxu0 0
    %9670 = vmatprep.subr.bf16.mxu0 0
    %9671 = vmatpush2.bf16.msra.mxu0 0
    %9672 = vmatprep.mubr.bf16.mxu0 0
    %9673 = vmatmul.mubr.bf16.gmra.mxu0 %v9638
    %v9674 = vpop.f32.mrf.mxu0
    %v9675 = vadd.f32 0.0, %v9674
    %v9676 = vpop.f32.mrf.mxu0
    %v9677 = vpop.f32.mrf.mxu0
    %v9678 = vpop.f32.mrf.mxu0
    %9679 = vdwg.mxu0
    %v9680 = vadd.f32 %v9618, %v9675
    %v9681 = vld [vmem:[#allocation3 + $0x9c] sm:$0x3]
    %v9682 = vpack.c.bf16 %v9681, %v9681
    %v9683 = vld [vmem:[#allocation4 + $0x440] sm:$0xf]
    %v9684 = vld [vmem:[#allocation4 + $0x444] sm:$0xf]
    %v9685 = vld [vmem:[#allocation4 + $0x448] sm:$0xf]
    %v9686 = vld [vmem:[#allocation4 + $0x44c] sm:$0xf]
    %v9691 = vunpack.c.l.b16 %v9683
    %v9692 = vunpack.c.l.b16 %v9684
    %v9693 = vunpack.c.l.b16 %v9685
    %v9694 = vunpack.c.l.b16 %v9686
    %v9695 = vpack.c.b16 %v9692, %v9691
    %v9696 = vpack.c.b16 %v9694, %v9693
    %v9700 = vsel %vm5086, %v9682, 0
    %9702 = vmatprep.subr.bf16.mxu0 0
    %9703 = vmatpush1.bf16.msra.mxu0 0
    %9704 = vmatprep.subr.bf16.mxu0 0
    %9705 = vmatpush1.bf16.msra.mxu0 0
    %9706 = vmatprep.subr.bf16.mxu0 0
    %9707 = vmatpush1.bf16.msra.mxu0 0
    %9708 = vmatprep.subr.bf16.mxu0 0
    %9709 = vmatpush1.bf16.msra.mxu0 0
    %9710 = vmatprep.subr.bf16.mxu0 0
    %9711 = vmatpush1.bf16.msra.mxu0 0
    %9712 = vmatprep.subr.bf16.mxu0 0
    %9713 = vmatpush1.bf16.msra.mxu0 0
    %9714 = vmatprep.subr.bf16.mxu0 0
    %9715 = vmatpush1.bf16.msra.mxu0 %v9696
    %9716 = vmatprep.subr.bf16.mxu0 0
    %9717 = vmatpush1.bf16.msra.mxu0 %v9695
    %9718 = vmatprep.subr.bf16.mxu0 0
    %9719 = vmatpush2.bf16.msra.mxu0 0
    %9720 = vmatprep.subr.bf16.mxu0 0
    %9721 = vmatpush2.bf16.msra.mxu0 0
    %9722 = vmatprep.subr.bf16.mxu0 0
    %9723 = vmatpush2.bf16.msra.mxu0 0
    %9724 = vmatprep.subr.bf16.mxu0 0
    %9725 = vmatpush2.bf16.msra.mxu0 0
    %9726 = vmatprep.subr.bf16.mxu0 0
    %9727 = vmatpush2.bf16.msra.mxu0 0
    %9728 = vmatprep.subr.bf16.mxu0 0
    %9729 = vmatpush2.bf16.msra.mxu0 0
    %9730 = vmatprep.subr.bf16.mxu0 0
    %9731 = vmatpush2.bf16.msra.mxu0 0
    %9732 = vmatprep.subr.bf16.mxu0 0
    %9733 = vmatpush2.bf16.msra.mxu0 0
    %9734 = vmatprep.mubr.bf16.mxu0 0
    %9735 = vmatmul.mubr.bf16.gmra.mxu0 %v9700
    %v9736 = vpop.f32.mrf.mxu0
    %v9737 = vadd.f32 0.0, %v9736
    %v9738 = vpop.f32.mrf.mxu0
    %v9739 = vpop.f32.mrf.mxu0
    %v9740 = vpop.f32.mrf.mxu0
    %9741 = vdwg.mxu0
    %v9742 = vadd.f32 %v9680, %v9737
    %v9743 = vld [vmem:[#allocation3 + $0x9e] sm:$0x3]
    %v9744 = vpack.c.bf16 %v9743, %v9743
    %v9745 = vld [vmem:[#allocation4 + $0x450] sm:$0xf]
    %v9746 = vld [vmem:[#allocation4 + $0x454] sm:$0xf]
    %v9747 = vld [vmem:[#allocation4 + $0x458] sm:$0xf]
    %v9748 = vld [vmem:[#allocation4 + $0x45c] sm:$0xf]
    %v9753 = vunpack.c.l.b16 %v9745
    %v9754 = vunpack.c.l.b16 %v9746
    %v9755 = vunpack.c.l.b16 %v9747
    %v9756 = vunpack.c.l.b16 %v9748
    %v9757 = vpack.c.b16 %v9754, %v9753
    %v9758 = vpack.c.b16 %v9756, %v9755
    %v9762 = vsel %vm5086, %v9744, 0
    %9764 = vmatprep.subr.bf16.mxu0 0
    %9765 = vmatpush1.bf16.msra.mxu0 0
    %9766 = vmatprep.subr.bf16.mxu0 0
    %9767 = vmatpush1.bf16.msra.mxu0 0
    %9768 = vmatprep.subr.bf16.mxu0 0
    %9769 = vmatpush1.bf16.msra.mxu0 0
    %9770 = vmatprep.subr.bf16.mxu0 0
    %9771 = vmatpush1.bf16.msra.mxu0 0
    %9772 = vmatprep.subr.bf16.mxu0 0
    %9773 = vmatpush1.bf16.msra.mxu0 0
    %9774 = vmatprep.subr.bf16.mxu0 0
    %9775 = vmatpush1.bf16.msra.mxu0 0
    %9776 = vmatprep.subr.bf16.mxu0 0
    %9777 = vmatpush1.bf16.msra.mxu0 %v9758
    %9778 = vmatprep.subr.bf16.mxu0 0
    %9779 = vmatpush1.bf16.msra.mxu0 %v9757
    %9780 = vmatprep.subr.bf16.mxu0 0
    %9781 = vmatpush2.bf16.msra.mxu0 0
    %9782 = vmatprep.subr.bf16.mxu0 0
    %9783 = vmatpush2.bf16.msra.mxu0 0
    %9784 = vmatprep.subr.bf16.mxu0 0
    %9785 = vmatpush2.bf16.msra.mxu0 0
    %9786 = vmatprep.subr.bf16.mxu0 0
    %9787 = vmatpush2.bf16.msra.mxu0 0
    %9788 = vmatprep.subr.bf16.mxu0 0
    %9789 = vmatpush2.bf16.msra.mxu0 0
    %9790 = vmatprep.subr.bf16.mxu0 0
    %9791 = vmatpush2.bf16.msra.mxu0 0
    %9792 = vmatprep.subr.bf16.mxu0 0
    %9793 = vmatpush2.bf16.msra.mxu0 0
    %9794 = vmatprep.subr.bf16.mxu0 0
    %9795 = vmatpush2.bf16.msra.mxu0 0
    %9796 = vmatprep.mubr.bf16.mxu0 0
    %9797 = vmatmul.mubr.bf16.gmra.mxu0 %v9762
    %v9798 = vpop.f32.mrf.mxu0
    %v9799 = vadd.f32 0.0, %v9798
    %v9800 = vpop.f32.mrf.mxu0
    %v9801 = vpop.f32.mrf.mxu0
    %v9802 = vpop.f32.mrf.mxu0
    %9803 = vdwg.mxu0
    %v9804 = vadd.f32 %v9742, %v9799
    %v9805 = vld [vmem:[#allocation3 + $0xa0] sm:$0x3]
    %v9806 = vpack.c.bf16 %v9805, %v9805
    %v9807 = vld [vmem:[#allocation4 + $0x460] sm:$0xf]
    %v9808 = vld [vmem:[#allocation4 + $0x464] sm:$0xf]
    %v9809 = vld [vmem:[#allocation4 + $0x468] sm:$0xf]
    %v9810 = vld [vmem:[#allocation4 + $0x46c] sm:$0xf]
    %v9815 = vunpack.c.l.b16 %v9807
    %v9816 = vunpack.c.l.b16 %v9808
    %v9817 = vunpack.c.l.b16 %v9809
    %v9818 = vunpack.c.l.b16 %v9810
    %v9819 = vpack.c.b16 %v9816, %v9815
    %v9820 = vpack.c.b16 %v9818, %v9817
    %v9824 = vsel %vm5086, %v9806, 0
    %9826 = vmatprep.subr.bf16.mxu0 0
    %9827 = vmatpush1.bf16.msra.mxu0 0
    %9828 = vmatprep.subr.bf16.mxu0 0
    %9829 = vmatpush1.bf16.msra.mxu0 0
    %9830 = vmatprep.subr.bf16.mxu0 0
    %9831 = vmatpush1.bf16.msra.mxu0 0
    %9832 = vmatprep.subr.bf16.mxu0 0
    %9833 = vmatpush1.bf16.msra.mxu0 0
    %9834 = vmatprep.subr.bf16.mxu0 0
    %9835 = vmatpush1.bf16.msra.mxu0 0
    %9836 = vmatprep.subr.bf16.mxu0 0
    %9837 = vmatpush1.bf16.msra.mxu0 0
    %9838 = vmatprep.subr.bf16.mxu0 0
    %9839 = vmatpush1.bf16.msra.mxu0 %v9820
    %9840 = vmatprep.subr.bf16.mxu0 0
    %9841 = vmatpush1.bf16.msra.mxu0 %v9819
    %9842 = vmatprep.subr.bf16.mxu0 0
    %9843 = vmatpush2.bf16.msra.mxu0 0
    %9844 = vmatprep.subr.bf16.mxu0 0
    %9845 = vmatpush2.bf16.msra.mxu0 0
    %9846 = vmatprep.subr.bf16.mxu0 0
    %9847 = vmatpush2.bf16.msra.mxu0 0
    %9848 = vmatprep.subr.bf16.mxu0 0
    %9849 = vmatpush2.bf16.msra.mxu0 0
    %9850 = vmatprep.subr.bf16.mxu0 0
    %9851 = vmatpush2.bf16.msra.mxu0 0
    %9852 = vmatprep.subr.bf16.mxu0 0
    %9853 = vmatpush2.bf16.msra.mxu0 0
    %9854 = vmatprep.subr.bf16.mxu0 0
    %9855 = vmatpush2.bf16.msra.mxu0 0
    %9856 = vmatprep.subr.bf16.mxu0 0
    %9857 = vmatpush2.bf16.msra.mxu0 0
    %9858 = vmatprep.mubr.bf16.mxu0 0
    %9859 = vmatmul.mubr.bf16.gmra.mxu0 %v9824
    %v9860 = vpop.f32.mrf.mxu0
    %v9861 = vadd.f32 0.0, %v9860
    %v9862 = vpop.f32.mrf.mxu0
    %v9863 = vpop.f32.mrf.mxu0
    %v9864 = vpop.f32.mrf.mxu0
    %9865 = vdwg.mxu0
    %v9866 = vadd.f32 %v9804, %v9861
    %v9867 = vld [vmem:[#allocation3 + $0xa2] sm:$0x3]
    %v9868 = vpack.c.bf16 %v9867, %v9867
    %v9869 = vld [vmem:[#allocation4 + $0x470] sm:$0xf]
    %v9870 = vld [vmem:[#allocation4 + $0x474] sm:$0xf]
    %v9871 = vld [vmem:[#allocation4 + $0x478] sm:$0xf]
    %v9872 = vld [vmem:[#allocation4 + $0x47c] sm:$0xf]
    %v9877 = vunpack.c.l.b16 %v9869
    %v9878 = vunpack.c.l.b16 %v9870
    %v9879 = vunpack.c.l.b16 %v9871
    %v9880 = vunpack.c.l.b16 %v9872
    %v9881 = vpack.c.b16 %v9878, %v9877
    %v9882 = vpack.c.b16 %v9880, %v9879
    %v9886 = vsel %vm5086, %v9868, 0
    %9888 = vmatprep.subr.bf16.mxu0 0
    %9889 = vmatpush1.bf16.msra.mxu0 0
    %9890 = vmatprep.subr.bf16.mxu0 0
    %9891 = vmatpush1.bf16.msra.mxu0 0
    %9892 = vmatprep.subr.bf16.mxu0 0
    %9893 = vmatpush1.bf16.msra.mxu0 0
    %9894 = vmatprep.subr.bf16.mxu0 0
    %9895 = vmatpush1.bf16.msra.mxu0 0
    %9896 = vmatprep.subr.bf16.mxu0 0
    %9897 = vmatpush1.bf16.msra.mxu0 0
    %9898 = vmatprep.subr.bf16.mxu0 0
    %9899 = vmatpush1.bf16.msra.mxu0 0
    %9900 = vmatprep.subr.bf16.mxu0 0
    %9901 = vmatpush1.bf16.msra.mxu0 %v9882
    %9902 = vmatprep.subr.bf16.mxu0 0
    %9903 = vmatpush1.bf16.msra.mxu0 %v9881
    %9904 = vmatprep.subr.bf16.mxu0 0
    %9905 = vmatpush2.bf16.msra.mxu0 0
    %9906 = vmatprep.subr.bf16.mxu0 0
    %9907 = vmatpush2.bf16.msra.mxu0 0
    %9908 = vmatprep.subr.bf16.mxu0 0
    %9909 = vmatpush2.bf16.msra.mxu0 0
    %9910 = vmatprep.subr.bf16.mxu0 0
    %9911 = vmatpush2.bf16.msra.mxu0 0
    %9912 = vmatprep.subr.bf16.mxu0 0
    %9913 = vmatpush2.bf16.msra.mxu0 0
    %9914 = vmatprep.subr.bf16.mxu0 0
    %9915 = vmatpush2.bf16.msra.mxu0 0
    %9916 = vmatprep.subr.bf16.mxu0 0
    %9917 = vmatpush2.bf16.msra.mxu0 0
    %9918 = vmatprep.subr.bf16.mxu0 0
    %9919 = vmatpush2.bf16.msra.mxu0 0
    %9920 = vmatprep.mubr.bf16.mxu0 0
    %9921 = vmatmul.mubr.bf16.gmra.mxu0 %v9886
    %v9922 = vpop.f32.mrf.mxu0
    %v9923 = vadd.f32 0.0, %v9922
    %v9924 = vpop.f32.mrf.mxu0
    %v9925 = vpop.f32.mrf.mxu0
    %v9926 = vpop.f32.mrf.mxu0
    %9927 = vdwg.mxu0
    %v9928 = vadd.f32 %v9866, %v9923
    %v9929 = vld [vmem:[#allocation3 + $0xa8] sm:$0x3]
    %v9930 = vpack.c.bf16 %v9929, %v9929
    %v9931 = vld [vmem:[#allocation4 + $0x480] sm:$0xf]
    %v9932 = vld [vmem:[#allocation4 + $0x484] sm:$0xf]
    %v9933 = vld [vmem:[#allocation4 + $0x488] sm:$0xf]
    %v9934 = vld [vmem:[#allocation4 + $0x48c] sm:$0xf]
    %v9939 = vunpack.c.l.b16 %v9931
    %v9940 = vunpack.c.l.b16 %v9932
    %v9941 = vunpack.c.l.b16 %v9933
    %v9942 = vunpack.c.l.b16 %v9934
    %v9943 = vpack.c.b16 %v9940, %v9939
    %v9944 = vpack.c.b16 %v9942, %v9941
    %v9948 = vsel %vm5086, %v9930, 0
    %9950 = vmatprep.subr.bf16.mxu0 0
    %9951 = vmatpush1.bf16.msra.mxu0 0
    %9952 = vmatprep.subr.bf16.mxu0 0
    %9953 = vmatpush1.bf16.msra.mxu0 0
    %9954 = vmatprep.subr.bf16.mxu0 0
    %9955 = vmatpush1.bf16.msra.mxu0 0
    %9956 = vmatprep.subr.bf16.mxu0 0
    %9957 = vmatpush1.bf16.msra.mxu0 0
    %9958 = vmatprep.subr.bf16.mxu0 0
    %9959 = vmatpush1.bf16.msra.mxu0 0
    %9960 = vmatprep.subr.bf16.mxu0 0
    %9961 = vmatpush1.bf16.msra.mxu0 0
    %9962 = vmatprep.subr.bf16.mxu0 0
    %9963 = vmatpush1.bf16.msra.mxu0 %v9944
    %9964 = vmatprep.subr.bf16.mxu0 0
    %9965 = vmatpush1.bf16.msra.mxu0 %v9943
    %9966 = vmatprep.subr.bf16.mxu0 0
    %9967 = vmatpush2.bf16.msra.mxu0 0
    %9968 = vmatprep.subr.bf16.mxu0 0
    %9969 = vmatpush2.bf16.msra.mxu0 0
    %9970 = vmatprep.subr.bf16.mxu0 0
    %9971 = vmatpush2.bf16.msra.mxu0 0
    %9972 = vmatprep.subr.bf16.mxu0 0
    %9973 = vmatpush2.bf16.msra.mxu0 0
    %9974 = vmatprep.subr.bf16.mxu0 0
    %9975 = vmatpush2.bf16.msra.mxu0 0
    %9976 = vmatprep.subr.bf16.mxu0 0
    %9977 = vmatpush2.bf16.msra.mxu0 0
    %9978 = vmatprep.subr.bf16.mxu0 0
    %9979 = vmatpush2.bf16.msra.mxu0 0
    %9980 = vmatprep.subr.bf16.mxu0 0
    %9981 = vmatpush2.bf16.msra.mxu0 0
    %9982 = vmatprep.mubr.bf16.mxu0 0
    %9983 = vmatmul.mubr.bf16.gmra.mxu0 %v9948
    %v9984 = vpop.f32.mrf.mxu0
    %v9985 = vadd.f32 0.0, %v9984
    %v9986 = vpop.f32.mrf.mxu0
    %v9987 = vpop.f32.mrf.mxu0
    %v9988 = vpop.f32.mrf.mxu0
    %9989 = vdwg.mxu0
    %v9990 = vadd.f32 %v9928, %v9985
    %v9991 = vld [vmem:[#allocation3 + $0xaa] sm:$0x3]
    %v9992 = vpack.c.bf16 %v9991, %v9991
    %v9993 = vld [vmem:[#allocation4 + $0x490] sm:$0xf]
    %v9994 = vld [vmem:[#allocation4 + $0x494] sm:$0xf]
    %v9995 = vld [vmem:[#allocation4 + $0x498] sm:$0xf]
    %v9996 = vld [vmem:[#allocation4 + $0x49c] sm:$0xf]
    %v10001 = vunpack.c.l.b16 %v9993
    %v10002 = vunpack.c.l.b16 %v9994
    %v10003 = vunpack.c.l.b16 %v9995
    %v10004 = vunpack.c.l.b16 %v9996
    %v10005 = vpack.c.b16 %v10002, %v10001
    %v10006 = vpack.c.b16 %v10004, %v10003
    %v10010 = vsel %vm5086, %v9992, 0
    %10012 = vmatprep.subr.bf16.mxu0 0
    %10013 = vmatpush1.bf16.msra.mxu0 0
    %10014 = vmatprep.subr.bf16.mxu0 0
    %10015 = vmatpush1.bf16.msra.mxu0 0
    %10016 = vmatprep.subr.bf16.mxu0 0
    %10017 = vmatpush1.bf16.msra.mxu0 0
    %10018 = vmatprep.subr.bf16.mxu0 0
    %10019 = vmatpush1.bf16.msra.mxu0 0
    %10020 = vmatprep.subr.bf16.mxu0 0
    %10021 = vmatpush1.bf16.msra.mxu0 0
    %10022 = vmatprep.subr.bf16.mxu0 0
    %10023 = vmatpush1.bf16.msra.mxu0 0
    %10024 = vmatprep.subr.bf16.mxu0 0
    %10025 = vmatpush1.bf16.msra.mxu0 %v10006
    %10026 = vmatprep.subr.bf16.mxu0 0
    %10027 = vmatpush1.bf16.msra.mxu0 %v10005
    %10028 = vmatprep.subr.bf16.mxu0 0
    %10029 = vmatpush2.bf16.msra.mxu0 0
    %10030 = vmatprep.subr.bf16.mxu0 0
    %10031 = vmatpush2.bf16.msra.mxu0 0
    %10032 = vmatprep.subr.bf16.mxu0 0
    %10033 = vmatpush2.bf16.msra.mxu0 0
    %10034 = vmatprep.subr.bf16.mxu0 0
    %10035 = vmatpush2.bf16.msra.mxu0 0
    %10036 = vmatprep.subr.bf16.mxu0 0
    %10037 = vmatpush2.bf16.msra.mxu0 0
    %10038 = vmatprep.subr.bf16.mxu0 0
    %10039 = vmatpush2.bf16.msra.mxu0 0
    %10040 = vmatprep.subr.bf16.mxu0 0
    %10041 = vmatpush2.bf16.msra.mxu0 0
    %10042 = vmatprep.subr.bf16.mxu0 0
    %10043 = vmatpush2.bf16.msra.mxu0 0
    %10044 = vmatprep.mubr.bf16.mxu0 0
    %10045 = vmatmul.mubr.bf16.gmra.mxu0 %v10010
    %v10046 = vpop.f32.mrf.mxu0
    %v10047 = vadd.f32 0.0, %v10046
    %v10048 = vpop.f32.mrf.mxu0
    %v10049 = vpop.f32.mrf.mxu0
    %v10050 = vpop.f32.mrf.mxu0
    %10051 = vdwg.mxu0
    %v10052 = vadd.f32 %v9990, %v10047
    %v10053 = vld [vmem:[#allocation3 + $0xac] sm:$0x3]
    %v10054 = vpack.c.bf16 %v10053, %v10053
    %v10055 = vld [vmem:[#allocation4 + $0x4a0] sm:$0xf]
    %v10056 = vld [vmem:[#allocation4 + $0x4a4] sm:$0xf]
    %v10057 = vld [vmem:[#allocation4 + $0x4a8] sm:$0xf]
    %v10058 = vld [vmem:[#allocation4 + $0x4ac] sm:$0xf]
    %v10063 = vunpack.c.l.b16 %v10055
    %v10064 = vunpack.c.l.b16 %v10056
    %v10065 = vunpack.c.l.b16 %v10057
    %v10066 = vunpack.c.l.b16 %v10058
    %v10067 = vpack.c.b16 %v10064, %v10063
    %v10068 = vpack.c.b16 %v10066, %v10065
    %v10072 = vsel %vm5086, %v10054, 0
    %10074 = vmatprep.subr.bf16.mxu0 0
    %10075 = vmatpush1.bf16.msra.mxu0 0
    %10076 = vmatprep.subr.bf16.mxu0 0
    %10077 = vmatpush1.bf16.msra.mxu0 0
    %10078 = vmatprep.subr.bf16.mxu0 0
    %10079 = vmatpush1.bf16.msra.mxu0 0
    %10080 = vmatprep.subr.bf16.mxu0 0
    %10081 = vmatpush1.bf16.msra.mxu0 0
    %10082 = vmatprep.subr.bf16.mxu0 0
    %10083 = vmatpush1.bf16.msra.mxu0 0
    %10084 = vmatprep.subr.bf16.mxu0 0
    %10085 = vmatpush1.bf16.msra.mxu0 0
    %10086 = vmatprep.subr.bf16.mxu0 0
    %10087 = vmatpush1.bf16.msra.mxu0 %v10068
    %10088 = vmatprep.subr.bf16.mxu0 0
    %10089 = vmatpush1.bf16.msra.mxu0 %v10067
    %10090 = vmatprep.subr.bf16.mxu0 0
    %10091 = vmatpush2.bf16.msra.mxu0 0
    %10092 = vmatprep.subr.bf16.mxu0 0
    %10093 = vmatpush2.bf16.msra.mxu0 0
    %10094 = vmatprep.subr.bf16.mxu0 0
    %10095 = vmatpush2.bf16.msra.mxu0 0
    %10096 = vmatprep.subr.bf16.mxu0 0
    %10097 = vmatpush2.bf16.msra.mxu0 0
    %10098 = vmatprep.subr.bf16.mxu0 0
    %10099 = vmatpush2.bf16.msra.mxu0 0
    %10100 = vmatprep.subr.bf16.mxu0 0
    %10101 = vmatpush2.bf16.msra.mxu0 0
    %10102 = vmatprep.subr.bf16.mxu0 0
    %10103 = vmatpush2.bf16.msra.mxu0 0
    %10104 = vmatprep.subr.bf16.mxu0 0
    %10105 = vmatpush2.bf16.msra.mxu0 0
    %10106 = vmatprep.mubr.bf16.mxu0 0
    %10107 = vmatmul.mubr.bf16.gmra.mxu0 %v10072
    %v10108 = vpop.f32.mrf.mxu0
    %v10109 = vadd.f32 0.0, %v10108
    %v10110 = vpop.f32.mrf.mxu0
    %v10111 = vpop.f32.mrf.mxu0
    %v10112 = vpop.f32.mrf.mxu0
    %10113 = vdwg.mxu0
    %v10114 = vadd.f32 %v10052, %v10109
    %v10115 = vld [vmem:[#allocation3 + $0xae] sm:$0x3]
    %v10116 = vpack.c.bf16 %v10115, %v10115
    %v10117 = vld [vmem:[#allocation4 + $0x4b0] sm:$0xf]
    %v10118 = vld [vmem:[#allocation4 + $0x4b4] sm:$0xf]
    %v10119 = vld [vmem:[#allocation4 + $0x4b8] sm:$0xf]
    %v10120 = vld [vmem:[#allocation4 + $0x4bc] sm:$0xf]
    %v10125 = vunpack.c.l.b16 %v10117
    %v10126 = vunpack.c.l.b16 %v10118
    %v10127 = vunpack.c.l.b16 %v10119
    %v10128 = vunpack.c.l.b16 %v10120
    %v10129 = vpack.c.b16 %v10126, %v10125
    %v10130 = vpack.c.b16 %v10128, %v10127
    %v10134 = vsel %vm5086, %v10116, 0
    %10136 = vmatprep.subr.bf16.mxu0 0
    %10137 = vmatpush1.bf16.msra.mxu0 0
    %10138 = vmatprep.subr.bf16.mxu0 0
    %10139 = vmatpush1.bf16.msra.mxu0 0
    %10140 = vmatprep.subr.bf16.mxu0 0
    %10141 = vmatpush1.bf16.msra.mxu0 0
    %10142 = vmatprep.subr.bf16.mxu0 0
    %10143 = vmatpush1.bf16.msra.mxu0 0
    %10144 = vmatprep.subr.bf16.mxu0 0
    %10145 = vmatpush1.bf16.msra.mxu0 0
    %10146 = vmatprep.subr.bf16.mxu0 0
    %10147 = vmatpush1.bf16.msra.mxu0 0
    %10148 = vmatprep.subr.bf16.mxu0 0
    %10149 = vmatpush1.bf16.msra.mxu0 %v10130
    %10150 = vmatprep.subr.bf16.mxu0 0
    %10151 = vmatpush1.bf16.msra.mxu0 %v10129
    %10152 = vmatprep.subr.bf16.mxu0 0
    %10153 = vmatpush2.bf16.msra.mxu0 0
    %10154 = vmatprep.subr.bf16.mxu0 0
    %10155 = vmatpush2.bf16.msra.mxu0 0
    %10156 = vmatprep.subr.bf16.mxu0 0
    %10157 = vmatpush2.bf16.msra.mxu0 0
    %10158 = vmatprep.subr.bf16.mxu0 0
    %10159 = vmatpush2.bf16.msra.mxu0 0
    %10160 = vmatprep.subr.bf16.mxu0 0
    %10161 = vmatpush2.bf16.msra.mxu0 0
    %10162 = vmatprep.subr.bf16.mxu0 0
    %10163 = vmatpush2.bf16.msra.mxu0 0
    %10164 = vmatprep.subr.bf16.mxu0 0
    %10165 = vmatpush2.bf16.msra.mxu0 0
    %10166 = vmatprep.subr.bf16.mxu0 0
    %10167 = vmatpush2.bf16.msra.mxu0 0
    %10168 = vmatprep.mubr.bf16.mxu0 0
    %10169 = vmatmul.mubr.bf16.gmra.mxu0 %v10134
    %v10170 = vpop.f32.mrf.mxu0
    %v10171 = vadd.f32 0.0, %v10170
    %v10172 = vpop.f32.mrf.mxu0
    %v10173 = vpop.f32.mrf.mxu0
    %v10174 = vpop.f32.mrf.mxu0
    %10175 = vdwg.mxu0
    %v10176 = vadd.f32 %v10114, %v10171
    %v10177 = vld [vmem:[#allocation3 + $0xb0] sm:$0x3]
    %v10178 = vpack.c.bf16 %v10177, %v10177
    %v10179 = vld [vmem:[#allocation4 + $0x4c0] sm:$0xf]
    %v10180 = vld [vmem:[#allocation4 + $0x4c4] sm:$0xf]
    %v10181 = vld [vmem:[#allocation4 + $0x4c8] sm:$0xf]
    %v10182 = vld [vmem:[#allocation4 + $0x4cc] sm:$0xf]
    %v10187 = vunpack.c.l.b16 %v10179
    %v10188 = vunpack.c.l.b16 %v10180
    %v10189 = vunpack.c.l.b16 %v10181
    %v10190 = vunpack.c.l.b16 %v10182
    %v10191 = vpack.c.b16 %v10188, %v10187
    %v10192 = vpack.c.b16 %v10190, %v10189
    %v10196 = vsel %vm5086, %v10178, 0
    %10198 = vmatprep.subr.bf16.mxu0 0
    %10199 = vmatpush1.bf16.msra.mxu0 0
    %10200 = vmatprep.subr.bf16.mxu0 0
    %10201 = vmatpush1.bf16.msra.mxu0 0
    %10202 = vmatprep.subr.bf16.mxu0 0
    %10203 = vmatpush1.bf16.msra.mxu0 0
    %10204 = vmatprep.subr.bf16.mxu0 0
    %10205 = vmatpush1.bf16.msra.mxu0 0
    %10206 = vmatprep.subr.bf16.mxu0 0
    %10207 = vmatpush1.bf16.msra.mxu0 0
    %10208 = vmatprep.subr.bf16.mxu0 0
    %10209 = vmatpush1.bf16.msra.mxu0 0
    %10210 = vmatprep.subr.bf16.mxu0 0
    %10211 = vmatpush1.bf16.msra.mxu0 %v10192
    %10212 = vmatprep.subr.bf16.mxu0 0
    %10213 = vmatpush1.bf16.msra.mxu0 %v10191
    %10214 = vmatprep.subr.bf16.mxu0 0
    %10215 = vmatpush2.bf16.msra.mxu0 0
    %10216 = vmatprep.subr.bf16.mxu0 0
    %10217 = vmatpush2.bf16.msra.mxu0 0
    %10218 = vmatprep.subr.bf16.mxu0 0
    %10219 = vmatpush2.bf16.msra.mxu0 0
    %10220 = vmatprep.subr.bf16.mxu0 0
    %10221 = vmatpush2.bf16.msra.mxu0 0
    %10222 = vmatprep.subr.bf16.mxu0 0
    %10223 = vmatpush2.bf16.msra.mxu0 0
    %10224 = vmatprep.subr.bf16.mxu0 0
    %10225 = vmatpush2.bf16.msra.mxu0 0
    %10226 = vmatprep.subr.bf16.mxu0 0
    %10227 = vmatpush2.bf16.msra.mxu0 0
    %10228 = vmatprep.subr.bf16.mxu0 0
    %10229 = vmatpush2.bf16.msra.mxu0 0
    %10230 = vmatprep.mubr.bf16.mxu0 0
    %10231 = vmatmul.mubr.bf16.gmra.mxu0 %v10196
    %v10232 = vpop.f32.mrf.mxu0
    %v10233 = vadd.f32 0.0, %v10232
    %v10234 = vpop.f32.mrf.mxu0
    %v10235 = vpop.f32.mrf.mxu0
    %v10236 = vpop.f32.mrf.mxu0
    %10237 = vdwg.mxu0
    %v10238 = vadd.f32 %v10176, %v10233
    %v10239 = vld [vmem:[#allocation3 + $0xb2] sm:$0x3]
    %v10240 = vpack.c.bf16 %v10239, %v10239
    %v10241 = vld [vmem:[#allocation4 + $0x4d0] sm:$0xf]
    %v10242 = vld [vmem:[#allocation4 + $0x4d4] sm:$0xf]
    %v10243 = vld [vmem:[#allocation4 + $0x4d8] sm:$0xf]
    %v10244 = vld [vmem:[#allocation4 + $0x4dc] sm:$0xf]
    %v10249 = vunpack.c.l.b16 %v10241
    %v10250 = vunpack.c.l.b16 %v10242
    %v10251 = vunpack.c.l.b16 %v10243
    %v10252 = vunpack.c.l.b16 %v10244
    %v10253 = vpack.c.b16 %v10250, %v10249
    %v10254 = vpack.c.b16 %v10252, %v10251
    %v10258 = vsel %vm5086, %v10240, 0
    %10260 = vmatprep.subr.bf16.mxu0 0
    %10261 = vmatpush1.bf16.msra.mxu0 0
    %10262 = vmatprep.subr.bf16.mxu0 0
    %10263 = vmatpush1.bf16.msra.mxu0 0
    %10264 = vmatprep.subr.bf16.mxu0 0
    %10265 = vmatpush1.bf16.msra.mxu0 0
    %10266 = vmatprep.subr.bf16.mxu0 0
    %10267 = vmatpush1.bf16.msra.mxu0 0
    %10268 = vmatprep.subr.bf16.mxu0 0
    %10269 = vmatpush1.bf16.msra.mxu0 0
    %10270 = vmatprep.subr.bf16.mxu0 0
    %10271 = vmatpush1.bf16.msra.mxu0 0
    %10272 = vmatprep.subr.bf16.mxu0 0
    %10273 = vmatpush1.bf16.msra.mxu0 %v10254
    %10274 = vmatprep.subr.bf16.mxu0 0
    %10275 = vmatpush1.bf16.msra.mxu0 %v10253
    %10276 = vmatprep.subr.bf16.mxu0 0
    %10277 = vmatpush2.bf16.msra.mxu0 0
    %10278 = vmatprep.subr.bf16.mxu0 0
    %10279 = vmatpush2.bf16.msra.mxu0 0
    %10280 = vmatprep.subr.bf16.mxu0 0
    %10281 = vmatpush2.bf16.msra.mxu0 0
    %10282 = vmatprep.subr.bf16.mxu0 0
    %10283 = vmatpush2.bf16.msra.mxu0 0
    %10284 = vmatprep.subr.bf16.mxu0 0
    %10285 = vmatpush2.bf16.msra.mxu0 0
    %10286 = vmatprep.subr.bf16.mxu0 0
    %10287 = vmatpush2.bf16.msra.mxu0 0
    %10288 = vmatprep.subr.bf16.mxu0 0
    %10289 = vmatpush2.bf16.msra.mxu0 0
    %10290 = vmatprep.subr.bf16.mxu0 0
    %10291 = vmatpush2.bf16.msra.mxu0 0
    %10292 = vmatprep.mubr.bf16.mxu0 0
    %10293 = vmatmul.mubr.bf16.gmra.mxu0 %v10258
    %v10294 = vpop.f32.mrf.mxu0
    %v10295 = vadd.f32 0.0, %v10294
    %v10296 = vpop.f32.mrf.mxu0
    %v10297 = vpop.f32.mrf.mxu0
    %v10298 = vpop.f32.mrf.mxu0
    %10299 = vdwg.mxu0
    %v10300 = vadd.f32 %v10238, %v10295
    %v10301 = vld [vmem:[#allocation3 + $0xb4] sm:$0x3]
    %v10302 = vpack.c.bf16 %v10301, %v10301
    %v10303 = vld [vmem:[#allocation4 + $0x4e0] sm:$0xf]
    %v10304 = vld [vmem:[#allocation4 + $0x4e4] sm:$0xf]
    %v10305 = vld [vmem:[#allocation4 + $0x4e8] sm:$0xf]
    %v10306 = vld [vmem:[#allocation4 + $0x4ec] sm:$0xf]
    %v10311 = vunpack.c.l.b16 %v10303
    %v10312 = vunpack.c.l.b16 %v10304
    %v10313 = vunpack.c.l.b16 %v10305
    %v10314 = vunpack.c.l.b16 %v10306
    %v10315 = vpack.c.b16 %v10312, %v10311
    %v10316 = vpack.c.b16 %v10314, %v10313
    %v10320 = vsel %vm5086, %v10302, 0
    %10322 = vmatprep.subr.bf16.mxu0 0
    %10323 = vmatpush1.bf16.msra.mxu0 0
    %10324 = vmatprep.subr.bf16.mxu0 0
    %10325 = vmatpush1.bf16.msra.mxu0 0
    %10326 = vmatprep.subr.bf16.mxu0 0
    %10327 = vmatpush1.bf16.msra.mxu0 0
    %10328 = vmatprep.subr.bf16.mxu0 0
    %10329 = vmatpush1.bf16.msra.mxu0 0
    %10330 = vmatprep.subr.bf16.mxu0 0
    %10331 = vmatpush1.bf16.msra.mxu0 0
    %10332 = vmatprep.subr.bf16.mxu0 0
    %10333 = vmatpush1.bf16.msra.mxu0 0
    %10334 = vmatprep.subr.bf16.mxu0 0
    %10335 = vmatpush1.bf16.msra.mxu0 %v10316
    %10336 = vmatprep.subr.bf16.mxu0 0
    %10337 = vmatpush1.bf16.msra.mxu0 %v10315
    %10338 = vmatprep.subr.bf16.mxu0 0
    %10339 = vmatpush2.bf16.msra.mxu0 0
    %10340 = vmatprep.subr.bf16.mxu0 0
    %10341 = vmatpush2.bf16.msra.mxu0 0
    %10342 = vmatprep.subr.bf16.mxu0 0
    %10343 = vmatpush2.bf16.msra.mxu0 0
    %10344 = vmatprep.subr.bf16.mxu0 0
    %10345 = vmatpush2.bf16.msra.mxu0 0
    %10346 = vmatprep.subr.bf16.mxu0 0
    %10347 = vmatpush2.bf16.msra.mxu0 0
    %10348 = vmatprep.subr.bf16.mxu0 0
    %10349 = vmatpush2.bf16.msra.mxu0 0
    %10350 = vmatprep.subr.bf16.mxu0 0
    %10351 = vmatpush2.bf16.msra.mxu0 0
    %10352 = vmatprep.subr.bf16.mxu0 0
    %10353 = vmatpush2.bf16.msra.mxu0 0
    %10354 = vmatprep.mubr.bf16.mxu0 0
    %10355 = vmatmul.mubr.bf16.gmra.mxu0 %v10320
    %v10356 = vpop.f32.mrf.mxu0
    %v10357 = vadd.f32 0.0, %v10356
    %v10358 = vpop.f32.mrf.mxu0
    %v10359 = vpop.f32.mrf.mxu0
    %v10360 = vpop.f32.mrf.mxu0
    %10361 = vdwg.mxu0
    %v10362 = vadd.f32 %v10300, %v10357
    %v10363 = vld [vmem:[#allocation3 + $0xb6] sm:$0x3]
    %v10364 = vpack.c.bf16 %v10363, %v10363
    %v10365 = vld [vmem:[#allocation4 + $0x4f0] sm:$0xf]
    %v10366 = vld [vmem:[#allocation4 + $0x4f4] sm:$0xf]
    %v10367 = vld [vmem:[#allocation4 + $0x4f8] sm:$0xf]
    %v10368 = vld [vmem:[#allocation4 + $0x4fc] sm:$0xf]
    %v10373 = vunpack.c.l.b16 %v10365
    %v10374 = vunpack.c.l.b16 %v10366
    %v10375 = vunpack.c.l.b16 %v10367
    %v10376 = vunpack.c.l.b16 %v10368
    %v10377 = vpack.c.b16 %v10374, %v10373
    %v10378 = vpack.c.b16 %v10376, %v10375
    %v10382 = vsel %vm5086, %v10364, 0
    %10384 = vmatprep.subr.bf16.mxu0 0
    %10385 = vmatpush1.bf16.msra.mxu0 0
    %10386 = vmatprep.subr.bf16.mxu0 0
    %10387 = vmatpush1.bf16.msra.mxu0 0
    %10388 = vmatprep.subr.bf16.mxu0 0
    %10389 = vmatpush1.bf16.msra.mxu0 0
    %10390 = vmatprep.subr.bf16.mxu0 0
    %10391 = vmatpush1.bf16.msra.mxu0 0
    %10392 = vmatprep.subr.bf16.mxu0 0
    %10393 = vmatpush1.bf16.msra.mxu0 0
    %10394 = vmatprep.subr.bf16.mxu0 0
    %10395 = vmatpush1.bf16.msra.mxu0 0
    %10396 = vmatprep.subr.bf16.mxu0 0
    %10397 = vmatpush1.bf16.msra.mxu0 %v10378
    %10398 = vmatprep.subr.bf16.mxu0 0
    %10399 = vmatpush1.bf16.msra.mxu0 %v10377
    %10400 = vmatprep.subr.bf16.mxu0 0
    %10401 = vmatpush2.bf16.msra.mxu0 0
    %10402 = vmatprep.subr.bf16.mxu0 0
    %10403 = vmatpush2.bf16.msra.mxu0 0
    %10404 = vmatprep.subr.bf16.mxu0 0
    %10405 = vmatpush2.bf16.msra.mxu0 0
    %10406 = vmatprep.subr.bf16.mxu0 0
    %10407 = vmatpush2.bf16.msra.mxu0 0
    %10408 = vmatprep.subr.bf16.mxu0 0
    %10409 = vmatpush2.bf16.msra.mxu0 0
    %10410 = vmatprep.subr.bf16.mxu0 0
    %10411 = vmatpush2.bf16.msra.mxu0 0
    %10412 = vmatprep.subr.bf16.mxu0 0
    %10413 = vmatpush2.bf16.msra.mxu0 0
    %10414 = vmatprep.subr.bf16.mxu0 0
    %10415 = vmatpush2.bf16.msra.mxu0 0
    %10416 = vmatprep.mubr.bf16.mxu0 0
    %10417 = vmatmul.mubr.bf16.gmra.mxu0 %v10382
    %v10418 = vpop.f32.mrf.mxu0
    %v10419 = vadd.f32 0.0, %v10418
    %v10420 = vpop.f32.mrf.mxu0
    %v10421 = vpop.f32.mrf.mxu0
    %v10422 = vpop.f32.mrf.mxu0
    %10423 = vdwg.mxu0
    %v10424 = vadd.f32 %v10362, %v10419
    %v10425 = vld [vmem:[#allocation3 + $0xb8] sm:$0x3]
    %v10426 = vpack.c.bf16 %v10425, %v10425
    %v10427 = vld [vmem:[#allocation4 + $0x500] sm:$0xf]
    %v10428 = vld [vmem:[#allocation4 + $0x504] sm:$0xf]
    %v10429 = vld [vmem:[#allocation4 + $0x508] sm:$0xf]
    %v10430 = vld [vmem:[#allocation4 + $0x50c] sm:$0xf]
    %v10435 = vunpack.c.l.b16 %v10427
    %v10436 = vunpack.c.l.b16 %v10428
    %v10437 = vunpack.c.l.b16 %v10429
    %v10438 = vunpack.c.l.b16 %v10430
    %v10439 = vpack.c.b16 %v10436, %v10435
    %v10440 = vpack.c.b16 %v10438, %v10437
    %v10444 = vsel %vm5086, %v10426, 0
    %10446 = vmatprep.subr.bf16.mxu0 0
    %10447 = vmatpush1.bf16.msra.mxu0 0
    %10448 = vmatprep.subr.bf16.mxu0 0
    %10449 = vmatpush1.bf16.msra.mxu0 0
    %10450 = vmatprep.subr.bf16.mxu0 0
    %10451 = vmatpush1.bf16.msra.mxu0 0
    %10452 = vmatprep.subr.bf16.mxu0 0
    %10453 = vmatpush1.bf16.msra.mxu0 0
    %10454 = vmatprep.subr.bf16.mxu0 0
    %10455 = vmatpush1.bf16.msra.mxu0 0
    %10456 = vmatprep.subr.bf16.mxu0 0
    %10457 = vmatpush1.bf16.msra.mxu0 0
    %10458 = vmatprep.subr.bf16.mxu0 0
    %10459 = vmatpush1.bf16.msra.mxu0 %v10440
    %10460 = vmatprep.subr.bf16.mxu0 0
    %10461 = vmatpush1.bf16.msra.mxu0 %v10439
    %10462 = vmatprep.subr.bf16.mxu0 0
    %10463 = vmatpush2.bf16.msra.mxu0 0
    %10464 = vmatprep.subr.bf16.mxu0 0
    %10465 = vmatpush2.bf16.msra.mxu0 0
    %10466 = vmatprep.subr.bf16.mxu0 0
    %10467 = vmatpush2.bf16.msra.mxu0 0
    %10468 = vmatprep.subr.bf16.mxu0 0
    %10469 = vmatpush2.bf16.msra.mxu0 0
    %10470 = vmatprep.subr.bf16.mxu0 0
    %10471 = vmatpush2.bf16.msra.mxu0 0
    %10472 = vmatprep.subr.bf16.mxu0 0
    %10473 = vmatpush2.bf16.msra.mxu0 0
    %10474 = vmatprep.subr.bf16.mxu0 0
    %10475 = vmatpush2.bf16.msra.mxu0 0
    %10476 = vmatprep.subr.bf16.mxu0 0
    %10477 = vmatpush2.bf16.msra.mxu0 0
    %10478 = vmatprep.mubr.bf16.mxu0 0
    %10479 = vmatmul.mubr.bf16.gmra.mxu0 %v10444
    %v10480 = vpop.f32.mrf.mxu0
    %v10481 = vadd.f32 0.0, %v10480
    %v10482 = vpop.f32.mrf.mxu0
    %v10483 = vpop.f32.mrf.mxu0
    %v10484 = vpop.f32.mrf.mxu0
    %10485 = vdwg.mxu0
    %v10486 = vadd.f32 %v10424, %v10481
    %v10487 = vld [vmem:[#allocation3 + $0xba] sm:$0x3]
    %v10488 = vpack.c.bf16 %v10487, %v10487
    %v10489 = vld [vmem:[#allocation4 + $0x510] sm:$0xf]
    %v10490 = vld [vmem:[#allocation4 + $0x514] sm:$0xf]
    %v10491 = vld [vmem:[#allocation4 + $0x518] sm:$0xf]
    %v10492 = vld [vmem:[#allocation4 + $0x51c] sm:$0xf]
    %v10497 = vunpack.c.l.b16 %v10489
    %v10498 = vunpack.c.l.b16 %v10490
    %v10499 = vunpack.c.l.b16 %v10491
    %v10500 = vunpack.c.l.b16 %v10492
    %v10501 = vpack.c.b16 %v10498, %v10497
    %v10502 = vpack.c.b16 %v10500, %v10499
    %v10506 = vsel %vm5086, %v10488, 0
    %10508 = vmatprep.subr.bf16.mxu0 0
    %10509 = vmatpush1.bf16.msra.mxu0 0
    %10510 = vmatprep.subr.bf16.mxu0 0
    %10511 = vmatpush1.bf16.msra.mxu0 0
    %10512 = vmatprep.subr.bf16.mxu0 0
    %10513 = vmatpush1.bf16.msra.mxu0 0
    %10514 = vmatprep.subr.bf16.mxu0 0
    %10515 = vmatpush1.bf16.msra.mxu0 0
    %10516 = vmatprep.subr.bf16.mxu0 0
    %10517 = vmatpush1.bf16.msra.mxu0 0
    %10518 = vmatprep.subr.bf16.mxu0 0
    %10519 = vmatpush1.bf16.msra.mxu0 0
    %10520 = vmatprep.subr.bf16.mxu0 0
    %10521 = vmatpush1.bf16.msra.mxu0 %v10502
    %10522 = vmatprep.subr.bf16.mxu0 0
    %10523 = vmatpush1.bf16.msra.mxu0 %v10501
    %10524 = vmatprep.subr.bf16.mxu0 0
    %10525 = vmatpush2.bf16.msra.mxu0 0
    %10526 = vmatprep.subr.bf16.mxu0 0
    %10527 = vmatpush2.bf16.msra.mxu0 0
    %10528 = vmatprep.subr.bf16.mxu0 0
    %10529 = vmatpush2.bf16.msra.mxu0 0
    %10530 = vmatprep.subr.bf16.mxu0 0
    %10531 = vmatpush2.bf16.msra.mxu0 0
    %10532 = vmatprep.subr.bf16.mxu0 0
    %10533 = vmatpush2.bf16.msra.mxu0 0
    %10534 = vmatprep.subr.bf16.mxu0 0
    %10535 = vmatpush2.bf16.msra.mxu0 0
    %10536 = vmatprep.subr.bf16.mxu0 0
    %10537 = vmatpush2.bf16.msra.mxu0 0
    %10538 = vmatprep.subr.bf16.mxu0 0
    %10539 = vmatpush2.bf16.msra.mxu0 0
    %10540 = vmatprep.mubr.bf16.mxu0 0
    %10541 = vmatmul.mubr.bf16.gmra.mxu0 %v10506
    %v10542 = vpop.f32.mrf.mxu0
    %v10543 = vadd.f32 0.0, %v10542
    %v10544 = vpop.f32.mrf.mxu0
    %v10545 = vpop.f32.mrf.mxu0
    %v10546 = vpop.f32.mrf.mxu0
    %10547 = vdwg.mxu0
    %v10548 = vadd.f32 %v10486, %v10543
    %v10549 = vld [vmem:[#allocation3 + $0xbc] sm:$0x3]
    %v10550 = vpack.c.bf16 %v10549, %v10549
    %v10551 = vld [vmem:[#allocation4 + $0x520] sm:$0xf]
    %v10552 = vld [vmem:[#allocation4 + $0x524] sm:$0xf]
    %v10553 = vld [vmem:[#allocation4 + $0x528] sm:$0xf]
    %v10554 = vld [vmem:[#allocation4 + $0x52c] sm:$0xf]
    %v10559 = vunpack.c.l.b16 %v10551
    %v10560 = vunpack.c.l.b16 %v10552
    %v10561 = vunpack.c.l.b16 %v10553
    %v10562 = vunpack.c.l.b16 %v10554
    %v10563 = vpack.c.b16 %v10560, %v10559
    %v10564 = vpack.c.b16 %v10562, %v10561
    %v10568 = vsel %vm5086, %v10550, 0
    %10570 = vmatprep.subr.bf16.mxu0 0
    %10571 = vmatpush1.bf16.msra.mxu0 0
    %10572 = vmatprep.subr.bf16.mxu0 0
    %10573 = vmatpush1.bf16.msra.mxu0 0
    %10574 = vmatprep.subr.bf16.mxu0 0
    %10575 = vmatpush1.bf16.msra.mxu0 0
    %10576 = vmatprep.subr.bf16.mxu0 0
    %10577 = vmatpush1.bf16.msra.mxu0 0
    %10578 = vmatprep.subr.bf16.mxu0 0
    %10579 = vmatpush1.bf16.msra.mxu0 0
    %10580 = vmatprep.subr.bf16.mxu0 0
    %10581 = vmatpush1.bf16.msra.mxu0 0
    %10582 = vmatprep.subr.bf16.mxu0 0
    %10583 = vmatpush1.bf16.msra.mxu0 %v10564
    %10584 = vmatprep.subr.bf16.mxu0 0
    %10585 = vmatpush1.bf16.msra.mxu0 %v10563
    %10586 = vmatprep.subr.bf16.mxu0 0
    %10587 = vmatpush2.bf16.msra.mxu0 0
    %10588 = vmatprep.subr.bf16.mxu0 0
    %10589 = vmatpush2.bf16.msra.mxu0 0
    %10590 = vmatprep.subr.bf16.mxu0 0
    %10591 = vmatpush2.bf16.msra.mxu0 0
    %10592 = vmatprep.subr.bf16.mxu0 0
    %10593 = vmatpush2.bf16.msra.mxu0 0
    %10594 = vmatprep.subr.bf16.mxu0 0
    %10595 = vmatpush2.bf16.msra.mxu0 0
    %10596 = vmatprep.subr.bf16.mxu0 0
    %10597 = vmatpush2.bf16.msra.mxu0 0
    %10598 = vmatprep.subr.bf16.mxu0 0
    %10599 = vmatpush2.bf16.msra.mxu0 0
    %10600 = vmatprep.subr.bf16.mxu0 0
    %10601 = vmatpush2.bf16.msra.mxu0 0
    %10602 = vmatprep.mubr.bf16.mxu0 0
    %10603 = vmatmul.mubr.bf16.gmra.mxu0 %v10568
    %v10604 = vpop.f32.mrf.mxu0
    %v10605 = vadd.f32 0.0, %v10604
    %v10606 = vpop.f32.mrf.mxu0
    %v10607 = vpop.f32.mrf.mxu0
    %v10608 = vpop.f32.mrf.mxu0
    %10609 = vdwg.mxu0
    %v10610 = vadd.f32 %v10548, %v10605
    %v10611 = vld [vmem:[#allocation3 + $0xbe] sm:$0x3]
    %v10612 = vpack.c.bf16 %v10611, %v10611
    %v10613 = vld [vmem:[#allocation4 + $0x530] sm:$0xf]
    %v10614 = vld [vmem:[#allocation4 + $0x534] sm:$0xf]
    %v10615 = vld [vmem:[#allocation4 + $0x538] sm:$0xf]
    %v10616 = vld [vmem:[#allocation4 + $0x53c] sm:$0xf]
    %v10621 = vunpack.c.l.b16 %v10613
    %v10622 = vunpack.c.l.b16 %v10614
    %v10623 = vunpack.c.l.b16 %v10615
    %v10624 = vunpack.c.l.b16 %v10616
    %v10625 = vpack.c.b16 %v10622, %v10621
    %v10626 = vpack.c.b16 %v10624, %v10623
    %v10630 = vsel %vm5086, %v10612, 0
    %10632 = vmatprep.subr.bf16.mxu0 0
    %10633 = vmatpush1.bf16.msra.mxu0 0
    %10634 = vmatprep.subr.bf16.mxu0 0
    %10635 = vmatpush1.bf16.msra.mxu0 0
    %10636 = vmatprep.subr.bf16.mxu0 0
    %10637 = vmatpush1.bf16.msra.mxu0 0
    %10638 = vmatprep.subr.bf16.mxu0 0
    %10639 = vmatpush1.bf16.msra.mxu0 0
    %10640 = vmatprep.subr.bf16.mxu0 0
    %10641 = vmatpush1.bf16.msra.mxu0 0
    %10642 = vmatprep.subr.bf16.mxu0 0
    %10643 = vmatpush1.bf16.msra.mxu0 0
    %10644 = vmatprep.subr.bf16.mxu0 0
    %10645 = vmatpush1.bf16.msra.mxu0 %v10626
    %10646 = vmatprep.subr.bf16.mxu0 0
    %10647 = vmatpush1.bf16.msra.mxu0 %v10625
    %10648 = vmatprep.subr.bf16.mxu0 0
    %10649 = vmatpush2.bf16.msra.mxu0 0
    %10650 = vmatprep.subr.bf16.mxu0 0
    %10651 = vmatpush2.bf16.msra.mxu0 0
    %10652 = vmatprep.subr.bf16.mxu0 0
    %10653 = vmatpush2.bf16.msra.mxu0 0
    %10654 = vmatprep.subr.bf16.mxu0 0
    %10655 = vmatpush2.bf16.msra.mxu0 0
    %10656 = vmatprep.subr.bf16.mxu0 0
    %10657 = vmatpush2.bf16.msra.mxu0 0
    %10658 = vmatprep.subr.bf16.mxu0 0
    %10659 = vmatpush2.bf16.msra.mxu0 0
    %10660 = vmatprep.subr.bf16.mxu0 0
    %10661 = vmatpush2.bf16.msra.mxu0 0
    %10662 = vmatprep.subr.bf16.mxu0 0
    %10663 = vmatpush2.bf16.msra.mxu0 0
    %10664 = vmatprep.mubr.bf16.mxu0 0
    %10665 = vmatmul.mubr.bf16.gmra.mxu0 %v10630
    %v10666 = vpop.f32.mrf.mxu0
    %v10667 = vadd.f32 0.0, %v10666
    %v10668 = vpop.f32.mrf.mxu0
    %v10669 = vpop.f32.mrf.mxu0
    %v10670 = vpop.f32.mrf.mxu0
    %10671 = vdwg.mxu0
    %v10672 = vadd.f32 %v10610, %v10667
    %v10673 = vld [vmem:[%s7] sm:$0x1]
    %v10674 = vlaneseq
    %v10675 = vshrl.u32 %v10674, 7
    %v10676 = vsub.s32 0, %v10675
    %v10677 = vrot.slane %v10673, %v10676
    %v10678 = vadd.f32 %v10672, %v10677
    %v10679 = vmax.f32 %v10678, 0.0
    %s10680 = smul.u32 4, 16
    %s10681 = smul.u32 %s10680, 1
    %s10682 = sshll.u32 %s10681, 4
    %10683 = dma.done %s413, %s10682
    %v10684 = vpack.c.bf16 %v10679, %v10679
    %v10685 = vld [vmem:[#allocation5] sm:$0xf]
    %v10686 = vld [vmem:[#allocation5 + $0x4] sm:$0xf]
    %v10687 = vld [vmem:[#allocation5 + $0x8] sm:$0xf]
    %v10688 = vld [vmem:[#allocation5 + $0xc] sm:$0xf]
    %v10689 = vld [vmem:[#allocation5 + $0x10] sm:$0xf]
    %v10690 = vld [vmem:[#allocation5 + $0x14] sm:$0xf]
    %v10691 = vld [vmem:[#allocation5 + $0x18] sm:$0xf]
    %v10692 = vld [vmem:[#allocation5 + $0x1c] sm:$0xf]
    %v10693 = vld [vmem:[#allocation5 + $0x20] sm:$0xf]
    %v10694 = vld [vmem:[#allocation5 + $0x24] sm:$0xf]
    %v10695 = vld [vmem:[#allocation5 + $0x28] sm:$0xf]
    %v10696 = vld [vmem:[#allocation5 + $0x2c] sm:$0xf]
    %v10697 = vld [vmem:[#allocation5 + $0x30] sm:$0xf]
    %v10698 = vld [vmem:[#allocation5 + $0x34] sm:$0xf]
    %v10699 = vld [vmem:[#allocation5 + $0x38] sm:$0xf]
    %v10700 = vld [vmem:[#allocation5 + $0x3c] sm:$0xf]
    %v10701 = vld [vmem:[%s7 + $0x1] sm:$0x1]
    %v10702 = vlaneseq
    %v10703 = vshrl.u32 %v10702, 7
    %v10704 = vsub.s32 0, %v10703
    %v10705 = vrot.slane %v10701, %v10704
    %v10722 = vunpack.c.l.b16 %v10685
    %v10723 = vunpack.c.l.b16 %v10686
    %v10724 = vunpack.c.l.b16 %v10687
    %v10725 = vunpack.c.l.b16 %v10688
    %v10726 = vunpack.c.l.b16 %v10689
    %v10727 = vunpack.c.l.b16 %v10690
    %v10728 = vunpack.c.l.b16 %v10691
    %v10729 = vunpack.c.l.b16 %v10692
    %v10730 = vunpack.c.l.b16 %v10693
    %v10731 = vunpack.c.l.b16 %v10694
    %v10732 = vunpack.c.l.b16 %v10695
    %v10733 = vunpack.c.l.b16 %v10696
    %v10734 = vunpack.c.l.b16 %v10697
    %v10735 = vunpack.c.l.b16 %v10698
    %v10736 = vunpack.c.l.b16 %v10699
    %v10737 = vunpack.c.l.b16 %v10700
    %v10738 = vpack.c.b16 %v10723, %v10722
    %v10739 = vpack.c.b16 %v10725, %v10724
    %v10740 = vpack.c.b16 %v10727, %v10726
    %v10741 = vpack.c.b16 %v10729, %v10728
    %v10742 = vpack.c.b16 %v10731, %v10730
    %v10743 = vpack.c.b16 %v10733, %v10732
    %v10744 = vpack.c.b16 %v10735, %v10734
    %v10745 = vpack.c.b16 %v10737, %v10736
    %10754 = vmatprep.subr.bf16.mxu0 0
    %10755 = vmatpush1.bf16.msra.mxu0 %v10745
    %10756 = vmatprep.subr.bf16.mxu0 0
    %10757 = vmatpush1.bf16.msra.mxu0 %v10744
    %10758 = vmatprep.subr.bf16.mxu0 0
    %10759 = vmatpush1.bf16.msra.mxu0 %v10743
    %10760 = vmatprep.subr.bf16.mxu0 0
    %10761 = vmatpush1.bf16.msra.mxu0 %v10742
    %10762 = vmatprep.subr.bf16.mxu0 0
    %10763 = vmatpush1.bf16.msra.mxu0 %v10741
    %10764 = vmatprep.subr.bf16.mxu0 0
    %10765 = vmatpush1.bf16.msra.mxu0 %v10740
    %10766 = vmatprep.subr.bf16.mxu0 0
    %10767 = vmatpush1.bf16.msra.mxu0 %v10739
    %10768 = vmatprep.subr.bf16.mxu0 0
    %10769 = vmatpush1.bf16.msra.mxu0 %v10738
    %10770 = vmatprep.subr.bf16.mxu0 0
    %10771 = vmatpush2.bf16.msra.mxu0 0
    %10772 = vmatprep.subr.bf16.mxu0 0
    %10773 = vmatpush2.bf16.msra.mxu0 0
    %10774 = vmatprep.subr.bf16.mxu0 0
    %10775 = vmatpush2.bf16.msra.mxu0 0
    %10776 = vmatprep.subr.bf16.mxu0 0
    %10777 = vmatpush2.bf16.msra.mxu0 0
    %10778 = vmatprep.subr.bf16.mxu0 0
    %10779 = vmatpush2.bf16.msra.mxu0 0
    %10780 = vmatprep.subr.bf16.mxu0 0
    %10781 = vmatpush2.bf16.msra.mxu0 0
    %10782 = vmatprep.subr.bf16.mxu0 0
    %10783 = vmatpush2.bf16.msra.mxu0 0
    %10784 = vmatprep.subr.bf16.mxu0 0
    %10785 = vmatpush2.bf16.msra.mxu0 0
    %10786 = vmatprep.mubr.bf16.mxu0 0
    %10787 = vmatmul.mubr.bf16.gmra.mxu0 %v10684
    %v10788 = vpop.f32.mrf.mxu0
    %v10789 = vadd.f32 %v10705, %v10788
    %v10790 = vpop.f32.mrf.mxu0
    %v10791 = vpop.f32.mrf.mxu0
    %v10792 = vpop.f32.mrf.mxu0
    %10793 = vdwg.mxu0
    %v10794 = vmax.f32 %v10789, 0.0
    %v10795 = vpack.c.bf16 %v10794, %v10794
    %v10796 = vld [vmem:[%s9] sm:$0xf]
    %v10797 = vld [vmem:[%s9 + $0x4] sm:$0xf]
    %v10798 = vld [vmem:[%s9 + $0x8] sm:$0xf]
    %v10799 = vld [vmem:[%s9 + $0xc] sm:$0xf]
    %v10800 = vld [vmem:[%s9 + $0x10] sm:$0xf]
    %v10801 = vld [vmem:[%s9 + $0x14] sm:$0xf]
    %v10802 = vld [vmem:[%s9 + $0x18] sm:$0xf]
    %v10803 = vld [vmem:[%s9 + $0x1c] sm:$0xf]
    %v10804 = vld [vmem:[%s9 + $0x20] sm:$0xf]
    %v10805 = vld [vmem:[%s9 + $0x24] sm:$0xf]
    %v10806 = vld [vmem:[%s9 + $0x28] sm:$0xf]
    %v10807 = vld [vmem:[%s9 + $0x2c] sm:$0xf]
    %v10808 = vld [vmem:[%s9 + $0x30] sm:$0xf]
    %v10809 = vld [vmem:[%s9 + $0x34] sm:$0xf]
    %v10810 = vld [vmem:[%s9 + $0x38] sm:$0xf]
    %v10811 = vld [vmem:[%s9 + $0x3c] sm:$0xf]
    %v10812 = vld [vmem:[%s10] sm:$0x1]
    %v10814 = vlaneseq
    %v10815 = vshrl.u32 %v10814, 7
    %v10816 = vsub.s32 0, %v10815
    %v10817 = vrot.slane %v10812, %v10816
    %v10835 = vunpack.c.l.b16 %v10796
    %v10836 = vunpack.c.l.b16 %v10797
    %v10837 = vunpack.c.l.b16 %v10798
    %v10838 = vunpack.c.l.b16 %v10799
    %v10839 = vunpack.c.l.b16 %v10800
    %v10840 = vunpack.c.l.b16 %v10801
    %v10841 = vunpack.c.l.b16 %v10802
    %v10842 = vunpack.c.l.b16 %v10803
    %v10843 = vunpack.c.l.b16 %v10804
    %v10844 = vunpack.c.l.b16 %v10805
    %v10845 = vunpack.c.l.b16 %v10806
    %v10846 = vunpack.c.l.b16 %v10807
    %v10847 = vunpack.c.l.b16 %v10808
    %v10848 = vunpack.c.l.b16 %v10809
    %v10849 = vunpack.c.l.b16 %v10810
    %v10850 = vunpack.c.l.b16 %v10811
    %v10851 = vpack.c.b16 %v10836, %v10835
    %v10852 = vpack.c.b16 %v10838, %v10837
    %v10853 = vpack.c.b16 %v10840, %v10839
    %v10854 = vpack.c.b16 %v10842, %v10841
    %v10855 = vpack.c.b16 %v10844, %v10843
    %v10856 = vpack.c.b16 %v10846, %v10845
    %v10857 = vpack.c.b16 %v10848, %v10847
    %v10858 = vpack.c.b16 %v10850, %v10849
    %10867 = vmatprep.subr.bf16.mxu0 0
    %10868 = vmatpush1.bf16.msra.mxu0 %v10858
    %10869 = vmatprep.subr.bf16.mxu0 0
    %10870 = vmatpush1.bf16.msra.mxu0 %v10857
    %10871 = vmatprep.subr.bf16.mxu0 0
    %10872 = vmatpush1.bf16.msra.mxu0 %v10856
    %10873 = vmatprep.subr.bf16.mxu0 0
    %10874 = vmatpush1.bf16.msra.mxu0 %v10855
    %10875 = vmatprep.subr.bf16.mxu0 0
    %10876 = vmatpush1.bf16.msra.mxu0 %v10854
    %10877 = vmatprep.subr.bf16.mxu0 0
    %10878 = vmatpush1.bf16.msra.mxu0 %v10853
    %10879 = vmatprep.subr.bf16.mxu0 0
    %10880 = vmatpush1.bf16.msra.mxu0 %v10852
    %10881 = vmatprep.subr.bf16.mxu0 0
    %10882 = vmatpush1.bf16.msra.mxu0 %v10851
    %10883 = vmatprep.subr.bf16.mxu0 0
    %10884 = vmatpush2.bf16.msra.mxu0 0
    %10885 = vmatprep.subr.bf16.mxu0 0
    %10886 = vmatpush2.bf16.msra.mxu0 0
    %10887 = vmatprep.subr.bf16.mxu0 0
    %10888 = vmatpush2.bf16.msra.mxu0 0
    %10889 = vmatprep.subr.bf16.mxu0 0
    %10890 = vmatpush2.bf16.msra.mxu0 0
    %10891 = vmatprep.subr.bf16.mxu0 0
    %10892 = vmatpush2.bf16.msra.mxu0 0
    %10893 = vmatprep.subr.bf16.mxu0 0
    %10894 = vmatpush2.bf16.msra.mxu0 0
    %10895 = vmatprep.subr.bf16.mxu0 0
    %10896 = vmatpush2.bf16.msra.mxu0 0
    %10897 = vmatprep.subr.bf16.mxu0 0
    %10898 = vmatpush2.bf16.msra.mxu0 0
    %10899 = vmatprep.mubr.bf16.mxu0 0
    %10900 = vmatmul.mubr.bf16.gmra.mxu0 %v10795
    %v10901 = vpop.f32.mrf.mxu0
    %v10902 = vadd.f32 %v10817, %v10901
    %v10903 = vpop.f32.mrf.mxu0
    %v10904 = vpop.f32.mrf.mxu0
    %v10905 = vpop.f32.mrf.mxu0
    %10906 = vdwg.mxu0
    %vm10907 = vcmask 58368
    %10908 = vst.msk [vmem:[#allocation7] sm:$0x3] %vm10907, %v10902
    // Predicated region
    $region106: #{actor_forward.1} parent=1 // pred_check
      _
    $region107: #{actor_forward.1} parent=1 // pred_check_branch
      %10910 = sbr.rel (0) target = $region109
    $region108: #{actor_forward.1} parent=1 // pred_region
      %s10912 = ssub.s32 32, 32
      %10913 = vsyncadd [#allocation8], %s10912
      %s10915 = sshll.u32 [#allocation7], 4
      %s10916 = int_to_ptr.vmem [resolvable:$true] %s10915
      %10918 = dma.vmem_to_hbm [thread:$0]  %s10916, 32, %s11, [#allocation8]
    $region109: #{actor_forward.1} parent=1 // pred_fallthru
      _
    // Predicated region
    $region110: #{actor_forward.1} parent=1 // pred_check
      _
    $region111: #{actor_forward.1} parent=1 // pred_check_branch
      %10920 = sbr.rel (0) target = $region113
    $region112: #{actor_forward.1} parent=1 // pred_region
      %10921 = dma.done [#allocation8], 32
    $region113: #{actor_forward.1} parent=1 // pred_fallthru
      _
    %10922 = vsyncpa [#allocation8], 1
  %10923 = vsyncmov [#allocation6]
  %s10924 = vpop.sfrf %10923
  %p10925 = scmp.eq.s32.totalorder %s10924, 0
  %p10926 = pneg %p10925
  %10928 = shalt.err (%p10926)
  %s10929 = scalar_lea.sflag [#allocation6], 1
  %10930 = vsyncmov %s10929
  %s10931 = vpop.sfrf %10930
  %p10932 = scmp.eq.s32.totalorder %s10931, 0
  %p10933 = pneg %p10932
  %10935 = shalt.err (%p10933)

</llo_original>
